<compile_context>
chip_gen: v7x
topology: tpu7x:2x2x1
jax: 0.10.0
libtpu: 0.0.40
codegen_flags: <defaults>
</compile_context>

<pallas_src>
import math

import jax
import jax.numpy as jnp
from jax import lax
from jax.experimental import pallas as pl
from jax.experimental.pallas import tpu as pltpu

# MXU operand dtype (accumulation is always f32). Set to None for exact f32 operands.
COMPUTE_DTYPE = jnp.bfloat16

_LN_EPS = 1e-5


def _mxu(a):
    return a if COMPUTE_DTYPE is None else a.astype(COMPUTE_DTYPE)


def _vmem_limit_bytes():
    """Generation-aware scoped-VMEM budget (~3/4 of per-core VMEM, capped)."""
    cap = 64 * 1024 * 1024  # conservative default (v7x per-core VMEM)
    try:
        v = getattr(pltpu.get_tpu_info(), "vmem_capacity_bytes", None)
        if v:
            cap = int(v)
    except Exception:
        pass
    return max(32 * 1024 * 1024, min((cap * 3) // 4, 100 * 1024 * 1024))


def _pick_tile(n, candidates):
    """Largest candidate that evenly divides n (else n itself, i.e. one full block)."""
    for c in candidates:
        if n >= c and n % c == 0:
            return c
    return n


def _pick_q_tile(sq, sk, n_heads, vmem_limit):
    """Query tile: multiple of 128 when possible, score block bounded by a VMEM share."""
    budget = max(vmem_limit // 4, 2 * 1024 * 1024)
    fallback = None
    for c in (512, 256, 128):
        if sq >= c and sq % c == 0:
            fallback = c
            if 3 * 4 * n_heads * c * sk <= budget:   # ~3 f32 copies of (H, tq, Sk)
                return c
    return fallback if fallback is not None else sq


# --------------------- fused attention sub-layer kernel ---------------------

def _make_attn_kernel(n_heads, dk, dv, scale, self_attn, has_mask):
    """out = x + Wo @ MHA(LN(x), kv, kv) + bo, one grid step per (batch, q-tile)."""

    def kernel(x_ref, kv_ref, g_ref, b_ref, wq_ref, bq_ref, wk_ref, bk_ref,
               wv_ref, bv_ref, wo_ref, bo_ref, *rest):
        if has_mask:
            mask_ref, o_ref = rest
        else:
            (o_ref,) = rest

        # ---- pre-LN of the query tile (f32) ----
        x = x_ref[0].astype(jnp.float32)                              # (tq, D)
        mu = jnp.mean(x, axis=-1, keepdims=True)
        var = jnp.mean((x - mu) ** 2, axis=-1, keepdims=True)
        h_q = (x - mu) * lax.rsqrt(var + _LN_EPS) * g_ref[...] + b_ref[...]

        # ---- K/V source: LN(x_full) for self-attn, raw encoder output otherwise ----
        kv = kv_ref[0].astype(jnp.float32)                            # (Sk, D)
        if self_attn:
            mu_k = jnp.mean(kv, axis=-1, keepdims=True)
            var_k = jnp.mean((kv - mu_k) ** 2, axis=-1, keepdims=True)
            kv = (kv - mu_k) * lax.rsqrt(var_k + _LN_EPS) * g_ref[...] + b_ref[...]

        h_q_c = _mxu(h_q)
        h_kv_c = _mxu(kv)

        # ---- fused wide Q/K/V projections (one MXU pass each, full H*d output width) ----
        q = jnp.dot(h_q_c, wq_ref[...], preferred_element_type=jnp.float32) + bq_ref[...]
        k = jnp.dot(h_kv_c, wk_ref[...], preferred_element_type=jnp.float32) + bk_ref[...]
        v = jnp.dot(h_kv_c, wv_ref[...], preferred_element_type=jnp.float32) + bv_ref[...]

        tq = q.shape[0]
        sk = k.shape[0]
        # head-leading layout for batched per-head matmuls
        qh = jnp.transpose(_mxu(q * scale).reshape(tq, n_heads, dk), (1, 0, 2))  # (H,tq,dk)
        kh = jnp.transpose(_mxu(k).reshape(sk, n_heads, dk), (1, 0, 2))          # (H,Sk,dk)
        vh = jnp.transpose(_mxu(v).reshape(sk, n_heads, dv), (1, 0, 2))          # (H,Sk,dv)

        # ---- batched scaled-dot-product attention (no explicit k.T) ----
        s = jnp.einsum('hqd,hkd->hqk', qh, kh,
                       preferred_element_type=jnp.float32)                       # (H,tq,Sk)
        if has_mask:
            s = s + mask_ref[0].astype(jnp.float32)[None, :, :]
        s = s - jnp.max(s, axis=-1, keepdims=True)
        p = jnp.exp(s)
        p = p * pl.reciprocal(jnp.sum(p, axis=-1, keepdims=True), approx=True)

        o = jnp.einsum('hqk,hkd->hqd', _mxu(p), vh,
                       preferred_element_type=jnp.float32)                       # (H,tq,dv)
        o = jnp.transpose(o, (1, 0, 2)).reshape(tq, n_heads * dv)

        # ---- single wide output projection + residual add ----
        out = jnp.dot(_mxu(o), wo_ref[...], preferred_element_type=jnp.float32)
        o_ref[0] = (x + out + bo_ref[...]).astype(o_ref.dtype)

    return kernel


def _prep_mask(mask, B, Sq, Sk):
    """Normalize a broadcastable additive mask to (1 or B, Sq, Sk), or None."""
    if mask is None:
        return None
    m = jnp.asarray(mask, jnp.float32)
    if m.ndim == 2:
        m = m[None]
    elif m.ndim == 4:
        m = m[:, 0, :, :]          # drop (broadcast) head dim
    if m.shape[0] not in (1, B):
        m = m[:1]
    return jnp.broadcast_to(m, (m.shape[0], Sq, Sk))


def attention_sublayer(x, kv, ln_g, ln_b, p, mask, *, self_attn):
    """Fused pre-LN + multi-head attention + output projection + residual add.

    x:  (B, Sq, D)  query source (also the residual input).
    kv: (B, Sk, D)  key/value source (ignored when self_attn: x is used).
    """
    B, Sq, D = x.shape
    kv_src = x if self_attn else kv
    Sk = kv_src.shape[1]
    H, dk, dv = p["n_heads"], p["dk"], p["dv"]

    # Weights stay in their original wide layout; cast once to the MXU dtype.
    wq, wk, wv, wo = _mxu(p["wq"]), _mxu(p["wk"]), _mxu(p["wv"]), _mxu(p["wo"])
    bq = p["bq"].reshape(1, H * dk).astype(jnp.float32)
    bk = p["bk"].reshape(1, H * dk).astype(jnp.float32)
    bv = p["bv"].reshape(1, H * dv).astype(jnp.float32)
    bo = p["bo"].reshape(1, D).astype(jnp.float32)
    g = ln_g.reshape(1, D).astype(jnp.float32)
    b = ln_b.reshape(1, D).astype(jnp.float32)

    mask_arr = _prep_mask(mask, B, Sq, Sk)
    has_mask = mask_arr is not None

    vmem_limit = _vmem_limit_bytes()
    tq = _pick_q_tile(Sq, Sk, H, vmem_limit)
    n_q = Sq // tq

    kern = _make_attn_kernel(H, dk, dv, 1.0 / math.sqrt(dk), self_attn, has_mask)

    in_specs = [
        pl.BlockSpec((1, tq, D), lambda bi, qi: (bi, qi, 0)),   # query / residual tile
        pl.BlockSpec((1, Sk, D), lambda bi, qi: (bi, 0, 0)),    # full K/V source
        pl.BlockSpec((1, D), lambda bi, qi: (0, 0)),            # ln gamma
        pl.BlockSpec((1, D), lambda bi, qi: (0, 0)),            # ln beta
        pl.BlockSpec((D, H * dk), lambda bi, qi: (0, 0)),       # Wq (wide)
        pl.BlockSpec((1, H * dk), lambda bi, qi: (0, 0)),       # bq
        pl.BlockSpec((D, H * dk), lambda bi, qi: (0, 0)),       # Wk
        pl.BlockSpec((1, H * dk), lambda bi, qi: (0, 0)),       # bk
        pl.BlockSpec((D, H * dv), lambda bi, qi: (0, 0)),       # Wv
        pl.BlockSpec((1, H * dv), lambda bi, qi: (0, 0)),       # bv
        pl.BlockSpec((H * dv, D), lambda bi, qi: (0, 0)),       # Wo (wide)
        pl.BlockSpec((1, D), lambda bi, qi: (0, 0)),            # bo
    ]
    args = [x, kv_src, g, b, wq, bq, wk, bk, wv, bv, wo, bo]
    if has_mask:
        if mask_arr.shape[0] == B:
            in_specs.append(pl.BlockSpec((1, tq, Sk), lambda bi, qi: (bi, qi, 0)))
        else:
            in_specs.append(pl.BlockSpec((1, tq, Sk), lambda bi, qi: (0, qi, 0)))
        args.append(mask_arr)

    wb = 2 if COMPUTE_DTYPE == jnp.bfloat16 else 4
    flops = 2 * B * (Sq * D * H * dk
                     + n_q * Sk * D * H * (dk + dv)          # K/V recomputed per q-tile
                     + H * Sq * Sk * (dk + dv)
                     + Sq * H * dv * D)
    bytes_acc = (4 * 2 * B * Sq * D + 4 * B * n_q * Sk * D
                 + wb * (D * H * (2 * dk + dv) + H * dv * D)
                 + 4 * (3 * D + H * (2 * dk + dv))
                 + (4 * int(mask_arr.size) if has_mask else 0))

    return pl.pallas_call(
        kern,
        out_shape=jax.ShapeDtypeStruct((B, Sq, D), x.dtype),
        grid=(B, n_q),
        in_specs=in_specs,
        out_specs=pl.BlockSpec((1, tq, D), lambda bi, qi: (bi, qi, 0)),
        compiler_params=pltpu.CompilerParams(
            dimension_semantics=("parallel", "parallel"),
            vmem_limit_bytes=vmem_limit),
        cost_estimate=pl.CostEstimate(
            flops=int(flops), transcendentals=int(B * H * Sq * Sk),
            bytes_accessed=int(bytes_acc)),
    )(*args)


# ------------------------ fused FFN sub-layer kernel -------------------------

def _ffn_kernel(x_ref, g_ref, b_ref, w1_ref, b1_ref, w2_ref, b2_ref,
                o_ref, h_ref, acc_ref):
    """out = x + Linear2(ReLU(Linear1(LN(x)))), d_ff tiled (reduction axis last)."""
    k = pl.program_id(1)

    @pl.when(k == 0)
    def _():
        xf = x_ref[...].astype(jnp.float32)
        mu = jnp.mean(xf, axis=-1, keepdims=True)
        var = jnp.mean((xf - mu) ** 2, axis=-1, keepdims=True)
        h = (xf - mu) * lax.rsqrt(var + _LN_EPS) * g_ref[...] + b_ref[...]
        h_ref[...] = h.astype(h_ref.dtype)          # cached LN(x) in the MXU dtype
        acc_ref[...] = jnp.zeros_like(acc_ref)

    h1 = jnp.dot(h_ref[...], w1_ref[...], preferred_element_type=jnp.float32) + b1_ref[...]
    h1 = jnp.maximum(h1, 0.0)
    acc_ref[...] += jnp.dot(_mxu(h1), w2_ref[...], preferred_element_type=jnp.float32)

    @pl.when(k == pl.num_programs(1) - 1)
    def _():
        o_ref[...] = (x_ref[...].astype(jnp.float32)
                      + acc_ref[...] + b2_ref[...]).astype(o_ref.dtype)


def ffn_sublayer(x, ln_g, ln_b, w1, b1, w2, b2):
    """Fused pre-LN + position-wise FFN + residual add on (B, S, D)."""
    B, S, D = x.shape
    rows = B * S
    d_ff = w1.shape[1]
    x2 = x.reshape(rows, D)

    vmem_limit = _vmem_limit_bytes()
    if vmem_limit >= 80 * 1024 * 1024:       # v5e / v6e: 128 MiB VMEM -> big tiles
        row_cands = (2048, 1024, 512, 256, 128)
        ff_cands = (2048, 1024, 512, 256, 128)
    else:                                    # v7x: 64 MiB per-core VMEM -> keep smaller
        row_cands = (1024, 512, 256, 128)
        ff_cands = (1024, 512, 256, 128)
    tm = _pick_tile(rows, row_cands)
    tff = _pick_tile(d_ff, ff_cands)
    grid = (rows // tm, d_ff // tff)

    w1c, w2c = _mxu(w1), _mxu(w2)            # bf16 weights halve re-streamed HBM bytes
    wb = 2 if COMPUTE_DTYPE == jnp.bfloat16 else 4
    h_dtype = jnp.float32 if COMPUTE_DTYPE is None else COMPUTE_DTYPE

    out = pl.pallas_call(
        _ffn_kernel,
        out_shape=jax.ShapeDtypeStruct((rows, D), x.dtype),
        grid=grid,
        in_specs=[
            pl.BlockSpec((tm, D), lambda i, k: (i, 0)),     # x (LN input + residual)
            pl.BlockSpec((1, D), lambda i, k: (0, 0)),      # ln gamma
            pl.BlockSpec((1, D), lambda i, k: (0, 0)),      # ln beta
            pl.BlockSpec((D, tff), lambda i, k: (0, k)),    # W1 tile
            pl.BlockSpec((1, tff), lambda i, k: (0, k)),    # b1 tile
            pl.BlockSpec((tff, D), lambda i, k: (k, 0)),    # W2 tile
            pl.BlockSpec((1, D), lambda i, k: (0, 0)),      # b2
        ],
        out_specs=pl.BlockSpec((tm, D), lambda i, k: (i, 0)),
        scratch_shapes=[pltpu.VMEM((tm, D), h_dtype),       # cached LN(x)
                        pltpu.VMEM((tm, D), jnp.float32)],  # f32 accumulator
        compiler_params=pltpu.CompilerParams(
            dimension_semantics=("parallel", "arbitrary"),
            vmem_limit_bytes=vmem_limit),
        cost_estimate=pl.CostEstimate(
            flops=int(4 * rows * D * d_ff), transcendentals=0,
            bytes_accessed=int(4 * 2 * rows * D
                               + (rows // tm) * wb * 2 * D * d_ff
                               + 4 * (d_ff + 3 * D))),
    )(x2, ln_g.reshape(1, D).astype(jnp.float32), ln_b.reshape(1, D).astype(jnp.float32),
      w1c, b1.reshape(1, d_ff).astype(jnp.float32), w2c, b2.reshape(1, D).astype(jnp.float32))
    return out.reshape(B, S, D)


# ------------------------------- model pieces --------------------------------

def decoder_block(p, x, encoder_output, encoder_mask, decoder_mask):
    # residuals[0]: x + SelfAttn(LN(x), LN(x), LN(x), decoder_mask)
    x = attention_sublayer(x, x, p["ln0_g"], p["ln0_b"], p["attn1"],
                           decoder_mask, self_attn=True)
    # residuals[1]: x + CrossAttn(LN(x), enc_out, enc_out, encoder_mask)
    x = attention_sublayer(x, encoder_output, p["ln1_g"], p["ln1_b"], p["attn2"],
                           encoder_mask, self_attn=False)
    # residuals[2]: x + FFN(LN(x))
    x = ffn_sublayer(x, p["ln2_g"], p["ln2_b"],
                     p["ffn_w1"], p["ffn_b1"], p["ffn_w2"], p["ffn_b2"])
    return x


def decoder(params, x, encoder_output, encoder_mask=None, decoder_mask=None):
    for idx, layer_p in enumerate(params["layers"]):
        em = encoder_mask[idx] if isinstance(encoder_mask, list) else encoder_mask
        dm = decoder_mask[idx] if isinstance(decoder_mask, list) else decoder_mask
        x = decoder_block(layer_p, x, encoder_output, em, dm)
    return x


# ----------------------------- parameter init --------------------------------

def init_mha_params(key, n_heads, d_model, dk, dv):
    ks = jax.random.split(key, 4)
    s = 0.02
    return {
        "n_heads": n_heads, "dk": dk, "dv": dv,
        "wq": jax.random.normal(ks[0], (d_model, n_heads * dk), jnp.float32) * s,
        "bq": jnp.zeros((n_heads * dk,), jnp.float32),
        "wk": jax.random.normal(ks[1], (d_model, n_heads * dk), jnp.float32) * s,
        "bk": jnp.zeros((n_heads * dk,), jnp.float32),
        "wv": jax.random.normal(ks[2], (d_model, n_heads * dv), jnp.float32) * s,
        "bv": jnp.zeros((n_heads * dv,), jnp.float32),
        "wo": jax.random.normal(ks[3], (n_heads * dv, d_model), jnp.float32) * s,
        "bo": jnp.zeros((d_model,), jnp.float32),
    }


def init_decoder_params(key, num, n_heads, d_model, dk, dv, d_ff):
    layers = []
    for i in range(num):
        k = jax.random.fold_in(key, i)
        k1, k2, k3, k4 = jax.random.split(k, 4)
        layers.append({
            "attn1": init_mha_params(k1, n_heads, d_model, dk, dv),
            "attn2": init_mha_params(k2, n_heads, d_model, dk, dv),
            "ffn_w1": jax.random.normal(k3, (d_model, d_ff), jnp.float32) * 0.02,
            "ffn_b1": jnp.zeros((d_ff,), jnp.float32),
            "ffn_w2": jax.random.normal(k4, (d_ff, d_model), jnp.float32) * 0.02,
            "ffn_b2": jnp.zeros((d_model,), jnp.float32),
            "ln0_g": jnp.ones((d_model,), jnp.float32), "ln0_b": jnp.zeros((d_model,), jnp.float32),
            "ln1_g": jnp.ones((d_model,), jnp.float32), "ln1_b": jnp.zeros((d_model,), jnp.float32),
            "ln2_g": jnp.ones((d_model,), jnp.float32), "ln2_b": jnp.zeros((d_model,), jnp.float32),
        })
    return {"layers": layers}


# ----------------------------------- demo ------------------------------------

if __name__ == "__main__":
    # Small but vreg/MXU-aligned shapes (H*dk = d_model = 128, seq multiple of 128).
    num_layers, n_heads, d_model, dk, dv, d_ff = 2, 4, 128, 32, 32, 256
    B, S_dec, S_enc = 2, 128, 128

    root = jax.random.PRNGKey(0)
    k_params, k_x, k_enc = jax.random.split(root, 3)

    params = init_decoder_params(k_params, num_layers, n_heads, d_model, dk, dv, d_ff)
    x = jax.random.normal(k_x, (B, S_dec, d_model), jnp.float32)
    enc_out = jax.random.normal(k_enc, (B, S_enc, d_model), jnp.float32)

    # causal decoder mask as an additive mask (0 where attended, -1e9 where blocked)
    causal = jnp.tril(jnp.ones((S_dec, S_dec), jnp.bool_))
    decoder_mask = jnp.where(causal, 0.0, -1e9).reshape(1, 1, S_dec, S_dec)
    encoder_mask = None  # no padding mask -> mask input skipped entirely

    out = decoder(params, x, enc_out, encoder_mask=encoder_mask, decoder_mask=decoder_mask)
    out = jax.block_until_ready(out)

    assert out.shape == (B, S_dec, d_model)
    assert bool(jnp.all(jnp.isfinite(out)))
    print("KERNEL_OK")
</pallas_src>

<mosaic_0001>
module attributes {stable_mosaic.version = 11 : i64} {
  func.func @kernel(%arg0: i32, %arg1: i32, %arg2: memref<1x128x128xf32, #tpu.memory_space<vmem>>, %arg3: memref<1x128x128xf32, #tpu.memory_space<vmem>>, %arg4: memref<1x128xf32, #tpu.memory_space<vmem>>, %arg5: memref<1x128xf32, #tpu.memory_space<vmem>>, %arg6: memref<128x128xbf16, #tpu.memory_space<vmem>>, %arg7: memref<1x128xf32, #tpu.memory_space<vmem>>, %arg8: memref<128x128xbf16, #tpu.memory_space<vmem>>, %arg9: memref<1x128xf32, #tpu.memory_space<vmem>>, %arg10: memref<128x128xbf16, #tpu.memory_space<vmem>>, %arg11: memref<1x128xf32, #tpu.memory_space<vmem>>, %arg12: memref<128x128xbf16, #tpu.memory_space<vmem>>, %arg13: memref<1x128xf32, #tpu.memory_space<vmem>>, %arg14: memref<1x128x128xf32, #tpu.memory_space<vmem>>, %arg15: memref<1x128x128xf32, #tpu.memory_space<vmem>>) attributes {dimension_semantics = [#tpu.dimension_semantics<parallel>, #tpu.dimension_semantics<parallel>], iteration_bounds = array<i64: 2, 1>, scalar_prefetch = 0 : i64, scratch_operands = 0 : i64, tpu.core_type = #tpu.core_type<tc>, window_params = [{transform_indices = @transform_0, window_bounds = array<i64: 1, 128, 128>}, {transform_indices = @transform_1, window_bounds = array<i64: 1, 128, 128>}, {pipeline_mode = #tpu.pipeline_mode<synchronous>, transform_indices = @transform_2, window_bounds = array<i64: 1, 128>}, {pipeline_mode = #tpu.pipeline_mode<synchronous>, transform_indices = @transform_3, window_bounds = array<i64: 1, 128>}, {pipeline_mode = #tpu.pipeline_mode<synchronous>, transform_indices = @transform_4, window_bounds = array<i64: 128, 128>}, {pipeline_mode = #tpu.pipeline_mode<synchronous>, transform_indices = @transform_5, window_bounds = array<i64: 1, 128>}, {pipeline_mode = #tpu.pipeline_mode<synchronous>, transform_indices = @transform_6, window_bounds = array<i64: 128, 128>}, {pipeline_mode = #tpu.pipeline_mode<synchronous>, transform_indices = @transform_7, window_bounds = array<i64: 1, 128>}, {pipeline_mode = #tpu.pipeline_mode<synchronous>, transform_indices = @transform_8, window_bounds = array<i64: 128, 128>}, {pipeline_mode = #tpu.pipeline_mode<synchronous>, transform_indices = @transform_9, window_bounds = array<i64: 1, 128>}, {pipeline_mode = #tpu.pipeline_mode<synchronous>, transform_indices = @transform_10, window_bounds = array<i64: 128, 128>}, {pipeline_mode = #tpu.pipeline_mode<synchronous>, transform_indices = @transform_11, window_bounds = array<i64: 1, 128>}, {transform_indices = @transform_12, window_bounds = array<i64: 1, 128, 128>}, {transform_indices = @transform_13, window_bounds = array<i64: 1, 128, 128>}]} {
    %c0 = arith.constant 0 : index
    %c0_0 = arith.constant 0 : index
    %c0_1 = arith.constant 0 : index
    %0 = vector.load %arg2[%c0, %c0_0, %c0_1] : memref<1x128x128xf32, #tpu.memory_space<vmem>>, vector<1x128x128xf32>
    %1 = vector.shape_cast %0 : vector<1x128x128xf32> to vector<128x128xf32>
    %cst = arith.constant dense<0.000000e+00> : vector<128xf32>
    %2 = vector.multi_reduction <add>, %1, %cst [1] : vector<128x128xf32> to vector<128xf32>
    %3 = vector.shape_cast %2 : vector<128xf32> to vector<128x1xf32>
    %cst_2 = arith.constant 1.280000e+02 : f32
    %4 = vector.broadcast %cst_2 : f32 to vector<128x1xf32>
    %5 = arith.divf %3, %4 : vector<128x1xf32>
    %6 = vector.broadcast %5 : vector<128x1xf32> to vector<128x128xf32>
    %7 = arith.subf %1, %6 : vector<128x128xf32>
    %8 = arith.mulf %7, %7 : vector<128x128xf32>
    %cst_3 = arith.constant dense<0.000000e+00> : vector<128xf32>
    %9 = vector.multi_reduction <add>, %8, %cst_3 [1] : vector<128x128xf32> to vector<128xf32>
    %10 = vector.shape_cast %9 : vector<128xf32> to vector<128x1xf32>
    %cst_4 = arith.constant 1.280000e+02 : f32
    %11 = vector.broadcast %cst_4 : f32 to vector<128x1xf32>
    %12 = arith.divf %10, %11 : vector<128x1xf32>
    %13 = vector.broadcast %5 : vector<128x1xf32> to vector<128x128xf32>
    %14 = arith.subf %1, %13 : vector<128x128xf32>
    %cst_5 = arith.constant 9.99999974E-6 : f32
    %15 = vector.broadcast %cst_5 : f32 to vector<128x1xf32>
    %16 = arith.addf %12, %15 : vector<128x1xf32>
    %17 = math.rsqrt %16 : vector<128x1xf32>
    %18 = vector.broadcast %17 : vector<128x1xf32> to vector<128x128xf32>
    %19 = arith.mulf %14, %18 : vector<128x128xf32>
    %c0_6 = arith.constant 0 : index
    %c0_7 = arith.constant 0 : index
    %20 = vector.load %arg4[%c0_6, %c0_7] : memref<1x128xf32, #tpu.memory_space<vmem>>, vector<1x128xf32>
    %21 = vector.broadcast %20 : vector<1x128xf32> to vector<128x128xf32>
    %22 = arith.mulf %19, %21 : vector<128x128xf32>
    %c0_8 = arith.constant 0 : index
    %c0_9 = arith.constant 0 : index
    %23 = vector.load %arg5[%c0_8, %c0_9] : memref<1x128xf32, #tpu.memory_space<vmem>>, vector<1x128xf32>
    %24 = vector.broadcast %23 : vector<1x128xf32> to vector<128x128xf32>
    %25 = arith.addf %22, %24 : vector<128x128xf32>
    %c0_10 = arith.constant 0 : index
    %c0_11 = arith.constant 0 : index
    %c0_12 = arith.constant 0 : index
    %26 = vector.load %arg3[%c0_10, %c0_11, %c0_12] : memref<1x128x128xf32, #tpu.memory_space<vmem>>, vector<1x128x128xf32>
    %27 = vector.shape_cast %26 : vector<1x128x128xf32> to vector<128x128xf32>
    %cst_13 = arith.constant dense<0.000000e+00> : vector<128xf32>
    %28 = vector.multi_reduction <add>, %27, %cst_13 [1] : vector<128x128xf32> to vector<128xf32>
    %29 = vector.shape_cast %28 : vector<128xf32> to vector<128x1xf32>
    %cst_14 = arith.constant 1.280000e+02 : f32
    %30 = vector.broadcast %cst_14 : f32 to vector<128x1xf32>
    %31 = arith.divf %29, %30 : vector<128x1xf32>
    %32 = vector.broadcast %31 : vector<128x1xf32> to vector<128x128xf32>
    %33 = arith.subf %27, %32 : vector<128x128xf32>
    %34 = arith.mulf %33, %33 : vector<128x128xf32>
    %cst_15 = arith.constant dense<0.000000e+00> : vector<128xf32>
    %35 = vector.multi_reduction <add>, %34, %cst_15 [1] : vector<128x128xf32> to vector<128xf32>
    %36 = vector.shape_cast %35 : vector<128xf32> to vector<128x1xf32>
    %cst_16 = arith.constant 1.280000e+02 : f32
    %37 = vector.broadcast %cst_16 : f32 to vector<128x1xf32>
    %38 = arith.divf %36, %37 : vector<128x1xf32>
    %39 = vector.broadcast %31 : vector<128x1xf32> to vector<128x128xf32>
    %40 = arith.subf %27, %39 : vector<128x128xf32>
    %cst_17 = arith.constant 9.99999974E-6 : f32
    %41 = vector.broadcast %cst_17 : f32 to vector<128x1xf32>
    %42 = arith.addf %38, %41 : vector<128x1xf32>
    %43 = math.rsqrt %42 : vector<128x1xf32>
    %44 = vector.broadcast %43 : vector<128x1xf32> to vector<128x128xf32>
    %45 = arith.mulf %40, %44 : vector<128x128xf32>
    %c0_18 = arith.constant 0 : index
    %c0_19 = arith.constant 0 : index
    %46 = vector.load %arg4[%c0_18, %c0_19] : memref<1x128xf32, #tpu.memory_space<vmem>>, vector<1x128xf32>
    %47 = vector.broadcast %46 : vector<1x128xf32> to vector<128x128xf32>
    %48 = arith.mulf %45, %47 : vector<128x128xf32>
    %c0_20 = arith.constant 0 : index
    %c0_21 = arith.constant 0 : index
    %49 = vector.load %arg5[%c0_20, %c0_21] : memref<1x128xf32, #tpu.memory_space<vmem>>, vector<1x128xf32>
    %50 = vector.broadcast %49 : vector<1x128xf32> to vector<128x128xf32>
    %51 = arith.addf %48, %50 : vector<128x128xf32>
    %52 = arith.truncf %25 : vector<128x128xf32> to vector<128x128xbf16>
    %53 = arith.truncf %51 : vector<128x128xf32> to vector<128x128xbf16>
    %c0_22 = arith.constant 0 : index
    %c0_23 = arith.constant 0 : index
    %54 = vector.load %arg6[%c0_22, %c0_23] : memref<128x128xbf16, #tpu.memory_space<vmem>>, vector<128x128xbf16>
    %cst_24 = arith.constant dense<0.000000e+00> : vector<128x128xf32>
    %55 = tpu.matmul %52, %54, %cst_24 {dimension_numbers = #tpu.dot_dimension_numbers<[1], [0], [0], [1], [0, 0, 1, 1], [], []>} : vector<128x128xbf16>, vector<128x128xbf16>, vector<128x128xf32> -> vector<128x128xf32>
    %c0_25 = arith.constant 0 : index
    %c0_26 = arith.constant 0 : index
    %56 = vector.load %arg7[%c0_25, %c0_26] : memref<1x128xf32, #tpu.memory_space<vmem>>, vector<1x128xf32>
    %57 = vector.broadcast %56 : vector<1x128xf32> to vector<128x128xf32>
    %58 = arith.addf %55, %57 : vector<128x128xf32>
    %c0_27 = arith.constant 0 : index
    %c0_28 = arith.constant 0 : index
    %59 = vector.load %arg8[%c0_27, %c0_28] : memref<128x128xbf16, #tpu.memory_space<vmem>>, vector<128x128xbf16>
    %cst_29 = arith.constant dense<0.000000e+00> : vector<128x128xf32>
    %60 = tpu.matmul %53, %59, %cst_29 {dimension_numbers = #tpu.dot_dimension_numbers<[1], [0], [0], [1], [0, 0, 1, 1], [], []>} : vector<128x128xbf16>, vector<128x128xbf16>, vector<128x128xf32> -> vector<128x128xf32>
    %c0_30 = arith.constant 0 : index
    %c0_31 = arith.constant 0 : index
    %61 = vector.load %arg9[%c0_30, %c0_31] : memref<1x128xf32, #tpu.memory_space<vmem>>, vector<1x128xf32>
    %62 = vector.broadcast %61 : vector<1x128xf32> to vector<128x128xf32>
    %63 = arith.addf %60, %62 : vector<128x128xf32>
    %c0_32 = arith.constant 0 : index
    %c0_33 = arith.constant 0 : index
    %64 = vector.load %arg10[%c0_32, %c0_33] : memref<128x128xbf16, #tpu.memory_space<vmem>>, vector<128x128xbf16>
    %cst_34 = arith.constant dense<0.000000e+00> : vector<128x128xf32>
    %65 = tpu.matmul %53, %64, %cst_34 {dimension_numbers = #tpu.dot_dimension_numbers<[1], [0], [0], [1], [0, 0, 1, 1], [], []>} : vector<128x128xbf16>, vector<128x128xbf16>, vector<128x128xf32> -> vector<128x128xf32>
    %c0_35 = arith.constant 0 : index
    %c0_36 = arith.constant 0 : index
    %66 = vector.load %arg11[%c0_35, %c0_36] : memref<1x128xf32, #tpu.memory_space<vmem>>, vector<1x128xf32>
    %67 = vector.broadcast %66 : vector<1x128xf32> to vector<128x128xf32>
    %68 = arith.addf %65, %67 : vector<128x128xf32>
    %cst_37 = arith.constant 0.176776692 : f32
    %69 = vector.broadcast %cst_37 : f32 to vector<128x128xf32>
    %70 = arith.mulf %58, %69 : vector<128x128xf32>
    %71 = arith.truncf %70 : vector<128x128xf32> to vector<128x128xbf16>
    %72 = vector.shape_cast %71 : vector<128x128xbf16> to vector<128x4x32xbf16>
    %73 = tpu.transpose %72, [1, 0, 2] : vector<128x4x32xbf16> -> vector<4x128x32xbf16>
    %74 = arith.truncf %63 : vector<128x128xf32> to vector<128x128xbf16>
    %75 = vector.shape_cast %74 : vector<128x128xbf16> to vector<128x4x32xbf16>
    %76 = tpu.transpose %75, [1, 0, 2] : vector<128x4x32xbf16> -> vector<4x128x32xbf16>
    %77 = arith.truncf %68 : vector<128x128xf32> to vector<128x128xbf16>
    %78 = vector.shape_cast %77 : vector<128x128xbf16> to vector<128x4x32xbf16>
    %79 = tpu.transpose %78, [1, 0, 2] : vector<128x4x32xbf16> -> vector<4x128x32xbf16>
    "tpu.trace_start"() <{level = 10 : i32, message = "hqd,hkd->hqk"}> : () -> ()
    %cst_38 = arith.constant dense<0.000000e+00> : vector<4x128x128xf32>
    %80 = tpu.matmul %73, %76, %cst_38 {dimension_numbers = #tpu.dot_dimension_numbers<[2], [2], [1], [1], [0, 0, 0, 1, 1, 1], [0], [0]>} : vector<4x128x32xbf16>, vector<4x128x32xbf16>, vector<4x128x128xf32> -> vector<4x128x128xf32>
    "tpu.trace_stop"() : () -> ()
    %c0_39 = arith.constant 0 : index
    %c0_40 = arith.constant 0 : index
    %c0_41 = arith.constant 0 : index
    %81 = vector.load %arg14[%c0_39, %c0_40, %c0_41] : memref<1x128x128xf32, #tpu.memory_space<vmem>>, vector<1x128x128xf32>
    %82 = vector.shape_cast %81 : vector<1x128x128xf32> to vector<128x128xf32>
    %83 = vector.shape_cast %82 : vector<128x128xf32> to vector<1x128x128xf32>
    %84 = vector.broadcast %83 : vector<1x128x128xf32> to vector<4x128x128xf32>
    %85 = arith.addf %80, %84 : vector<4x128x128xf32>
    %cst_42 = arith.constant dense<0xFF800000> : vector<4x128xf32>
    %86 = vector.multi_reduction <maximumf>, %85, %cst_42 [2] : vector<4x128x128xf32> to vector<4x128xf32>
    %87 = vector.shape_cast %86 : vector<4x128xf32> to vector<4x128x1xf32>
    %88 = vector.broadcast %87 : vector<4x128x1xf32> to vector<4x128x128xf32>
    %89 = arith.subf %85, %88 : vector<4x128x128xf32>
    %90 = math.exp %89 : vector<4x128x128xf32>
    %cst_43 = arith.constant dense<0.000000e+00> : vector<4x128xf32>
    %91 = vector.multi_reduction <add>, %90, %cst_43 [2] : vector<4x128x128xf32> to vector<4x128xf32>
    %92 = vector.shape_cast %91 : vector<4x128xf32> to vector<4x128x1xf32>
    %93 = tpu.reciprocal %92 {approx = true} : vector<4x128x1xf32> -> vector<4x128x1xf32>
    %94 = vector.broadcast %93 : vector<4x128x1xf32> to vector<4x128x128xf32>
    %95 = arith.mulf %90, %94 : vector<4x128x128xf32>
    %96 = arith.truncf %95 : vector<4x128x128xf32> to vector<4x128x128xbf16>
    "tpu.trace_start"() <{level = 10 : i32, message = "hqk,hkd->hqd"}> : () -> ()
    %cst_44 = arith.constant dense<0.000000e+00> : vector<4x128x32xf32>
    %97 = tpu.matmul %96, %79, %cst_44 {dimension_numbers = #tpu.dot_dimension_numbers<[2], [1], [1], [2], [0, 0, 0, 1, 1, 2], [0], [0]>} : vector<4x128x128xbf16>, vector<4x128x32xbf16>, vector<4x128x32xf32> -> vector<4x128x32xf32>
    "tpu.trace_stop"() : () -> ()
    %98 = tpu.transpose %97, [1, 0, 2] : vector<4x128x32xf32> -> vector<128x4x32xf32>
    %99 = vector.shape_cast %98 : vector<128x4x32xf32> to vector<128x128xf32>
    %100 = arith.truncf %99 : vector<128x128xf32> to vector<128x128xbf16>
    %c0_45 = arith.constant 0 : index
    %c0_46 = arith.constant 0 : index
    %101 = vector.load %arg12[%c0_45, %c0_46] : memref<128x128xbf16, #tpu.memory_space<vmem>>, vector<128x128xbf16>
    %cst_47 = arith.constant dense<0.000000e+00> : vector<128x128xf32>
    %102 = tpu.matmul %100, %101, %cst_47 {dimension_numbers = #tpu.dot_dimension_numbers<[1], [0], [0], [1], [0, 0, 1, 1], [], []>} : vector<128x128xbf16>, vector<128x128xbf16>, vector<128x128xf32> -> vector<128x128xf32>
    %103 = arith.addf %1, %102 : vector<128x128xf32>
    %c0_48 = arith.constant 0 : index
    %c0_49 = arith.constant 0 : index
    %104 = vector.load %arg13[%c0_48, %c0_49] : memref<1x128xf32, #tpu.memory_space<vmem>>, vector<1x128xf32>
    %105 = vector.broadcast %104 : vector<1x128xf32> to vector<128x128xf32>
    %106 = arith.addf %103, %105 : vector<128x128xf32>
    %c0_50 = arith.constant 0 : index
    %c0_51 = arith.constant 0 : index
    %c0_52 = arith.constant 0 : index
    %107 = vector.load %arg15[%c0_50, %c0_51, %c0_52] : memref<1x128x128xf32, #tpu.memory_space<vmem>>, vector<1x128x128xf32>
    %108 = vector.shape_cast %107 : vector<1x128x128xf32> to vector<128x128xf32>
    %109 = vector.shape_cast %106 : vector<128x128xf32> to vector<1x128x128xf32>
    tpu.vector_store %arg15[%c0_50, %c0_51, %c0_52], %109 {strides = array<i32>} : memref<1x128x128xf32, #tpu.memory_space<vmem>>, vector<1x128x128xf32>,
    return
  }
  func.func @transform_0(%arg0: i32, %arg1: i32) -> (i32, i32, i32) {
    %c0_i32 = arith.constant 0 : i32
    %c0_i32_0 = arith.constant 0 : i32
    return %arg0, %arg1, %c0_i32 : i32, i32, i32
  }
  func.func @transform_1(%arg0: i32, %arg1: i32) -> (i32, i32, i32) {
    %c0_i32 = arith.constant 0 : i32
    %c0_i32_0 = arith.constant 0 : i32
    %c0_i32_1 = arith.constant 0 : i32
    return %arg0, %c0_i32, %c0_i32_0 : i32, i32, i32
  }
  func.func @transform_2(%arg0: i32, %arg1: i32) -> (i32, i32) {
    %c0_i32 = arith.constant 0 : i32
    %c0_i32_0 = arith.constant 0 : i32
    %c0_i32_1 = arith.constant 0 : i32
    return %c0_i32, %c0_i32_0 : i32, i32
  }
  func.func @transform_3(%arg0: i32, %arg1: i32) -> (i32, i32) {
    %c0_i32 = arith.constant 0 : i32
    %c0_i32_0 = arith.constant 0 : i32
    %c0_i32_1 = arith.constant 0 : i32
    return %c0_i32, %c0_i32_0 : i32, i32
  }
  func.func @transform_4(%arg0: i32, %arg1: i32) -> (i32, i32) {
    %c0_i32 = arith.constant 0 : i32
    %c0_i32_0 = arith.constant 0 : i32
    %c0_i32_1 = arith.constant 0 : i32
    return %c0_i32, %c0_i32_0 : i32, i32
  }
  func.func @transform_5(%arg0: i32, %arg1: i32) -> (i32, i32) {
    %c0_i32 = arith.constant 0 : i32
    %c0_i32_0 = arith.constant 0 : i32
    %c0_i32_1 = arith.constant 0 : i32
    return %c0_i32, %c0_i32_0 : i32, i32
  }
  func.func @transform_6(%arg0: i32, %arg1: i32) -> (i32, i32) {
    %c0_i32 = arith.constant 0 : i32
    %c0_i32_0 = arith.constant 0 : i32
    %c0_i32_1 = arith.constant 0 : i32
    return %c0_i32, %c0_i32_0 : i32, i32
  }
  func.func @transform_7(%arg0: i32, %arg1: i32) -> (i32, i32) {
    %c0_i32 = arith.constant 0 : i32
    %c0_i32_0 = arith.constant 0 : i32
    %c0_i32_1 = arith.constant 0 : i32
    return %c0_i32, %c0_i32_0 : i32, i32
  }
  func.func @transform_8(%arg0: i32, %arg1: i32) -> (i32, i32) {
    %c0_i32 = arith.constant 0 : i32
    %c0_i32_0 = arith.constant 0 : i32
    %c0_i32_1 = arith.constant 0 : i32
    return %c0_i32, %c0_i32_0 : i32, i32
  }
  func.func @transform_9(%arg0: i32, %arg1: i32) -> (i32, i32) {
    %c0_i32 = arith.constant 0 : i32
    %c0_i32_0 = arith.constant 0 : i32
    %c0_i32_1 = arith.constant 0 : i32
    return %c0_i32, %c0_i32_0 : i32, i32
  }
  func.func @transform_10(%arg0: i32, %arg1: i32) -> (i32, i32) {
    %c0_i32 = arith.constant 0 : i32
    %c0_i32_0 = arith.constant 0 : i32
    %c0_i32_1 = arith.constant 0 : i32
    return %c0_i32, %c0_i32_0 : i32, i32
  }
  func.func @transform_11(%arg0: i32, %arg1: i32) -> (i32, i32) {
    %c0_i32 = arith.constant 0 : i32
    %c0_i32_0 = arith.constant 0 : i32
    %c0_i32_1 = arith.constant 0 : i32
    return %c0_i32, %c0_i32_0 : i32, i32
  }
  func.func @transform_12(%arg0: i32, %arg1: i32) -> (i32, i32, i32) {
    %c0_i32 = arith.constant 0 : i32
    %c0_i32_0 = arith.constant 0 : i32
    %c0_i32_1 = arith.constant 0 : i32
    return %c0_i32, %arg1, %c0_i32_0 : i32, i32, i32
  }
  func.func @transform_13(%arg0: i32, %arg1: i32) -> (i32, i32, i32) {
    %c0_i32 = arith.constant 0 : i32
    %c0_i32_0 = arith.constant 0 : i32
    return %arg0, %arg1, %c0_i32 : i32, i32, i32
  }
}

</mosaic_0001>

<llo_original>
// kernel: tpu_custom_call.1
$region0: #{tpu_custom_call.1}
  #allocation0 [shape = 'u32[]', space=smem, size = 0x4, offset = 0x4, fixed_abs, tag = 'smem constant byte address 0x4 - core index']
  #allocation1 [shape = 'u32[144,128]{1,0:T(1,128)}', space=vmem, size = 0x12000, scoped, tag = 'internal scratch']
  %s0 = inlined_call_operand.hbm [shape: f32[2,128,128], index: 0, kind: input, shape index: {}]
  %s1 = inlined_call_operand.hbm [shape: f32[2,128,128], index: 1, kind: input, shape index: {}]
  %s2 = inlined_call_operand.vmem [shape: f32[1,128], index: 2, kind: input, shape index: {}]
  %s3 = inlined_call_operand.vmem [shape: f32[1,128], index: 3, kind: input, shape index: {}]
  %s4 = inlined_call_operand.hbm [shape: bf16[128,128], index: 4, kind: input, shape index: {}]
  %s5 = inlined_call_operand.vmem [shape: f32[1,128], index: 5, kind: input, shape index: {}]
  %s6 = inlined_call_operand.hbm [shape: bf16[128,128], index: 6, kind: input, shape index: {}]
  %s7 = inlined_call_operand.vmem [shape: f32[1,128], index: 7, kind: input, shape index: {}]
  %s8 = inlined_call_operand.hbm [shape: bf16[128,128], index: 8, kind: input, shape index: {}]
  %s9 = inlined_call_operand.vmem [shape: f32[1,128], index: 9, kind: input, shape index: {}]
  %s10 = inlined_call_operand.hbm [shape: bf16[128,128], index: 10, kind: input, shape index: {}]
  %s11 = inlined_call_operand.vmem [shape: f32[1,128], index: 11, kind: input, shape index: {}]
  %s12 = inlined_call_operand.hbm [shape: f32[1,128,128], index: 12, kind: input, shape index: {}]
  %s13 = inlined_call_operand.hbm [shape: f32[2,128,128], index: 13, kind: output, shape index: {}]
  %s14 = sld [smem:[#allocation0]]
  $region113: #{tpu_custom_call.1} parent=0
    _
  %s16 = ssub.s32 1, %s14
  %s17 = scalar_select 0, %s16, %s14
  $region1: #{tpu_custom_call.1} parent=0
    #allocation2 [shape = 'u8[131072]{0}', space=vmem, size = 0x20000, scoped, tag = 'input window, operand 0']
    #allocation3 [shape = 's32[2]{0}', space=sflag, size = 0x8, scoped, tag = 'scoped memory for tpu_custom_call.1']
    #allocation4 [shape = 's32[2]{0}', space=sflag, size = 0x8, scoped, tag = 'scoped memory for tpu_custom_call.1']
    #allocation5 [shape = 'u8[131072]{0}', space=vmem, size = 0x20000, scoped, tag = 'input window, operand 1']
    #allocation6 [shape = 's32[2]{0}', space=sflag, size = 0x8, scoped, tag = 'scoped memory for tpu_custom_call.1']
    #allocation7 [shape = 'u8[32768]{0}', space=vmem, size = 0x8000, scoped, tag = 'input window, operand 4, single buffered']
    #allocation8 [shape = 'u8[32768]{0}', space=vmem, size = 0x8000, scoped, tag = 'input window, operand 6, single buffered']
    #allocation9 [shape = 's32[1]{0}', space=sflag, size = 0x4, scoped, tag = 'scoped memory for tpu_custom_call.1']
    #allocation10 [shape = 'u8[32768]{0}', space=vmem, size = 0x8000, scoped, tag = 'input window, operand 8, single buffered']
    #allocation11 [shape = 'u8[32768]{0}', space=vmem, size = 0x8000, scoped, tag = 'input window, operand 10, single buffered']
    #allocation12 [shape = 's32[1]{0}', space=sflag, size = 0x4, scoped, tag = 'scoped memory for tpu_custom_call.1']
    #allocation13 [shape = 'u8[65536]{0}', space=vmem, size = 0x10000, scoped, tag = 'input window, operand 12, single buffered']
    #allocation14 [shape = 'u8[131072]{0}', space=vmem, size = 0x20000, scoped, tag = 'output window, operand 0']
    %18 = vsyncpa [#allocation3], 0
    %s19 = scalar_lea.sflag [#allocation3], 1
    %20 = vsyncpa %s19, 0
    %21 = vsyncpa [#allocation6], 0
    %s22 = scalar_lea.sflag [#allocation6], 1
    %23 = vsyncpa %s22, 0
    %24 = vsyncpa [#allocation9], 0
    %25 = vsyncpa [#allocation12], 0
    %26 = vsyncpa [#allocation4], 0
    %s27 = scalar_lea.sflag [#allocation4], 1
    %28 = vsyncpa %s27, 0
    loop: start=0, step=1, limit=4
    $region2: #{tpu_custom_call.1} parent=1 // loop_pre_header
      _
    $region3: #{tpu_custom_call.1} parent=1 // loop_header
      %s30 = sphi 0, %s34
      %p31 = scmp.ge.s32.totalorder %s30, 4
      %s37 = sphi 0, %s49
      %s38 = sphi 0, %s45
      %s39 = sphi 0, %s37
      %s40 = sphi 0, %s38
      %s41 = sphi 0, %s39
      %s42 = sphi 0, %s40
      %s54 = sphi 0, %s56
      %s57 = sphi 0, %s54
      %s58 = sphi 0, %s57
      %s74 = sphi 0, %s58
      %s80 = sphi 0, %s82
      %s83 = sphi 0, %s80
      %s84 = sphi 0, %s83
      %s100 = sphi 0, %s84
      %s104 = sphi 0, %s104
      %s106 = sphi 0, %s104
      %s107 = sphi 0, %s106
      %s121 = sphi 0, %s107
      %s125 = sphi 0, %s125
      %s127 = sphi 0, %s125
      %s128 = sphi 0, %s127
      %s142 = sphi 0, %s128
      %s146 = sphi 0, %s146
      %s148 = sphi 0, %s146
      %s149 = sphi 0, %s148
      %s163 = sphi 0, %s149
      %s167 = sphi 0, %s167
      %s169 = sphi 0, %s167
      %s170 = sphi 0, %s169
      %s184 = sphi 0, %s170
      %s188 = sphi 0, %s188
      %s190 = sphi 0, %s188
      %s191 = sphi 0, %s190
      %s205 = sphi 0, %s191
      %s209 = sphi 0, %s209
      %s211 = sphi 0, %s209
      %s212 = sphi 0, %s211
      %s226 = sphi 0, %s212
      %s230 = sphi 0, %s230
      %s232 = sphi 0, %s230
      %s233 = sphi 0, %s232
      %s247 = sphi 0, %s233
      %s251 = sphi 0, %s251
      %s253 = sphi 0, %s251
      %s254 = sphi 0, %s253
      %s268 = sphi 0, %s254
      %s272 = sphi 0, %s272
      %s274 = sphi 0, %s272
      %s275 = sphi 0, %s274
      %s289 = sphi 0, %s275
      %s293 = sphi 0, %s293
      %s295 = sphi 0, %s293
      %s296 = sphi 0, %s295
      %s310 = sphi 0, %s296
      %s316 = sphi 0, %s318
      %s319 = sphi 0, %s316
      %s320 = sphi 0, %s319
      %s336 = sphi 0, %s320
      %s344 = sphi 0, %s346
      %s347 = sphi 0, %s344
      %s348 = sphi 0, %s347
      %s364 = sphi 0, %s348
    $region4: #{tpu_custom_call.1} parent=1 // loop_header_branch
      %33 = sbr.rel (%p31) target = $region8
    $region5: #{tpu_custom_call.1} parent=1 // loop_body
      %s35 = ssub.s32 %s30, 1
      %s36 = ssub.s32 %s30, 2
      %s43 = sadd.s32 1, %s38
      %p44 = scmp.ge.s32.totalorder %s43, 1
      %s45 = scalar_select %p44, 0, %s43
      %s46 = sadd.s32 1, %s37
      %s47 = scalar_select %p44, %s46, %s37
      %p48 = scmp.ge.s32.totalorder %s47, 2
      %s49 = scalar_select %p48, 0, %s47
      %s50 = ssub.s32 %s37, %s49
      %s51 = ssub.s32 %s38, %s45
      %s52 = sor.u32 %s50, %s51
      %p53 = scmp.eq.s32.totalorder %s52, 0
      %s55 = sadd.s32 %s54, 1
      %s56 = scalar_select %p53, %s54, %s55
      %p59 = pneg %p53
      %p60 = scmp.eq.s32.totalorder %s30, 1
      %p61 = por %p59, %p60
      %p62 = scmp.ne.s32.totalorder %s54, %s57
      %p63 = scmp.eq.s32.totalorder %s30, 0
      %p64 = por %p62, %p63
      %p65 = scmp.ne.s32.totalorder %s54, %s57
      %p66 = scmp.eq.s32.totalorder %s35, 1
      %p67 = por %p65, %p66
      %p68 = scmp.ne.s32.totalorder %s57, %s58
      %p69 = scmp.eq.s32.totalorder %s35, 0
      %p70 = por %p68, %p69
      %p71 = scmp.ne.s32.totalorder %s57, %s58
      %p72 = scmp.eq.s32.totalorder %s36, 1
      %p73 = por %p71, %p72
      %p75 = scmp.ne.s32.totalorder %s58, %s74
      %p76 = scmp.eq.s32.totalorder %s36, 0
      %p77 = por %p75, %p76
      %s78 = ssub.s32 %s37, %s49
      %p79 = scmp.eq.s32.totalorder %s78, 0
      %s81 = sadd.s32 %s80, 1
      %s82 = scalar_select %p79, %s80, %s81
      %p85 = pneg %p79
      %p86 = scmp.eq.s32.totalorder %s30, 1
      %p87 = por %p85, %p86
      %p88 = scmp.ne.s32.totalorder %s80, %s83
      %p89 = scmp.eq.s32.totalorder %s30, 0
      %p90 = por %p88, %p89
      %p91 = scmp.ne.s32.totalorder %s80, %s83
      %p92 = scmp.eq.s32.totalorder %s35, 1
      %p93 = por %p91, %p92
      %p94 = scmp.ne.s32.totalorder %s83, %s84
      %p95 = scmp.eq.s32.totalorder %s35, 0
      %p96 = por %p94, %p95
      %p97 = scmp.ne.s32.totalorder %s83, %s84
      %p98 = scmp.eq.s32.totalorder %s36, 1
      %p99 = por %p97, %p98
      %p101 = scmp.ne.s32.totalorder %s84, %s100
      %p102 = scmp.eq.s32.totalorder %s36, 0
      %p103 = por %p101, %p102
      %s105 = sadd.s32 %s104, 1
      %p108 = scmp.eq.s32.totalorder %s30, 1
      %p109 = scmp.ne.s32.totalorder %s104, %s106
      %p110 = scmp.eq.s32.totalorder %s30, 0
      %p111 = por %p109, %p110
      %p112 = scmp.ne.s32.totalorder %s104, %s106
      %p113 = scmp.eq.s32.totalorder %s35, 1
      %p114 = por %p112, %p113
      %p115 = scmp.ne.s32.totalorder %s106, %s107
      %p116 = scmp.eq.s32.totalorder %s35, 0
      %p117 = por %p115, %p116
      %p118 = scmp.ne.s32.totalorder %s106, %s107
      %p119 = scmp.eq.s32.totalorder %s36, 1
      %p120 = por %p118, %p119
      %p122 = scmp.ne.s32.totalorder %s107, %s121
      %p123 = scmp.eq.s32.totalorder %s36, 0
      %p124 = por %p122, %p123
      %s126 = sadd.s32 %s125, 1
      %p129 = scmp.eq.s32.totalorder %s30, 1
      %p130 = scmp.ne.s32.totalorder %s125, %s127
      %p131 = scmp.eq.s32.totalorder %s30, 0
      %p132 = por %p130, %p131
      %p133 = scmp.ne.s32.totalorder %s125, %s127
      %p134 = scmp.eq.s32.totalorder %s35, 1
      %p135 = por %p133, %p134
      %p136 = scmp.ne.s32.totalorder %s127, %s128
      %p137 = scmp.eq.s32.totalorder %s35, 0
      %p138 = por %p136, %p137
      %p139 = scmp.ne.s32.totalorder %s127, %s128
      %p140 = scmp.eq.s32.totalorder %s36, 1
      %p141 = por %p139, %p140
      %p143 = scmp.ne.s32.totalorder %s128, %s142
      %p144 = scmp.eq.s32.totalorder %s36, 0
      %p145 = por %p143, %p144
      %s147 = sadd.s32 %s146, 1
      %p150 = scmp.eq.s32.totalorder %s30, 1
      %p151 = scmp.ne.s32.totalorder %s146, %s148
      %p152 = scmp.eq.s32.totalorder %s30, 0
      %p153 = por %p151, %p152
      %p154 = scmp.ne.s32.totalorder %s146, %s148
      %p155 = scmp.eq.s32.totalorder %s35, 1
      %p156 = por %p154, %p155
      %p157 = scmp.ne.s32.totalorder %s148, %s149
      %p158 = scmp.eq.s32.totalorder %s35, 0
      %p159 = por %p157, %p158
      %p160 = scmp.ne.s32.totalorder %s148, %s149
      %p161 = scmp.eq.s32.totalorder %s36, 1
      %p162 = por %p160, %p161
      %p164 = scmp.ne.s32.totalorder %s149, %s163
      %p165 = scmp.eq.s32.totalorder %s36, 0
      %p166 = por %p164, %p165
      %s168 = sadd.s32 %s167, 1
      %p171 = scmp.eq.s32.totalorder %s30, 1
      %p172 = scmp.ne.s32.totalorder %s167, %s169
      %p173 = scmp.eq.s32.totalorder %s30, 0
      %p174 = por %p172, %p173
      %p175 = scmp.ne.s32.totalorder %s167, %s169
      %p176 = scmp.eq.s32.totalorder %s35, 1
      %p177 = por %p175, %p176
      %p178 = scmp.ne.s32.totalorder %s169, %s170
      %p179 = scmp.eq.s32.totalorder %s35, 0
      %p180 = por %p178, %p179
      %p181 = scmp.ne.s32.totalorder %s169, %s170
      %p182 = scmp.eq.s32.totalorder %s36, 1
      %p183 = por %p181, %p182
      %p185 = scmp.ne.s32.totalorder %s170, %s184
      %p186 = scmp.eq.s32.totalorder %s36, 0
      %p187 = por %p185, %p186
      %s189 = sadd.s32 %s188, 1
      %p192 = scmp.eq.s32.totalorder %s30, 1
      %p193 = scmp.ne.s32.totalorder %s188, %s190
      %p194 = scmp.eq.s32.totalorder %s30, 0
      %p195 = por %p193, %p194
      %p196 = scmp.ne.s32.totalorder %s188, %s190
      %p197 = scmp.eq.s32.totalorder %s35, 1
      %p198 = por %p196, %p197
      %p199 = scmp.ne.s32.totalorder %s190, %s191
      %p200 = scmp.eq.s32.totalorder %s35, 0
      %p201 = por %p199, %p200
      %p202 = scmp.ne.s32.totalorder %s190, %s191
      %p203 = scmp.eq.s32.totalorder %s36, 1
      %p204 = por %p202, %p203
      %p206 = scmp.ne.s32.totalorder %s191, %s205
      %p207 = scmp.eq.s32.totalorder %s36, 0
      %p208 = por %p206, %p207
      %s210 = sadd.s32 %s209, 1
      %p213 = scmp.eq.s32.totalorder %s30, 1
      %p214 = scmp.ne.s32.totalorder %s209, %s211
      %p215 = scmp.eq.s32.totalorder %s30, 0
      %p216 = por %p214, %p215
      %p217 = scmp.ne.s32.totalorder %s209, %s211
      %p218 = scmp.eq.s32.totalorder %s35, 1
      %p219 = por %p217, %p218
      %p220 = scmp.ne.s32.totalorder %s211, %s212
      %p221 = scmp.eq.s32.totalorder %s35, 0
      %p222 = por %p220, %p221
      %p223 = scmp.ne.s32.totalorder %s211, %s212
      %p224 = scmp.eq.s32.totalorder %s36, 1
      %p225 = por %p223, %p224
      %p227 = scmp.ne.s32.totalorder %s212, %s226
      %p228 = scmp.eq.s32.totalorder %s36, 0
      %p229 = por %p227, %p228
      %s231 = sadd.s32 %s230, 1
      %p234 = scmp.eq.s32.totalorder %s30, 1
      %p235 = scmp.ne.s32.totalorder %s230, %s232
      %p236 = scmp.eq.s32.totalorder %s30, 0
      %p237 = por %p235, %p236
      %p238 = scmp.ne.s32.totalorder %s230, %s232
      %p239 = scmp.eq.s32.totalorder %s35, 1
      %p240 = por %p238, %p239
      %p241 = scmp.ne.s32.totalorder %s232, %s233
      %p242 = scmp.eq.s32.totalorder %s35, 0
      %p243 = por %p241, %p242
      %p244 = scmp.ne.s32.totalorder %s232, %s233
      %p245 = scmp.eq.s32.totalorder %s36, 1
      %p246 = por %p244, %p245
      %p248 = scmp.ne.s32.totalorder %s233, %s247
      %p249 = scmp.eq.s32.totalorder %s36, 0
      %p250 = por %p248, %p249
      %s252 = sadd.s32 %s251, 1
      %p255 = scmp.eq.s32.totalorder %s30, 1
      %p256 = scmp.ne.s32.totalorder %s251, %s253
      %p257 = scmp.eq.s32.totalorder %s30, 0
      %p258 = por %p256, %p257
      %p259 = scmp.ne.s32.totalorder %s251, %s253
      %p260 = scmp.eq.s32.totalorder %s35, 1
      %p261 = por %p259, %p260
      %p262 = scmp.ne.s32.totalorder %s253, %s254
      %p263 = scmp.eq.s32.totalorder %s35, 0
      %p264 = por %p262, %p263
      %p265 = scmp.ne.s32.totalorder %s253, %s254
      %p266 = scmp.eq.s32.totalorder %s36, 1
      %p267 = por %p265, %p266
      %p269 = scmp.ne.s32.totalorder %s254, %s268
      %p270 = scmp.eq.s32.totalorder %s36, 0
      %p271 = por %p269, %p270
      %s273 = sadd.s32 %s272, 1
      %p276 = scmp.eq.s32.totalorder %s30, 1
      %p277 = scmp.ne.s32.totalorder %s272, %s274
      %p278 = scmp.eq.s32.totalorder %s30, 0
      %p279 = por %p277, %p278
      %p280 = scmp.ne.s32.totalorder %s272, %s274
      %p281 = scmp.eq.s32.totalorder %s35, 1
      %p282 = por %p280, %p281
      %p283 = scmp.ne.s32.totalorder %s274, %s275
      %p284 = scmp.eq.s32.totalorder %s35, 0
      %p285 = por %p283, %p284
      %p286 = scmp.ne.s32.totalorder %s274, %s275
      %p287 = scmp.eq.s32.totalorder %s36, 1
      %p288 = por %p286, %p287
      %p290 = scmp.ne.s32.totalorder %s275, %s289
      %p291 = scmp.eq.s32.totalorder %s36, 0
      %p292 = por %p290, %p291
      %s294 = sadd.s32 %s293, 1
      %p297 = scmp.eq.s32.totalorder %s30, 1
      %p298 = scmp.ne.s32.totalorder %s293, %s295
      %p299 = scmp.eq.s32.totalorder %s30, 0
      %p300 = por %p298, %p299
      %p301 = scmp.ne.s32.totalorder %s293, %s295
      %p302 = scmp.eq.s32.totalorder %s35, 1
      %p303 = por %p301, %p302
      %p304 = scmp.ne.s32.totalorder %s295, %s296
      %p305 = scmp.eq.s32.totalorder %s35, 0
      %p306 = por %p304, %p305
      %p307 = scmp.ne.s32.totalorder %s295, %s296
      %p308 = scmp.eq.s32.totalorder %s36, 1
      %p309 = por %p307, %p308
      %p311 = scmp.ne.s32.totalorder %s296, %s310
      %p312 = scmp.eq.s32.totalorder %s36, 0
      %p313 = por %p311, %p312
      %s314 = ssub.s32 %s38, %s45
      %p315 = scmp.eq.s32.totalorder %s314, 0
      %s317 = sadd.s32 %s316, 1
      %s318 = scalar_select %p315, %s316, %s317
      %p321 = pneg %p315
      %p322 = scmp.eq.s32.totalorder %s30, 1
      %p323 = por %p321, %p322
      %p324 = scmp.ne.s32.totalorder %s316, %s319
      %p325 = scmp.eq.s32.totalorder %s30, 0
      %p326 = por %p324, %p325
      %p327 = scmp.ne.s32.totalorder %s316, %s319
      %p328 = scmp.eq.s32.totalorder %s35, 1
      %p329 = por %p327, %p328
      %p330 = scmp.ne.s32.totalorder %s319, %s320
      %p331 = scmp.eq.s32.totalorder %s35, 0
      %p332 = por %p330, %p331
      %p333 = scmp.ne.s32.totalorder %s319, %s320
      %p334 = scmp.eq.s32.totalorder %s36, 1
      %p335 = por %p333, %p334
      %p337 = scmp.ne.s32.totalorder %s320, %s336
      %p338 = scmp.eq.s32.totalorder %s36, 0
      %p339 = por %p337, %p338
      %s340 = ssub.s32 %s37, %s49
      %s341 = ssub.s32 %s38, %s45
      %s342 = sor.u32 %s340, %s341
      %p343 = scmp.eq.s32.totalorder %s342, 0
      %s345 = sadd.s32 %s344, 1
      %s346 = scalar_select %p343, %s344, %s345
      %p349 = pneg %p343
      %p350 = scmp.eq.s32.totalorder %s30, 1
      %p351 = por %p349, %p350
      %p352 = scmp.ne.s32.totalorder %s344, %s347
      %p353 = scmp.eq.s32.totalorder %s30, 0
      %p354 = por %p352, %p353
      %p355 = scmp.ne.s32.totalorder %s344, %s347
      %p356 = scmp.eq.s32.totalorder %s35, 1
      %p357 = por %p355, %p356
      %p358 = scmp.ne.s32.totalorder %s347, %s348
      %p359 = scmp.eq.s32.totalorder %s35, 0
      %p360 = por %p358, %p359
      %p361 = scmp.ne.s32.totalorder %s347, %s348
      %p362 = scmp.eq.s32.totalorder %s36, 1
      %p363 = por %p361, %p362
      %p365 = scmp.ne.s32.totalorder %s348, %s364
      %p366 = scmp.eq.s32.totalorder %s36, 0
      %p367 = por %p365, %p366
      %p368 = scmp.le.s32.totalorder 1, %s30
      %p369 = scmp.lt.s32.totalorder %s30, 3
      %p370 = pnand %p368, %p369
      %p371 = pneg %p370
      // Predicated region
      $region9: #{tpu_custom_call.1} parent=5 // pred_check
        _
      $region10: #{tpu_custom_call.1} parent=5 // pred_check_branch
        %373 = sbr.rel (%p370) target = $region12
      $region11: #{tpu_custom_call.1} parent=5 // pred_region
        %s374 = ssub.s32 %s30, 1
        // Predicated region
        $region13: #{tpu_custom_call.1} parent=11 // pred_check
          %p375 = pneg %p117
        $region14: #{tpu_custom_call.1} parent=11 // pred_check_branch
          %377 = sbr.rel (%p375) target = $region16
        $region15: #{tpu_custom_call.1} parent=11 // pred_region
          _
        $region16: #{tpu_custom_call.1} parent=11 // pred_fallthru
          _
        // Predicated region
        $region17: #{tpu_custom_call.1} parent=11 // pred_check
          %p378 = pneg %p138
        $region18: #{tpu_custom_call.1} parent=11 // pred_check_branch
          %380 = sbr.rel (%p378) target = $region20
        $region19: #{tpu_custom_call.1} parent=11 // pred_region
          _
        $region20: #{tpu_custom_call.1} parent=11 // pred_fallthru
          _
        // Predicated region
        $region21: #{tpu_custom_call.1} parent=11 // pred_check
          %p381 = pneg %p159
        $region22: #{tpu_custom_call.1} parent=11 // pred_check_branch
          %383 = sbr.rel (%p381) target = $region24
        $region23: #{tpu_custom_call.1} parent=11 // pred_region
          %s385 = ssub.s32 1024, 1024
          %386 = vsyncadd [#allocation6], %s385
          %s387 = sshll.u32 [#allocation7], 4
          %s388 = int_to_ptr.vmem [resolvable:$true] %s387
          %393 = dma.hbm_to_vmem [thread:$0]  %s4, 1024, %s388, [#allocation6], 64, 64, 4
        $region24: #{tpu_custom_call.1} parent=11 // pred_fallthru
          _
        // Predicated region
        $region25: #{tpu_custom_call.1} parent=11 // pred_check
          %p394 = pneg %p180
        $region26: #{tpu_custom_call.1} parent=11 // pred_check_branch
          %396 = sbr.rel (%p394) target = $region28
        $region27: #{tpu_custom_call.1} parent=11 // pred_region
          _
        $region28: #{tpu_custom_call.1} parent=11 // pred_fallthru
          _
        // Predicated region
        $region29: #{tpu_custom_call.1} parent=11 // pred_check
          %p397 = pneg %p201
        $region30: #{tpu_custom_call.1} parent=11 // pred_check_branch
          %399 = sbr.rel (%p397) target = $region32
        $region31: #{tpu_custom_call.1} parent=11 // pred_region
          %s401 = ssub.s32 1024, 1024
          %402 = vsyncadd [#allocation9], %s401
          %s403 = sshll.u32 [#allocation8], 4
          %s404 = int_to_ptr.vmem [resolvable:$true] %s403
          %409 = dma.hbm_to_vmem [thread:$0]  %s6, 1024, %s404, [#allocation9], 64, 64, 4
        $region32: #{tpu_custom_call.1} parent=11 // pred_fallthru
          _
        // Predicated region
        $region33: #{tpu_custom_call.1} parent=11 // pred_check
          %p410 = pneg %p222
        $region34: #{tpu_custom_call.1} parent=11 // pred_check_branch
          %412 = sbr.rel (%p410) target = $region36
        $region35: #{tpu_custom_call.1} parent=11 // pred_region
          _
        $region36: #{tpu_custom_call.1} parent=11 // pred_fallthru
          _
        // Predicated region
        $region37: #{tpu_custom_call.1} parent=11 // pred_check
          %p413 = pneg %p243
        $region38: #{tpu_custom_call.1} parent=11 // pred_check_branch
          %415 = sbr.rel (%p413) target = $region40
        $region39: #{tpu_custom_call.1} parent=11 // pred_region
          %s417 = ssub.s32 1024, 1024
          %418 = vsyncadd [#allocation9], %s417
          %s419 = sshll.u32 [#allocation10], 4
          %s420 = int_to_ptr.vmem [resolvable:$true] %s419
          %425 = dma.hbm_to_vmem [thread:$0]  %s8, 1024, %s420, [#allocation9], 64, 64, 4
        $region40: #{tpu_custom_call.1} parent=11 // pred_fallthru
          _
        // Predicated region
        $region41: #{tpu_custom_call.1} parent=11 // pred_check
          %p426 = pneg %p264
        $region42: #{tpu_custom_call.1} parent=11 // pred_check_branch
          %428 = sbr.rel (%p426) target = $region44
        $region43: #{tpu_custom_call.1} parent=11 // pred_region
          _
        $region44: #{tpu_custom_call.1} parent=11 // pred_fallthru
          _
        // Predicated region
        $region45: #{tpu_custom_call.1} parent=11 // pred_check
          %p429 = pneg %p285
        $region46: #{tpu_custom_call.1} parent=11 // pred_check_branch
          %431 = sbr.rel (%p429) target = $region48
        $region47: #{tpu_custom_call.1} parent=11 // pred_region
          %s433 = ssub.s32 1024, 1024
          %434 = vsyncadd [#allocation12], %s433
          %s435 = sshll.u32 [#allocation11], 4
          %s436 = int_to_ptr.vmem [resolvable:$true] %s435
          %441 = dma.hbm_to_vmem [thread:$0]  %s10, 1024, %s436, [#allocation12], 64, 64, 4
        $region48: #{tpu_custom_call.1} parent=11 // pred_fallthru
          _
        // Predicated region
        $region49: #{tpu_custom_call.1} parent=11 // pred_check
          %p442 = pneg %p306
        $region50: #{tpu_custom_call.1} parent=11 // pred_check_branch
          %444 = sbr.rel (%p442) target = $region52
        $region51: #{tpu_custom_call.1} parent=11 // pred_region
          _
        $region52: #{tpu_custom_call.1} parent=11 // pred_fallthru
          _
        // Predicated region
        $region53: #{tpu_custom_call.1} parent=11 // pred_check
          %p445 = pneg %p332
        $region54: #{tpu_custom_call.1} parent=11 // pred_check_branch
          %447 = sbr.rel (%p445) target = $region56
        $region55: #{tpu_custom_call.1} parent=11 // pred_region
          %s448 = smul.u32 16, %s40
          %s450 = ssub.s32 2048, 2048
          %451 = vsyncadd [#allocation12], %s450
          %s452 = smul.addr %s448, 128
          %s453 = scalar_lea.hbm %s12, %s452
          %s454 = sshll.u32 [#allocation13], 4
          %s455 = int_to_ptr.vmem [resolvable:$true] %s454
          %460 = dma.hbm_to_vmem [thread:$0]  %s453, 2048, %s455, [#allocation12], 128, 128, 8
        $region56: #{tpu_custom_call.1} parent=11 // pred_fallthru
          _
      $region12: #{tpu_custom_call.1} parent=5 // pred_fallthru
        _
      %p461 = scmp.lt.s32.totalorder %s30, 2
      // Predicated region
      $region57: #{tpu_custom_call.1} parent=5 // pred_check
        %p462 = pneg %p461
      $region58: #{tpu_custom_call.1} parent=5 // pred_check_branch
        %464 = sbr.rel (%p462) target = $region60
      $region59: #{tpu_custom_call.1} parent=5 // pred_region
        // Predicated region
        $region61: #{tpu_custom_call.1} parent=59 // pred_check
          %p465 = pneg %p64
        $region62: #{tpu_custom_call.1} parent=59 // pred_check_branch
          %467 = sbr.rel (%p465) target = $region64
        $region63: #{tpu_custom_call.1} parent=59 // pred_region
          %s468 = sand.u32 %s54, 1
          %s469 = scalar_lea.sflag [#allocation3], %s468
          %s470 = sand.u32 %s54, 1
          %s471 = smul.addr %s470, 128
          %s472 = scalar_lea.vmem [#allocation2], %s471
          %s473 = smul.u32 16, %s38
          %s475 = ssub.s32 2048, 2048
          %476 = vsyncadd %s469, %s475
          %s477 = smul.addr %s37, 16
          %s478 = sadd.s32 %s473, %s477
          %s479 = smul.addr %s478, 128
          %s480 = scalar_lea.hbm %s0, %s479
          %s481 = sshll.u32 %s472, 4
          %s482 = int_to_ptr.vmem [resolvable:$true] %s481
          %487 = dma.hbm_to_vmem [thread:$0]  %s480, 2048, %s482, %s469, 128, 128, 8
        $region64: #{tpu_custom_call.1} parent=59 // pred_fallthru
          _
        // Predicated region
        $region65: #{tpu_custom_call.1} parent=59 // pred_check
          %p488 = pneg %p90
        $region66: #{tpu_custom_call.1} parent=59 // pred_check_branch
          %490 = sbr.rel (%p488) target = $region68
        $region67: #{tpu_custom_call.1} parent=59 // pred_region
          %s491 = sand.u32 %s30, 1
          %s492 = scalar_lea.sflag [#allocation6], %s491
          %s493 = sand.u32 %s80, 1
          %s494 = smul.addr %s493, 128
          %s495 = scalar_lea.vmem [#allocation5], %s494
          %s497 = ssub.s32 2048, 2048
          %498 = vsyncadd %s492, %s497
          %s499 = smul.addr %s37, 16
          %s500 = smul.addr %s499, 128
          %s501 = scalar_lea.hbm %s1, %s500
          %s502 = sshll.u32 %s495, 4
          %s503 = int_to_ptr.vmem [resolvable:$true] %s502
          %508 = dma.hbm_to_vmem [thread:$0]  %s501, 2048, %s503, %s492, 128, 128, 8
        $region68: #{tpu_custom_call.1} parent=59 // pred_fallthru
          _
      $region60: #{tpu_custom_call.1} parent=5 // pred_fallthru
        _
      %p509 = scmp.le.s32.totalorder 1, %s30
      %p510 = scmp.lt.s32.totalorder %s30, 3
      %p511 = pnand %p509, %p510
      %p512 = pneg %p511
      // Predicated region
      $region69: #{tpu_custom_call.1} parent=5 // pred_check
        _
      $region70: #{tpu_custom_call.1} parent=5 // pred_check_branch
        %514 = sbr.rel (%p511) target = $region72
      $region71: #{tpu_custom_call.1} parent=5 // pred_region
        %s515 = ssub.s32 %s30, 1
        %s516 = sand.u32 %s57, 1
        %s517 = scalar_lea.sflag [#allocation3], %s516
        %s518 = sand.u32 %s57, 1
        %s519 = smul.addr %s518, 128
        %s520 = scalar_lea.vmem [#allocation2], %s519
        // Predicated region
        $region73: #{tpu_custom_call.1} parent=71 // pred_check
          %p521 = pneg %p70
        $region74: #{tpu_custom_call.1} parent=71 // pred_check_branch
          %523 = sbr.rel (%p521) target = $region76
        $region75: #{tpu_custom_call.1} parent=71 // pred_region
          %524 = dma.done %s517, 2048
        $region76: #{tpu_custom_call.1} parent=71 // pred_fallthru
          _
        %s525 = sand.u32 %s35, 1
        %s526 = scalar_lea.sflag [#allocation6], %s525
        %s527 = sand.u32 %s83, 1
        %s528 = smul.addr %s527, 128
        %s529 = scalar_lea.vmem [#allocation5], %s528
        // Predicated region
        $region77: #{tpu_custom_call.1} parent=71 // pred_check
          %p530 = pneg %p96
        $region78: #{tpu_custom_call.1} parent=71 // pred_check_branch
          %532 = sbr.rel (%p530) target = $region80
        $region79: #{tpu_custom_call.1} parent=71 // pred_region
          %533 = dma.done %s526, 2048
        $region80: #{tpu_custom_call.1} parent=71 // pred_fallthru
          _
        // Predicated region
        $region81: #{tpu_custom_call.1} parent=71 // pred_check
          %p534 = pneg %p159
        $region82: #{tpu_custom_call.1} parent=71 // pred_check_branch
          %536 = sbr.rel (%p534) target = $region84
        $region83: #{tpu_custom_call.1} parent=71 // pred_region
          %537 = dma.done [#allocation6], 1024
        $region84: #{tpu_custom_call.1} parent=71 // pred_fallthru
          _
        // Predicated region
        $region85: #{tpu_custom_call.1} parent=71 // pred_check
          %p538 = pneg %p201
        $region86: #{tpu_custom_call.1} parent=71 // pred_check_branch
          %540 = sbr.rel (%p538) target = $region88
        $region87: #{tpu_custom_call.1} parent=71 // pred_region
          %541 = dma.done [#allocation9], 1024
        $region88: #{tpu_custom_call.1} parent=71 // pred_fallthru
          _
        // Predicated region
        $region89: #{tpu_custom_call.1} parent=71 // pred_check
          %p542 = pneg %p243
        $region90: #{tpu_custom_call.1} parent=71 // pred_check_branch
          %544 = sbr.rel (%p542) target = $region92
        $region91: #{tpu_custom_call.1} parent=71 // pred_region
          %545 = dma.done [#allocation9], 1024
        $region92: #{tpu_custom_call.1} parent=71 // pred_fallthru
          _
        // Predicated region
        $region93: #{tpu_custom_call.1} parent=71 // pred_check
          %p546 = pneg %p285
        $region94: #{tpu_custom_call.1} parent=71 // pred_check_branch
          %548 = sbr.rel (%p546) target = $region96
        $region95: #{tpu_custom_call.1} parent=71 // pred_region
          %549 = dma.done [#allocation12], 1024
        $region96: #{tpu_custom_call.1} parent=71 // pred_fallthru
          _
        // Predicated region
        $region97: #{tpu_custom_call.1} parent=71 // pred_check
          %p550 = pneg %p332
        $region98: #{tpu_custom_call.1} parent=71 // pred_check_branch
          %552 = sbr.rel (%p550) target = $region100
        $region99: #{tpu_custom_call.1} parent=71 // pred_region
          %553 = dma.done [#allocation12], 2048
        $region100: #{tpu_custom_call.1} parent=71 // pred_fallthru
          _
        %s554 = sand.u32 %s57, 1
        %s555 = scalar_lea.sflag [#allocation3], %s554
        %s556 = sand.u32 %s57, 1
        %s557 = smul.addr %s556, 128
        %s558 = scalar_lea.vmem [#allocation2], %s557
        %p559 = pneg %p70
        %p560 = pneg %p67
        %s561 = sand.u32 %s35, 1
        %s562 = scalar_lea.sflag [#allocation6], %s561
        %s563 = sand.u32 %s83, 1
        %s564 = smul.addr %s563, 128
        %s565 = scalar_lea.vmem [#allocation5], %s564
        %p566 = pneg %p96
        %p567 = pneg %p93
        %p568 = pneg %p117
        %p569 = pneg %p114
        %p570 = pneg %p138
        %p571 = pneg %p135
        %p572 = pneg %p159
        %p573 = pneg %p156
        %p574 = pneg %p180
        %p575 = pneg %p177
        %p576 = pneg %p201
        %p577 = pneg %p198
        %p578 = pneg %p222
        %p579 = pneg %p219
        %p580 = pneg %p243
        %p581 = pneg %p240
        %p582 = pneg %p264
        %p583 = pneg %p261
        %p584 = pneg %p285
        %p585 = pneg %p282
        %p586 = pneg %p306
        %p587 = pneg %p303
        %p588 = pneg %p332
        %p589 = pneg %p329
        %p590 = pneg %p360
        %p591 = pneg %p357
        %s592 = sand.u32 %s347, 1
        %s593 = scalar_lea.sflag [#allocation4], %s592
        %s594 = sand.u32 %s347, 1
        %s595 = smul.addr %s594, 128
        %s596 = scalar_lea.vmem [#allocation14], %s595
        %s597 = smul.u32 16, %s40
        %s598 = smul.u32 16, %s40
        %s599 = smul.u32 16, %s40
        %v601 = vld [vmem:[%s520] sm:$0xff]
        %v602 = vld [vmem:[%s520 + $0x8] sm:$0xff]
        %v603 = vld [vmem:[%s520 + $0x10] sm:$0xff]
        %v604 = vld [vmem:[%s520 + $0x18] sm:$0xff]
        %v605 = vld [vmem:[%s520 + $0x20] sm:$0xff]
        %v606 = vld [vmem:[%s520 + $0x28] sm:$0xff]
        %v607 = vld [vmem:[%s520 + $0x30] sm:$0xff]
        %v608 = vld [vmem:[%s520 + $0x38] sm:$0xff]
        %v609 = vld [vmem:[%s520 + $0x40] sm:$0xff]
        %v610 = vld [vmem:[%s520 + $0x48] sm:$0xff]
        %v611 = vld [vmem:[%s520 + $0x50] sm:$0xff]
        %v612 = vld [vmem:[%s520 + $0x58] sm:$0xff]
        %v613 = vld [vmem:[%s520 + $0x60] sm:$0xff]
        %v614 = vld [vmem:[%s520 + $0x68] sm:$0xff]
        %v615 = vld [vmem:[%s520 + $0x70] sm:$0xff]
        %v616 = vld [vmem:[%s520 + $0x78] sm:$0xff]
        %617 = vadd.xlane.f32.xlu0 %v601
        %v618 = vpop.xlane.xlu0 %617
        %619 = vadd.xlane.f32.xlu0 %v602
        %v620 = vpop.xlane.xlu0 %619
        %621 = vadd.xlane.f32.xlu0 %v603
        %v622 = vpop.xlane.xlu0 %621
        %623 = vadd.xlane.f32.xlu0 %v604
        %v624 = vpop.xlane.xlu0 %623
        %625 = vadd.xlane.f32.xlu0 %v605
        %v626 = vpop.xlane.xlu0 %625
        %627 = vadd.xlane.f32.xlu0 %v606
        %v628 = vpop.xlane.xlu0 %627
        %629 = vadd.xlane.f32.xlu0 %v607
        %v630 = vpop.xlane.xlu0 %629
        %631 = vadd.xlane.f32.xlu0 %v608
        %v632 = vpop.xlane.xlu0 %631
        %633 = vadd.xlane.f32.xlu0 %v609
        %v634 = vpop.xlane.xlu0 %633
        %635 = vadd.xlane.f32.xlu0 %v610
        %v636 = vpop.xlane.xlu0 %635
        %637 = vadd.xlane.f32.xlu0 %v611
        %v638 = vpop.xlane.xlu0 %637
        %639 = vadd.xlane.f32.xlu0 %v612
        %v640 = vpop.xlane.xlu0 %639
        %641 = vadd.xlane.f32.xlu0 %v613
        %v642 = vpop.xlane.xlu0 %641
        %643 = vadd.xlane.f32.xlu0 %v614
        %v644 = vpop.xlane.xlu0 %643
        %645 = vadd.xlane.f32.xlu0 %v615
        %v646 = vpop.xlane.xlu0 %645
        %647 = vadd.xlane.f32.xlu0 %v616
        %v648 = vpop.xlane.xlu0 %647
        %v649 = vrcp.pop 128.0
        %v650 = vmul.f32 %v618, %v649
        %v651 = vmul.f32 %v620, %v649
        %v652 = vmul.f32 %v622, %v649
        %v653 = vmul.f32 %v624, %v649
        %v654 = vmul.f32 %v626, %v649
        %v655 = vmul.f32 %v628, %v649
        %v656 = vmul.f32 %v630, %v649
        %v657 = vmul.f32 %v632, %v649
        %v658 = vmul.f32 %v634, %v649
        %v659 = vmul.f32 %v636, %v649
        %v660 = vmul.f32 %v638, %v649
        %v661 = vmul.f32 %v640, %v649
        %v662 = vmul.f32 %v642, %v649
        %v663 = vmul.f32 %v644, %v649
        %v664 = vmul.f32 %v646, %v649
        %v665 = vmul.f32 %v648, %v649
        %v666 = vsub.f32 %v601, %v650
        %v667 = vsub.f32 %v602, %v651
        %v668 = vsub.f32 %v603, %v652
        %v669 = vsub.f32 %v604, %v653
        %v670 = vsub.f32 %v605, %v654
        %v671 = vsub.f32 %v606, %v655
        %v672 = vsub.f32 %v607, %v656
        %v673 = vsub.f32 %v608, %v657
        %v674 = vsub.f32 %v609, %v658
        %v675 = vsub.f32 %v610, %v659
        %v676 = vsub.f32 %v611, %v660
        %v677 = vsub.f32 %v612, %v661
        %v678 = vsub.f32 %v613, %v662
        %v679 = vsub.f32 %v614, %v663
        %v680 = vsub.f32 %v615, %v664
        %v681 = vsub.f32 %v616, %v665
        %v682 = vmul.f32 %v666, %v666
        %v683 = vmul.f32 %v667, %v667
        %v684 = vmul.f32 %v668, %v668
        %v685 = vmul.f32 %v669, %v669
        %v686 = vmul.f32 %v670, %v670
        %v687 = vmul.f32 %v671, %v671
        %v688 = vmul.f32 %v672, %v672
        %v689 = vmul.f32 %v673, %v673
        %v690 = vmul.f32 %v674, %v674
        %v691 = vmul.f32 %v675, %v675
        %v692 = vmul.f32 %v676, %v676
        %v693 = vmul.f32 %v677, %v677
        %v694 = vmul.f32 %v678, %v678
        %v695 = vmul.f32 %v679, %v679
        %v696 = vmul.f32 %v680, %v680
        %v697 = vmul.f32 %v681, %v681
        %698 = vadd.xlane.f32.xlu0 %v682
        %v699 = vpop.xlane.xlu0 %698
        %700 = vadd.xlane.f32.xlu0 %v683
        %v701 = vpop.xlane.xlu0 %700
        %702 = vadd.xlane.f32.xlu0 %v684
        %v703 = vpop.xlane.xlu0 %702
        %704 = vadd.xlane.f32.xlu0 %v685
        %v705 = vpop.xlane.xlu0 %704
        %706 = vadd.xlane.f32.xlu0 %v686
        %v707 = vpop.xlane.xlu0 %706
        %708 = vadd.xlane.f32.xlu0 %v687
        %v709 = vpop.xlane.xlu0 %708
        %710 = vadd.xlane.f32.xlu0 %v688
        %v711 = vpop.xlane.xlu0 %710
        %712 = vadd.xlane.f32.xlu0 %v689
        %v713 = vpop.xlane.xlu0 %712
        %714 = vadd.xlane.f32.xlu0 %v690
        %v715 = vpop.xlane.xlu0 %714
        %716 = vadd.xlane.f32.xlu0 %v691
        %v717 = vpop.xlane.xlu0 %716
        %718 = vadd.xlane.f32.xlu0 %v692
        %v719 = vpop.xlane.xlu0 %718
        %720 = vadd.xlane.f32.xlu0 %v693
        %v721 = vpop.xlane.xlu0 %720
        %722 = vadd.xlane.f32.xlu0 %v694
        %v723 = vpop.xlane.xlu0 %722
        %724 = vadd.xlane.f32.xlu0 %v695
        %v725 = vpop.xlane.xlu0 %724
        %726 = vadd.xlane.f32.xlu0 %v696
        %v727 = vpop.xlane.xlu0 %726
        %728 = vadd.xlane.f32.xlu0 %v697
        %v729 = vpop.xlane.xlu0 %728
        %v730 = vmul.f32 %v699, %v649
        %v731 = vmul.f32 %v701, %v649
        %v732 = vmul.f32 %v703, %v649
        %v733 = vmul.f32 %v705, %v649
        %v734 = vmul.f32 %v707, %v649
        %v735 = vmul.f32 %v709, %v649
        %v736 = vmul.f32 %v711, %v649
        %v737 = vmul.f32 %v713, %v649
        %v738 = vmul.f32 %v715, %v649
        %v739 = vmul.f32 %v717, %v649
        %v740 = vmul.f32 %v719, %v649
        %v741 = vmul.f32 %v721, %v649
        %v742 = vmul.f32 %v723, %v649
        %v743 = vmul.f32 %v725, %v649
        %v744 = vmul.f32 %v727, %v649
        %v745 = vmul.f32 %v729, %v649
        %v746 = vadd.f32 %v730, 1e-05
        %v747 = vadd.f32 %v731, 1e-05
        %v748 = vadd.f32 %v732, 1e-05
        %v749 = vadd.f32 %v733, 1e-05
        %v750 = vadd.f32 %v734, 1e-05
        %v751 = vadd.f32 %v735, 1e-05
        %v752 = vadd.f32 %v736, 1e-05
        %v753 = vadd.f32 %v737, 1e-05
        %v754 = vadd.f32 %v738, 1e-05
        %v755 = vadd.f32 %v739, 1e-05
        %v756 = vadd.f32 %v740, 1e-05
        %v757 = vadd.f32 %v741, 1e-05
        %v758 = vadd.f32 %v742, 1e-05
        %v759 = vadd.f32 %v743, 1e-05
        %v760 = vadd.f32 %v744, 1e-05
        %v761 = vadd.f32 %v745, 1e-05
        %v762 = vrsqrt.pop %v746
        %v763 = vrsqrt.pop %v747
        %v764 = vrsqrt.pop %v748
        %v765 = vrsqrt.pop %v749
        %v766 = vrsqrt.pop %v750
        %v767 = vrsqrt.pop %v751
        %v768 = vrsqrt.pop %v752
        %v769 = vrsqrt.pop %v753
        %v770 = vrsqrt.pop %v754
        %v771 = vrsqrt.pop %v755
        %v772 = vrsqrt.pop %v756
        %v773 = vrsqrt.pop %v757
        %v774 = vrsqrt.pop %v758
        %v775 = vrsqrt.pop %v759
        %v776 = vrsqrt.pop %v760
        %v777 = vrsqrt.pop %v761
        %v778 = vmul.f32 %v666, %v762
        %v779 = vmul.f32 %v667, %v763
        %v780 = vmul.f32 %v668, %v764
        %v781 = vmul.f32 %v669, %v765
        %v782 = vmul.f32 %v670, %v766
        %v783 = vmul.f32 %v671, %v767
        %v784 = vmul.f32 %v672, %v768
        %v785 = vmul.f32 %v673, %v769
        %v786 = vmul.f32 %v674, %v770
        %v787 = vmul.f32 %v675, %v771
        %v788 = vmul.f32 %v676, %v772
        %v789 = vmul.f32 %v677, %v773
        %v790 = vmul.f32 %v678, %v774
        %v791 = vmul.f32 %v679, %v775
        %v792 = vmul.f32 %v680, %v776
        %v793 = vmul.f32 %v681, %v777
        %v794 = vld [vmem:[%s2] sm:$0x1]
        %v796 = vlaneseq
        %v797 = vshrl.u32 %v796, 7
        %v798 = vsub.s32 0, %v797
        %v799 = vrot.slane %v794, %v798
        %v801 = vmul.f32 %v778, %v799
        %v802 = vmul.f32 %v779, %v799
        %v803 = vmul.f32 %v780, %v799
        %v804 = vmul.f32 %v781, %v799
        %v805 = vmul.f32 %v782, %v799
        %v806 = vmul.f32 %v783, %v799
        %v807 = vmul.f32 %v784, %v799
        %v808 = vmul.f32 %v785, %v799
        %v809 = vmul.f32 %v786, %v799
        %v810 = vmul.f32 %v787, %v799
        %v811 = vmul.f32 %v788, %v799
        %v812 = vmul.f32 %v789, %v799
        %v813 = vmul.f32 %v790, %v799
        %v814 = vmul.f32 %v791, %v799
        %v815 = vmul.f32 %v792, %v799
        %v816 = vmul.f32 %v793, %v799
        %v817 = vld [vmem:[%s3] sm:$0x1]
        %v819 = vlaneseq
        %v820 = vshrl.u32 %v819, 7
        %v821 = vsub.s32 0, %v820
        %v822 = vrot.slane %v817, %v821
        %v824 = vadd.f32 %v801, %v822
        %v825 = vadd.f32 %v802, %v822
        %v826 = vadd.f32 %v803, %v822
        %v827 = vadd.f32 %v804, %v822
        %v828 = vadd.f32 %v805, %v822
        %v829 = vadd.f32 %v806, %v822
        %v830 = vadd.f32 %v807, %v822
        %v831 = vadd.f32 %v808, %v822
        %v832 = vadd.f32 %v809, %v822
        %v833 = vadd.f32 %v810, %v822
        %v834 = vadd.f32 %v811, %v822
        %v835 = vadd.f32 %v812, %v822
        %v836 = vadd.f32 %v813, %v822
        %v837 = vadd.f32 %v814, %v822
        %v838 = vadd.f32 %v815, %v822
        %v839 = vadd.f32 %v816, %v822
        %v840 = vld [vmem:[%s529] sm:$0xff]
        %v841 = vld [vmem:[%s529 + $0x8] sm:$0xff]
        %v842 = vld [vmem:[%s529 + $0x10] sm:$0xff]
        %v843 = vld [vmem:[%s529 + $0x18] sm:$0xff]
        %v844 = vld [vmem:[%s529 + $0x20] sm:$0xff]
        %v845 = vld [vmem:[%s529 + $0x28] sm:$0xff]
        %v846 = vld [vmem:[%s529 + $0x30] sm:$0xff]
        %v847 = vld [vmem:[%s529 + $0x38] sm:$0xff]
        %v848 = vld [vmem:[%s529 + $0x40] sm:$0xff]
        %v849 = vld [vmem:[%s529 + $0x48] sm:$0xff]
        %v850 = vld [vmem:[%s529 + $0x50] sm:$0xff]
        %v851 = vld [vmem:[%s529 + $0x58] sm:$0xff]
        %v852 = vld [vmem:[%s529 + $0x60] sm:$0xff]
        %v853 = vld [vmem:[%s529 + $0x68] sm:$0xff]
        %v854 = vld [vmem:[%s529 + $0x70] sm:$0xff]
        %v855 = vld [vmem:[%s529 + $0x78] sm:$0xff]
        %856 = vadd.xlane.f32.xlu0 %v840
        %v857 = vpop.xlane.xlu0 %856
        %858 = vadd.xlane.f32.xlu0 %v841
        %v859 = vpop.xlane.xlu0 %858
        %860 = vadd.xlane.f32.xlu0 %v842
        %v861 = vpop.xlane.xlu0 %860
        %862 = vadd.xlane.f32.xlu0 %v843
        %v863 = vpop.xlane.xlu0 %862
        %864 = vadd.xlane.f32.xlu0 %v844
        %v865 = vpop.xlane.xlu0 %864
        %866 = vadd.xlane.f32.xlu0 %v845
        %v867 = vpop.xlane.xlu0 %866
        %868 = vadd.xlane.f32.xlu0 %v846
        %v869 = vpop.xlane.xlu0 %868
        %870 = vadd.xlane.f32.xlu0 %v847
        %v871 = vpop.xlane.xlu0 %870
        %872 = vadd.xlane.f32.xlu0 %v848
        %v873 = vpop.xlane.xlu0 %872
        %874 = vadd.xlane.f32.xlu0 %v849
        %v875 = vpop.xlane.xlu0 %874
        %876 = vadd.xlane.f32.xlu0 %v850
        %v877 = vpop.xlane.xlu0 %876
        %878 = vadd.xlane.f32.xlu0 %v851
        %v879 = vpop.xlane.xlu0 %878
        %880 = vadd.xlane.f32.xlu0 %v852
        %v881 = vpop.xlane.xlu0 %880
        %882 = vadd.xlane.f32.xlu0 %v853
        %v883 = vpop.xlane.xlu0 %882
        %884 = vadd.xlane.f32.xlu0 %v854
        %v885 = vpop.xlane.xlu0 %884
        %886 = vadd.xlane.f32.xlu0 %v855
        %v887 = vpop.xlane.xlu0 %886
        %v888 = vmul.f32 %v857, %v649
        %v889 = vmul.f32 %v859, %v649
        %v890 = vmul.f32 %v861, %v649
        %v891 = vmul.f32 %v863, %v649
        %v892 = vmul.f32 %v865, %v649
        %v893 = vmul.f32 %v867, %v649
        %v894 = vmul.f32 %v869, %v649
        %v895 = vmul.f32 %v871, %v649
        %v896 = vmul.f32 %v873, %v649
        %v897 = vmul.f32 %v875, %v649
        %v898 = vmul.f32 %v877, %v649
        %v899 = vmul.f32 %v879, %v649
        %v900 = vmul.f32 %v881, %v649
        %v901 = vmul.f32 %v883, %v649
        %v902 = vmul.f32 %v885, %v649
        %v903 = vmul.f32 %v887, %v649
        %v904 = vsub.f32 %v840, %v888
        %v905 = vsub.f32 %v841, %v889
        %v906 = vsub.f32 %v842, %v890
        %v907 = vsub.f32 %v843, %v891
        %v908 = vsub.f32 %v844, %v892
        %v909 = vsub.f32 %v845, %v893
        %v910 = vsub.f32 %v846, %v894
        %v911 = vsub.f32 %v847, %v895
        %v912 = vsub.f32 %v848, %v896
        %v913 = vsub.f32 %v849, %v897
        %v914 = vsub.f32 %v850, %v898
        %v915 = vsub.f32 %v851, %v899
        %v916 = vsub.f32 %v852, %v900
        %v917 = vsub.f32 %v853, %v901
        %v918 = vsub.f32 %v854, %v902
        %v919 = vsub.f32 %v855, %v903
        %v920 = vmul.f32 %v904, %v904
        %v921 = vmul.f32 %v905, %v905
        %v922 = vmul.f32 %v906, %v906
        %v923 = vmul.f32 %v907, %v907
        %v924 = vmul.f32 %v908, %v908
        %v925 = vmul.f32 %v909, %v909
        %v926 = vmul.f32 %v910, %v910
        %v927 = vmul.f32 %v911, %v911
        %v928 = vmul.f32 %v912, %v912
        %v929 = vmul.f32 %v913, %v913
        %v930 = vmul.f32 %v914, %v914
        %v931 = vmul.f32 %v915, %v915
        %v932 = vmul.f32 %v916, %v916
        %v933 = vmul.f32 %v917, %v917
        %v934 = vmul.f32 %v918, %v918
        %v935 = vmul.f32 %v919, %v919
        %936 = vadd.xlane.f32.xlu0 %v920
        %v937 = vpop.xlane.xlu0 %936
        %938 = vadd.xlane.f32.xlu0 %v921
        %v939 = vpop.xlane.xlu0 %938
        %940 = vadd.xlane.f32.xlu0 %v922
        %v941 = vpop.xlane.xlu0 %940
        %942 = vadd.xlane.f32.xlu0 %v923
        %v943 = vpop.xlane.xlu0 %942
        %944 = vadd.xlane.f32.xlu0 %v924
        %v945 = vpop.xlane.xlu0 %944
        %946 = vadd.xlane.f32.xlu0 %v925
        %v947 = vpop.xlane.xlu0 %946
        %948 = vadd.xlane.f32.xlu0 %v926
        %v949 = vpop.xlane.xlu0 %948
        %950 = vadd.xlane.f32.xlu0 %v927
        %v951 = vpop.xlane.xlu0 %950
        %952 = vadd.xlane.f32.xlu0 %v928
        %v953 = vpop.xlane.xlu0 %952
        %954 = vadd.xlane.f32.xlu0 %v929
        %v955 = vpop.xlane.xlu0 %954
        %956 = vadd.xlane.f32.xlu0 %v930
        %v957 = vpop.xlane.xlu0 %956
        %958 = vadd.xlane.f32.xlu0 %v931
        %v959 = vpop.xlane.xlu0 %958
        %960 = vadd.xlane.f32.xlu0 %v932
        %v961 = vpop.xlane.xlu0 %960
        %962 = vadd.xlane.f32.xlu0 %v933
        %v963 = vpop.xlane.xlu0 %962
        %964 = vadd.xlane.f32.xlu0 %v934
        %v965 = vpop.xlane.xlu0 %964
        %966 = vadd.xlane.f32.xlu0 %v935
        %v967 = vpop.xlane.xlu0 %966
        %v968 = vmul.f32 %v937, %v649
        %v969 = vmul.f32 %v939, %v649
        %v970 = vmul.f32 %v941, %v649
        %v971 = vmul.f32 %v943, %v649
        %v972 = vmul.f32 %v945, %v649
        %v973 = vmul.f32 %v947, %v649
        %v974 = vmul.f32 %v949, %v649
        %v975 = vmul.f32 %v951, %v649
        %v976 = vmul.f32 %v953, %v649
        %v977 = vmul.f32 %v955, %v649
        %v978 = vmul.f32 %v957, %v649
        %v979 = vmul.f32 %v959, %v649
        %v980 = vmul.f32 %v961, %v649
        %v981 = vmul.f32 %v963, %v649
        %v982 = vmul.f32 %v965, %v649
        %v983 = vmul.f32 %v967, %v649
        %v984 = vadd.f32 %v968, 1e-05
        %v985 = vadd.f32 %v969, 1e-05
        %v986 = vadd.f32 %v970, 1e-05
        %v987 = vadd.f32 %v971, 1e-05
        %v988 = vadd.f32 %v972, 1e-05
        %v989 = vadd.f32 %v973, 1e-05
        %v990 = vadd.f32 %v974, 1e-05
        %v991 = vadd.f32 %v975, 1e-05
        %v992 = vadd.f32 %v976, 1e-05
        %v993 = vadd.f32 %v977, 1e-05
        %v994 = vadd.f32 %v978, 1e-05
        %v995 = vadd.f32 %v979, 1e-05
        %v996 = vadd.f32 %v980, 1e-05
        %v997 = vadd.f32 %v981, 1e-05
        %v998 = vadd.f32 %v982, 1e-05
        %v999 = vadd.f32 %v983, 1e-05
        %v1000 = vrsqrt.pop %v984
        %v1001 = vrsqrt.pop %v985
        %v1002 = vrsqrt.pop %v986
        %v1003 = vrsqrt.pop %v987
        %v1004 = vrsqrt.pop %v988
        %v1005 = vrsqrt.pop %v989
        %v1006 = vrsqrt.pop %v990
        %v1007 = vrsqrt.pop %v991
        %v1008 = vrsqrt.pop %v992
        %v1009 = vrsqrt.pop %v993
        %v1010 = vrsqrt.pop %v994
        %v1011 = vrsqrt.pop %v995
        %v1012 = vrsqrt.pop %v996
        %v1013 = vrsqrt.pop %v997
        %v1014 = vrsqrt.pop %v998
        %v1015 = vrsqrt.pop %v999
        %v1016 = vmul.f32 %v904, %v1000
        %v1017 = vmul.f32 %v905, %v1001
        %v1018 = vmul.f32 %v906, %v1002
        %v1019 = vmul.f32 %v907, %v1003
        %v1020 = vmul.f32 %v908, %v1004
        %v1021 = vmul.f32 %v909, %v1005
        %v1022 = vmul.f32 %v910, %v1006
        %v1023 = vmul.f32 %v911, %v1007
        %v1024 = vmul.f32 %v912, %v1008
        %v1025 = vmul.f32 %v913, %v1009
        %v1026 = vmul.f32 %v914, %v1010
        %v1027 = vmul.f32 %v915, %v1011
        %v1028 = vmul.f32 %v916, %v1012
        %v1029 = vmul.f32 %v917, %v1013
        %v1030 = vmul.f32 %v918, %v1014
        %v1031 = vmul.f32 %v919, %v1015
        %v1032 = vmul.f32 %v1016, %v799
        %v1033 = vmul.f32 %v1017, %v799
        %v1034 = vmul.f32 %v1018, %v799
        %v1035 = vmul.f32 %v1019, %v799
        %v1036 = vmul.f32 %v1020, %v799
        %v1037 = vmul.f32 %v1021, %v799
        %v1038 = vmul.f32 %v1022, %v799
        %v1039 = vmul.f32 %v1023, %v799
        %v1040 = vmul.f32 %v1024, %v799
        %v1041 = vmul.f32 %v1025, %v799
        %v1042 = vmul.f32 %v1026, %v799
        %v1043 = vmul.f32 %v1027, %v799
        %v1044 = vmul.f32 %v1028, %v799
        %v1045 = vmul.f32 %v1029, %v799
        %v1046 = vmul.f32 %v1030, %v799
        %v1047 = vmul.f32 %v1031, %v799
        %v1048 = vadd.f32 %v1032, %v822
        %v1049 = vadd.f32 %v1033, %v822
        %v1050 = vadd.f32 %v1034, %v822
        %v1051 = vadd.f32 %v1035, %v822
        %v1052 = vadd.f32 %v1036, %v822
        %v1053 = vadd.f32 %v1037, %v822
        %v1054 = vadd.f32 %v1038, %v822
        %v1055 = vadd.f32 %v1039, %v822
        %v1056 = vadd.f32 %v1040, %v822
        %v1057 = vadd.f32 %v1041, %v822
        %v1058 = vadd.f32 %v1042, %v822
        %v1059 = vadd.f32 %v1043, %v822
        %v1060 = vadd.f32 %v1044, %v822
        %v1061 = vadd.f32 %v1045, %v822
        %v1062 = vadd.f32 %v1046, %v822
        %v1063 = vadd.f32 %v1047, %v822
        %v1064 = vpack.c.bf16 %v825, %v824
        %v1065 = vpack.c.bf16 %v827, %v826
        %v1066 = vpack.c.bf16 %v829, %v828
        %v1067 = vpack.c.bf16 %v831, %v830
        %v1068 = vpack.c.bf16 %v833, %v832
        %v1069 = vpack.c.bf16 %v835, %v834
        %v1070 = vpack.c.bf16 %v837, %v836
        %v1071 = vpack.c.bf16 %v839, %v838
        %v1072 = vpack.c.bf16 %v1049, %v1048
        %v1073 = vpack.c.bf16 %v1051, %v1050
        %v1074 = vpack.c.bf16 %v1053, %v1052
        %v1075 = vpack.c.bf16 %v1055, %v1054
        %v1076 = vpack.c.bf16 %v1057, %v1056
        %v1077 = vpack.c.bf16 %v1059, %v1058
        %v1078 = vpack.c.bf16 %v1061, %v1060
        %v1079 = vpack.c.bf16 %v1063, %v1062
        %v1080 = vld [vmem:[#allocation7] sm:$0xf]
        %v1081 = vld [vmem:[#allocation7 + $0x4] sm:$0xf]
        %v1082 = vld [vmem:[#allocation7 + $0x8] sm:$0xf]
        %v1083 = vld [vmem:[#allocation7 + $0xc] sm:$0xf]
        %v1084 = vld [vmem:[#allocation7 + $0x10] sm:$0xf]
        %v1085 = vld [vmem:[#allocation7 + $0x14] sm:$0xf]
        %v1086 = vld [vmem:[#allocation7 + $0x18] sm:$0xf]
        %v1087 = vld [vmem:[#allocation7 + $0x1c] sm:$0xf]
        %v1088 = vld [vmem:[#allocation7 + $0x20] sm:$0xf]
        %v1089 = vld [vmem:[#allocation7 + $0x24] sm:$0xf]
        %v1090 = vld [vmem:[#allocation7 + $0x28] sm:$0xf]
        %v1091 = vld [vmem:[#allocation7 + $0x2c] sm:$0xf]
        %v1092 = vld [vmem:[#allocation7 + $0x30] sm:$0xf]
        %v1093 = vld [vmem:[#allocation7 + $0x34] sm:$0xf]
        %v1094 = vld [vmem:[#allocation7 + $0x38] sm:$0xf]
        %v1095 = vld [vmem:[#allocation7 + $0x3c] sm:$0xf]
        %v1096 = vld [vmem:[%s5] sm:$0x1]
        %v1098 = vlaneseq
        %v1099 = vshrl.u32 %v1098, 7
        %v1100 = vsub.s32 0, %v1099
        %v1101 = vrot.slane %v1096, %v1100
        %v1119 = vunpack.c.l.b16 %v1080
        %v1120 = vunpack.c.l.b16 %v1081
        %v1121 = vunpack.c.l.b16 %v1082
        %v1122 = vunpack.c.l.b16 %v1083
        %v1123 = vunpack.c.l.b16 %v1084
        %v1124 = vunpack.c.l.b16 %v1085
        %v1125 = vunpack.c.l.b16 %v1086
        %v1126 = vunpack.c.l.b16 %v1087
        %v1127 = vunpack.c.l.b16 %v1088
        %v1128 = vunpack.c.l.b16 %v1089
        %v1129 = vunpack.c.l.b16 %v1090
        %v1130 = vunpack.c.l.b16 %v1091
        %v1131 = vunpack.c.l.b16 %v1092
        %v1132 = vunpack.c.l.b16 %v1093
        %v1133 = vunpack.c.l.b16 %v1094
        %v1134 = vunpack.c.l.b16 %v1095
        %v1135 = vpack.c.b16 %v1120, %v1119
        %v1136 = vpack.c.b16 %v1122, %v1121
        %v1137 = vpack.c.b16 %v1124, %v1123
        %v1138 = vpack.c.b16 %v1126, %v1125
        %v1139 = vpack.c.b16 %v1128, %v1127
        %v1140 = vpack.c.b16 %v1130, %v1129
        %v1141 = vpack.c.b16 %v1132, %v1131
        %v1142 = vpack.c.b16 %v1134, %v1133
        %1151 = vmatprep.subr.bf16.mxu0 0
        %1152 = vmatpush1.bf16.msra.mxu0 %v1135
        %1153 = vmatprep.subr.bf16.mxu0 0
        %1154 = vmatpush1.bf16.msra.mxu0 %v1136
        %1155 = vmatprep.subr.bf16.mxu0 0
        %1156 = vmatpush1.bf16.msra.mxu0 %v1137
        %1157 = vmatprep.subr.bf16.mxu0 0
        %1158 = vmatpush1.bf16.msra.mxu0 %v1138
        %1159 = vmatprep.subr.bf16.mxu0 0
        %1160 = vmatpush1.bf16.msra.mxu0 %v1139
        %1161 = vmatprep.subr.bf16.mxu0 0
        %1162 = vmatpush1.bf16.msra.mxu0 %v1140
        %1163 = vmatprep.subr.bf16.mxu0 0
        %1164 = vmatpush1.bf16.msra.mxu0 %v1141
        %1165 = vmatprep.subr.bf16.mxu0 0
        %1166 = vmatpush1.bf16.msra.mxu0 %v1142
        %1167 = vmatprep.subr.bf16.mxu0 0
        %1168 = vmatpush1.bf16.msra.mxu0 0
        %1169 = vmatprep.subr.bf16.mxu0 0
        %1170 = vmatpush1.bf16.msra.mxu0 0
        %1171 = vmatprep.subr.bf16.mxu0 0
        %1172 = vmatpush1.bf16.msra.mxu0 0
        %1173 = vmatprep.subr.bf16.mxu0 0
        %1174 = vmatpush1.bf16.msra.mxu0 0
        %1175 = vmatprep.subr.bf16.mxu0 0
        %1176 = vmatpush1.bf16.msra.mxu0 0
        %1177 = vmatprep.subr.bf16.mxu0 0
        %1178 = vmatpush1.bf16.msra.mxu0 0
        %1179 = vmatprep.subr.bf16.mxu0 0
        %1180 = vmatpush1.bf16.msra.mxu0 0
        %1181 = vmatprep.subr.bf16.mxu0 0
        %1182 = vmatpush1.bf16.msra.mxu0 0
        %1183 = vmatprep.mubr.bf16.mxu0 0
        %1184 = vmatmul.mubr.bf16.gmra.mrb[0].mxu0 %v1064
        %v1185 = vpop.f32.mrb[0].mxu0
        %v1186 = vadd.f32 %v1101, %v1185
        %v1187 = vpop.f32.mrb[0].mxu0
        %v1188 = vpop.f32.mrb[0].mxu0
        %v1189 = vadd.f32 %v1101, %v1188
        %v1190 = vpop.f32.mrb[0].mxu0
        %1191 = vmatprep.mubr.bf16.mxu0 0
        %1192 = vmatmul.mubr.bf16.gmra.mrb[0].mxu0 %v1065
        %v1193 = vpop.f32.mrb[0].mxu0
        %v1194 = vadd.f32 %v1101, %v1193
        %v1195 = vpop.f32.mrb[0].mxu0
        %v1196 = vpop.f32.mrb[0].mxu0
        %v1197 = vadd.f32 %v1101, %v1196
        %v1198 = vpop.f32.mrb[0].mxu0
        %1199 = vmatprep.mubr.bf16.mxu0 0
        %1200 = vmatmul.mubr.bf16.gmra.mrb[0].mxu0 %v1066
        %v1201 = vpop.f32.mrb[0].mxu0
        %v1202 = vadd.f32 %v1101, %v1201
        %v1203 = vpop.f32.mrb[0].mxu0
        %v1204 = vpop.f32.mrb[0].mxu0
        %v1205 = vadd.f32 %v1101, %v1204
        %v1206 = vpop.f32.mrb[0].mxu0
        %1207 = vmatprep.mubr.bf16.mxu0 0
        %1208 = vmatmul.mubr.bf16.gmra.mrb[0].mxu0 %v1067
        %v1209 = vpop.f32.mrb[0].mxu0
        %v1210 = vadd.f32 %v1101, %v1209
        %v1211 = vpop.f32.mrb[0].mxu0
        %v1212 = vpop.f32.mrb[0].mxu0
        %v1213 = vadd.f32 %v1101, %v1212
        %v1214 = vpop.f32.mrb[0].mxu0
        %1215 = vmatprep.mubr.bf16.mxu0 0
        %1216 = vmatmul.mubr.bf16.gmra.mrb[0].mxu0 %v1068
        %v1217 = vpop.f32.mrb[0].mxu0
        %v1218 = vadd.f32 %v1101, %v1217
        %v1219 = vpop.f32.mrb[0].mxu0
        %v1220 = vpop.f32.mrb[0].mxu0
        %v1221 = vadd.f32 %v1101, %v1220
        %v1222 = vpop.f32.mrb[0].mxu0
        %1223 = vmatprep.mubr.bf16.mxu0 0
        %1224 = vmatmul.mubr.bf16.gmra.mrb[0].mxu0 %v1069
        %v1225 = vpop.f32.mrb[0].mxu0
        %v1226 = vadd.f32 %v1101, %v1225
        %v1227 = vpop.f32.mrb[0].mxu0
        %v1228 = vpop.f32.mrb[0].mxu0
        %v1229 = vadd.f32 %v1101, %v1228
        %v1230 = vpop.f32.mrb[0].mxu0
        %1231 = vmatprep.mubr.bf16.mxu0 0
        %1232 = vmatmul.mubr.bf16.gmra.mrb[0].mxu0 %v1070
        %v1233 = vpop.f32.mrb[0].mxu0
        %v1234 = vadd.f32 %v1101, %v1233
        %v1235 = vpop.f32.mrb[0].mxu0
        %v1236 = vpop.f32.mrb[0].mxu0
        %v1237 = vadd.f32 %v1101, %v1236
        %v1238 = vpop.f32.mrb[0].mxu0
        %1239 = vmatprep.mubr.bf16.mxu0 0
        %1240 = vmatmul.mubr.bf16.gmra.mrb[0].mxu0 %v1071
        %v1241 = vpop.f32.mrb[0].mxu0
        %v1242 = vadd.f32 %v1101, %v1241
        %v1243 = vpop.f32.mrb[0].mxu0
        %v1244 = vpop.f32.mrb[0].mxu0
        %v1245 = vadd.f32 %v1101, %v1244
        %v1246 = vpop.f32.mrb[0].mxu0
        %1247 = vdwg.mxu0
        %v1248 = vld [vmem:[#allocation8] sm:$0xf]
        %v1249 = vld [vmem:[#allocation8 + $0x4] sm:$0xf]
        %v1250 = vld [vmem:[#allocation8 + $0x8] sm:$0xf]
        %v1251 = vld [vmem:[#allocation8 + $0xc] sm:$0xf]
        %v1252 = vld [vmem:[#allocation8 + $0x10] sm:$0xf]
        %v1253 = vld [vmem:[#allocation8 + $0x14] sm:$0xf]
        %v1254 = vld [vmem:[#allocation8 + $0x18] sm:$0xf]
        %v1255 = vld [vmem:[#allocation8 + $0x1c] sm:$0xf]
        %v1256 = vld [vmem:[#allocation8 + $0x20] sm:$0xf]
        %v1257 = vld [vmem:[#allocation8 + $0x24] sm:$0xf]
        %v1258 = vld [vmem:[#allocation8 + $0x28] sm:$0xf]
        %v1259 = vld [vmem:[#allocation8 + $0x2c] sm:$0xf]
        %v1260 = vld [vmem:[#allocation8 + $0x30] sm:$0xf]
        %v1261 = vld [vmem:[#allocation8 + $0x34] sm:$0xf]
        %v1262 = vld [vmem:[#allocation8 + $0x38] sm:$0xf]
        %v1263 = vld [vmem:[#allocation8 + $0x3c] sm:$0xf]
        %v1264 = vld [vmem:[%s7] sm:$0x1]
        %v1266 = vlaneseq
        %v1267 = vshrl.u32 %v1266, 7
        %v1268 = vsub.s32 0, %v1267
        %v1269 = vrot.slane %v1264, %v1268
        %v1287 = vunpack.c.l.b16 %v1248
        %v1288 = vunpack.c.l.b16 %v1249
        %v1289 = vunpack.c.l.b16 %v1250
        %v1290 = vunpack.c.l.b16 %v1251
        %v1291 = vunpack.c.l.b16 %v1252
        %v1292 = vunpack.c.l.b16 %v1253
        %v1293 = vunpack.c.l.b16 %v1254
        %v1294 = vunpack.c.l.b16 %v1255
        %v1295 = vunpack.c.l.b16 %v1256
        %v1296 = vunpack.c.l.b16 %v1257
        %v1297 = vunpack.c.l.b16 %v1258
        %v1298 = vunpack.c.l.b16 %v1259
        %v1299 = vunpack.c.l.b16 %v1260
        %v1300 = vunpack.c.l.b16 %v1261
        %v1301 = vunpack.c.l.b16 %v1262
        %v1302 = vunpack.c.l.b16 %v1263
        %v1303 = vpack.c.b16 %v1288, %v1287
        %v1304 = vpack.c.b16 %v1290, %v1289
        %v1305 = vpack.c.b16 %v1292, %v1291
        %v1306 = vpack.c.b16 %v1294, %v1293
        %v1307 = vpack.c.b16 %v1296, %v1295
        %v1308 = vpack.c.b16 %v1298, %v1297
        %v1309 = vpack.c.b16 %v1300, %v1299
        %v1310 = vpack.c.b16 %v1302, %v1301
        %1319 = vmatprep.subr.bf16.mxu0 0
        %1320 = vmatpush1.bf16.msra.mxu0 %v1303
        %1321 = vmatprep.subr.bf16.mxu0 0
        %1322 = vmatpush1.bf16.msra.mxu0 %v1304
        %1323 = vmatprep.subr.bf16.mxu0 0
        %1324 = vmatpush1.bf16.msra.mxu0 %v1305
        %1325 = vmatprep.subr.bf16.mxu0 0
        %1326 = vmatpush1.bf16.msra.mxu0 %v1306
        %1327 = vmatprep.subr.bf16.mxu0 0
        %1328 = vmatpush1.bf16.msra.mxu0 %v1307
        %1329 = vmatprep.subr.bf16.mxu0 0
        %1330 = vmatpush1.bf16.msra.mxu0 %v1308
        %1331 = vmatprep.subr.bf16.mxu0 0
        %1332 = vmatpush1.bf16.msra.mxu0 %v1309
        %1333 = vmatprep.subr.bf16.mxu0 0
        %1334 = vmatpush1.bf16.msra.mxu0 %v1310
        %1335 = vmatprep.subr.bf16.mxu0 0
        %1336 = vmatpush1.bf16.msra.mxu0 0
        %1337 = vmatprep.subr.bf16.mxu0 0
        %1338 = vmatpush1.bf16.msra.mxu0 0
        %1339 = vmatprep.subr.bf16.mxu0 0
        %1340 = vmatpush1.bf16.msra.mxu0 0
        %1341 = vmatprep.subr.bf16.mxu0 0
        %1342 = vmatpush1.bf16.msra.mxu0 0
        %1343 = vmatprep.subr.bf16.mxu0 0
        %1344 = vmatpush1.bf16.msra.mxu0 0
        %1345 = vmatprep.subr.bf16.mxu0 0
        %1346 = vmatpush1.bf16.msra.mxu0 0
        %1347 = vmatprep.subr.bf16.mxu0 0
        %1348 = vmatpush1.bf16.msra.mxu0 0
        %1349 = vmatprep.subr.bf16.mxu0 0
        %1350 = vmatpush1.bf16.msra.mxu0 0
        %1351 = vmatprep.mubr.bf16.mxu0 0
        %1352 = vmatmul.mubr.bf16.gmra.mrb[0].mxu0 %v1072
        %v1353 = vpop.f32.mrb[0].mxu0
        %v1354 = vadd.f32 %v1269, %v1353
        %v1355 = vpop.f32.mrb[0].mxu0
        %v1356 = vpop.f32.mrb[0].mxu0
        %v1357 = vadd.f32 %v1269, %v1356
        %v1358 = vpop.f32.mrb[0].mxu0
        %1359 = vmatprep.mubr.bf16.mxu0 0
        %1360 = vmatmul.mubr.bf16.gmra.mrb[0].mxu0 %v1073
        %v1361 = vpop.f32.mrb[0].mxu0
        %v1362 = vadd.f32 %v1269, %v1361
        %v1363 = vpop.f32.mrb[0].mxu0
        %v1364 = vpop.f32.mrb[0].mxu0
        %v1365 = vadd.f32 %v1269, %v1364
        %v1366 = vpop.f32.mrb[0].mxu0
        %1367 = vmatprep.mubr.bf16.mxu0 0
        %1368 = vmatmul.mubr.bf16.gmra.mrb[0].mxu0 %v1074
        %v1369 = vpop.f32.mrb[0].mxu0
        %v1370 = vadd.f32 %v1269, %v1369
        %v1371 = vpop.f32.mrb[0].mxu0
        %v1372 = vpop.f32.mrb[0].mxu0
        %v1373 = vadd.f32 %v1269, %v1372
        %v1374 = vpop.f32.mrb[0].mxu0
        %1375 = vmatprep.mubr.bf16.mxu0 0
        %1376 = vmatmul.mubr.bf16.gmra.mrb[0].mxu0 %v1075
        %v1377 = vpop.f32.mrb[0].mxu0
        %v1378 = vadd.f32 %v1269, %v1377
        %v1379 = vpop.f32.mrb[0].mxu0
        %v1380 = vpop.f32.mrb[0].mxu0
        %v1381 = vadd.f32 %v1269, %v1380
        %v1382 = vpop.f32.mrb[0].mxu0
        %1383 = vmatprep.mubr.bf16.mxu0 0
        %1384 = vmatmul.mubr.bf16.gmra.mrb[0].mxu0 %v1076
        %v1385 = vpop.f32.mrb[0].mxu0
        %v1386 = vadd.f32 %v1269, %v1385
        %v1387 = vpop.f32.mrb[0].mxu0
        %v1388 = vpop.f32.mrb[0].mxu0
        %v1389 = vadd.f32 %v1269, %v1388
        %v1390 = vpop.f32.mrb[0].mxu0
        %1391 = vmatprep.mubr.bf16.mxu0 0
        %1392 = vmatmul.mubr.bf16.gmra.mrb[0].mxu0 %v1077
        %v1393 = vpop.f32.mrb[0].mxu0
        %v1394 = vadd.f32 %v1269, %v1393
        %v1395 = vpop.f32.mrb[0].mxu0
        %v1396 = vpop.f32.mrb[0].mxu0
        %v1397 = vadd.f32 %v1269, %v1396
        %v1398 = vpop.f32.mrb[0].mxu0
        %1399 = vmatprep.mubr.bf16.mxu0 0
        %1400 = vmatmul.mubr.bf16.gmra.mrb[0].mxu0 %v1078
        %v1401 = vpop.f32.mrb[0].mxu0
        %v1402 = vadd.f32 %v1269, %v1401
        %v1403 = vpop.f32.mrb[0].mxu0
        %v1404 = vpop.f32.mrb[0].mxu0
        %v1405 = vadd.f32 %v1269, %v1404
        %v1406 = vpop.f32.mrb[0].mxu0
        %1407 = vmatprep.mubr.bf16.mxu0 0
        %1408 = vmatmul.mubr.bf16.gmra.mrb[0].mxu0 %v1079
        %v1409 = vpop.f32.mrb[0].mxu0
        %v1410 = vadd.f32 %v1269, %v1409
        %v1411 = vpop.f32.mrb[0].mxu0
        %v1412 = vpop.f32.mrb[0].mxu0
        %v1413 = vadd.f32 %v1269, %v1412
        %v1414 = vpop.f32.mrb[0].mxu0
        %1415 = vdwg.mxu0
        %v1416 = vld [vmem:[#allocation10] sm:$0xf]
        %v1417 = vld [vmem:[#allocation10 + $0x4] sm:$0xf]
        %v1418 = vld [vmem:[#allocation10 + $0x8] sm:$0xf]
        %v1419 = vld [vmem:[#allocation10 + $0xc] sm:$0xf]
        %v1420 = vld [vmem:[#allocation10 + $0x10] sm:$0xf]
        %v1421 = vld [vmem:[#allocation10 + $0x14] sm:$0xf]
        %v1422 = vld [vmem:[#allocation10 + $0x18] sm:$0xf]
        %v1423 = vld [vmem:[#allocation10 + $0x1c] sm:$0xf]
        %v1424 = vld [vmem:[#allocation10 + $0x20] sm:$0xf]
        %v1425 = vld [vmem:[#allocation10 + $0x24] sm:$0xf]
        %v1426 = vld [vmem:[#allocation10 + $0x28] sm:$0xf]
        %v1427 = vld [vmem:[#allocation10 + $0x2c] sm:$0xf]
        %v1428 = vld [vmem:[#allocation10 + $0x30] sm:$0xf]
        %v1429 = vld [vmem:[#allocation10 + $0x34] sm:$0xf]
        %v1430 = vld [vmem:[#allocation10 + $0x38] sm:$0xf]
        %v1431 = vld [vmem:[#allocation10 + $0x3c] sm:$0xf]
        %v1432 = vld [vmem:[%s9] sm:$0x1]
        %v1434 = vlaneseq
        %v1435 = vshrl.u32 %v1434, 7
        %v1436 = vsub.s32 0, %v1435
        %v1437 = vrot.slane %v1432, %v1436
        %v1455 = vunpack.c.l.b16 %v1416
        %v1456 = vunpack.c.l.b16 %v1417
        %v1457 = vunpack.c.l.b16 %v1418
        %v1458 = vunpack.c.l.b16 %v1419
        %v1459 = vunpack.c.l.b16 %v1420
        %v1460 = vunpack.c.l.b16 %v1421
        %v1461 = vunpack.c.l.b16 %v1422
        %v1462 = vunpack.c.l.b16 %v1423
        %v1463 = vunpack.c.l.b16 %v1424
        %v1464 = vunpack.c.l.b16 %v1425
        %v1465 = vunpack.c.l.b16 %v1426
        %v1466 = vunpack.c.l.b16 %v1427
        %v1467 = vunpack.c.l.b16 %v1428
        %v1468 = vunpack.c.l.b16 %v1429
        %v1469 = vunpack.c.l.b16 %v1430
        %v1470 = vunpack.c.l.b16 %v1431
        %v1471 = vpack.c.b16 %v1456, %v1455
        %v1472 = vpack.c.b16 %v1458, %v1457
        %v1473 = vpack.c.b16 %v1460, %v1459
        %v1474 = vpack.c.b16 %v1462, %v1461
        %v1475 = vpack.c.b16 %v1464, %v1463
        %v1476 = vpack.c.b16 %v1466, %v1465
        %v1477 = vpack.c.b16 %v1468, %v1467
        %v1478 = vpack.c.b16 %v1470, %v1469
        %1487 = vmatprep.subr.bf16.mxu0 0
        %1488 = vmatpush1.bf16.msra.mxu0 %v1471
        %1489 = vmatprep.subr.bf16.mxu0 0
        %1490 = vmatpush1.bf16.msra.mxu0 %v1472
        %1491 = vmatprep.subr.bf16.mxu0 0
        %1492 = vmatpush1.bf16.msra.mxu0 %v1473
        %1493 = vmatprep.subr.bf16.mxu0 0
        %1494 = vmatpush1.bf16.msra.mxu0 %v1474
        %1495 = vmatprep.subr.bf16.mxu0 0
        %1496 = vmatpush1.bf16.msra.mxu0 %v1475
        %1497 = vmatprep.subr.bf16.mxu0 0
        %1498 = vmatpush1.bf16.msra.mxu0 %v1476
        %1499 = vmatprep.subr.bf16.mxu0 0
        %1500 = vmatpush1.bf16.msra.mxu0 %v1477
        %1501 = vmatprep.subr.bf16.mxu0 0
        %1502 = vmatpush1.bf16.msra.mxu0 %v1478
        %1503 = vmatprep.subr.bf16.mxu0 0
        %1504 = vmatpush1.bf16.msra.mxu0 0
        %1505 = vmatprep.subr.bf16.mxu0 0
        %1506 = vmatpush1.bf16.msra.mxu0 0
        %1507 = vmatprep.subr.bf16.mxu0 0
        %1508 = vmatpush1.bf16.msra.mxu0 0
        %1509 = vmatprep.subr.bf16.mxu0 0
        %1510 = vmatpush1.bf16.msra.mxu0 0
        %1511 = vmatprep.subr.bf16.mxu0 0
        %1512 = vmatpush1.bf16.msra.mxu0 0
        %1513 = vmatprep.subr.bf16.mxu0 0
        %1514 = vmatpush1.bf16.msra.mxu0 0
        %1515 = vmatprep.subr.bf16.mxu0 0
        %1516 = vmatpush1.bf16.msra.mxu0 0
        %1517 = vmatprep.subr.bf16.mxu0 0
        %1518 = vmatpush1.bf16.msra.mxu0 0
        %1519 = vmatprep.mubr.bf16.mxu0 0
        %1520 = vmatmul.mubr.bf16.gmra.mrb[0].mxu0 %v1072
        %v1521 = vpop.f32.mrb[0].mxu0
        %v1522 = vadd.f32 %v1437, %v1521
        %v1523 = vpop.f32.mrb[0].mxu0
        %v1524 = vpop.f32.mrb[0].mxu0
        %v1525 = vadd.f32 %v1437, %v1524
        %v1526 = vpop.f32.mrb[0].mxu0
        %1527 = vmatprep.mubr.bf16.mxu0 0
        %1528 = vmatmul.mubr.bf16.gmra.mrb[0].mxu0 %v1073
        %v1529 = vpop.f32.mrb[0].mxu0
        %v1530 = vadd.f32 %v1437, %v1529
        %v1531 = vpop.f32.mrb[0].mxu0
        %v1532 = vpop.f32.mrb[0].mxu0
        %v1533 = vadd.f32 %v1437, %v1532
        %v1534 = vpop.f32.mrb[0].mxu0
        %1535 = vmatprep.mubr.bf16.mxu0 0
        %1536 = vmatmul.mubr.bf16.gmra.mrb[0].mxu0 %v1074
        %v1537 = vpop.f32.mrb[0].mxu0
        %v1538 = vadd.f32 %v1437, %v1537
        %v1539 = vpop.f32.mrb[0].mxu0
        %v1540 = vpop.f32.mrb[0].mxu0
        %v1541 = vadd.f32 %v1437, %v1540
        %v1542 = vpop.f32.mrb[0].mxu0
        %1543 = vmatprep.mubr.bf16.mxu0 0
        %1544 = vmatmul.mubr.bf16.gmra.mrb[0].mxu0 %v1075
        %v1545 = vpop.f32.mrb[0].mxu0
        %v1546 = vadd.f32 %v1437, %v1545
        %v1547 = vpop.f32.mrb[0].mxu0
        %v1548 = vpop.f32.mrb[0].mxu0
        %v1549 = vadd.f32 %v1437, %v1548
        %v1550 = vpop.f32.mrb[0].mxu0
        %1551 = vmatprep.mubr.bf16.mxu0 0
        %1552 = vmatmul.mubr.bf16.gmra.mrb[0].mxu0 %v1076
        %v1553 = vpop.f32.mrb[0].mxu0
        %v1554 = vadd.f32 %v1437, %v1553
        %v1555 = vpop.f32.mrb[0].mxu0
        %v1556 = vpop.f32.mrb[0].mxu0
        %v1557 = vadd.f32 %v1437, %v1556
        %v1558 = vpop.f32.mrb[0].mxu0
        %1559 = vmatprep.mubr.bf16.mxu0 0
        %1560 = vmatmul.mubr.bf16.gmra.mrb[0].mxu0 %v1077
        %v1561 = vpop.f32.mrb[0].mxu0
        %v1562 = vadd.f32 %v1437, %v1561
        %v1563 = vpop.f32.mrb[0].mxu0
        %v1564 = vpop.f32.mrb[0].mxu0
        %v1565 = vadd.f32 %v1437, %v1564
        %v1566 = vpop.f32.mrb[0].mxu0
        %1567 = vmatprep.mubr.bf16.mxu0 0
        %1568 = vmatmul.mubr.bf16.gmra.mrb[0].mxu0 %v1078
        %v1569 = vpop.f32.mrb[0].mxu0
        %v1570 = vadd.f32 %v1437, %v1569
        %v1571 = vpop.f32.mrb[0].mxu0
        %v1572 = vpop.f32.mrb[0].mxu0
        %v1573 = vadd.f32 %v1437, %v1572
        %v1574 = vpop.f32.mrb[0].mxu0
        %1575 = vmatprep.mubr.bf16.mxu0 0
        %1576 = vmatmul.mubr.bf16.gmra.mrb[0].mxu0 %v1079
        %v1577 = vpop.f32.mrb[0].mxu0
        %v1578 = vadd.f32 %v1437, %v1577
        %v1579 = vpop.f32.mrb[0].mxu0
        %v1580 = vpop.f32.mrb[0].mxu0
        %v1581 = vadd.f32 %v1437, %v1580
        %v1582 = vpop.f32.mrb[0].mxu0
        %1583 = vdwg.mxu0
        %v1584 = vmul.f32 %v1186, 0.17677669
        %v1585 = vmul.f32 %v1189, 0.17677669
        %v1586 = vmul.f32 %v1194, 0.17677669
        %v1587 = vmul.f32 %v1197, 0.17677669
        %v1588 = vmul.f32 %v1202, 0.17677669
        %v1589 = vmul.f32 %v1205, 0.17677669
        %v1590 = vmul.f32 %v1210, 0.17677669
        %v1591 = vmul.f32 %v1213, 0.17677669
        %v1592 = vmul.f32 %v1218, 0.17677669
        %v1593 = vmul.f32 %v1221, 0.17677669
        %v1594 = vmul.f32 %v1226, 0.17677669
        %v1595 = vmul.f32 %v1229, 0.17677669
        %v1596 = vmul.f32 %v1234, 0.17677669
        %v1597 = vmul.f32 %v1237, 0.17677669
        %v1598 = vmul.f32 %v1242, 0.17677669
        %v1599 = vmul.f32 %v1245, 0.17677669
        %v1600 = vpack.c.bf16 %v1585, %v1584
        %v1601 = vpack.c.bf16 %v1587, %v1586
        %v1602 = vpack.c.bf16 %v1589, %v1588
        %v1603 = vpack.c.bf16 %v1591, %v1590
        %v1604 = vpack.c.bf16 %v1593, %v1592
        %v1605 = vpack.c.bf16 %v1595, %v1594
        %v1606 = vpack.c.bf16 %v1597, %v1596
        %v1607 = vpack.c.bf16 %v1599, %v1598
        %1616 = vrot.lane.b32.xlu0 %v1600, 96
        %v1617 = vpop.permute.xlu0 %1616
        %1618 = vrot.lane.b32.xlu0 %v1601, 96
        %v1619 = vpop.permute.xlu0 %1618
        %1620 = vrot.lane.b32.xlu0 %v1602, 96
        %v1621 = vpop.permute.xlu0 %1620
        %1622 = vrot.lane.b32.xlu0 %v1603, 96
        %v1623 = vpop.permute.xlu0 %1622
        %1624 = vrot.lane.b32.xlu0 %v1604, 96
        %v1625 = vpop.permute.xlu0 %1624
        %1626 = vrot.lane.b32.xlu0 %v1605, 96
        %v1627 = vpop.permute.xlu0 %1626
        %1628 = vrot.lane.b32.xlu0 %v1606, 96
        %v1629 = vpop.permute.xlu0 %1628
        %1630 = vrot.lane.b32.xlu0 %v1607, 96
        %v1631 = vpop.permute.xlu0 %1630
        %1632 = vrot.lane.b32.xlu0 %v1600, 64
        %v1633 = vpop.permute.xlu0 %1632
        %1634 = vrot.lane.b32.xlu0 %v1601, 64
        %v1635 = vpop.permute.xlu0 %1634
        %1636 = vrot.lane.b32.xlu0 %v1602, 64
        %v1637 = vpop.permute.xlu0 %1636
        %1638 = vrot.lane.b32.xlu0 %v1603, 64
        %v1639 = vpop.permute.xlu0 %1638
        %1640 = vrot.lane.b32.xlu0 %v1604, 64
        %v1641 = vpop.permute.xlu0 %1640
        %1642 = vrot.lane.b32.xlu0 %v1605, 64
        %v1643 = vpop.permute.xlu0 %1642
        %1644 = vrot.lane.b32.xlu0 %v1606, 64
        %v1645 = vpop.permute.xlu0 %1644
        %1646 = vrot.lane.b32.xlu0 %v1607, 64
        %v1647 = vpop.permute.xlu0 %1646
        %1648 = vrot.lane.b32.xlu0 %v1600, 32
        %v1649 = vpop.permute.xlu0 %1648
        %1650 = vrot.lane.b32.xlu0 %v1601, 32
        %v1651 = vpop.permute.xlu0 %1650
        %1652 = vrot.lane.b32.xlu0 %v1602, 32
        %v1653 = vpop.permute.xlu0 %1652
        %1654 = vrot.lane.b32.xlu0 %v1603, 32
        %v1655 = vpop.permute.xlu0 %1654
        %1656 = vrot.lane.b32.xlu0 %v1604, 32
        %v1657 = vpop.permute.xlu0 %1656
        %1658 = vrot.lane.b32.xlu0 %v1605, 32
        %v1659 = vpop.permute.xlu0 %1658
        %1660 = vrot.lane.b32.xlu0 %v1606, 32
        %v1661 = vpop.permute.xlu0 %1660
        %1662 = vrot.lane.b32.xlu0 %v1607, 32
        %v1663 = vpop.permute.xlu0 %1662
        %v1666 = vpack.i.b16 %v1617, %v1600
        %v1668 = vshrl.u32 %v1600, 16
        %v1669 = vshrl.u32 %v1617, 16
        %v1670 = vpack.i.b16 %v1669, %v1668
        %v1674 = vpack.i.b16 %v1649, %v1633
        %v1676 = vshrl.u32 %v1633, 16
        %v1677 = vshrl.u32 %v1649, 16
        %v1678 = vpack.i.b16 %v1677, %v1676
        %v1681 = vpack.i.b16 0, 0
        %v1683 = vshrl.u32 0, 16
        %v1684 = vpack.i.b16 %v1683, %v1683
        %v1688 = vpack.i.b16 %v1619, %v1601
        %v1690 = vshrl.u32 %v1601, 16
        %v1691 = vshrl.u32 %v1619, 16
        %v1692 = vpack.i.b16 %v1691, %v1690
        %v1696 = vpack.i.b16 %v1651, %v1635
        %v1698 = vshrl.u32 %v1635, 16
        %v1699 = vshrl.u32 %v1651, 16
        %v1700 = vpack.i.b16 %v1699, %v1698
        %v1704 = vpack.i.b16 %v1621, %v1602
        %v1706 = vshrl.u32 %v1602, 16
        %v1707 = vshrl.u32 %v1621, 16
        %v1708 = vpack.i.b16 %v1707, %v1706
        %v1712 = vpack.i.b16 %v1653, %v1637
        %v1714 = vshrl.u32 %v1637, 16
        %v1715 = vshrl.u32 %v1653, 16
        %v1716 = vpack.i.b16 %v1715, %v1714
        %v1720 = vpack.i.b16 %v1623, %v1603
        %v1722 = vshrl.u32 %v1603, 16
        %v1723 = vshrl.u32 %v1623, 16
        %v1724 = vpack.i.b16 %v1723, %v1722
        %v1728 = vpack.i.b16 %v1655, %v1639
        %v1730 = vshrl.u32 %v1639, 16
        %v1731 = vshrl.u32 %v1655, 16
        %v1732 = vpack.i.b16 %v1731, %v1730
        %v1736 = vpack.i.b16 %v1625, %v1604
        %v1738 = vshrl.u32 %v1604, 16
        %v1739 = vshrl.u32 %v1625, 16
        %v1740 = vpack.i.b16 %v1739, %v1738
        %v1744 = vpack.i.b16 %v1657, %v1641
        %v1746 = vshrl.u32 %v1641, 16
        %v1747 = vshrl.u32 %v1657, 16
        %v1748 = vpack.i.b16 %v1747, %v1746
        %v1752 = vpack.i.b16 %v1627, %v1605
        %v1754 = vshrl.u32 %v1605, 16
        %v1755 = vshrl.u32 %v1627, 16
        %v1756 = vpack.i.b16 %v1755, %v1754
        %v1760 = vpack.i.b16 %v1659, %v1643
        %v1762 = vshrl.u32 %v1643, 16
        %v1763 = vshrl.u32 %v1659, 16
        %v1764 = vpack.i.b16 %v1763, %v1762
        %v1768 = vpack.i.b16 %v1629, %v1606
        %v1770 = vshrl.u32 %v1606, 16
        %v1771 = vshrl.u32 %v1629, 16
        %v1772 = vpack.i.b16 %v1771, %v1770
        %v1776 = vpack.i.b16 %v1661, %v1645
        %v1778 = vshrl.u32 %v1645, 16
        %v1779 = vshrl.u32 %v1661, 16
        %v1780 = vpack.i.b16 %v1779, %v1778
        %v1784 = vpack.i.b16 %v1631, %v1607
        %v1786 = vshrl.u32 %v1607, 16
        %v1787 = vshrl.u32 %v1631, 16
        %v1788 = vpack.i.b16 %v1787, %v1786
        %v1792 = vpack.i.b16 %v1663, %v1647
        %v1794 = vshrl.u32 %v1647, 16
        %v1795 = vshrl.u32 %v1663, 16
        %v1796 = vpack.i.b16 %v1795, %v1794
        %v1798 = vcombine.high %v1666, %v1681
        %v1800 = vunpack.c.l.s4 1983009808
        %v1801 = vunpack.c.0.s8 %v1800
        %v1802 = vlaneseq
        %v1803 = vshrl.u32 %v1802, 7
        %v1804 = vsub.s32 %v1801, %v1803
        %v1805 = vrot.slane %v1666, %v1804
        %v1807 = vunpack.c.l.s4 1983009808
        %v1808 = vunpack.c.0.s8 %v1807
        %v1809 = vlaneseq
        %v1810 = vshrl.u32 %v1809, 7
        %v1811 = vsub.s32 %v1808, %v1810
        %v1812 = vrot.slane %v1798, %v1811
        %v1813 = vcombine.high %v1674, %v1681
        %v1815 = vunpack.c.l.s4 1983009808
        %v1816 = vunpack.c.0.s8 %v1815
        %v1817 = vlaneseq
        %v1818 = vshrl.u32 %v1817, 7
        %v1819 = vsub.s32 %v1816, %v1818
        %v1820 = vrot.slane %v1674, %v1819
        %v1822 = vunpack.c.l.s4 1983009808
        %v1823 = vunpack.c.0.s8 %v1822
        %v1824 = vlaneseq
        %v1825 = vshrl.u32 %v1824, 7
        %v1826 = vsub.s32 %v1823, %v1825
        %v1827 = vrot.slane %v1813, %v1826
        %v1828 = vcombine.low %v1805, %v1820
        %v1829 = vcombine.high %v1805, %v1820
        %v1831 = vunpack.c.l.s4 1934713408
        %v1832 = vunpack.c.0.s8 %v1831
        %v1833 = vlaneseq
        %v1834 = vshrl.u32 %v1833, 7
        %v1835 = vsub.s32 %v1832, %v1834
        %v1836 = vrot.slane %v1828, %v1835
        %v1838 = vunpack.c.l.s4 1934713408
        %v1839 = vunpack.c.0.s8 %v1838
        %v1840 = vlaneseq
        %v1841 = vshrl.u32 %v1840, 7
        %v1842 = vsub.s32 %v1839, %v1841
        %v1843 = vrot.slane %v1829, %v1842
        %v1844 = vcombine.low %v1812, %v1827
        %v1845 = vcombine.high %v1812, %v1827
        %v1847 = vunpack.c.l.s4 1934713408
        %v1848 = vunpack.c.0.s8 %v1847
        %v1849 = vlaneseq
        %v1850 = vshrl.u32 %v1849, 7
        %v1851 = vsub.s32 %v1848, %v1850
        %v1852 = vrot.slane %v1844, %v1851
        %v1854 = vunpack.c.l.s4 1934713408
        %v1855 = vunpack.c.0.s8 %v1854
        %v1856 = vlaneseq
        %v1857 = vshrl.u32 %v1856, 7
        %v1858 = vsub.s32 %v1855, %v1857
        %v1859 = vrot.slane %v1845, %v1858
        %v1860 = vcombine.high %v1836, 0
        %v1861 = vcombine.high %v1843, 0
        %v1862 = vcombine.high %v1852, 0
        %v1863 = vcombine.high %v1859, 0
        %v1864 = vcombine.high %v1670, %v1684
        %v1866 = vunpack.c.l.s4 1983009808
        %v1867 = vunpack.c.0.s8 %v1866
        %v1868 = vlaneseq
        %v1869 = vshrl.u32 %v1868, 7
        %v1870 = vsub.s32 %v1867, %v1869
        %v1871 = vrot.slane %v1670, %v1870
        %v1873 = vunpack.c.l.s4 1983009808
        %v1874 = vunpack.c.0.s8 %v1873
        %v1875 = vlaneseq
        %v1876 = vshrl.u32 %v1875, 7
        %v1877 = vsub.s32 %v1874, %v1876
        %v1878 = vrot.slane %v1864, %v1877
        %v1879 = vcombine.high %v1678, %v1684
        %v1881 = vunpack.c.l.s4 1983009808
        %v1882 = vunpack.c.0.s8 %v1881
        %v1883 = vlaneseq
        %v1884 = vshrl.u32 %v1883, 7
        %v1885 = vsub.s32 %v1882, %v1884
        %v1886 = vrot.slane %v1678, %v1885
        %v1888 = vunpack.c.l.s4 1983009808
        %v1889 = vunpack.c.0.s8 %v1888
        %v1890 = vlaneseq
        %v1891 = vshrl.u32 %v1890, 7
        %v1892 = vsub.s32 %v1889, %v1891
        %v1893 = vrot.slane %v1879, %v1892
        %v1894 = vcombine.low %v1871, %v1886
        %v1895 = vcombine.high %v1871, %v1886
        %v1897 = vunpack.c.l.s4 1934713408
        %v1898 = vunpack.c.0.s8 %v1897
        %v1899 = vlaneseq
        %v1900 = vshrl.u32 %v1899, 7
        %v1901 = vsub.s32 %v1898, %v1900
        %v1902 = vrot.slane %v1894, %v1901
        %v1904 = vunpack.c.l.s4 1934713408
        %v1905 = vunpack.c.0.s8 %v1904
        %v1906 = vlaneseq
        %v1907 = vshrl.u32 %v1906, 7
        %v1908 = vsub.s32 %v1905, %v1907
        %v1909 = vrot.slane %v1895, %v1908
        %v1910 = vcombine.low %v1878, %v1893
        %v1911 = vcombine.high %v1878, %v1893
        %v1913 = vunpack.c.l.s4 1934713408
        %v1914 = vunpack.c.0.s8 %v1913
        %v1915 = vlaneseq
        %v1916 = vshrl.u32 %v1915, 7
        %v1917 = vsub.s32 %v1914, %v1916
        %v1918 = vrot.slane %v1910, %v1917
        %v1920 = vunpack.c.l.s4 1934713408
        %v1921 = vunpack.c.0.s8 %v1920
        %v1922 = vlaneseq
        %v1923 = vshrl.u32 %v1922, 7
        %v1924 = vsub.s32 %v1921, %v1923
        %v1925 = vrot.slane %v1911, %v1924
        %v1926 = vcombine.high %v1902, 0
        %v1927 = vcombine.high %v1909, 0
        %v1928 = vcombine.high %v1918, 0
        %v1929 = vcombine.high %v1925, 0
        %v1930 = vcombine.high %v1688, %v1681
        %v1932 = vunpack.c.l.s4 1983009808
        %v1933 = vunpack.c.0.s8 %v1932
        %v1934 = vlaneseq
        %v1935 = vshrl.u32 %v1934, 7
        %v1936 = vsub.s32 %v1933, %v1935
        %v1937 = vrot.slane %v1688, %v1936
        %v1939 = vunpack.c.l.s4 1983009808
        %v1940 = vunpack.c.0.s8 %v1939
        %v1941 = vlaneseq
        %v1942 = vshrl.u32 %v1941, 7
        %v1943 = vsub.s32 %v1940, %v1942
        %v1944 = vrot.slane %v1930, %v1943
        %v1945 = vcombine.high %v1696, %v1681
        %v1947 = vunpack.c.l.s4 1983009808
        %v1948 = vunpack.c.0.s8 %v1947
        %v1949 = vlaneseq
        %v1950 = vshrl.u32 %v1949, 7
        %v1951 = vsub.s32 %v1948, %v1950
        %v1952 = vrot.slane %v1696, %v1951
        %v1954 = vunpack.c.l.s4 1983009808
        %v1955 = vunpack.c.0.s8 %v1954
        %v1956 = vlaneseq
        %v1957 = vshrl.u32 %v1956, 7
        %v1958 = vsub.s32 %v1955, %v1957
        %v1959 = vrot.slane %v1945, %v1958
        %v1960 = vcombine.low %v1937, %v1952
        %v1961 = vcombine.high %v1937, %v1952
        %v1963 = vunpack.c.l.s4 1934713408
        %v1964 = vunpack.c.0.s8 %v1963
        %v1965 = vlaneseq
        %v1966 = vshrl.u32 %v1965, 7
        %v1967 = vsub.s32 %v1964, %v1966
        %v1968 = vrot.slane %v1960, %v1967
        %v1970 = vunpack.c.l.s4 1934713408
        %v1971 = vunpack.c.0.s8 %v1970
        %v1972 = vlaneseq
        %v1973 = vshrl.u32 %v1972, 7
        %v1974 = vsub.s32 %v1971, %v1973
        %v1975 = vrot.slane %v1961, %v1974
        %v1976 = vcombine.low %v1944, %v1959
        %v1977 = vcombine.high %v1944, %v1959
        %v1979 = vunpack.c.l.s4 1934713408
        %v1980 = vunpack.c.0.s8 %v1979
        %v1981 = vlaneseq
        %v1982 = vshrl.u32 %v1981, 7
        %v1983 = vsub.s32 %v1980, %v1982
        %v1984 = vrot.slane %v1976, %v1983
        %v1986 = vunpack.c.l.s4 1934713408
        %v1987 = vunpack.c.0.s8 %v1986
        %v1988 = vlaneseq
        %v1989 = vshrl.u32 %v1988, 7
        %v1990 = vsub.s32 %v1987, %v1989
        %v1991 = vrot.slane %v1977, %v1990
        %v1992 = vcombine.high %v1968, 0
        %v1993 = vcombine.high %v1975, 0
        %v1994 = vcombine.high %v1984, 0
        %v1995 = vcombine.high %v1991, 0
        %v1996 = vcombine.high %v1692, %v1684
        %v1998 = vunpack.c.l.s4 1983009808
        %v1999 = vunpack.c.0.s8 %v1998
        %v2000 = vlaneseq
        %v2001 = vshrl.u32 %v2000, 7
        %v2002 = vsub.s32 %v1999, %v2001
        %v2003 = vrot.slane %v1692, %v2002
        %v2005 = vunpack.c.l.s4 1983009808
        %v2006 = vunpack.c.0.s8 %v2005
        %v2007 = vlaneseq
        %v2008 = vshrl.u32 %v2007, 7
        %v2009 = vsub.s32 %v2006, %v2008
        %v2010 = vrot.slane %v1996, %v2009
        %v2011 = vcombine.high %v1700, %v1684
        %v2013 = vunpack.c.l.s4 1983009808
        %v2014 = vunpack.c.0.s8 %v2013
        %v2015 = vlaneseq
        %v2016 = vshrl.u32 %v2015, 7
        %v2017 = vsub.s32 %v2014, %v2016
        %v2018 = vrot.slane %v1700, %v2017
        %v2020 = vunpack.c.l.s4 1983009808
        %v2021 = vunpack.c.0.s8 %v2020
        %v2022 = vlaneseq
        %v2023 = vshrl.u32 %v2022, 7
        %v2024 = vsub.s32 %v2021, %v2023
        %v2025 = vrot.slane %v2011, %v2024
        %v2026 = vcombine.low %v2003, %v2018
        %v2027 = vcombine.high %v2003, %v2018
        %v2029 = vunpack.c.l.s4 1934713408
        %v2030 = vunpack.c.0.s8 %v2029
        %v2031 = vlaneseq
        %v2032 = vshrl.u32 %v2031, 7
        %v2033 = vsub.s32 %v2030, %v2032
        %v2034 = vrot.slane %v2026, %v2033
        %v2036 = vunpack.c.l.s4 1934713408
        %v2037 = vunpack.c.0.s8 %v2036
        %v2038 = vlaneseq
        %v2039 = vshrl.u32 %v2038, 7
        %v2040 = vsub.s32 %v2037, %v2039
        %v2041 = vrot.slane %v2027, %v2040
        %v2042 = vcombine.low %v2010, %v2025
        %v2043 = vcombine.high %v2010, %v2025
        %v2045 = vunpack.c.l.s4 1934713408
        %v2046 = vunpack.c.0.s8 %v2045
        %v2047 = vlaneseq
        %v2048 = vshrl.u32 %v2047, 7
        %v2049 = vsub.s32 %v2046, %v2048
        %v2050 = vrot.slane %v2042, %v2049
        %v2052 = vunpack.c.l.s4 1934713408
        %v2053 = vunpack.c.0.s8 %v2052
        %v2054 = vlaneseq
        %v2055 = vshrl.u32 %v2054, 7
        %v2056 = vsub.s32 %v2053, %v2055
        %v2057 = vrot.slane %v2043, %v2056
        %v2058 = vcombine.high %v2034, 0
        %v2059 = vcombine.high %v2041, 0
        %v2060 = vcombine.high %v2050, 0
        %v2061 = vcombine.high %v2057, 0
        %v2062 = vcombine.high %v1704, %v1681
        %v2064 = vunpack.c.l.s4 1983009808
        %v2065 = vunpack.c.0.s8 %v2064
        %v2066 = vlaneseq
        %v2067 = vshrl.u32 %v2066, 7
        %v2068 = vsub.s32 %v2065, %v2067
        %v2069 = vrot.slane %v1704, %v2068
        %v2071 = vunpack.c.l.s4 1983009808
        %v2072 = vunpack.c.0.s8 %v2071
        %v2073 = vlaneseq
        %v2074 = vshrl.u32 %v2073, 7
        %v2075 = vsub.s32 %v2072, %v2074
        %v2076 = vrot.slane %v2062, %v2075
        %v2077 = vcombine.high %v1712, %v1681
        %v2079 = vunpack.c.l.s4 1983009808
        %v2080 = vunpack.c.0.s8 %v2079
        %v2081 = vlaneseq
        %v2082 = vshrl.u32 %v2081, 7
        %v2083 = vsub.s32 %v2080, %v2082
        %v2084 = vrot.slane %v1712, %v2083
        %v2086 = vunpack.c.l.s4 1983009808
        %v2087 = vunpack.c.0.s8 %v2086
        %v2088 = vlaneseq
        %v2089 = vshrl.u32 %v2088, 7
        %v2090 = vsub.s32 %v2087, %v2089
        %v2091 = vrot.slane %v2077, %v2090
        %v2092 = vcombine.low %v2069, %v2084
        %v2093 = vcombine.high %v2069, %v2084
        %v2095 = vunpack.c.l.s4 1934713408
        %v2096 = vunpack.c.0.s8 %v2095
        %v2097 = vlaneseq
        %v2098 = vshrl.u32 %v2097, 7
        %v2099 = vsub.s32 %v2096, %v2098
        %v2100 = vrot.slane %v2092, %v2099
        %v2102 = vunpack.c.l.s4 1934713408
        %v2103 = vunpack.c.0.s8 %v2102
        %v2104 = vlaneseq
        %v2105 = vshrl.u32 %v2104, 7
        %v2106 = vsub.s32 %v2103, %v2105
        %v2107 = vrot.slane %v2093, %v2106
        %v2108 = vcombine.low %v2076, %v2091
        %v2109 = vcombine.high %v2076, %v2091
        %v2111 = vunpack.c.l.s4 1934713408
        %v2112 = vunpack.c.0.s8 %v2111
        %v2113 = vlaneseq
        %v2114 = vshrl.u32 %v2113, 7
        %v2115 = vsub.s32 %v2112, %v2114
        %v2116 = vrot.slane %v2108, %v2115
        %v2118 = vunpack.c.l.s4 1934713408
        %v2119 = vunpack.c.0.s8 %v2118
        %v2120 = vlaneseq
        %v2121 = vshrl.u32 %v2120, 7
        %v2122 = vsub.s32 %v2119, %v2121
        %v2123 = vrot.slane %v2109, %v2122
        %v2124 = vcombine.high %v2100, 0
        %v2125 = vcombine.high %v2107, 0
        %v2126 = vcombine.high %v2116, 0
        %v2127 = vcombine.high %v2123, 0
        %v2128 = vcombine.high %v1708, %v1684
        %v2130 = vunpack.c.l.s4 1983009808
        %v2131 = vunpack.c.0.s8 %v2130
        %v2132 = vlaneseq
        %v2133 = vshrl.u32 %v2132, 7
        %v2134 = vsub.s32 %v2131, %v2133
        %v2135 = vrot.slane %v1708, %v2134
        %v2137 = vunpack.c.l.s4 1983009808
        %v2138 = vunpack.c.0.s8 %v2137
        %v2139 = vlaneseq
        %v2140 = vshrl.u32 %v2139, 7
        %v2141 = vsub.s32 %v2138, %v2140
        %v2142 = vrot.slane %v2128, %v2141
        %v2143 = vcombine.high %v1716, %v1684
        %v2145 = vunpack.c.l.s4 1983009808
        %v2146 = vunpack.c.0.s8 %v2145
        %v2147 = vlaneseq
        %v2148 = vshrl.u32 %v2147, 7
        %v2149 = vsub.s32 %v2146, %v2148
        %v2150 = vrot.slane %v1716, %v2149
        %v2152 = vunpack.c.l.s4 1983009808
        %v2153 = vunpack.c.0.s8 %v2152
        %v2154 = vlaneseq
        %v2155 = vshrl.u32 %v2154, 7
        %v2156 = vsub.s32 %v2153, %v2155
        %v2157 = vrot.slane %v2143, %v2156
        %v2158 = vcombine.low %v2135, %v2150
        %v2159 = vcombine.high %v2135, %v2150
        %v2161 = vunpack.c.l.s4 1934713408
        %v2162 = vunpack.c.0.s8 %v2161
        %v2163 = vlaneseq
        %v2164 = vshrl.u32 %v2163, 7
        %v2165 = vsub.s32 %v2162, %v2164
        %v2166 = vrot.slane %v2158, %v2165
        %v2168 = vunpack.c.l.s4 1934713408
        %v2169 = vunpack.c.0.s8 %v2168
        %v2170 = vlaneseq
        %v2171 = vshrl.u32 %v2170, 7
        %v2172 = vsub.s32 %v2169, %v2171
        %v2173 = vrot.slane %v2159, %v2172
        %v2174 = vcombine.low %v2142, %v2157
        %v2175 = vcombine.high %v2142, %v2157
        %v2177 = vunpack.c.l.s4 1934713408
        %v2178 = vunpack.c.0.s8 %v2177
        %v2179 = vlaneseq
        %v2180 = vshrl.u32 %v2179, 7
        %v2181 = vsub.s32 %v2178, %v2180
        %v2182 = vrot.slane %v2174, %v2181
        %v2184 = vunpack.c.l.s4 1934713408
        %v2185 = vunpack.c.0.s8 %v2184
        %v2186 = vlaneseq
        %v2187 = vshrl.u32 %v2186, 7
        %v2188 = vsub.s32 %v2185, %v2187
        %v2189 = vrot.slane %v2175, %v2188
        %v2190 = vcombine.high %v2166, 0
        %v2191 = vcombine.high %v2173, 0
        %v2192 = vcombine.high %v2182, 0
        %v2193 = vcombine.high %v2189, 0
        %v2194 = vcombine.high %v1720, %v1681
        %v2196 = vunpack.c.l.s4 1983009808
        %v2197 = vunpack.c.0.s8 %v2196
        %v2198 = vlaneseq
        %v2199 = vshrl.u32 %v2198, 7
        %v2200 = vsub.s32 %v2197, %v2199
        %v2201 = vrot.slane %v1720, %v2200
        %v2203 = vunpack.c.l.s4 1983009808
        %v2204 = vunpack.c.0.s8 %v2203
        %v2205 = vlaneseq
        %v2206 = vshrl.u32 %v2205, 7
        %v2207 = vsub.s32 %v2204, %v2206
        %v2208 = vrot.slane %v2194, %v2207
        %v2209 = vcombine.high %v1728, %v1681
        %v2211 = vunpack.c.l.s4 1983009808
        %v2212 = vunpack.c.0.s8 %v2211
        %v2213 = vlaneseq
        %v2214 = vshrl.u32 %v2213, 7
        %v2215 = vsub.s32 %v2212, %v2214
        %v2216 = vrot.slane %v1728, %v2215
        %v2218 = vunpack.c.l.s4 1983009808
        %v2219 = vunpack.c.0.s8 %v2218
        %v2220 = vlaneseq
        %v2221 = vshrl.u32 %v2220, 7
        %v2222 = vsub.s32 %v2219, %v2221
        %v2223 = vrot.slane %v2209, %v2222
        %v2224 = vcombine.low %v2201, %v2216
        %v2225 = vcombine.high %v2201, %v2216
        %v2227 = vunpack.c.l.s4 1934713408
        %v2228 = vunpack.c.0.s8 %v2227
        %v2229 = vlaneseq
        %v2230 = vshrl.u32 %v2229, 7
        %v2231 = vsub.s32 %v2228, %v2230
        %v2232 = vrot.slane %v2224, %v2231
        %v2234 = vunpack.c.l.s4 1934713408
        %v2235 = vunpack.c.0.s8 %v2234
        %v2236 = vlaneseq
        %v2237 = vshrl.u32 %v2236, 7
        %v2238 = vsub.s32 %v2235, %v2237
        %v2239 = vrot.slane %v2225, %v2238
        %v2240 = vcombine.low %v2208, %v2223
        %v2241 = vcombine.high %v2208, %v2223
        %v2243 = vunpack.c.l.s4 1934713408
        %v2244 = vunpack.c.0.s8 %v2243
        %v2245 = vlaneseq
        %v2246 = vshrl.u32 %v2245, 7
        %v2247 = vsub.s32 %v2244, %v2246
        %v2248 = vrot.slane %v2240, %v2247
        %v2250 = vunpack.c.l.s4 1934713408
        %v2251 = vunpack.c.0.s8 %v2250
        %v2252 = vlaneseq
        %v2253 = vshrl.u32 %v2252, 7
        %v2254 = vsub.s32 %v2251, %v2253
        %v2255 = vrot.slane %v2241, %v2254
        %v2256 = vcombine.high %v2232, 0
        %v2257 = vcombine.high %v2239, 0
        %v2258 = vcombine.high %v2248, 0
        %v2259 = vcombine.high %v2255, 0
        %v2260 = vcombine.high %v1724, %v1684
        %v2262 = vunpack.c.l.s4 1983009808
        %v2263 = vunpack.c.0.s8 %v2262
        %v2264 = vlaneseq
        %v2265 = vshrl.u32 %v2264, 7
        %v2266 = vsub.s32 %v2263, %v2265
        %v2267 = vrot.slane %v1724, %v2266
        %v2269 = vunpack.c.l.s4 1983009808
        %v2270 = vunpack.c.0.s8 %v2269
        %v2271 = vlaneseq
        %v2272 = vshrl.u32 %v2271, 7
        %v2273 = vsub.s32 %v2270, %v2272
        %v2274 = vrot.slane %v2260, %v2273
        %v2275 = vcombine.high %v1732, %v1684
        %v2277 = vunpack.c.l.s4 1983009808
        %v2278 = vunpack.c.0.s8 %v2277
        %v2279 = vlaneseq
        %v2280 = vshrl.u32 %v2279, 7
        %v2281 = vsub.s32 %v2278, %v2280
        %v2282 = vrot.slane %v1732, %v2281
        %v2284 = vunpack.c.l.s4 1983009808
        %v2285 = vunpack.c.0.s8 %v2284
        %v2286 = vlaneseq
        %v2287 = vshrl.u32 %v2286, 7
        %v2288 = vsub.s32 %v2285, %v2287
        %v2289 = vrot.slane %v2275, %v2288
        %v2290 = vcombine.low %v2267, %v2282
        %v2291 = vcombine.high %v2267, %v2282
        %v2293 = vunpack.c.l.s4 1934713408
        %v2294 = vunpack.c.0.s8 %v2293
        %v2295 = vlaneseq
        %v2296 = vshrl.u32 %v2295, 7
        %v2297 = vsub.s32 %v2294, %v2296
        %v2298 = vrot.slane %v2290, %v2297
        %v2300 = vunpack.c.l.s4 1934713408
        %v2301 = vunpack.c.0.s8 %v2300
        %v2302 = vlaneseq
        %v2303 = vshrl.u32 %v2302, 7
        %v2304 = vsub.s32 %v2301, %v2303
        %v2305 = vrot.slane %v2291, %v2304
        %v2306 = vcombine.low %v2274, %v2289
        %v2307 = vcombine.high %v2274, %v2289
        %v2309 = vunpack.c.l.s4 1934713408
        %v2310 = vunpack.c.0.s8 %v2309
        %v2311 = vlaneseq
        %v2312 = vshrl.u32 %v2311, 7
        %v2313 = vsub.s32 %v2310, %v2312
        %v2314 = vrot.slane %v2306, %v2313
        %v2316 = vunpack.c.l.s4 1934713408
        %v2317 = vunpack.c.0.s8 %v2316
        %v2318 = vlaneseq
        %v2319 = vshrl.u32 %v2318, 7
        %v2320 = vsub.s32 %v2317, %v2319
        %v2321 = vrot.slane %v2307, %v2320
        %v2322 = vcombine.high %v2298, 0
        %v2323 = vcombine.high %v2305, 0
        %v2324 = vcombine.high %v2314, 0
        %v2325 = vcombine.high %v2321, 0
        %v2326 = vcombine.high %v1736, %v1681
        %v2328 = vunpack.c.l.s4 1983009808
        %v2329 = vunpack.c.0.s8 %v2328
        %v2330 = vlaneseq
        %v2331 = vshrl.u32 %v2330, 7
        %v2332 = vsub.s32 %v2329, %v2331
        %v2333 = vrot.slane %v1736, %v2332
        %v2335 = vunpack.c.l.s4 1983009808
        %v2336 = vunpack.c.0.s8 %v2335
        %v2337 = vlaneseq
        %v2338 = vshrl.u32 %v2337, 7
        %v2339 = vsub.s32 %v2336, %v2338
        %v2340 = vrot.slane %v2326, %v2339
        %v2341 = vcombine.high %v1744, %v1681
        %v2343 = vunpack.c.l.s4 1983009808
        %v2344 = vunpack.c.0.s8 %v2343
        %v2345 = vlaneseq
        %v2346 = vshrl.u32 %v2345, 7
        %v2347 = vsub.s32 %v2344, %v2346
        %v2348 = vrot.slane %v1744, %v2347
        %v2350 = vunpack.c.l.s4 1983009808
        %v2351 = vunpack.c.0.s8 %v2350
        %v2352 = vlaneseq
        %v2353 = vshrl.u32 %v2352, 7
        %v2354 = vsub.s32 %v2351, %v2353
        %v2355 = vrot.slane %v2341, %v2354
        %v2356 = vcombine.low %v2333, %v2348
        %v2357 = vcombine.high %v2333, %v2348
        %v2359 = vunpack.c.l.s4 1934713408
        %v2360 = vunpack.c.0.s8 %v2359
        %v2361 = vlaneseq
        %v2362 = vshrl.u32 %v2361, 7
        %v2363 = vsub.s32 %v2360, %v2362
        %v2364 = vrot.slane %v2356, %v2363
        %v2366 = vunpack.c.l.s4 1934713408
        %v2367 = vunpack.c.0.s8 %v2366
        %v2368 = vlaneseq
        %v2369 = vshrl.u32 %v2368, 7
        %v2370 = vsub.s32 %v2367, %v2369
        %v2371 = vrot.slane %v2357, %v2370
        %v2372 = vcombine.low %v2340, %v2355
        %v2373 = vcombine.high %v2340, %v2355
        %v2375 = vunpack.c.l.s4 1934713408
        %v2376 = vunpack.c.0.s8 %v2375
        %v2377 = vlaneseq
        %v2378 = vshrl.u32 %v2377, 7
        %v2379 = vsub.s32 %v2376, %v2378
        %v2380 = vrot.slane %v2372, %v2379
        %v2382 = vunpack.c.l.s4 1934713408
        %v2383 = vunpack.c.0.s8 %v2382
        %v2384 = vlaneseq
        %v2385 = vshrl.u32 %v2384, 7
        %v2386 = vsub.s32 %v2383, %v2385
        %v2387 = vrot.slane %v2373, %v2386
        %v2388 = vcombine.high %v2364, 0
        %v2389 = vcombine.high %v2371, 0
        %v2390 = vcombine.high %v2380, 0
        %v2391 = vcombine.high %v2387, 0
        %v2392 = vcombine.high %v1740, %v1684
        %v2394 = vunpack.c.l.s4 1983009808
        %v2395 = vunpack.c.0.s8 %v2394
        %v2396 = vlaneseq
        %v2397 = vshrl.u32 %v2396, 7
        %v2398 = vsub.s32 %v2395, %v2397
        %v2399 = vrot.slane %v1740, %v2398
        %v2401 = vunpack.c.l.s4 1983009808
        %v2402 = vunpack.c.0.s8 %v2401
        %v2403 = vlaneseq
        %v2404 = vshrl.u32 %v2403, 7
        %v2405 = vsub.s32 %v2402, %v2404
        %v2406 = vrot.slane %v2392, %v2405
        %v2407 = vcombine.high %v1748, %v1684
        %v2409 = vunpack.c.l.s4 1983009808
        %v2410 = vunpack.c.0.s8 %v2409
        %v2411 = vlaneseq
        %v2412 = vshrl.u32 %v2411, 7
        %v2413 = vsub.s32 %v2410, %v2412
        %v2414 = vrot.slane %v1748, %v2413
        %v2416 = vunpack.c.l.s4 1983009808
        %v2417 = vunpack.c.0.s8 %v2416
        %v2418 = vlaneseq
        %v2419 = vshrl.u32 %v2418, 7
        %v2420 = vsub.s32 %v2417, %v2419
        %v2421 = vrot.slane %v2407, %v2420
        %v2422 = vcombine.low %v2399, %v2414
        %v2423 = vcombine.high %v2399, %v2414
        %v2425 = vunpack.c.l.s4 1934713408
        %v2426 = vunpack.c.0.s8 %v2425
        %v2427 = vlaneseq
        %v2428 = vshrl.u32 %v2427, 7
        %v2429 = vsub.s32 %v2426, %v2428
        %v2430 = vrot.slane %v2422, %v2429
        %v2432 = vunpack.c.l.s4 1934713408
        %v2433 = vunpack.c.0.s8 %v2432
        %v2434 = vlaneseq
        %v2435 = vshrl.u32 %v2434, 7
        %v2436 = vsub.s32 %v2433, %v2435
        %v2437 = vrot.slane %v2423, %v2436
        %v2438 = vcombine.low %v2406, %v2421
        %v2439 = vcombine.high %v2406, %v2421
        %v2441 = vunpack.c.l.s4 1934713408
        %v2442 = vunpack.c.0.s8 %v2441
        %v2443 = vlaneseq
        %v2444 = vshrl.u32 %v2443, 7
        %v2445 = vsub.s32 %v2442, %v2444
        %v2446 = vrot.slane %v2438, %v2445
        %v2448 = vunpack.c.l.s4 1934713408
        %v2449 = vunpack.c.0.s8 %v2448
        %v2450 = vlaneseq
        %v2451 = vshrl.u32 %v2450, 7
        %v2452 = vsub.s32 %v2449, %v2451
        %v2453 = vrot.slane %v2439, %v2452
        %v2454 = vcombine.high %v2430, 0
        %v2455 = vcombine.high %v2437, 0
        %v2456 = vcombine.high %v2446, 0
        %v2457 = vcombine.high %v2453, 0
        %v2458 = vcombine.high %v1752, %v1681
        %v2460 = vunpack.c.l.s4 1983009808
        %v2461 = vunpack.c.0.s8 %v2460
        %v2462 = vlaneseq
        %v2463 = vshrl.u32 %v2462, 7
        %v2464 = vsub.s32 %v2461, %v2463
        %v2465 = vrot.slane %v1752, %v2464
        %v2467 = vunpack.c.l.s4 1983009808
        %v2468 = vunpack.c.0.s8 %v2467
        %v2469 = vlaneseq
        %v2470 = vshrl.u32 %v2469, 7
        %v2471 = vsub.s32 %v2468, %v2470
        %v2472 = vrot.slane %v2458, %v2471
        %v2473 = vcombine.high %v1760, %v1681
        %v2475 = vunpack.c.l.s4 1983009808
        %v2476 = vunpack.c.0.s8 %v2475
        %v2477 = vlaneseq
        %v2478 = vshrl.u32 %v2477, 7
        %v2479 = vsub.s32 %v2476, %v2478
        %v2480 = vrot.slane %v1760, %v2479
        %v2482 = vunpack.c.l.s4 1983009808
        %v2483 = vunpack.c.0.s8 %v2482
        %v2484 = vlaneseq
        %v2485 = vshrl.u32 %v2484, 7
        %v2486 = vsub.s32 %v2483, %v2485
        %v2487 = vrot.slane %v2473, %v2486
        %v2488 = vcombine.low %v2465, %v2480
        %v2489 = vcombine.high %v2465, %v2480
        %v2491 = vunpack.c.l.s4 1934713408
        %v2492 = vunpack.c.0.s8 %v2491
        %v2493 = vlaneseq
        %v2494 = vshrl.u32 %v2493, 7
        %v2495 = vsub.s32 %v2492, %v2494
        %v2496 = vrot.slane %v2488, %v2495
        %v2498 = vunpack.c.l.s4 1934713408
        %v2499 = vunpack.c.0.s8 %v2498
        %v2500 = vlaneseq
        %v2501 = vshrl.u32 %v2500, 7
        %v2502 = vsub.s32 %v2499, %v2501
        %v2503 = vrot.slane %v2489, %v2502
        %v2504 = vcombine.low %v2472, %v2487
        %v2505 = vcombine.high %v2472, %v2487
        %v2507 = vunpack.c.l.s4 1934713408
        %v2508 = vunpack.c.0.s8 %v2507
        %v2509 = vlaneseq
        %v2510 = vshrl.u32 %v2509, 7
        %v2511 = vsub.s32 %v2508, %v2510
        %v2512 = vrot.slane %v2504, %v2511
        %v2514 = vunpack.c.l.s4 1934713408
        %v2515 = vunpack.c.0.s8 %v2514
        %v2516 = vlaneseq
        %v2517 = vshrl.u32 %v2516, 7
        %v2518 = vsub.s32 %v2515, %v2517
        %v2519 = vrot.slane %v2505, %v2518
        %v2520 = vcombine.high %v2496, 0
        %v2521 = vcombine.high %v2503, 0
        %v2522 = vcombine.high %v2512, 0
        %v2523 = vcombine.high %v2519, 0
        %v2524 = vcombine.high %v1756, %v1684
        %v2526 = vunpack.c.l.s4 1983009808
        %v2527 = vunpack.c.0.s8 %v2526
        %v2528 = vlaneseq
        %v2529 = vshrl.u32 %v2528, 7
        %v2530 = vsub.s32 %v2527, %v2529
        %v2531 = vrot.slane %v1756, %v2530
        %v2533 = vunpack.c.l.s4 1983009808
        %v2534 = vunpack.c.0.s8 %v2533
        %v2535 = vlaneseq
        %v2536 = vshrl.u32 %v2535, 7
        %v2537 = vsub.s32 %v2534, %v2536
        %v2538 = vrot.slane %v2524, %v2537
        %v2539 = vcombine.high %v1764, %v1684
        %v2541 = vunpack.c.l.s4 1983009808
        %v2542 = vunpack.c.0.s8 %v2541
        %v2543 = vlaneseq
        %v2544 = vshrl.u32 %v2543, 7
        %v2545 = vsub.s32 %v2542, %v2544
        %v2546 = vrot.slane %v1764, %v2545
        %v2548 = vunpack.c.l.s4 1983009808
        %v2549 = vunpack.c.0.s8 %v2548
        %v2550 = vlaneseq
        %v2551 = vshrl.u32 %v2550, 7
        %v2552 = vsub.s32 %v2549, %v2551
        %v2553 = vrot.slane %v2539, %v2552
        %v2554 = vcombine.low %v2531, %v2546
        %v2555 = vcombine.high %v2531, %v2546
        %v2557 = vunpack.c.l.s4 1934713408
        %v2558 = vunpack.c.0.s8 %v2557
        %v2559 = vlaneseq
        %v2560 = vshrl.u32 %v2559, 7
        %v2561 = vsub.s32 %v2558, %v2560
        %v2562 = vrot.slane %v2554, %v2561
        %v2564 = vunpack.c.l.s4 1934713408
        %v2565 = vunpack.c.0.s8 %v2564
        %v2566 = vlaneseq
        %v2567 = vshrl.u32 %v2566, 7
        %v2568 = vsub.s32 %v2565, %v2567
        %v2569 = vrot.slane %v2555, %v2568
        %v2570 = vcombine.low %v2538, %v2553
        %v2571 = vcombine.high %v2538, %v2553
        %v2573 = vunpack.c.l.s4 1934713408
        %v2574 = vunpack.c.0.s8 %v2573
        %v2575 = vlaneseq
        %v2576 = vshrl.u32 %v2575, 7
        %v2577 = vsub.s32 %v2574, %v2576
        %v2578 = vrot.slane %v2570, %v2577
        %v2580 = vunpack.c.l.s4 1934713408
        %v2581 = vunpack.c.0.s8 %v2580
        %v2582 = vlaneseq
        %v2583 = vshrl.u32 %v2582, 7
        %v2584 = vsub.s32 %v2581, %v2583
        %v2585 = vrot.slane %v2571, %v2584
        %v2586 = vcombine.high %v2562, 0
        %v2587 = vcombine.high %v2569, 0
        %v2588 = vcombine.high %v2578, 0
        %v2589 = vcombine.high %v2585, 0
        %v2590 = vcombine.high %v1768, %v1681
        %v2592 = vunpack.c.l.s4 1983009808
        %v2593 = vunpack.c.0.s8 %v2592
        %v2594 = vlaneseq
        %v2595 = vshrl.u32 %v2594, 7
        %v2596 = vsub.s32 %v2593, %v2595
        %v2597 = vrot.slane %v1768, %v2596
        %v2599 = vunpack.c.l.s4 1983009808
        %v2600 = vunpack.c.0.s8 %v2599
        %v2601 = vlaneseq
        %v2602 = vshrl.u32 %v2601, 7
        %v2603 = vsub.s32 %v2600, %v2602
        %v2604 = vrot.slane %v2590, %v2603
        %v2605 = vcombine.high %v1776, %v1681
        %v2607 = vunpack.c.l.s4 1983009808
        %v2608 = vunpack.c.0.s8 %v2607
        %v2609 = vlaneseq
        %v2610 = vshrl.u32 %v2609, 7
        %v2611 = vsub.s32 %v2608, %v2610
        %v2612 = vrot.slane %v1776, %v2611
        %v2614 = vunpack.c.l.s4 1983009808
        %v2615 = vunpack.c.0.s8 %v2614
        %v2616 = vlaneseq
        %v2617 = vshrl.u32 %v2616, 7
        %v2618 = vsub.s32 %v2615, %v2617
        %v2619 = vrot.slane %v2605, %v2618
        %v2620 = vcombine.low %v2597, %v2612
        %v2621 = vcombine.high %v2597, %v2612
        %v2623 = vunpack.c.l.s4 1934713408
        %v2624 = vunpack.c.0.s8 %v2623
        %v2625 = vlaneseq
        %v2626 = vshrl.u32 %v2625, 7
        %v2627 = vsub.s32 %v2624, %v2626
        %v2628 = vrot.slane %v2620, %v2627
        %v2630 = vunpack.c.l.s4 1934713408
        %v2631 = vunpack.c.0.s8 %v2630
        %v2632 = vlaneseq
        %v2633 = vshrl.u32 %v2632, 7
        %v2634 = vsub.s32 %v2631, %v2633
        %v2635 = vrot.slane %v2621, %v2634
        %v2636 = vcombine.low %v2604, %v2619
        %v2637 = vcombine.high %v2604, %v2619
        %v2639 = vunpack.c.l.s4 1934713408
        %v2640 = vunpack.c.0.s8 %v2639
        %v2641 = vlaneseq
        %v2642 = vshrl.u32 %v2641, 7
        %v2643 = vsub.s32 %v2640, %v2642
        %v2644 = vrot.slane %v2636, %v2643
        %v2646 = vunpack.c.l.s4 1934713408
        %v2647 = vunpack.c.0.s8 %v2646
        %v2648 = vlaneseq
        %v2649 = vshrl.u32 %v2648, 7
        %v2650 = vsub.s32 %v2647, %v2649
        %v2651 = vrot.slane %v2637, %v2650
        %v2652 = vcombine.high %v2628, 0
        %v2653 = vcombine.high %v2635, 0
        %v2654 = vcombine.high %v2644, 0
        %v2655 = vcombine.high %v2651, 0
        %v2656 = vcombine.high %v1772, %v1684
        %v2658 = vunpack.c.l.s4 1983009808
        %v2659 = vunpack.c.0.s8 %v2658
        %v2660 = vlaneseq
        %v2661 = vshrl.u32 %v2660, 7
        %v2662 = vsub.s32 %v2659, %v2661
        %v2663 = vrot.slane %v1772, %v2662
        %v2665 = vunpack.c.l.s4 1983009808
        %v2666 = vunpack.c.0.s8 %v2665
        %v2667 = vlaneseq
        %v2668 = vshrl.u32 %v2667, 7
        %v2669 = vsub.s32 %v2666, %v2668
        %v2670 = vrot.slane %v2656, %v2669
        %v2671 = vcombine.high %v1780, %v1684
        %v2673 = vunpack.c.l.s4 1983009808
        %v2674 = vunpack.c.0.s8 %v2673
        %v2675 = vlaneseq
        %v2676 = vshrl.u32 %v2675, 7
        %v2677 = vsub.s32 %v2674, %v2676
        %v2678 = vrot.slane %v1780, %v2677
        %v2680 = vunpack.c.l.s4 1983009808
        %v2681 = vunpack.c.0.s8 %v2680
        %v2682 = vlaneseq
        %v2683 = vshrl.u32 %v2682, 7
        %v2684 = vsub.s32 %v2681, %v2683
        %v2685 = vrot.slane %v2671, %v2684
        %v2686 = vcombine.low %v2663, %v2678
        %v2687 = vcombine.high %v2663, %v2678
        %v2689 = vunpack.c.l.s4 1934713408
        %v2690 = vunpack.c.0.s8 %v2689
        %v2691 = vlaneseq
        %v2692 = vshrl.u32 %v2691, 7
        %v2693 = vsub.s32 %v2690, %v2692
        %v2694 = vrot.slane %v2686, %v2693
        %v2696 = vunpack.c.l.s4 1934713408
        %v2697 = vunpack.c.0.s8 %v2696
        %v2698 = vlaneseq
        %v2699 = vshrl.u32 %v2698, 7
        %v2700 = vsub.s32 %v2697, %v2699
        %v2701 = vrot.slane %v2687, %v2700
        %v2702 = vcombine.low %v2670, %v2685
        %v2703 = vcombine.high %v2670, %v2685
        %v2705 = vunpack.c.l.s4 1934713408
        %v2706 = vunpack.c.0.s8 %v2705
        %v2707 = vlaneseq
        %v2708 = vshrl.u32 %v2707, 7
        %v2709 = vsub.s32 %v2706, %v2708
        %v2710 = vrot.slane %v2702, %v2709
        %v2712 = vunpack.c.l.s4 1934713408
        %v2713 = vunpack.c.0.s8 %v2712
        %v2714 = vlaneseq
        %v2715 = vshrl.u32 %v2714, 7
        %v2716 = vsub.s32 %v2713, %v2715
        %v2717 = vrot.slane %v2703, %v2716
        %v2718 = vcombine.high %v2694, 0
        %v2719 = vcombine.high %v2701, 0
        %v2720 = vcombine.high %v2710, 0
        %v2721 = vcombine.high %v2717, 0
        %v2722 = vcombine.high %v1784, %v1681
        %v2724 = vunpack.c.l.s4 1983009808
        %v2725 = vunpack.c.0.s8 %v2724
        %v2726 = vlaneseq
        %v2727 = vshrl.u32 %v2726, 7
        %v2728 = vsub.s32 %v2725, %v2727
        %v2729 = vrot.slane %v1784, %v2728
        %v2731 = vunpack.c.l.s4 1983009808
        %v2732 = vunpack.c.0.s8 %v2731
        %v2733 = vlaneseq
        %v2734 = vshrl.u32 %v2733, 7
        %v2735 = vsub.s32 %v2732, %v2734
        %v2736 = vrot.slane %v2722, %v2735
        %v2737 = vcombine.high %v1792, %v1681
        %v2739 = vunpack.c.l.s4 1983009808
        %v2740 = vunpack.c.0.s8 %v2739
        %v2741 = vlaneseq
        %v2742 = vshrl.u32 %v2741, 7
        %v2743 = vsub.s32 %v2740, %v2742
        %v2744 = vrot.slane %v1792, %v2743
        %v2746 = vunpack.c.l.s4 1983009808
        %v2747 = vunpack.c.0.s8 %v2746
        %v2748 = vlaneseq
        %v2749 = vshrl.u32 %v2748, 7
        %v2750 = vsub.s32 %v2747, %v2749
        %v2751 = vrot.slane %v2737, %v2750
        %v2752 = vcombine.low %v2729, %v2744
        %v2753 = vcombine.high %v2729, %v2744
        %v2755 = vunpack.c.l.s4 1934713408
        %v2756 = vunpack.c.0.s8 %v2755
        %v2757 = vlaneseq
        %v2758 = vshrl.u32 %v2757, 7
        %v2759 = vsub.s32 %v2756, %v2758
        %v2760 = vrot.slane %v2752, %v2759
        %v2762 = vunpack.c.l.s4 1934713408
        %v2763 = vunpack.c.0.s8 %v2762
        %v2764 = vlaneseq
        %v2765 = vshrl.u32 %v2764, 7
        %v2766 = vsub.s32 %v2763, %v2765
        %v2767 = vrot.slane %v2753, %v2766
        %v2768 = vcombine.low %v2736, %v2751
        %v2769 = vcombine.high %v2736, %v2751
        %v2771 = vunpack.c.l.s4 1934713408
        %v2772 = vunpack.c.0.s8 %v2771
        %v2773 = vlaneseq
        %v2774 = vshrl.u32 %v2773, 7
        %v2775 = vsub.s32 %v2772, %v2774
        %v2776 = vrot.slane %v2768, %v2775
        %v2778 = vunpack.c.l.s4 1934713408
        %v2779 = vunpack.c.0.s8 %v2778
        %v2780 = vlaneseq
        %v2781 = vshrl.u32 %v2780, 7
        %v2782 = vsub.s32 %v2779, %v2781
        %v2783 = vrot.slane %v2769, %v2782
        %v2784 = vcombine.high %v2760, 0
        %v2785 = vcombine.high %v2767, 0
        %v2786 = vcombine.high %v2776, 0
        %v2787 = vcombine.high %v2783, 0
        %v2788 = vcombine.high %v1788, %v1684
        %v2790 = vunpack.c.l.s4 1983009808
        %v2791 = vunpack.c.0.s8 %v2790
        %v2792 = vlaneseq
        %v2793 = vshrl.u32 %v2792, 7
        %v2794 = vsub.s32 %v2791, %v2793
        %v2795 = vrot.slane %v1788, %v2794
        %v2797 = vunpack.c.l.s4 1983009808
        %v2798 = vunpack.c.0.s8 %v2797
        %v2799 = vlaneseq
        %v2800 = vshrl.u32 %v2799, 7
        %v2801 = vsub.s32 %v2798, %v2800
        %v2802 = vrot.slane %v2788, %v2801
        %v2803 = vcombine.high %v1796, %v1684
        %v2805 = vunpack.c.l.s4 1983009808
        %v2806 = vunpack.c.0.s8 %v2805
        %v2807 = vlaneseq
        %v2808 = vshrl.u32 %v2807, 7
        %v2809 = vsub.s32 %v2806, %v2808
        %v2810 = vrot.slane %v1796, %v2809
        %v2812 = vunpack.c.l.s4 1983009808
        %v2813 = vunpack.c.0.s8 %v2812
        %v2814 = vlaneseq
        %v2815 = vshrl.u32 %v2814, 7
        %v2816 = vsub.s32 %v2813, %v2815
        %v2817 = vrot.slane %v2803, %v2816
        %v2818 = vcombine.low %v2795, %v2810
        %v2819 = vcombine.high %v2795, %v2810
        %v2821 = vunpack.c.l.s4 1934713408
        %v2822 = vunpack.c.0.s8 %v2821
        %v2823 = vlaneseq
        %v2824 = vshrl.u32 %v2823, 7
        %v2825 = vsub.s32 %v2822, %v2824
        %v2826 = vrot.slane %v2818, %v2825
        %v2828 = vunpack.c.l.s4 1934713408
        %v2829 = vunpack.c.0.s8 %v2828
        %v2830 = vlaneseq
        %v2831 = vshrl.u32 %v2830, 7
        %v2832 = vsub.s32 %v2829, %v2831
        %v2833 = vrot.slane %v2819, %v2832
        %v2834 = vcombine.low %v2802, %v2817
        %v2835 = vcombine.high %v2802, %v2817
        %v2837 = vunpack.c.l.s4 1934713408
        %v2838 = vunpack.c.0.s8 %v2837
        %v2839 = vlaneseq
        %v2840 = vshrl.u32 %v2839, 7
        %v2841 = vsub.s32 %v2838, %v2840
        %v2842 = vrot.slane %v2834, %v2841
        %v2844 = vunpack.c.l.s4 1934713408
        %v2845 = vunpack.c.0.s8 %v2844
        %v2846 = vlaneseq
        %v2847 = vshrl.u32 %v2846, 7
        %v2848 = vsub.s32 %v2845, %v2847
        %v2849 = vrot.slane %v2835, %v2848
        %v2850 = vcombine.high %v2826, 0
        %v2851 = vcombine.high %v2833, 0
        %v2852 = vcombine.high %v2842, 0
        %v2853 = vcombine.high %v2849, 0
        %v2854 = vcombine.low %v1836, %v1843
        %v2856 = vunpack.c.l.s4 1983009808
        %v2857 = vunpack.c.0.s8 %v2856
        %v2858 = vlaneseq
        %v2859 = vshrl.u32 %v2858, 7
        %v2860 = vsub.s32 %v2857, %v2859
        %v2861 = vrot.slane %v2854, %v2860
        %v2862 = vcombine.low %v1860, %v1861
        %v2864 = vunpack.c.l.s4 1983009808
        %v2865 = vunpack.c.0.s8 %v2864
        %v2866 = vlaneseq
        %v2867 = vshrl.u32 %v2866, 7
        %v2868 = vsub.s32 %v2865, %v2867
        %v2869 = vrot.slane %v2862, %v2868
        %v2870 = vcombine.low %v1852, %v1859
        %v2872 = vunpack.c.l.s4 1983009808
        %v2873 = vunpack.c.0.s8 %v2872
        %v2874 = vlaneseq
        %v2875 = vshrl.u32 %v2874, 7
        %v2876 = vsub.s32 %v2873, %v2875
        %v2877 = vrot.slane %v2870, %v2876
        %v2878 = vcombine.low %v1862, %v1863
        %v2880 = vunpack.c.l.s4 1983009808
        %v2881 = vunpack.c.0.s8 %v2880
        %v2882 = vlaneseq
        %v2883 = vshrl.u32 %v2882, 7
        %v2884 = vsub.s32 %v2881, %v2883
        %v2885 = vrot.slane %v2878, %v2884
        %v2886 = vcombine.low %v2861, %v2869
        %v2888 = vunpack.c.l.s4 1934713408
        %v2889 = vunpack.c.0.s8 %v2888
        %v2890 = vlaneseq
        %v2891 = vshrl.u32 %v2890, 7
        %v2892 = vsub.s32 %v2889, %v2891
        %v2893 = vrot.slane %v2886, %v2892
        %v2894 = vcombine.low %v2877, %v2885
        %v2896 = vunpack.c.l.s4 1934713408
        %v2897 = vunpack.c.0.s8 %v2896
        %v2898 = vlaneseq
        %v2899 = vshrl.u32 %v2898, 7
        %v2900 = vsub.s32 %v2897, %v2899
        %v2901 = vrot.slane %v2894, %v2900
        %v2902 = vcombine.low %v2893, %v2901
        %v2903 = vcombine.high %v2893, %v2901
        %v2904 = vcombine.low %v1902, %v1909
        %v2906 = vunpack.c.l.s4 1983009808
        %v2907 = vunpack.c.0.s8 %v2906
        %v2908 = vlaneseq
        %v2909 = vshrl.u32 %v2908, 7
        %v2910 = vsub.s32 %v2907, %v2909
        %v2911 = vrot.slane %v2904, %v2910
        %v2912 = vcombine.low %v1926, %v1927
        %v2914 = vunpack.c.l.s4 1983009808
        %v2915 = vunpack.c.0.s8 %v2914
        %v2916 = vlaneseq
        %v2917 = vshrl.u32 %v2916, 7
        %v2918 = vsub.s32 %v2915, %v2917
        %v2919 = vrot.slane %v2912, %v2918
        %v2920 = vcombine.low %v1918, %v1925
        %v2922 = vunpack.c.l.s4 1983009808
        %v2923 = vunpack.c.0.s8 %v2922
        %v2924 = vlaneseq
        %v2925 = vshrl.u32 %v2924, 7
        %v2926 = vsub.s32 %v2923, %v2925
        %v2927 = vrot.slane %v2920, %v2926
        %v2928 = vcombine.low %v1928, %v1929
        %v2930 = vunpack.c.l.s4 1983009808
        %v2931 = vunpack.c.0.s8 %v2930
        %v2932 = vlaneseq
        %v2933 = vshrl.u32 %v2932, 7
        %v2934 = vsub.s32 %v2931, %v2933
        %v2935 = vrot.slane %v2928, %v2934
        %v2936 = vcombine.low %v2911, %v2919
        %v2938 = vunpack.c.l.s4 1934713408
        %v2939 = vunpack.c.0.s8 %v2938
        %v2940 = vlaneseq
        %v2941 = vshrl.u32 %v2940, 7
        %v2942 = vsub.s32 %v2939, %v2941
        %v2943 = vrot.slane %v2936, %v2942
        %v2944 = vcombine.low %v2927, %v2935
        %v2946 = vunpack.c.l.s4 1934713408
        %v2947 = vunpack.c.0.s8 %v2946
        %v2948 = vlaneseq
        %v2949 = vshrl.u32 %v2948, 7
        %v2950 = vsub.s32 %v2947, %v2949
        %v2951 = vrot.slane %v2944, %v2950
        %v2952 = vcombine.low %v2943, %v2951
        %v2953 = vcombine.high %v2943, %v2951
        %v2954 = vcombine.low %v1968, %v1975
        %v2956 = vunpack.c.l.s4 1983009808
        %v2957 = vunpack.c.0.s8 %v2956
        %v2958 = vlaneseq
        %v2959 = vshrl.u32 %v2958, 7
        %v2960 = vsub.s32 %v2957, %v2959
        %v2961 = vrot.slane %v2954, %v2960
        %v2962 = vcombine.low %v1992, %v1993
        %v2964 = vunpack.c.l.s4 1983009808
        %v2965 = vunpack.c.0.s8 %v2964
        %v2966 = vlaneseq
        %v2967 = vshrl.u32 %v2966, 7
        %v2968 = vsub.s32 %v2965, %v2967
        %v2969 = vrot.slane %v2962, %v2968
        %v2970 = vcombine.low %v1984, %v1991
        %v2972 = vunpack.c.l.s4 1983009808
        %v2973 = vunpack.c.0.s8 %v2972
        %v2974 = vlaneseq
        %v2975 = vshrl.u32 %v2974, 7
        %v2976 = vsub.s32 %v2973, %v2975
        %v2977 = vrot.slane %v2970, %v2976
        %v2978 = vcombine.low %v1994, %v1995
        %v2980 = vunpack.c.l.s4 1983009808
        %v2981 = vunpack.c.0.s8 %v2980
        %v2982 = vlaneseq
        %v2983 = vshrl.u32 %v2982, 7
        %v2984 = vsub.s32 %v2981, %v2983
        %v2985 = vrot.slane %v2978, %v2984
        %v2986 = vcombine.low %v2961, %v2969
        %v2988 = vunpack.c.l.s4 1934713408
        %v2989 = vunpack.c.0.s8 %v2988
        %v2990 = vlaneseq
        %v2991 = vshrl.u32 %v2990, 7
        %v2992 = vsub.s32 %v2989, %v2991
        %v2993 = vrot.slane %v2986, %v2992
        %v2994 = vcombine.low %v2977, %v2985
        %v2996 = vunpack.c.l.s4 1934713408
        %v2997 = vunpack.c.0.s8 %v2996
        %v2998 = vlaneseq
        %v2999 = vshrl.u32 %v2998, 7
        %v3000 = vsub.s32 %v2997, %v2999
        %v3001 = vrot.slane %v2994, %v3000
        %v3002 = vcombine.low %v2993, %v3001
        %v3003 = vcombine.high %v2993, %v3001
        %v3004 = vcombine.low %v2034, %v2041
        %v3006 = vunpack.c.l.s4 1983009808
        %v3007 = vunpack.c.0.s8 %v3006
        %v3008 = vlaneseq
        %v3009 = vshrl.u32 %v3008, 7
        %v3010 = vsub.s32 %v3007, %v3009
        %v3011 = vrot.slane %v3004, %v3010
        %v3012 = vcombine.low %v2058, %v2059
        %v3014 = vunpack.c.l.s4 1983009808
        %v3015 = vunpack.c.0.s8 %v3014
        %v3016 = vlaneseq
        %v3017 = vshrl.u32 %v3016, 7
        %v3018 = vsub.s32 %v3015, %v3017
        %v3019 = vrot.slane %v3012, %v3018
        %v3020 = vcombine.low %v2050, %v2057
        %v3022 = vunpack.c.l.s4 1983009808
        %v3023 = vunpack.c.0.s8 %v3022
        %v3024 = vlaneseq
        %v3025 = vshrl.u32 %v3024, 7
        %v3026 = vsub.s32 %v3023, %v3025
        %v3027 = vrot.slane %v3020, %v3026
        %v3028 = vcombine.low %v2060, %v2061
        %v3030 = vunpack.c.l.s4 1983009808
        %v3031 = vunpack.c.0.s8 %v3030
        %v3032 = vlaneseq
        %v3033 = vshrl.u32 %v3032, 7
        %v3034 = vsub.s32 %v3031, %v3033
        %v3035 = vrot.slane %v3028, %v3034
        %v3036 = vcombine.low %v3011, %v3019
        %v3038 = vunpack.c.l.s4 1934713408
        %v3039 = vunpack.c.0.s8 %v3038
        %v3040 = vlaneseq
        %v3041 = vshrl.u32 %v3040, 7
        %v3042 = vsub.s32 %v3039, %v3041
        %v3043 = vrot.slane %v3036, %v3042
        %v3044 = vcombine.low %v3027, %v3035
        %v3046 = vunpack.c.l.s4 1934713408
        %v3047 = vunpack.c.0.s8 %v3046
        %v3048 = vlaneseq
        %v3049 = vshrl.u32 %v3048, 7
        %v3050 = vsub.s32 %v3047, %v3049
        %v3051 = vrot.slane %v3044, %v3050
        %v3052 = vcombine.low %v3043, %v3051
        %v3053 = vcombine.high %v3043, %v3051
        %v3054 = vcombine.low %v2100, %v2107
        %v3056 = vunpack.c.l.s4 1983009808
        %v3057 = vunpack.c.0.s8 %v3056
        %v3058 = vlaneseq
        %v3059 = vshrl.u32 %v3058, 7
        %v3060 = vsub.s32 %v3057, %v3059
        %v3061 = vrot.slane %v3054, %v3060
        %v3062 = vcombine.low %v2124, %v2125
        %v3064 = vunpack.c.l.s4 1983009808
        %v3065 = vunpack.c.0.s8 %v3064
        %v3066 = vlaneseq
        %v3067 = vshrl.u32 %v3066, 7
        %v3068 = vsub.s32 %v3065, %v3067
        %v3069 = vrot.slane %v3062, %v3068
        %v3070 = vcombine.low %v2116, %v2123
        %v3072 = vunpack.c.l.s4 1983009808
        %v3073 = vunpack.c.0.s8 %v3072
        %v3074 = vlaneseq
        %v3075 = vshrl.u32 %v3074, 7
        %v3076 = vsub.s32 %v3073, %v3075
        %v3077 = vrot.slane %v3070, %v3076
        %v3078 = vcombine.low %v2126, %v2127
        %v3080 = vunpack.c.l.s4 1983009808
        %v3081 = vunpack.c.0.s8 %v3080
        %v3082 = vlaneseq
        %v3083 = vshrl.u32 %v3082, 7
        %v3084 = vsub.s32 %v3081, %v3083
        %v3085 = vrot.slane %v3078, %v3084
        %v3086 = vcombine.low %v3061, %v3069
        %v3088 = vunpack.c.l.s4 1934713408
        %v3089 = vunpack.c.0.s8 %v3088
        %v3090 = vlaneseq
        %v3091 = vshrl.u32 %v3090, 7
        %v3092 = vsub.s32 %v3089, %v3091
        %v3093 = vrot.slane %v3086, %v3092
        %v3094 = vcombine.low %v3077, %v3085
        %v3096 = vunpack.c.l.s4 1934713408
        %v3097 = vunpack.c.0.s8 %v3096
        %v3098 = vlaneseq
        %v3099 = vshrl.u32 %v3098, 7
        %v3100 = vsub.s32 %v3097, %v3099
        %v3101 = vrot.slane %v3094, %v3100
        %v3102 = vcombine.low %v3093, %v3101
        %v3103 = vcombine.high %v3093, %v3101
        %v3104 = vcombine.low %v2166, %v2173
        %v3106 = vunpack.c.l.s4 1983009808
        %v3107 = vunpack.c.0.s8 %v3106
        %v3108 = vlaneseq
        %v3109 = vshrl.u32 %v3108, 7
        %v3110 = vsub.s32 %v3107, %v3109
        %v3111 = vrot.slane %v3104, %v3110
        %v3112 = vcombine.low %v2190, %v2191
        %v3114 = vunpack.c.l.s4 1983009808
        %v3115 = vunpack.c.0.s8 %v3114
        %v3116 = vlaneseq
        %v3117 = vshrl.u32 %v3116, 7
        %v3118 = vsub.s32 %v3115, %v3117
        %v3119 = vrot.slane %v3112, %v3118
        %v3120 = vcombine.low %v2182, %v2189
        %v3122 = vunpack.c.l.s4 1983009808
        %v3123 = vunpack.c.0.s8 %v3122
        %v3124 = vlaneseq
        %v3125 = vshrl.u32 %v3124, 7
        %v3126 = vsub.s32 %v3123, %v3125
        %v3127 = vrot.slane %v3120, %v3126
        %v3128 = vcombine.low %v2192, %v2193
        %v3130 = vunpack.c.l.s4 1983009808
        %v3131 = vunpack.c.0.s8 %v3130
        %v3132 = vlaneseq
        %v3133 = vshrl.u32 %v3132, 7
        %v3134 = vsub.s32 %v3131, %v3133
        %v3135 = vrot.slane %v3128, %v3134
        %v3136 = vcombine.low %v3111, %v3119
        %v3138 = vunpack.c.l.s4 1934713408
        %v3139 = vunpack.c.0.s8 %v3138
        %v3140 = vlaneseq
        %v3141 = vshrl.u32 %v3140, 7
        %v3142 = vsub.s32 %v3139, %v3141
        %v3143 = vrot.slane %v3136, %v3142
        %v3144 = vcombine.low %v3127, %v3135
        %v3146 = vunpack.c.l.s4 1934713408
        %v3147 = vunpack.c.0.s8 %v3146
        %v3148 = vlaneseq
        %v3149 = vshrl.u32 %v3148, 7
        %v3150 = vsub.s32 %v3147, %v3149
        %v3151 = vrot.slane %v3144, %v3150
        %v3152 = vcombine.low %v3143, %v3151
        %v3153 = vcombine.high %v3143, %v3151
        %v3154 = vcombine.low %v2232, %v2239
        %v3156 = vunpack.c.l.s4 1983009808
        %v3157 = vunpack.c.0.s8 %v3156
        %v3158 = vlaneseq
        %v3159 = vshrl.u32 %v3158, 7
        %v3160 = vsub.s32 %v3157, %v3159
        %v3161 = vrot.slane %v3154, %v3160
        %v3162 = vcombine.low %v2256, %v2257
        %v3164 = vunpack.c.l.s4 1983009808
        %v3165 = vunpack.c.0.s8 %v3164
        %v3166 = vlaneseq
        %v3167 = vshrl.u32 %v3166, 7
        %v3168 = vsub.s32 %v3165, %v3167
        %v3169 = vrot.slane %v3162, %v3168
        %v3170 = vcombine.low %v2248, %v2255
        %v3172 = vunpack.c.l.s4 1983009808
        %v3173 = vunpack.c.0.s8 %v3172
        %v3174 = vlaneseq
        %v3175 = vshrl.u32 %v3174, 7
        %v3176 = vsub.s32 %v3173, %v3175
        %v3177 = vrot.slane %v3170, %v3176
        %v3178 = vcombine.low %v2258, %v2259
        %v3180 = vunpack.c.l.s4 1983009808
        %v3181 = vunpack.c.0.s8 %v3180
        %v3182 = vlaneseq
        %v3183 = vshrl.u32 %v3182, 7
        %v3184 = vsub.s32 %v3181, %v3183
        %v3185 = vrot.slane %v3178, %v3184
        %v3186 = vcombine.low %v3161, %v3169
        %v3188 = vunpack.c.l.s4 1934713408
        %v3189 = vunpack.c.0.s8 %v3188
        %v3190 = vlaneseq
        %v3191 = vshrl.u32 %v3190, 7
        %v3192 = vsub.s32 %v3189, %v3191
        %v3193 = vrot.slane %v3186, %v3192
        %v3194 = vcombine.low %v3177, %v3185
        %v3196 = vunpack.c.l.s4 1934713408
        %v3197 = vunpack.c.0.s8 %v3196
        %v3198 = vlaneseq
        %v3199 = vshrl.u32 %v3198, 7
        %v3200 = vsub.s32 %v3197, %v3199
        %v3201 = vrot.slane %v3194, %v3200
        %v3202 = vcombine.low %v3193, %v3201
        %v3203 = vcombine.high %v3193, %v3201
        %v3204 = vcombine.low %v2298, %v2305
        %v3206 = vunpack.c.l.s4 1983009808
        %v3207 = vunpack.c.0.s8 %v3206
        %v3208 = vlaneseq
        %v3209 = vshrl.u32 %v3208, 7
        %v3210 = vsub.s32 %v3207, %v3209
        %v3211 = vrot.slane %v3204, %v3210
        %v3212 = vcombine.low %v2322, %v2323
        %v3214 = vunpack.c.l.s4 1983009808
        %v3215 = vunpack.c.0.s8 %v3214
        %v3216 = vlaneseq
        %v3217 = vshrl.u32 %v3216, 7
        %v3218 = vsub.s32 %v3215, %v3217
        %v3219 = vrot.slane %v3212, %v3218
        %v3220 = vcombine.low %v2314, %v2321
        %v3222 = vunpack.c.l.s4 1983009808
        %v3223 = vunpack.c.0.s8 %v3222
        %v3224 = vlaneseq
        %v3225 = vshrl.u32 %v3224, 7
        %v3226 = vsub.s32 %v3223, %v3225
        %v3227 = vrot.slane %v3220, %v3226
        %v3228 = vcombine.low %v2324, %v2325
        %v3230 = vunpack.c.l.s4 1983009808
        %v3231 = vunpack.c.0.s8 %v3230
        %v3232 = vlaneseq
        %v3233 = vshrl.u32 %v3232, 7
        %v3234 = vsub.s32 %v3231, %v3233
        %v3235 = vrot.slane %v3228, %v3234
        %v3236 = vcombine.low %v3211, %v3219
        %v3238 = vunpack.c.l.s4 1934713408
        %v3239 = vunpack.c.0.s8 %v3238
        %v3240 = vlaneseq
        %v3241 = vshrl.u32 %v3240, 7
        %v3242 = vsub.s32 %v3239, %v3241
        %v3243 = vrot.slane %v3236, %v3242
        %v3244 = vcombine.low %v3227, %v3235
        %v3246 = vunpack.c.l.s4 1934713408
        %v3247 = vunpack.c.0.s8 %v3246
        %v3248 = vlaneseq
        %v3249 = vshrl.u32 %v3248, 7
        %v3250 = vsub.s32 %v3247, %v3249
        %v3251 = vrot.slane %v3244, %v3250
        %v3252 = vcombine.low %v3243, %v3251
        %v3253 = vcombine.high %v3243, %v3251
        %v3254 = vcombine.low %v2364, %v2371
        %v3256 = vunpack.c.l.s4 1983009808
        %v3257 = vunpack.c.0.s8 %v3256
        %v3258 = vlaneseq
        %v3259 = vshrl.u32 %v3258, 7
        %v3260 = vsub.s32 %v3257, %v3259
        %v3261 = vrot.slane %v3254, %v3260
        %v3262 = vcombine.low %v2388, %v2389
        %v3264 = vunpack.c.l.s4 1983009808
        %v3265 = vunpack.c.0.s8 %v3264
        %v3266 = vlaneseq
        %v3267 = vshrl.u32 %v3266, 7
        %v3268 = vsub.s32 %v3265, %v3267
        %v3269 = vrot.slane %v3262, %v3268
        %v3270 = vcombine.low %v2380, %v2387
        %v3272 = vunpack.c.l.s4 1983009808
        %v3273 = vunpack.c.0.s8 %v3272
        %v3274 = vlaneseq
        %v3275 = vshrl.u32 %v3274, 7
        %v3276 = vsub.s32 %v3273, %v3275
        %v3277 = vrot.slane %v3270, %v3276
        %v3278 = vcombine.low %v2390, %v2391
        %v3280 = vunpack.c.l.s4 1983009808
        %v3281 = vunpack.c.0.s8 %v3280
        %v3282 = vlaneseq
        %v3283 = vshrl.u32 %v3282, 7
        %v3284 = vsub.s32 %v3281, %v3283
        %v3285 = vrot.slane %v3278, %v3284
        %v3286 = vcombine.low %v3261, %v3269
        %v3288 = vunpack.c.l.s4 1934713408
        %v3289 = vunpack.c.0.s8 %v3288
        %v3290 = vlaneseq
        %v3291 = vshrl.u32 %v3290, 7
        %v3292 = vsub.s32 %v3289, %v3291
        %v3293 = vrot.slane %v3286, %v3292
        %v3294 = vcombine.low %v3277, %v3285
        %v3296 = vunpack.c.l.s4 1934713408
        %v3297 = vunpack.c.0.s8 %v3296
        %v3298 = vlaneseq
        %v3299 = vshrl.u32 %v3298, 7
        %v3300 = vsub.s32 %v3297, %v3299
        %v3301 = vrot.slane %v3294, %v3300
        %v3302 = vcombine.low %v3293, %v3301
        %v3303 = vcombine.high %v3293, %v3301
        %v3304 = vcombine.low %v2430, %v2437
        %v3306 = vunpack.c.l.s4 1983009808
        %v3307 = vunpack.c.0.s8 %v3306
        %v3308 = vlaneseq
        %v3309 = vshrl.u32 %v3308, 7
        %v3310 = vsub.s32 %v3307, %v3309
        %v3311 = vrot.slane %v3304, %v3310
        %v3312 = vcombine.low %v2454, %v2455
        %v3314 = vunpack.c.l.s4 1983009808
        %v3315 = vunpack.c.0.s8 %v3314
        %v3316 = vlaneseq
        %v3317 = vshrl.u32 %v3316, 7
        %v3318 = vsub.s32 %v3315, %v3317
        %v3319 = vrot.slane %v3312, %v3318
        %v3320 = vcombine.low %v2446, %v2453
        %v3322 = vunpack.c.l.s4 1983009808
        %v3323 = vunpack.c.0.s8 %v3322
        %v3324 = vlaneseq
        %v3325 = vshrl.u32 %v3324, 7
        %v3326 = vsub.s32 %v3323, %v3325
        %v3327 = vrot.slane %v3320, %v3326
        %v3328 = vcombine.low %v2456, %v2457
        %v3330 = vunpack.c.l.s4 1983009808
        %v3331 = vunpack.c.0.s8 %v3330
        %v3332 = vlaneseq
        %v3333 = vshrl.u32 %v3332, 7
        %v3334 = vsub.s32 %v3331, %v3333
        %v3335 = vrot.slane %v3328, %v3334
        %v3336 = vcombine.low %v3311, %v3319
        %v3338 = vunpack.c.l.s4 1934713408
        %v3339 = vunpack.c.0.s8 %v3338
        %v3340 = vlaneseq
        %v3341 = vshrl.u32 %v3340, 7
        %v3342 = vsub.s32 %v3339, %v3341
        %v3343 = vrot.slane %v3336, %v3342
        %v3344 = vcombine.low %v3327, %v3335
        %v3346 = vunpack.c.l.s4 1934713408
        %v3347 = vunpack.c.0.s8 %v3346
        %v3348 = vlaneseq
        %v3349 = vshrl.u32 %v3348, 7
        %v3350 = vsub.s32 %v3347, %v3349
        %v3351 = vrot.slane %v3344, %v3350
        %v3352 = vcombine.low %v3343, %v3351
        %v3353 = vcombine.high %v3343, %v3351
        %v3354 = vcombine.low %v2496, %v2503
        %v3356 = vunpack.c.l.s4 1983009808
        %v3357 = vunpack.c.0.s8 %v3356
        %v3358 = vlaneseq
        %v3359 = vshrl.u32 %v3358, 7
        %v3360 = vsub.s32 %v3357, %v3359
        %v3361 = vrot.slane %v3354, %v3360
        %v3362 = vcombine.low %v2520, %v2521
        %v3364 = vunpack.c.l.s4 1983009808
        %v3365 = vunpack.c.0.s8 %v3364
        %v3366 = vlaneseq
        %v3367 = vshrl.u32 %v3366, 7
        %v3368 = vsub.s32 %v3365, %v3367
        %v3369 = vrot.slane %v3362, %v3368
        %v3370 = vcombine.low %v2512, %v2519
        %v3372 = vunpack.c.l.s4 1983009808
        %v3373 = vunpack.c.0.s8 %v3372
        %v3374 = vlaneseq
        %v3375 = vshrl.u32 %v3374, 7
        %v3376 = vsub.s32 %v3373, %v3375
        %v3377 = vrot.slane %v3370, %v3376
        %v3378 = vcombine.low %v2522, %v2523
        %v3380 = vunpack.c.l.s4 1983009808
        %v3381 = vunpack.c.0.s8 %v3380
        %v3382 = vlaneseq
        %v3383 = vshrl.u32 %v3382, 7
        %v3384 = vsub.s32 %v3381, %v3383
        %v3385 = vrot.slane %v3378, %v3384
        %v3386 = vcombine.low %v3361, %v3369
        %v3388 = vunpack.c.l.s4 1934713408
        %v3389 = vunpack.c.0.s8 %v3388
        %v3390 = vlaneseq
        %v3391 = vshrl.u32 %v3390, 7
        %v3392 = vsub.s32 %v3389, %v3391
        %v3393 = vrot.slane %v3386, %v3392
        %v3394 = vcombine.low %v3377, %v3385
        %v3396 = vunpack.c.l.s4 1934713408
        %v3397 = vunpack.c.0.s8 %v3396
        %v3398 = vlaneseq
        %v3399 = vshrl.u32 %v3398, 7
        %v3400 = vsub.s32 %v3397, %v3399
        %v3401 = vrot.slane %v3394, %v3400
        %v3402 = vcombine.low %v3393, %v3401
        %v3403 = vcombine.high %v3393, %v3401
        %v3404 = vcombine.low %v2562, %v2569
        %v3406 = vunpack.c.l.s4 1983009808
        %v3407 = vunpack.c.0.s8 %v3406
        %v3408 = vlaneseq
        %v3409 = vshrl.u32 %v3408, 7
        %v3410 = vsub.s32 %v3407, %v3409
        %v3411 = vrot.slane %v3404, %v3410
        %v3412 = vcombine.low %v2586, %v2587
        %v3414 = vunpack.c.l.s4 1983009808
        %v3415 = vunpack.c.0.s8 %v3414
        %v3416 = vlaneseq
        %v3417 = vshrl.u32 %v3416, 7
        %v3418 = vsub.s32 %v3415, %v3417
        %v3419 = vrot.slane %v3412, %v3418
        %v3420 = vcombine.low %v2578, %v2585
        %v3422 = vunpack.c.l.s4 1983009808
        %v3423 = vunpack.c.0.s8 %v3422
        %v3424 = vlaneseq
        %v3425 = vshrl.u32 %v3424, 7
        %v3426 = vsub.s32 %v3423, %v3425
        %v3427 = vrot.slane %v3420, %v3426
        %v3428 = vcombine.low %v2588, %v2589
        %v3430 = vunpack.c.l.s4 1983009808
        %v3431 = vunpack.c.0.s8 %v3430
        %v3432 = vlaneseq
        %v3433 = vshrl.u32 %v3432, 7
        %v3434 = vsub.s32 %v3431, %v3433
        %v3435 = vrot.slane %v3428, %v3434
        %v3436 = vcombine.low %v3411, %v3419
        %v3438 = vunpack.c.l.s4 1934713408
        %v3439 = vunpack.c.0.s8 %v3438
        %v3440 = vlaneseq
        %v3441 = vshrl.u32 %v3440, 7
        %v3442 = vsub.s32 %v3439, %v3441
        %v3443 = vrot.slane %v3436, %v3442
        %v3444 = vcombine.low %v3427, %v3435
        %v3446 = vunpack.c.l.s4 1934713408
        %v3447 = vunpack.c.0.s8 %v3446
        %v3448 = vlaneseq
        %v3449 = vshrl.u32 %v3448, 7
        %v3450 = vsub.s32 %v3447, %v3449
        %v3451 = vrot.slane %v3444, %v3450
        %v3452 = vcombine.low %v3443, %v3451
        %v3453 = vcombine.high %v3443, %v3451
        %v3454 = vcombine.low %v2628, %v2635
        %v3456 = vunpack.c.l.s4 1983009808
        %v3457 = vunpack.c.0.s8 %v3456
        %v3458 = vlaneseq
        %v3459 = vshrl.u32 %v3458, 7
        %v3460 = vsub.s32 %v3457, %v3459
        %v3461 = vrot.slane %v3454, %v3460
        %v3462 = vcombine.low %v2652, %v2653
        %v3464 = vunpack.c.l.s4 1983009808
        %v3465 = vunpack.c.0.s8 %v3464
        %v3466 = vlaneseq
        %v3467 = vshrl.u32 %v3466, 7
        %v3468 = vsub.s32 %v3465, %v3467
        %v3469 = vrot.slane %v3462, %v3468
        %v3470 = vcombine.low %v2644, %v2651
        %v3472 = vunpack.c.l.s4 1983009808
        %v3473 = vunpack.c.0.s8 %v3472
        %v3474 = vlaneseq
        %v3475 = vshrl.u32 %v3474, 7
        %v3476 = vsub.s32 %v3473, %v3475
        %v3477 = vrot.slane %v3470, %v3476
        %v3478 = vcombine.low %v2654, %v2655
        %v3480 = vunpack.c.l.s4 1983009808
        %v3481 = vunpack.c.0.s8 %v3480
        %v3482 = vlaneseq
        %v3483 = vshrl.u32 %v3482, 7
        %v3484 = vsub.s32 %v3481, %v3483
        %v3485 = vrot.slane %v3478, %v3484
        %v3486 = vcombine.low %v3461, %v3469
        %v3488 = vunpack.c.l.s4 1934713408
        %v3489 = vunpack.c.0.s8 %v3488
        %v3490 = vlaneseq
        %v3491 = vshrl.u32 %v3490, 7
        %v3492 = vsub.s32 %v3489, %v3491
        %v3493 = vrot.slane %v3486, %v3492
        %v3494 = vcombine.low %v3477, %v3485
        %v3496 = vunpack.c.l.s4 1934713408
        %v3497 = vunpack.c.0.s8 %v3496
        %v3498 = vlaneseq
        %v3499 = vshrl.u32 %v3498, 7
        %v3500 = vsub.s32 %v3497, %v3499
        %v3501 = vrot.slane %v3494, %v3500
        %v3502 = vcombine.low %v3493, %v3501
        %v3503 = vcombine.high %v3493, %v3501
        %v3504 = vcombine.low %v2694, %v2701
        %v3506 = vunpack.c.l.s4 1983009808
        %v3507 = vunpack.c.0.s8 %v3506
        %v3508 = vlaneseq
        %v3509 = vshrl.u32 %v3508, 7
        %v3510 = vsub.s32 %v3507, %v3509
        %v3511 = vrot.slane %v3504, %v3510
        %v3512 = vcombine.low %v2718, %v2719
        %v3514 = vunpack.c.l.s4 1983009808
        %v3515 = vunpack.c.0.s8 %v3514
        %v3516 = vlaneseq
        %v3517 = vshrl.u32 %v3516, 7
        %v3518 = vsub.s32 %v3515, %v3517
        %v3519 = vrot.slane %v3512, %v3518
        %v3520 = vcombine.low %v2710, %v2717
        %v3522 = vunpack.c.l.s4 1983009808
        %v3523 = vunpack.c.0.s8 %v3522
        %v3524 = vlaneseq
        %v3525 = vshrl.u32 %v3524, 7
        %v3526 = vsub.s32 %v3523, %v3525
        %v3527 = vrot.slane %v3520, %v3526
        %v3528 = vcombine.low %v2720, %v2721
        %v3530 = vunpack.c.l.s4 1983009808
        %v3531 = vunpack.c.0.s8 %v3530
        %v3532 = vlaneseq
        %v3533 = vshrl.u32 %v3532, 7
        %v3534 = vsub.s32 %v3531, %v3533
        %v3535 = vrot.slane %v3528, %v3534
        %v3536 = vcombine.low %v3511, %v3519
        %v3538 = vunpack.c.l.s4 1934713408
        %v3539 = vunpack.c.0.s8 %v3538
        %v3540 = vlaneseq
        %v3541 = vshrl.u32 %v3540, 7
        %v3542 = vsub.s32 %v3539, %v3541
        %v3543 = vrot.slane %v3536, %v3542
        %v3544 = vcombine.low %v3527, %v3535
        %v3546 = vunpack.c.l.s4 1934713408
        %v3547 = vunpack.c.0.s8 %v3546
        %v3548 = vlaneseq
        %v3549 = vshrl.u32 %v3548, 7
        %v3550 = vsub.s32 %v3547, %v3549
        %v3551 = vrot.slane %v3544, %v3550
        %v3552 = vcombine.low %v3543, %v3551
        %v3553 = vcombine.high %v3543, %v3551
        %v3554 = vcombine.low %v2760, %v2767
        %v3556 = vunpack.c.l.s4 1983009808
        %v3557 = vunpack.c.0.s8 %v3556
        %v3558 = vlaneseq
        %v3559 = vshrl.u32 %v3558, 7
        %v3560 = vsub.s32 %v3557, %v3559
        %v3561 = vrot.slane %v3554, %v3560
        %v3562 = vcombine.low %v2784, %v2785
        %v3564 = vunpack.c.l.s4 1983009808
        %v3565 = vunpack.c.0.s8 %v3564
        %v3566 = vlaneseq
        %v3567 = vshrl.u32 %v3566, 7
        %v3568 = vsub.s32 %v3565, %v3567
        %v3569 = vrot.slane %v3562, %v3568
        %v3570 = vcombine.low %v2776, %v2783
        %v3572 = vunpack.c.l.s4 1983009808
        %v3573 = vunpack.c.0.s8 %v3572
        %v3574 = vlaneseq
        %v3575 = vshrl.u32 %v3574, 7
        %v3576 = vsub.s32 %v3573, %v3575
        %v3577 = vrot.slane %v3570, %v3576
        %v3578 = vcombine.low %v2786, %v2787
        %v3580 = vunpack.c.l.s4 1983009808
        %v3581 = vunpack.c.0.s8 %v3580
        %v3582 = vlaneseq
        %v3583 = vshrl.u32 %v3582, 7
        %v3584 = vsub.s32 %v3581, %v3583
        %v3585 = vrot.slane %v3578, %v3584
        %v3586 = vcombine.low %v3561, %v3569
        %v3588 = vunpack.c.l.s4 1934713408
        %v3589 = vunpack.c.0.s8 %v3588
        %v3590 = vlaneseq
        %v3591 = vshrl.u32 %v3590, 7
        %v3592 = vsub.s32 %v3589, %v3591
        %v3593 = vrot.slane %v3586, %v3592
        %v3594 = vcombine.low %v3577, %v3585
        %v3596 = vunpack.c.l.s4 1934713408
        %v3597 = vunpack.c.0.s8 %v3596
        %v3598 = vlaneseq
        %v3599 = vshrl.u32 %v3598, 7
        %v3600 = vsub.s32 %v3597, %v3599
        %v3601 = vrot.slane %v3594, %v3600
        %v3602 = vcombine.low %v3593, %v3601
        %v3603 = vcombine.high %v3593, %v3601
        %v3604 = vcombine.low %v2826, %v2833
        %v3606 = vunpack.c.l.s4 1983009808
        %v3607 = vunpack.c.0.s8 %v3606
        %v3608 = vlaneseq
        %v3609 = vshrl.u32 %v3608, 7
        %v3610 = vsub.s32 %v3607, %v3609
        %v3611 = vrot.slane %v3604, %v3610
        %v3612 = vcombine.low %v2850, %v2851
        %v3614 = vunpack.c.l.s4 1983009808
        %v3615 = vunpack.c.0.s8 %v3614
        %v3616 = vlaneseq
        %v3617 = vshrl.u32 %v3616, 7
        %v3618 = vsub.s32 %v3615, %v3617
        %v3619 = vrot.slane %v3612, %v3618
        %v3620 = vcombine.low %v2842, %v2849
        %v3622 = vunpack.c.l.s4 1983009808
        %v3623 = vunpack.c.0.s8 %v3622
        %v3624 = vlaneseq
        %v3625 = vshrl.u32 %v3624, 7
        %v3626 = vsub.s32 %v3623, %v3625
        %v3627 = vrot.slane %v3620, %v3626
        %v3628 = vcombine.low %v2852, %v2853
        %v3630 = vunpack.c.l.s4 1983009808
        %v3631 = vunpack.c.0.s8 %v3630
        %v3632 = vlaneseq
        %v3633 = vshrl.u32 %v3632, 7
        %v3634 = vsub.s32 %v3631, %v3633
        %v3635 = vrot.slane %v3628, %v3634
        %v3636 = vcombine.low %v3611, %v3619
        %v3638 = vunpack.c.l.s4 1934713408
        %v3639 = vunpack.c.0.s8 %v3638
        %v3640 = vlaneseq
        %v3641 = vshrl.u32 %v3640, 7
        %v3642 = vsub.s32 %v3639, %v3641
        %v3643 = vrot.slane %v3636, %v3642
        %v3644 = vcombine.low %v3627, %v3635
        %v3646 = vunpack.c.l.s4 1934713408
        %v3647 = vunpack.c.0.s8 %v3646
        %v3648 = vlaneseq
        %v3649 = vshrl.u32 %v3648, 7
        %v3650 = vsub.s32 %v3647, %v3649
        %v3651 = vrot.slane %v3644, %v3650
        %v3652 = vcombine.low %v3643, %v3651
        %v3653 = vcombine.high %v3643, %v3651
        %v3656 = vpack.i.b16 %v2952, %v2902
        %v3657 = vshrl.u32 %v2902, 16
        %v3658 = vshrl.u32 %v2952, 16
        %v3659 = vpack.i.b16 %v3658, %v3657
        %v3662 = vpack.i.b16 %v2953, %v2903
        %v3663 = vshrl.u32 %v2903, 16
        %v3664 = vshrl.u32 %v2953, 16
        %v3665 = vpack.i.b16 %v3664, %v3663
        %v3668 = vpack.i.b16 %v3052, %v3002
        %v3669 = vshrl.u32 %v3002, 16
        %v3670 = vshrl.u32 %v3052, 16
        %v3671 = vpack.i.b16 %v3670, %v3669
        %v3674 = vpack.i.b16 %v3053, %v3003
        %v3675 = vshrl.u32 %v3003, 16
        %v3676 = vshrl.u32 %v3053, 16
        %v3677 = vpack.i.b16 %v3676, %v3675
        %v3680 = vpack.i.b16 %v3152, %v3102
        %v3681 = vshrl.u32 %v3102, 16
        %v3682 = vshrl.u32 %v3152, 16
        %v3683 = vpack.i.b16 %v3682, %v3681
        %v3686 = vpack.i.b16 %v3153, %v3103
        %v3687 = vshrl.u32 %v3103, 16
        %v3688 = vshrl.u32 %v3153, 16
        %v3689 = vpack.i.b16 %v3688, %v3687
        %v3692 = vpack.i.b16 %v3252, %v3202
        %v3693 = vshrl.u32 %v3202, 16
        %v3694 = vshrl.u32 %v3252, 16
        %v3695 = vpack.i.b16 %v3694, %v3693
        %v3698 = vpack.i.b16 %v3253, %v3203
        %v3699 = vshrl.u32 %v3203, 16
        %v3700 = vshrl.u32 %v3253, 16
        %v3701 = vpack.i.b16 %v3700, %v3699
        %v3704 = vpack.i.b16 %v3352, %v3302
        %v3705 = vshrl.u32 %v3302, 16
        %v3706 = vshrl.u32 %v3352, 16
        %v3707 = vpack.i.b16 %v3706, %v3705
        %v3710 = vpack.i.b16 %v3353, %v3303
        %v3711 = vshrl.u32 %v3303, 16
        %v3712 = vshrl.u32 %v3353, 16
        %v3713 = vpack.i.b16 %v3712, %v3711
        %v3716 = vpack.i.b16 %v3452, %v3402
        %v3717 = vshrl.u32 %v3402, 16
        %v3718 = vshrl.u32 %v3452, 16
        %v3719 = vpack.i.b16 %v3718, %v3717
        %v3722 = vpack.i.b16 %v3453, %v3403
        %v3723 = vshrl.u32 %v3403, 16
        %v3724 = vshrl.u32 %v3453, 16
        %v3725 = vpack.i.b16 %v3724, %v3723
        %v3728 = vpack.i.b16 %v3552, %v3502
        %v3729 = vshrl.u32 %v3502, 16
        %v3730 = vshrl.u32 %v3552, 16
        %v3731 = vpack.i.b16 %v3730, %v3729
        %v3734 = vpack.i.b16 %v3553, %v3503
        %v3735 = vshrl.u32 %v3503, 16
        %v3736 = vshrl.u32 %v3553, 16
        %v3737 = vpack.i.b16 %v3736, %v3735
        %v3740 = vpack.i.b16 %v3652, %v3602
        %v3741 = vshrl.u32 %v3602, 16
        %v3742 = vshrl.u32 %v3652, 16
        %v3743 = vpack.i.b16 %v3742, %v3741
        %v3746 = vpack.i.b16 %v3653, %v3603
        %v3747 = vshrl.u32 %v3603, 16
        %v3748 = vshrl.u32 %v3653, 16
        %v3749 = vpack.i.b16 %v3748, %v3747
        %v3750 = vpack.c.bf16 %v1357, %v1354
        %v3751 = vpack.c.bf16 %v1365, %v1362
        %v3752 = vpack.c.bf16 %v1373, %v1370
        %v3753 = vpack.c.bf16 %v1381, %v1378
        %v3754 = vpack.c.bf16 %v1389, %v1386
        %v3755 = vpack.c.bf16 %v1397, %v1394
        %v3756 = vpack.c.bf16 %v1405, %v1402
        %v3757 = vpack.c.bf16 %v1413, %v1410
        %3766 = vrot.lane.b32.xlu0 %v3750, 96
        %v3767 = vpop.permute.xlu0 %3766
        %3768 = vrot.lane.b32.xlu0 %v3751, 96
        %v3769 = vpop.permute.xlu0 %3768
        %3770 = vrot.lane.b32.xlu0 %v3752, 96
        %v3771 = vpop.permute.xlu0 %3770
        %3772 = vrot.lane.b32.xlu0 %v3753, 96
        %v3773 = vpop.permute.xlu0 %3772
        %3774 = vrot.lane.b32.xlu0 %v3754, 96
        %v3775 = vpop.permute.xlu0 %3774
        %3776 = vrot.lane.b32.xlu0 %v3755, 96
        %v3777 = vpop.permute.xlu0 %3776
        %3778 = vrot.lane.b32.xlu0 %v3756, 96
        %v3779 = vpop.permute.xlu0 %3778
        %3780 = vrot.lane.b32.xlu0 %v3757, 96
        %v3781 = vpop.permute.xlu0 %3780
        %3782 = vrot.lane.b32.xlu0 %v3750, 64
        %v3783 = vpop.permute.xlu0 %3782
        %3784 = vrot.lane.b32.xlu0 %v3751, 64
        %v3785 = vpop.permute.xlu0 %3784
        %3786 = vrot.lane.b32.xlu0 %v3752, 64
        %v3787 = vpop.permute.xlu0 %3786
        %3788 = vrot.lane.b32.xlu0 %v3753, 64
        %v3789 = vpop.permute.xlu0 %3788
        %3790 = vrot.lane.b32.xlu0 %v3754, 64
        %v3791 = vpop.permute.xlu0 %3790
        %3792 = vrot.lane.b32.xlu0 %v3755, 64
        %v3793 = vpop.permute.xlu0 %3792
        %3794 = vrot.lane.b32.xlu0 %v3756, 64
        %v3795 = vpop.permute.xlu0 %3794
        %3796 = vrot.lane.b32.xlu0 %v3757, 64
        %v3797 = vpop.permute.xlu0 %3796
        %3798 = vrot.lane.b32.xlu0 %v3750, 32
        %v3799 = vpop.permute.xlu0 %3798
        %3800 = vrot.lane.b32.xlu0 %v3751, 32
        %v3801 = vpop.permute.xlu0 %3800
        %3802 = vrot.lane.b32.xlu0 %v3752, 32
        %v3803 = vpop.permute.xlu0 %3802
        %3804 = vrot.lane.b32.xlu0 %v3753, 32
        %v3805 = vpop.permute.xlu0 %3804
        %3806 = vrot.lane.b32.xlu0 %v3754, 32
        %v3807 = vpop.permute.xlu0 %3806
        %3808 = vrot.lane.b32.xlu0 %v3755, 32
        %v3809 = vpop.permute.xlu0 %3808
        %3810 = vrot.lane.b32.xlu0 %v3756, 32
        %v3811 = vpop.permute.xlu0 %3810
        %3812 = vrot.lane.b32.xlu0 %v3757, 32
        %v3813 = vpop.permute.xlu0 %3812
        %v3816 = vpack.i.b16 %v3767, %v3750
        %v3818 = vshrl.u32 %v3750, 16
        %v3819 = vshrl.u32 %v3767, 16
        %v3820 = vpack.i.b16 %v3819, %v3818
        %v3824 = vpack.i.b16 %v3799, %v3783
        %v3826 = vshrl.u32 %v3783, 16
        %v3827 = vshrl.u32 %v3799, 16
        %v3828 = vpack.i.b16 %v3827, %v3826
        %v3832 = vpack.i.b16 %v3769, %v3751
        %v3834 = vshrl.u32 %v3751, 16
        %v3835 = vshrl.u32 %v3769, 16
        %v3836 = vpack.i.b16 %v3835, %v3834
        %v3840 = vpack.i.b16 %v3801, %v3785
        %v3842 = vshrl.u32 %v3785, 16
        %v3843 = vshrl.u32 %v3801, 16
        %v3844 = vpack.i.b16 %v3843, %v3842
        %v3848 = vpack.i.b16 %v3771, %v3752
        %v3850 = vshrl.u32 %v3752, 16
        %v3851 = vshrl.u32 %v3771, 16
        %v3852 = vpack.i.b16 %v3851, %v3850
        %v3856 = vpack.i.b16 %v3803, %v3787
        %v3858 = vshrl.u32 %v3787, 16
        %v3859 = vshrl.u32 %v3803, 16
        %v3860 = vpack.i.b16 %v3859, %v3858
        %v3864 = vpack.i.b16 %v3773, %v3753
        %v3866 = vshrl.u32 %v3753, 16
        %v3867 = vshrl.u32 %v3773, 16
        %v3868 = vpack.i.b16 %v3867, %v3866
        %v3872 = vpack.i.b16 %v3805, %v3789
        %v3874 = vshrl.u32 %v3789, 16
        %v3875 = vshrl.u32 %v3805, 16
        %v3876 = vpack.i.b16 %v3875, %v3874
        %v3880 = vpack.i.b16 %v3775, %v3754
        %v3882 = vshrl.u32 %v3754, 16
        %v3883 = vshrl.u32 %v3775, 16
        %v3884 = vpack.i.b16 %v3883, %v3882
        %v3888 = vpack.i.b16 %v3807, %v3791
        %v3890 = vshrl.u32 %v3791, 16
        %v3891 = vshrl.u32 %v3807, 16
        %v3892 = vpack.i.b16 %v3891, %v3890
        %v3896 = vpack.i.b16 %v3777, %v3755
        %v3898 = vshrl.u32 %v3755, 16
        %v3899 = vshrl.u32 %v3777, 16
        %v3900 = vpack.i.b16 %v3899, %v3898
        %v3904 = vpack.i.b16 %v3809, %v3793
        %v3906 = vshrl.u32 %v3793, 16
        %v3907 = vshrl.u32 %v3809, 16
        %v3908 = vpack.i.b16 %v3907, %v3906
        %v3912 = vpack.i.b16 %v3779, %v3756
        %v3914 = vshrl.u32 %v3756, 16
        %v3915 = vshrl.u32 %v3779, 16
        %v3916 = vpack.i.b16 %v3915, %v3914
        %v3920 = vpack.i.b16 %v3811, %v3795
        %v3922 = vshrl.u32 %v3795, 16
        %v3923 = vshrl.u32 %v3811, 16
        %v3924 = vpack.i.b16 %v3923, %v3922
        %v3928 = vpack.i.b16 %v3781, %v3757
        %v3930 = vshrl.u32 %v3757, 16
        %v3931 = vshrl.u32 %v3781, 16
        %v3932 = vpack.i.b16 %v3931, %v3930
        %v3936 = vpack.i.b16 %v3813, %v3797
        %v3938 = vshrl.u32 %v3797, 16
        %v3939 = vshrl.u32 %v3813, 16
        %v3940 = vpack.i.b16 %v3939, %v3938
        %v3942 = vcombine.high %v3816, %v1681
        %v3944 = vunpack.c.l.s4 1983009808
        %v3945 = vunpack.c.0.s8 %v3944
        %v3946 = vlaneseq
        %v3947 = vshrl.u32 %v3946, 7
        %v3948 = vsub.s32 %v3945, %v3947
        %v3949 = vrot.slane %v3816, %v3948
        %v3951 = vunpack.c.l.s4 1983009808
        %v3952 = vunpack.c.0.s8 %v3951
        %v3953 = vlaneseq
        %v3954 = vshrl.u32 %v3953, 7
        %v3955 = vsub.s32 %v3952, %v3954
        %v3956 = vrot.slane %v3942, %v3955
        %v3957 = vcombine.high %v3824, %v1681
        %v3959 = vunpack.c.l.s4 1983009808
        %v3960 = vunpack.c.0.s8 %v3959
        %v3961 = vlaneseq
        %v3962 = vshrl.u32 %v3961, 7
        %v3963 = vsub.s32 %v3960, %v3962
        %v3964 = vrot.slane %v3824, %v3963
        %v3966 = vunpack.c.l.s4 1983009808
        %v3967 = vunpack.c.0.s8 %v3966
        %v3968 = vlaneseq
        %v3969 = vshrl.u32 %v3968, 7
        %v3970 = vsub.s32 %v3967, %v3969
        %v3971 = vrot.slane %v3957, %v3970
        %v3972 = vcombine.low %v3949, %v3964
        %v3973 = vcombine.high %v3949, %v3964
        %v3975 = vunpack.c.l.s4 1934713408
        %v3976 = vunpack.c.0.s8 %v3975
        %v3977 = vlaneseq
        %v3978 = vshrl.u32 %v3977, 7
        %v3979 = vsub.s32 %v3976, %v3978
        %v3980 = vrot.slane %v3972, %v3979
        %v3982 = vunpack.c.l.s4 1934713408
        %v3983 = vunpack.c.0.s8 %v3982
        %v3984 = vlaneseq
        %v3985 = vshrl.u32 %v3984, 7
        %v3986 = vsub.s32 %v3983, %v3985
        %v3987 = vrot.slane %v3973, %v3986
        %v3988 = vcombine.low %v3956, %v3971
        %v3989 = vcombine.high %v3956, %v3971
        %v3991 = vunpack.c.l.s4 1934713408
        %v3992 = vunpack.c.0.s8 %v3991
        %v3993 = vlaneseq
        %v3994 = vshrl.u32 %v3993, 7
        %v3995 = vsub.s32 %v3992, %v3994
        %v3996 = vrot.slane %v3988, %v3995
        %v3998 = vunpack.c.l.s4 1934713408
        %v3999 = vunpack.c.0.s8 %v3998
        %v4000 = vlaneseq
        %v4001 = vshrl.u32 %v4000, 7
        %v4002 = vsub.s32 %v3999, %v4001
        %v4003 = vrot.slane %v3989, %v4002
        %v4004 = vcombine.high %v3980, 0
        %v4005 = vcombine.high %v3987, 0
        %v4006 = vcombine.high %v3996, 0
        %v4007 = vcombine.high %v4003, 0
        %v4008 = vcombine.high %v3820, %v1684
        %v4010 = vunpack.c.l.s4 1983009808
        %v4011 = vunpack.c.0.s8 %v4010
        %v4012 = vlaneseq
        %v4013 = vshrl.u32 %v4012, 7
        %v4014 = vsub.s32 %v4011, %v4013
        %v4015 = vrot.slane %v3820, %v4014
        %v4017 = vunpack.c.l.s4 1983009808
        %v4018 = vunpack.c.0.s8 %v4017
        %v4019 = vlaneseq
        %v4020 = vshrl.u32 %v4019, 7
        %v4021 = vsub.s32 %v4018, %v4020
        %v4022 = vrot.slane %v4008, %v4021
        %v4023 = vcombine.high %v3828, %v1684
        %v4025 = vunpack.c.l.s4 1983009808
        %v4026 = vunpack.c.0.s8 %v4025
        %v4027 = vlaneseq
        %v4028 = vshrl.u32 %v4027, 7
        %v4029 = vsub.s32 %v4026, %v4028
        %v4030 = vrot.slane %v3828, %v4029
        %v4032 = vunpack.c.l.s4 1983009808
        %v4033 = vunpack.c.0.s8 %v4032
        %v4034 = vlaneseq
        %v4035 = vshrl.u32 %v4034, 7
        %v4036 = vsub.s32 %v4033, %v4035
        %v4037 = vrot.slane %v4023, %v4036
        %v4038 = vcombine.low %v4015, %v4030
        %v4039 = vcombine.high %v4015, %v4030
        %v4041 = vunpack.c.l.s4 1934713408
        %v4042 = vunpack.c.0.s8 %v4041
        %v4043 = vlaneseq
        %v4044 = vshrl.u32 %v4043, 7
        %v4045 = vsub.s32 %v4042, %v4044
        %v4046 = vrot.slane %v4038, %v4045
        %v4048 = vunpack.c.l.s4 1934713408
        %v4049 = vunpack.c.0.s8 %v4048
        %v4050 = vlaneseq
        %v4051 = vshrl.u32 %v4050, 7
        %v4052 = vsub.s32 %v4049, %v4051
        %v4053 = vrot.slane %v4039, %v4052
        %v4054 = vcombine.low %v4022, %v4037
        %v4055 = vcombine.high %v4022, %v4037
        %v4057 = vunpack.c.l.s4 1934713408
        %v4058 = vunpack.c.0.s8 %v4057
        %v4059 = vlaneseq
        %v4060 = vshrl.u32 %v4059, 7
        %v4061 = vsub.s32 %v4058, %v4060
        %v4062 = vrot.slane %v4054, %v4061
        %v4064 = vunpack.c.l.s4 1934713408
        %v4065 = vunpack.c.0.s8 %v4064
        %v4066 = vlaneseq
        %v4067 = vshrl.u32 %v4066, 7
        %v4068 = vsub.s32 %v4065, %v4067
        %v4069 = vrot.slane %v4055, %v4068
        %v4070 = vcombine.high %v4046, 0
        %v4071 = vcombine.high %v4053, 0
        %v4072 = vcombine.high %v4062, 0
        %v4073 = vcombine.high %v4069, 0
        %v4074 = vcombine.high %v3832, %v1681
        %v4076 = vunpack.c.l.s4 1983009808
        %v4077 = vunpack.c.0.s8 %v4076
        %v4078 = vlaneseq
        %v4079 = vshrl.u32 %v4078, 7
        %v4080 = vsub.s32 %v4077, %v4079
        %v4081 = vrot.slane %v3832, %v4080
        %v4083 = vunpack.c.l.s4 1983009808
        %v4084 = vunpack.c.0.s8 %v4083
        %v4085 = vlaneseq
        %v4086 = vshrl.u32 %v4085, 7
        %v4087 = vsub.s32 %v4084, %v4086
        %v4088 = vrot.slane %v4074, %v4087
        %v4089 = vcombine.high %v3840, %v1681
        %v4091 = vunpack.c.l.s4 1983009808
        %v4092 = vunpack.c.0.s8 %v4091
        %v4093 = vlaneseq
        %v4094 = vshrl.u32 %v4093, 7
        %v4095 = vsub.s32 %v4092, %v4094
        %v4096 = vrot.slane %v3840, %v4095
        %v4098 = vunpack.c.l.s4 1983009808
        %v4099 = vunpack.c.0.s8 %v4098
        %v4100 = vlaneseq
        %v4101 = vshrl.u32 %v4100, 7
        %v4102 = vsub.s32 %v4099, %v4101
        %v4103 = vrot.slane %v4089, %v4102
        %v4104 = vcombine.low %v4081, %v4096
        %v4105 = vcombine.high %v4081, %v4096
        %v4107 = vunpack.c.l.s4 1934713408
        %v4108 = vunpack.c.0.s8 %v4107
        %v4109 = vlaneseq
        %v4110 = vshrl.u32 %v4109, 7
        %v4111 = vsub.s32 %v4108, %v4110
        %v4112 = vrot.slane %v4104, %v4111
        %v4114 = vunpack.c.l.s4 1934713408
        %v4115 = vunpack.c.0.s8 %v4114
        %v4116 = vlaneseq
        %v4117 = vshrl.u32 %v4116, 7
        %v4118 = vsub.s32 %v4115, %v4117
        %v4119 = vrot.slane %v4105, %v4118
        %v4120 = vcombine.low %v4088, %v4103
        %v4121 = vcombine.high %v4088, %v4103
        %v4123 = vunpack.c.l.s4 1934713408
        %v4124 = vunpack.c.0.s8 %v4123
        %v4125 = vlaneseq
        %v4126 = vshrl.u32 %v4125, 7
        %v4127 = vsub.s32 %v4124, %v4126
        %v4128 = vrot.slane %v4120, %v4127
        %v4130 = vunpack.c.l.s4 1934713408
        %v4131 = vunpack.c.0.s8 %v4130
        %v4132 = vlaneseq
        %v4133 = vshrl.u32 %v4132, 7
        %v4134 = vsub.s32 %v4131, %v4133
        %v4135 = vrot.slane %v4121, %v4134
        %v4136 = vcombine.high %v4112, 0
        %v4137 = vcombine.high %v4119, 0
        %v4138 = vcombine.high %v4128, 0
        %v4139 = vcombine.high %v4135, 0
        %v4140 = vcombine.high %v3836, %v1684
        %v4142 = vunpack.c.l.s4 1983009808
        %v4143 = vunpack.c.0.s8 %v4142
        %v4144 = vlaneseq
        %v4145 = vshrl.u32 %v4144, 7
        %v4146 = vsub.s32 %v4143, %v4145
        %v4147 = vrot.slane %v3836, %v4146
        %v4149 = vunpack.c.l.s4 1983009808
        %v4150 = vunpack.c.0.s8 %v4149
        %v4151 = vlaneseq
        %v4152 = vshrl.u32 %v4151, 7
        %v4153 = vsub.s32 %v4150, %v4152
        %v4154 = vrot.slane %v4140, %v4153
        %v4155 = vcombine.high %v3844, %v1684
        %v4157 = vunpack.c.l.s4 1983009808
        %v4158 = vunpack.c.0.s8 %v4157
        %v4159 = vlaneseq
        %v4160 = vshrl.u32 %v4159, 7
        %v4161 = vsub.s32 %v4158, %v4160
        %v4162 = vrot.slane %v3844, %v4161
        %v4164 = vunpack.c.l.s4 1983009808
        %v4165 = vunpack.c.0.s8 %v4164
        %v4166 = vlaneseq
        %v4167 = vshrl.u32 %v4166, 7
        %v4168 = vsub.s32 %v4165, %v4167
        %v4169 = vrot.slane %v4155, %v4168
        %v4170 = vcombine.low %v4147, %v4162
        %v4171 = vcombine.high %v4147, %v4162
        %v4173 = vunpack.c.l.s4 1934713408
        %v4174 = vunpack.c.0.s8 %v4173
        %v4175 = vlaneseq
        %v4176 = vshrl.u32 %v4175, 7
        %v4177 = vsub.s32 %v4174, %v4176
        %v4178 = vrot.slane %v4170, %v4177
        %v4180 = vunpack.c.l.s4 1934713408
        %v4181 = vunpack.c.0.s8 %v4180
        %v4182 = vlaneseq
        %v4183 = vshrl.u32 %v4182, 7
        %v4184 = vsub.s32 %v4181, %v4183
        %v4185 = vrot.slane %v4171, %v4184
        %v4186 = vcombine.low %v4154, %v4169
        %v4187 = vcombine.high %v4154, %v4169
        %v4189 = vunpack.c.l.s4 1934713408
        %v4190 = vunpack.c.0.s8 %v4189
        %v4191 = vlaneseq
        %v4192 = vshrl.u32 %v4191, 7
        %v4193 = vsub.s32 %v4190, %v4192
        %v4194 = vrot.slane %v4186, %v4193
        %v4196 = vunpack.c.l.s4 1934713408
        %v4197 = vunpack.c.0.s8 %v4196
        %v4198 = vlaneseq
        %v4199 = vshrl.u32 %v4198, 7
        %v4200 = vsub.s32 %v4197, %v4199
        %v4201 = vrot.slane %v4187, %v4200
        %v4202 = vcombine.high %v4178, 0
        %v4203 = vcombine.high %v4185, 0
        %v4204 = vcombine.high %v4194, 0
        %v4205 = vcombine.high %v4201, 0
        %v4206 = vcombine.high %v3848, %v1681
        %v4208 = vunpack.c.l.s4 1983009808
        %v4209 = vunpack.c.0.s8 %v4208
        %v4210 = vlaneseq
        %v4211 = vshrl.u32 %v4210, 7
        %v4212 = vsub.s32 %v4209, %v4211
        %v4213 = vrot.slane %v3848, %v4212
        %v4215 = vunpack.c.l.s4 1983009808
        %v4216 = vunpack.c.0.s8 %v4215
        %v4217 = vlaneseq
        %v4218 = vshrl.u32 %v4217, 7
        %v4219 = vsub.s32 %v4216, %v4218
        %v4220 = vrot.slane %v4206, %v4219
        %v4221 = vcombine.high %v3856, %v1681
        %v4223 = vunpack.c.l.s4 1983009808
        %v4224 = vunpack.c.0.s8 %v4223
        %v4225 = vlaneseq
        %v4226 = vshrl.u32 %v4225, 7
        %v4227 = vsub.s32 %v4224, %v4226
        %v4228 = vrot.slane %v3856, %v4227
        %v4230 = vunpack.c.l.s4 1983009808
        %v4231 = vunpack.c.0.s8 %v4230
        %v4232 = vlaneseq
        %v4233 = vshrl.u32 %v4232, 7
        %v4234 = vsub.s32 %v4231, %v4233
        %v4235 = vrot.slane %v4221, %v4234
        %v4236 = vcombine.low %v4213, %v4228
        %v4237 = vcombine.high %v4213, %v4228
        %v4239 = vunpack.c.l.s4 1934713408
        %v4240 = vunpack.c.0.s8 %v4239
        %v4241 = vlaneseq
        %v4242 = vshrl.u32 %v4241, 7
        %v4243 = vsub.s32 %v4240, %v4242
        %v4244 = vrot.slane %v4236, %v4243
        %v4246 = vunpack.c.l.s4 1934713408
        %v4247 = vunpack.c.0.s8 %v4246
        %v4248 = vlaneseq
        %v4249 = vshrl.u32 %v4248, 7
        %v4250 = vsub.s32 %v4247, %v4249
        %v4251 = vrot.slane %v4237, %v4250
        %v4252 = vcombine.low %v4220, %v4235
        %v4253 = vcombine.high %v4220, %v4235
        %v4255 = vunpack.c.l.s4 1934713408
        %v4256 = vunpack.c.0.s8 %v4255
        %v4257 = vlaneseq
        %v4258 = vshrl.u32 %v4257, 7
        %v4259 = vsub.s32 %v4256, %v4258
        %v4260 = vrot.slane %v4252, %v4259
        %v4262 = vunpack.c.l.s4 1934713408
        %v4263 = vunpack.c.0.s8 %v4262
        %v4264 = vlaneseq
        %v4265 = vshrl.u32 %v4264, 7
        %v4266 = vsub.s32 %v4263, %v4265
        %v4267 = vrot.slane %v4253, %v4266
        %v4268 = vcombine.high %v4244, 0
        %v4269 = vcombine.high %v4251, 0
        %v4270 = vcombine.high %v4260, 0
        %v4271 = vcombine.high %v4267, 0
        %v4272 = vcombine.high %v3852, %v1684
        %v4274 = vunpack.c.l.s4 1983009808
        %v4275 = vunpack.c.0.s8 %v4274
        %v4276 = vlaneseq
        %v4277 = vshrl.u32 %v4276, 7
        %v4278 = vsub.s32 %v4275, %v4277
        %v4279 = vrot.slane %v3852, %v4278
        %v4281 = vunpack.c.l.s4 1983009808
        %v4282 = vunpack.c.0.s8 %v4281
        %v4283 = vlaneseq
        %v4284 = vshrl.u32 %v4283, 7
        %v4285 = vsub.s32 %v4282, %v4284
        %v4286 = vrot.slane %v4272, %v4285
        %v4287 = vcombine.high %v3860, %v1684
        %v4289 = vunpack.c.l.s4 1983009808
        %v4290 = vunpack.c.0.s8 %v4289
        %v4291 = vlaneseq
        %v4292 = vshrl.u32 %v4291, 7
        %v4293 = vsub.s32 %v4290, %v4292
        %v4294 = vrot.slane %v3860, %v4293
        %v4296 = vunpack.c.l.s4 1983009808
        %v4297 = vunpack.c.0.s8 %v4296
        %v4298 = vlaneseq
        %v4299 = vshrl.u32 %v4298, 7
        %v4300 = vsub.s32 %v4297, %v4299
        %v4301 = vrot.slane %v4287, %v4300
        %v4302 = vcombine.low %v4279, %v4294
        %v4303 = vcombine.high %v4279, %v4294
        %v4305 = vunpack.c.l.s4 1934713408
        %v4306 = vunpack.c.0.s8 %v4305
        %v4307 = vlaneseq
        %v4308 = vshrl.u32 %v4307, 7
        %v4309 = vsub.s32 %v4306, %v4308
        %v4310 = vrot.slane %v4302, %v4309
        %v4312 = vunpack.c.l.s4 1934713408
        %v4313 = vunpack.c.0.s8 %v4312
        %v4314 = vlaneseq
        %v4315 = vshrl.u32 %v4314, 7
        %v4316 = vsub.s32 %v4313, %v4315
        %v4317 = vrot.slane %v4303, %v4316
        %v4318 = vcombine.low %v4286, %v4301
        %v4319 = vcombine.high %v4286, %v4301
        %v4321 = vunpack.c.l.s4 1934713408
        %v4322 = vunpack.c.0.s8 %v4321
        %v4323 = vlaneseq
        %v4324 = vshrl.u32 %v4323, 7
        %v4325 = vsub.s32 %v4322, %v4324
        %v4326 = vrot.slane %v4318, %v4325
        %v4328 = vunpack.c.l.s4 1934713408
        %v4329 = vunpack.c.0.s8 %v4328
        %v4330 = vlaneseq
        %v4331 = vshrl.u32 %v4330, 7
        %v4332 = vsub.s32 %v4329, %v4331
        %v4333 = vrot.slane %v4319, %v4332
        %v4334 = vcombine.high %v4310, 0
        %v4335 = vcombine.high %v4317, 0
        %v4336 = vcombine.high %v4326, 0
        %v4337 = vcombine.high %v4333, 0
        %v4338 = vcombine.high %v3864, %v1681
        %v4340 = vunpack.c.l.s4 1983009808
        %v4341 = vunpack.c.0.s8 %v4340
        %v4342 = vlaneseq
        %v4343 = vshrl.u32 %v4342, 7
        %v4344 = vsub.s32 %v4341, %v4343
        %v4345 = vrot.slane %v3864, %v4344
        %v4347 = vunpack.c.l.s4 1983009808
        %v4348 = vunpack.c.0.s8 %v4347
        %v4349 = vlaneseq
        %v4350 = vshrl.u32 %v4349, 7
        %v4351 = vsub.s32 %v4348, %v4350
        %v4352 = vrot.slane %v4338, %v4351
        %v4353 = vcombine.high %v3872, %v1681
        %v4355 = vunpack.c.l.s4 1983009808
        %v4356 = vunpack.c.0.s8 %v4355
        %v4357 = vlaneseq
        %v4358 = vshrl.u32 %v4357, 7
        %v4359 = vsub.s32 %v4356, %v4358
        %v4360 = vrot.slane %v3872, %v4359
        %v4362 = vunpack.c.l.s4 1983009808
        %v4363 = vunpack.c.0.s8 %v4362
        %v4364 = vlaneseq
        %v4365 = vshrl.u32 %v4364, 7
        %v4366 = vsub.s32 %v4363, %v4365
        %v4367 = vrot.slane %v4353, %v4366
        %v4368 = vcombine.low %v4345, %v4360
        %v4369 = vcombine.high %v4345, %v4360
        %v4371 = vunpack.c.l.s4 1934713408
        %v4372 = vunpack.c.0.s8 %v4371
        %v4373 = vlaneseq
        %v4374 = vshrl.u32 %v4373, 7
        %v4375 = vsub.s32 %v4372, %v4374
        %v4376 = vrot.slane %v4368, %v4375
        %v4378 = vunpack.c.l.s4 1934713408
        %v4379 = vunpack.c.0.s8 %v4378
        %v4380 = vlaneseq
        %v4381 = vshrl.u32 %v4380, 7
        %v4382 = vsub.s32 %v4379, %v4381
        %v4383 = vrot.slane %v4369, %v4382
        %v4384 = vcombine.low %v4352, %v4367
        %v4385 = vcombine.high %v4352, %v4367
        %v4387 = vunpack.c.l.s4 1934713408
        %v4388 = vunpack.c.0.s8 %v4387
        %v4389 = vlaneseq
        %v4390 = vshrl.u32 %v4389, 7
        %v4391 = vsub.s32 %v4388, %v4390
        %v4392 = vrot.slane %v4384, %v4391
        %v4394 = vunpack.c.l.s4 1934713408
        %v4395 = vunpack.c.0.s8 %v4394
        %v4396 = vlaneseq
        %v4397 = vshrl.u32 %v4396, 7
        %v4398 = vsub.s32 %v4395, %v4397
        %v4399 = vrot.slane %v4385, %v4398
        %v4400 = vcombine.high %v4376, 0
        %v4401 = vcombine.high %v4383, 0
        %v4402 = vcombine.high %v4392, 0
        %v4403 = vcombine.high %v4399, 0
        %v4404 = vcombine.high %v3868, %v1684
        %v4406 = vunpack.c.l.s4 1983009808
        %v4407 = vunpack.c.0.s8 %v4406
        %v4408 = vlaneseq
        %v4409 = vshrl.u32 %v4408, 7
        %v4410 = vsub.s32 %v4407, %v4409
        %v4411 = vrot.slane %v3868, %v4410
        %v4413 = vunpack.c.l.s4 1983009808
        %v4414 = vunpack.c.0.s8 %v4413
        %v4415 = vlaneseq
        %v4416 = vshrl.u32 %v4415, 7
        %v4417 = vsub.s32 %v4414, %v4416
        %v4418 = vrot.slane %v4404, %v4417
        %v4419 = vcombine.high %v3876, %v1684
        %v4421 = vunpack.c.l.s4 1983009808
        %v4422 = vunpack.c.0.s8 %v4421
        %v4423 = vlaneseq
        %v4424 = vshrl.u32 %v4423, 7
        %v4425 = vsub.s32 %v4422, %v4424
        %v4426 = vrot.slane %v3876, %v4425
        %v4428 = vunpack.c.l.s4 1983009808
        %v4429 = vunpack.c.0.s8 %v4428
        %v4430 = vlaneseq
        %v4431 = vshrl.u32 %v4430, 7
        %v4432 = vsub.s32 %v4429, %v4431
        %v4433 = vrot.slane %v4419, %v4432
        %v4434 = vcombine.low %v4411, %v4426
        %v4435 = vcombine.high %v4411, %v4426
        %v4437 = vunpack.c.l.s4 1934713408
        %v4438 = vunpack.c.0.s8 %v4437
        %v4439 = vlaneseq
        %v4440 = vshrl.u32 %v4439, 7
        %v4441 = vsub.s32 %v4438, %v4440
        %v4442 = vrot.slane %v4434, %v4441
        %v4444 = vunpack.c.l.s4 1934713408
        %v4445 = vunpack.c.0.s8 %v4444
        %v4446 = vlaneseq
        %v4447 = vshrl.u32 %v4446, 7
        %v4448 = vsub.s32 %v4445, %v4447
        %v4449 = vrot.slane %v4435, %v4448
        %v4450 = vcombine.low %v4418, %v4433
        %v4451 = vcombine.high %v4418, %v4433
        %v4453 = vunpack.c.l.s4 1934713408
        %v4454 = vunpack.c.0.s8 %v4453
        %v4455 = vlaneseq
        %v4456 = vshrl.u32 %v4455, 7
        %v4457 = vsub.s32 %v4454, %v4456
        %v4458 = vrot.slane %v4450, %v4457
        %v4460 = vunpack.c.l.s4 1934713408
        %v4461 = vunpack.c.0.s8 %v4460
        %v4462 = vlaneseq
        %v4463 = vshrl.u32 %v4462, 7
        %v4464 = vsub.s32 %v4461, %v4463
        %v4465 = vrot.slane %v4451, %v4464
        %v4466 = vcombine.high %v4442, 0
        %v4467 = vcombine.high %v4449, 0
        %v4468 = vcombine.high %v4458, 0
        %v4469 = vcombine.high %v4465, 0
        %v4470 = vcombine.high %v3880, %v1681
        %v4472 = vunpack.c.l.s4 1983009808
        %v4473 = vunpack.c.0.s8 %v4472
        %v4474 = vlaneseq
        %v4475 = vshrl.u32 %v4474, 7
        %v4476 = vsub.s32 %v4473, %v4475
        %v4477 = vrot.slane %v3880, %v4476
        %v4479 = vunpack.c.l.s4 1983009808
        %v4480 = vunpack.c.0.s8 %v4479
        %v4481 = vlaneseq
        %v4482 = vshrl.u32 %v4481, 7
        %v4483 = vsub.s32 %v4480, %v4482
        %v4484 = vrot.slane %v4470, %v4483
        %v4485 = vcombine.high %v3888, %v1681
        %v4487 = vunpack.c.l.s4 1983009808
        %v4488 = vunpack.c.0.s8 %v4487
        %v4489 = vlaneseq
        %v4490 = vshrl.u32 %v4489, 7
        %v4491 = vsub.s32 %v4488, %v4490
        %v4492 = vrot.slane %v3888, %v4491
        %v4494 = vunpack.c.l.s4 1983009808
        %v4495 = vunpack.c.0.s8 %v4494
        %v4496 = vlaneseq
        %v4497 = vshrl.u32 %v4496, 7
        %v4498 = vsub.s32 %v4495, %v4497
        %v4499 = vrot.slane %v4485, %v4498
        %v4500 = vcombine.low %v4477, %v4492
        %v4501 = vcombine.high %v4477, %v4492
        %v4503 = vunpack.c.l.s4 1934713408
        %v4504 = vunpack.c.0.s8 %v4503
        %v4505 = vlaneseq
        %v4506 = vshrl.u32 %v4505, 7
        %v4507 = vsub.s32 %v4504, %v4506
        %v4508 = vrot.slane %v4500, %v4507
        %v4510 = vunpack.c.l.s4 1934713408
        %v4511 = vunpack.c.0.s8 %v4510
        %v4512 = vlaneseq
        %v4513 = vshrl.u32 %v4512, 7
        %v4514 = vsub.s32 %v4511, %v4513
        %v4515 = vrot.slane %v4501, %v4514
        %v4516 = vcombine.low %v4484, %v4499
        %v4517 = vcombine.high %v4484, %v4499
        %v4519 = vunpack.c.l.s4 1934713408
        %v4520 = vunpack.c.0.s8 %v4519
        %v4521 = vlaneseq
        %v4522 = vshrl.u32 %v4521, 7
        %v4523 = vsub.s32 %v4520, %v4522
        %v4524 = vrot.slane %v4516, %v4523
        %v4526 = vunpack.c.l.s4 1934713408
        %v4527 = vunpack.c.0.s8 %v4526
        %v4528 = vlaneseq
        %v4529 = vshrl.u32 %v4528, 7
        %v4530 = vsub.s32 %v4527, %v4529
        %v4531 = vrot.slane %v4517, %v4530
        %v4532 = vcombine.high %v4508, 0
        %v4533 = vcombine.high %v4515, 0
        %v4534 = vcombine.high %v4524, 0
        %v4535 = vcombine.high %v4531, 0
        %v4536 = vcombine.high %v3884, %v1684
        %v4538 = vunpack.c.l.s4 1983009808
        %v4539 = vunpack.c.0.s8 %v4538
        %v4540 = vlaneseq
        %v4541 = vshrl.u32 %v4540, 7
        %v4542 = vsub.s32 %v4539, %v4541
        %v4543 = vrot.slane %v3884, %v4542
        %v4545 = vunpack.c.l.s4 1983009808
        %v4546 = vunpack.c.0.s8 %v4545
        %v4547 = vlaneseq
        %v4548 = vshrl.u32 %v4547, 7
        %v4549 = vsub.s32 %v4546, %v4548
        %v4550 = vrot.slane %v4536, %v4549
        %v4551 = vcombine.high %v3892, %v1684
        %v4553 = vunpack.c.l.s4 1983009808
        %v4554 = vunpack.c.0.s8 %v4553
        %v4555 = vlaneseq
        %v4556 = vshrl.u32 %v4555, 7
        %v4557 = vsub.s32 %v4554, %v4556
        %v4558 = vrot.slane %v3892, %v4557
        %v4560 = vunpack.c.l.s4 1983009808
        %v4561 = vunpack.c.0.s8 %v4560
        %v4562 = vlaneseq
        %v4563 = vshrl.u32 %v4562, 7
        %v4564 = vsub.s32 %v4561, %v4563
        %v4565 = vrot.slane %v4551, %v4564
        %v4566 = vcombine.low %v4543, %v4558
        %v4567 = vcombine.high %v4543, %v4558
        %v4569 = vunpack.c.l.s4 1934713408
        %v4570 = vunpack.c.0.s8 %v4569
        %v4571 = vlaneseq
        %v4572 = vshrl.u32 %v4571, 7
        %v4573 = vsub.s32 %v4570, %v4572
        %v4574 = vrot.slane %v4566, %v4573
        %v4576 = vunpack.c.l.s4 1934713408
        %v4577 = vunpack.c.0.s8 %v4576
        %v4578 = vlaneseq
        %v4579 = vshrl.u32 %v4578, 7
        %v4580 = vsub.s32 %v4577, %v4579
        %v4581 = vrot.slane %v4567, %v4580
        %v4582 = vcombine.low %v4550, %v4565
        %v4583 = vcombine.high %v4550, %v4565
        %v4585 = vunpack.c.l.s4 1934713408
        %v4586 = vunpack.c.0.s8 %v4585
        %v4587 = vlaneseq
        %v4588 = vshrl.u32 %v4587, 7
        %v4589 = vsub.s32 %v4586, %v4588
        %v4590 = vrot.slane %v4582, %v4589
        %v4592 = vunpack.c.l.s4 1934713408
        %v4593 = vunpack.c.0.s8 %v4592
        %v4594 = vlaneseq
        %v4595 = vshrl.u32 %v4594, 7
        %v4596 = vsub.s32 %v4593, %v4595
        %v4597 = vrot.slane %v4583, %v4596
        %v4598 = vcombine.high %v4574, 0
        %v4599 = vcombine.high %v4581, 0
        %v4600 = vcombine.high %v4590, 0
        %v4601 = vcombine.high %v4597, 0
        %v4602 = vcombine.high %v3896, %v1681
        %v4604 = vunpack.c.l.s4 1983009808
        %v4605 = vunpack.c.0.s8 %v4604
        %v4606 = vlaneseq
        %v4607 = vshrl.u32 %v4606, 7
        %v4608 = vsub.s32 %v4605, %v4607
        %v4609 = vrot.slane %v3896, %v4608
        %v4611 = vunpack.c.l.s4 1983009808
        %v4612 = vunpack.c.0.s8 %v4611
        %v4613 = vlaneseq
        %v4614 = vshrl.u32 %v4613, 7
        %v4615 = vsub.s32 %v4612, %v4614
        %v4616 = vrot.slane %v4602, %v4615
        %v4617 = vcombine.high %v3904, %v1681
        %v4619 = vunpack.c.l.s4 1983009808
        %v4620 = vunpack.c.0.s8 %v4619
        %v4621 = vlaneseq
        %v4622 = vshrl.u32 %v4621, 7
        %v4623 = vsub.s32 %v4620, %v4622
        %v4624 = vrot.slane %v3904, %v4623
        %v4626 = vunpack.c.l.s4 1983009808
        %v4627 = vunpack.c.0.s8 %v4626
        %v4628 = vlaneseq
        %v4629 = vshrl.u32 %v4628, 7
        %v4630 = vsub.s32 %v4627, %v4629
        %v4631 = vrot.slane %v4617, %v4630
        %v4632 = vcombine.low %v4609, %v4624
        %v4633 = vcombine.high %v4609, %v4624
        %v4635 = vunpack.c.l.s4 1934713408
        %v4636 = vunpack.c.0.s8 %v4635
        %v4637 = vlaneseq
        %v4638 = vshrl.u32 %v4637, 7
        %v4639 = vsub.s32 %v4636, %v4638
        %v4640 = vrot.slane %v4632, %v4639
        %v4642 = vunpack.c.l.s4 1934713408
        %v4643 = vunpack.c.0.s8 %v4642
        %v4644 = vlaneseq
        %v4645 = vshrl.u32 %v4644, 7
        %v4646 = vsub.s32 %v4643, %v4645
        %v4647 = vrot.slane %v4633, %v4646
        %v4648 = vcombine.low %v4616, %v4631
        %v4649 = vcombine.high %v4616, %v4631
        %v4651 = vunpack.c.l.s4 1934713408
        %v4652 = vunpack.c.0.s8 %v4651
        %v4653 = vlaneseq
        %v4654 = vshrl.u32 %v4653, 7
        %v4655 = vsub.s32 %v4652, %v4654
        %v4656 = vrot.slane %v4648, %v4655
        %v4658 = vunpack.c.l.s4 1934713408
        %v4659 = vunpack.c.0.s8 %v4658
        %v4660 = vlaneseq
        %v4661 = vshrl.u32 %v4660, 7
        %v4662 = vsub.s32 %v4659, %v4661
        %v4663 = vrot.slane %v4649, %v4662
        %v4664 = vcombine.high %v4640, 0
        %v4665 = vcombine.high %v4647, 0
        %v4666 = vcombine.high %v4656, 0
        %v4667 = vcombine.high %v4663, 0
        %v4668 = vcombine.high %v3900, %v1684
        %v4670 = vunpack.c.l.s4 1983009808
        %v4671 = vunpack.c.0.s8 %v4670
        %v4672 = vlaneseq
        %v4673 = vshrl.u32 %v4672, 7
        %v4674 = vsub.s32 %v4671, %v4673
        %v4675 = vrot.slane %v3900, %v4674
        %v4677 = vunpack.c.l.s4 1983009808
        %v4678 = vunpack.c.0.s8 %v4677
        %v4679 = vlaneseq
        %v4680 = vshrl.u32 %v4679, 7
        %v4681 = vsub.s32 %v4678, %v4680
        %v4682 = vrot.slane %v4668, %v4681
        %v4683 = vcombine.high %v3908, %v1684
        %v4685 = vunpack.c.l.s4 1983009808
        %v4686 = vunpack.c.0.s8 %v4685
        %v4687 = vlaneseq
        %v4688 = vshrl.u32 %v4687, 7
        %v4689 = vsub.s32 %v4686, %v4688
        %v4690 = vrot.slane %v3908, %v4689
        %v4692 = vunpack.c.l.s4 1983009808
        %v4693 = vunpack.c.0.s8 %v4692
        %v4694 = vlaneseq
        %v4695 = vshrl.u32 %v4694, 7
        %v4696 = vsub.s32 %v4693, %v4695
        %v4697 = vrot.slane %v4683, %v4696
        %v4698 = vcombine.low %v4675, %v4690
        %v4699 = vcombine.high %v4675, %v4690
        %v4701 = vunpack.c.l.s4 1934713408
        %v4702 = vunpack.c.0.s8 %v4701
        %v4703 = vlaneseq
        %v4704 = vshrl.u32 %v4703, 7
        %v4705 = vsub.s32 %v4702, %v4704
        %v4706 = vrot.slane %v4698, %v4705
        %v4708 = vunpack.c.l.s4 1934713408
        %v4709 = vunpack.c.0.s8 %v4708
        %v4710 = vlaneseq
        %v4711 = vshrl.u32 %v4710, 7
        %v4712 = vsub.s32 %v4709, %v4711
        %v4713 = vrot.slane %v4699, %v4712
        %v4714 = vcombine.low %v4682, %v4697
        %v4715 = vcombine.high %v4682, %v4697
        %v4717 = vunpack.c.l.s4 1934713408
        %v4718 = vunpack.c.0.s8 %v4717
        %v4719 = vlaneseq
        %v4720 = vshrl.u32 %v4719, 7
        %v4721 = vsub.s32 %v4718, %v4720
        %v4722 = vrot.slane %v4714, %v4721
        %v4724 = vunpack.c.l.s4 1934713408
        %v4725 = vunpack.c.0.s8 %v4724
        %v4726 = vlaneseq
        %v4727 = vshrl.u32 %v4726, 7
        %v4728 = vsub.s32 %v4725, %v4727
        %v4729 = vrot.slane %v4715, %v4728
        %v4730 = vcombine.high %v4706, 0
        %v4731 = vcombine.high %v4713, 0
        %v4732 = vcombine.high %v4722, 0
        %v4733 = vcombine.high %v4729, 0
        %v4734 = vcombine.high %v3912, %v1681
        %v4736 = vunpack.c.l.s4 1983009808
        %v4737 = vunpack.c.0.s8 %v4736
        %v4738 = vlaneseq
        %v4739 = vshrl.u32 %v4738, 7
        %v4740 = vsub.s32 %v4737, %v4739
        %v4741 = vrot.slane %v3912, %v4740
        %v4743 = vunpack.c.l.s4 1983009808
        %v4744 = vunpack.c.0.s8 %v4743
        %v4745 = vlaneseq
        %v4746 = vshrl.u32 %v4745, 7
        %v4747 = vsub.s32 %v4744, %v4746
        %v4748 = vrot.slane %v4734, %v4747
        %v4749 = vcombine.high %v3920, %v1681
        %v4751 = vunpack.c.l.s4 1983009808
        %v4752 = vunpack.c.0.s8 %v4751
        %v4753 = vlaneseq
        %v4754 = vshrl.u32 %v4753, 7
        %v4755 = vsub.s32 %v4752, %v4754
        %v4756 = vrot.slane %v3920, %v4755
        %v4758 = vunpack.c.l.s4 1983009808
        %v4759 = vunpack.c.0.s8 %v4758
        %v4760 = vlaneseq
        %v4761 = vshrl.u32 %v4760, 7
        %v4762 = vsub.s32 %v4759, %v4761
        %v4763 = vrot.slane %v4749, %v4762
        %v4764 = vcombine.low %v4741, %v4756
        %v4765 = vcombine.high %v4741, %v4756
        %v4767 = vunpack.c.l.s4 1934713408
        %v4768 = vunpack.c.0.s8 %v4767
        %v4769 = vlaneseq
        %v4770 = vshrl.u32 %v4769, 7
        %v4771 = vsub.s32 %v4768, %v4770
        %v4772 = vrot.slane %v4764, %v4771
        %v4774 = vunpack.c.l.s4 1934713408
        %v4775 = vunpack.c.0.s8 %v4774
        %v4776 = vlaneseq
        %v4777 = vshrl.u32 %v4776, 7
        %v4778 = vsub.s32 %v4775, %v4777
        %v4779 = vrot.slane %v4765, %v4778
        %v4780 = vcombine.low %v4748, %v4763
        %v4781 = vcombine.high %v4748, %v4763
        %v4783 = vunpack.c.l.s4 1934713408
        %v4784 = vunpack.c.0.s8 %v4783
        %v4785 = vlaneseq
        %v4786 = vshrl.u32 %v4785, 7
        %v4787 = vsub.s32 %v4784, %v4786
        %v4788 = vrot.slane %v4780, %v4787
        %v4790 = vunpack.c.l.s4 1934713408
        %v4791 = vunpack.c.0.s8 %v4790
        %v4792 = vlaneseq
        %v4793 = vshrl.u32 %v4792, 7
        %v4794 = vsub.s32 %v4791, %v4793
        %v4795 = vrot.slane %v4781, %v4794
        %v4796 = vcombine.high %v4772, 0
        %v4797 = vcombine.high %v4779, 0
        %v4798 = vcombine.high %v4788, 0
        %v4799 = vcombine.high %v4795, 0
        %v4800 = vcombine.high %v3916, %v1684
        %v4802 = vunpack.c.l.s4 1983009808
        %v4803 = vunpack.c.0.s8 %v4802
        %v4804 = vlaneseq
        %v4805 = vshrl.u32 %v4804, 7
        %v4806 = vsub.s32 %v4803, %v4805
        %v4807 = vrot.slane %v3916, %v4806
        %v4809 = vunpack.c.l.s4 1983009808
        %v4810 = vunpack.c.0.s8 %v4809
        %v4811 = vlaneseq
        %v4812 = vshrl.u32 %v4811, 7
        %v4813 = vsub.s32 %v4810, %v4812
        %v4814 = vrot.slane %v4800, %v4813
        %v4815 = vcombine.high %v3924, %v1684
        %v4817 = vunpack.c.l.s4 1983009808
        %v4818 = vunpack.c.0.s8 %v4817
        %v4819 = vlaneseq
        %v4820 = vshrl.u32 %v4819, 7
        %v4821 = vsub.s32 %v4818, %v4820
        %v4822 = vrot.slane %v3924, %v4821
        %v4824 = vunpack.c.l.s4 1983009808
        %v4825 = vunpack.c.0.s8 %v4824
        %v4826 = vlaneseq
        %v4827 = vshrl.u32 %v4826, 7
        %v4828 = vsub.s32 %v4825, %v4827
        %v4829 = vrot.slane %v4815, %v4828
        %v4830 = vcombine.low %v4807, %v4822
        %v4831 = vcombine.high %v4807, %v4822
        %v4833 = vunpack.c.l.s4 1934713408
        %v4834 = vunpack.c.0.s8 %v4833
        %v4835 = vlaneseq
        %v4836 = vshrl.u32 %v4835, 7
        %v4837 = vsub.s32 %v4834, %v4836
        %v4838 = vrot.slane %v4830, %v4837
        %v4840 = vunpack.c.l.s4 1934713408
        %v4841 = vunpack.c.0.s8 %v4840
        %v4842 = vlaneseq
        %v4843 = vshrl.u32 %v4842, 7
        %v4844 = vsub.s32 %v4841, %v4843
        %v4845 = vrot.slane %v4831, %v4844
        %v4846 = vcombine.low %v4814, %v4829
        %v4847 = vcombine.high %v4814, %v4829
        %v4849 = vunpack.c.l.s4 1934713408
        %v4850 = vunpack.c.0.s8 %v4849
        %v4851 = vlaneseq
        %v4852 = vshrl.u32 %v4851, 7
        %v4853 = vsub.s32 %v4850, %v4852
        %v4854 = vrot.slane %v4846, %v4853
        %v4856 = vunpack.c.l.s4 1934713408
        %v4857 = vunpack.c.0.s8 %v4856
        %v4858 = vlaneseq
        %v4859 = vshrl.u32 %v4858, 7
        %v4860 = vsub.s32 %v4857, %v4859
        %v4861 = vrot.slane %v4847, %v4860
        %v4862 = vcombine.high %v4838, 0
        %v4863 = vcombine.high %v4845, 0
        %v4864 = vcombine.high %v4854, 0
        %v4865 = vcombine.high %v4861, 0
        %v4866 = vcombine.high %v3928, %v1681
        %v4868 = vunpack.c.l.s4 1983009808
        %v4869 = vunpack.c.0.s8 %v4868
        %v4870 = vlaneseq
        %v4871 = vshrl.u32 %v4870, 7
        %v4872 = vsub.s32 %v4869, %v4871
        %v4873 = vrot.slane %v3928, %v4872
        %v4875 = vunpack.c.l.s4 1983009808
        %v4876 = vunpack.c.0.s8 %v4875
        %v4877 = vlaneseq
        %v4878 = vshrl.u32 %v4877, 7
        %v4879 = vsub.s32 %v4876, %v4878
        %v4880 = vrot.slane %v4866, %v4879
        %v4881 = vcombine.high %v3936, %v1681
        %v4883 = vunpack.c.l.s4 1983009808
        %v4884 = vunpack.c.0.s8 %v4883
        %v4885 = vlaneseq
        %v4886 = vshrl.u32 %v4885, 7
        %v4887 = vsub.s32 %v4884, %v4886
        %v4888 = vrot.slane %v3936, %v4887
        %v4890 = vunpack.c.l.s4 1983009808
        %v4891 = vunpack.c.0.s8 %v4890
        %v4892 = vlaneseq
        %v4893 = vshrl.u32 %v4892, 7
        %v4894 = vsub.s32 %v4891, %v4893
        %v4895 = vrot.slane %v4881, %v4894
        %v4896 = vcombine.low %v4873, %v4888
        %v4897 = vcombine.high %v4873, %v4888
        %v4899 = vunpack.c.l.s4 1934713408
        %v4900 = vunpack.c.0.s8 %v4899
        %v4901 = vlaneseq
        %v4902 = vshrl.u32 %v4901, 7
        %v4903 = vsub.s32 %v4900, %v4902
        %v4904 = vrot.slane %v4896, %v4903
        %v4906 = vunpack.c.l.s4 1934713408
        %v4907 = vunpack.c.0.s8 %v4906
        %v4908 = vlaneseq
        %v4909 = vshrl.u32 %v4908, 7
        %v4910 = vsub.s32 %v4907, %v4909
        %v4911 = vrot.slane %v4897, %v4910
        %v4912 = vcombine.low %v4880, %v4895
        %v4913 = vcombine.high %v4880, %v4895
        %v4915 = vunpack.c.l.s4 1934713408
        %v4916 = vunpack.c.0.s8 %v4915
        %v4917 = vlaneseq
        %v4918 = vshrl.u32 %v4917, 7
        %v4919 = vsub.s32 %v4916, %v4918
        %v4920 = vrot.slane %v4912, %v4919
        %v4922 = vunpack.c.l.s4 1934713408
        %v4923 = vunpack.c.0.s8 %v4922
        %v4924 = vlaneseq
        %v4925 = vshrl.u32 %v4924, 7
        %v4926 = vsub.s32 %v4923, %v4925
        %v4927 = vrot.slane %v4913, %v4926
        %v4928 = vcombine.high %v4904, 0
        %v4929 = vcombine.high %v4911, 0
        %v4930 = vcombine.high %v4920, 0
        %v4931 = vcombine.high %v4927, 0
        %v4932 = vcombine.high %v3932, %v1684
        %v4934 = vunpack.c.l.s4 1983009808
        %v4935 = vunpack.c.0.s8 %v4934
        %v4936 = vlaneseq
        %v4937 = vshrl.u32 %v4936, 7
        %v4938 = vsub.s32 %v4935, %v4937
        %v4939 = vrot.slane %v3932, %v4938
        %v4941 = vunpack.c.l.s4 1983009808
        %v4942 = vunpack.c.0.s8 %v4941
        %v4943 = vlaneseq
        %v4944 = vshrl.u32 %v4943, 7
        %v4945 = vsub.s32 %v4942, %v4944
        %v4946 = vrot.slane %v4932, %v4945
        %v4947 = vcombine.high %v3940, %v1684
        %v4949 = vunpack.c.l.s4 1983009808
        %v4950 = vunpack.c.0.s8 %v4949
        %v4951 = vlaneseq
        %v4952 = vshrl.u32 %v4951, 7
        %v4953 = vsub.s32 %v4950, %v4952
        %v4954 = vrot.slane %v3940, %v4953
        %v4956 = vunpack.c.l.s4 1983009808
        %v4957 = vunpack.c.0.s8 %v4956
        %v4958 = vlaneseq
        %v4959 = vshrl.u32 %v4958, 7
        %v4960 = vsub.s32 %v4957, %v4959
        %v4961 = vrot.slane %v4947, %v4960
        %v4962 = vcombine.low %v4939, %v4954
        %v4963 = vcombine.high %v4939, %v4954
        %v4965 = vunpack.c.l.s4 1934713408
        %v4966 = vunpack.c.0.s8 %v4965
        %v4967 = vlaneseq
        %v4968 = vshrl.u32 %v4967, 7
        %v4969 = vsub.s32 %v4966, %v4968
        %v4970 = vrot.slane %v4962, %v4969
        %v4972 = vunpack.c.l.s4 1934713408
        %v4973 = vunpack.c.0.s8 %v4972
        %v4974 = vlaneseq
        %v4975 = vshrl.u32 %v4974, 7
        %v4976 = vsub.s32 %v4973, %v4975
        %v4977 = vrot.slane %v4963, %v4976
        %v4978 = vcombine.low %v4946, %v4961
        %v4979 = vcombine.high %v4946, %v4961
        %v4981 = vunpack.c.l.s4 1934713408
        %v4982 = vunpack.c.0.s8 %v4981
        %v4983 = vlaneseq
        %v4984 = vshrl.u32 %v4983, 7
        %v4985 = vsub.s32 %v4982, %v4984
        %v4986 = vrot.slane %v4978, %v4985
        %v4988 = vunpack.c.l.s4 1934713408
        %v4989 = vunpack.c.0.s8 %v4988
        %v4990 = vlaneseq
        %v4991 = vshrl.u32 %v4990, 7
        %v4992 = vsub.s32 %v4989, %v4991
        %v4993 = vrot.slane %v4979, %v4992
        %v4994 = vcombine.high %v4970, 0
        %v4995 = vcombine.high %v4977, 0
        %v4996 = vcombine.high %v4986, 0
        %v4997 = vcombine.high %v4993, 0
        %v4998 = vcombine.low %v3980, %v3987
        %v5000 = vunpack.c.l.s4 1983009808
        %v5001 = vunpack.c.0.s8 %v5000
        %v5002 = vlaneseq
        %v5003 = vshrl.u32 %v5002, 7
        %v5004 = vsub.s32 %v5001, %v5003
        %v5005 = vrot.slane %v4998, %v5004
        %v5006 = vcombine.low %v4004, %v4005
        %v5008 = vunpack.c.l.s4 1983009808
        %v5009 = vunpack.c.0.s8 %v5008
        %v5010 = vlaneseq
        %v5011 = vshrl.u32 %v5010, 7
        %v5012 = vsub.s32 %v5009, %v5011
        %v5013 = vrot.slane %v5006, %v5012
        %v5014 = vcombine.low %v3996, %v4003
        %v5016 = vunpack.c.l.s4 1983009808
        %v5017 = vunpack.c.0.s8 %v5016
        %v5018 = vlaneseq
        %v5019 = vshrl.u32 %v5018, 7
        %v5020 = vsub.s32 %v5017, %v5019
        %v5021 = vrot.slane %v5014, %v5020
        %v5022 = vcombine.low %v4006, %v4007
        %v5024 = vunpack.c.l.s4 1983009808
        %v5025 = vunpack.c.0.s8 %v5024
        %v5026 = vlaneseq
        %v5027 = vshrl.u32 %v5026, 7
        %v5028 = vsub.s32 %v5025, %v5027
        %v5029 = vrot.slane %v5022, %v5028
        %v5030 = vcombine.low %v5005, %v5013
        %v5032 = vunpack.c.l.s4 1934713408
        %v5033 = vunpack.c.0.s8 %v5032
        %v5034 = vlaneseq
        %v5035 = vshrl.u32 %v5034, 7
        %v5036 = vsub.s32 %v5033, %v5035
        %v5037 = vrot.slane %v5030, %v5036
        %v5038 = vcombine.low %v5021, %v5029
        %v5040 = vunpack.c.l.s4 1934713408
        %v5041 = vunpack.c.0.s8 %v5040
        %v5042 = vlaneseq
        %v5043 = vshrl.u32 %v5042, 7
        %v5044 = vsub.s32 %v5041, %v5043
        %v5045 = vrot.slane %v5038, %v5044
        %v5046 = vcombine.low %v5037, %v5045
        %v5047 = vcombine.high %v5037, %v5045
        %v5048 = vcombine.low %v4046, %v4053
        %v5050 = vunpack.c.l.s4 1983009808
        %v5051 = vunpack.c.0.s8 %v5050
        %v5052 = vlaneseq
        %v5053 = vshrl.u32 %v5052, 7
        %v5054 = vsub.s32 %v5051, %v5053
        %v5055 = vrot.slane %v5048, %v5054
        %v5056 = vcombine.low %v4070, %v4071
        %v5058 = vunpack.c.l.s4 1983009808
        %v5059 = vunpack.c.0.s8 %v5058
        %v5060 = vlaneseq
        %v5061 = vshrl.u32 %v5060, 7
        %v5062 = vsub.s32 %v5059, %v5061
        %v5063 = vrot.slane %v5056, %v5062
        %v5064 = vcombine.low %v4062, %v4069
        %v5066 = vunpack.c.l.s4 1983009808
        %v5067 = vunpack.c.0.s8 %v5066
        %v5068 = vlaneseq
        %v5069 = vshrl.u32 %v5068, 7
        %v5070 = vsub.s32 %v5067, %v5069
        %v5071 = vrot.slane %v5064, %v5070
        %v5072 = vcombine.low %v4072, %v4073
        %v5074 = vunpack.c.l.s4 1983009808
        %v5075 = vunpack.c.0.s8 %v5074
        %v5076 = vlaneseq
        %v5077 = vshrl.u32 %v5076, 7
        %v5078 = vsub.s32 %v5075, %v5077
        %v5079 = vrot.slane %v5072, %v5078
        %v5080 = vcombine.low %v5055, %v5063
        %v5082 = vunpack.c.l.s4 1934713408
        %v5083 = vunpack.c.0.s8 %v5082
        %v5084 = vlaneseq
        %v5085 = vshrl.u32 %v5084, 7
        %v5086 = vsub.s32 %v5083, %v5085
        %v5087 = vrot.slane %v5080, %v5086
        %v5088 = vcombine.low %v5071, %v5079
        %v5090 = vunpack.c.l.s4 1934713408
        %v5091 = vunpack.c.0.s8 %v5090
        %v5092 = vlaneseq
        %v5093 = vshrl.u32 %v5092, 7
        %v5094 = vsub.s32 %v5091, %v5093
        %v5095 = vrot.slane %v5088, %v5094
        %v5096 = vcombine.low %v5087, %v5095
        %v5097 = vcombine.high %v5087, %v5095
        %v5098 = vcombine.low %v4112, %v4119
        %v5100 = vunpack.c.l.s4 1983009808
        %v5101 = vunpack.c.0.s8 %v5100
        %v5102 = vlaneseq
        %v5103 = vshrl.u32 %v5102, 7
        %v5104 = vsub.s32 %v5101, %v5103
        %v5105 = vrot.slane %v5098, %v5104
        %v5106 = vcombine.low %v4136, %v4137
        %v5108 = vunpack.c.l.s4 1983009808
        %v5109 = vunpack.c.0.s8 %v5108
        %v5110 = vlaneseq
        %v5111 = vshrl.u32 %v5110, 7
        %v5112 = vsub.s32 %v5109, %v5111
        %v5113 = vrot.slane %v5106, %v5112
        %v5114 = vcombine.low %v4128, %v4135
        %v5116 = vunpack.c.l.s4 1983009808
        %v5117 = vunpack.c.0.s8 %v5116
        %v5118 = vlaneseq
        %v5119 = vshrl.u32 %v5118, 7
        %v5120 = vsub.s32 %v5117, %v5119
        %v5121 = vrot.slane %v5114, %v5120
        %v5122 = vcombine.low %v4138, %v4139
        %v5124 = vunpack.c.l.s4 1983009808
        %v5125 = vunpack.c.0.s8 %v5124
        %v5126 = vlaneseq
        %v5127 = vshrl.u32 %v5126, 7
        %v5128 = vsub.s32 %v5125, %v5127
        %v5129 = vrot.slane %v5122, %v5128
        %v5130 = vcombine.low %v5105, %v5113
        %v5132 = vunpack.c.l.s4 1934713408
        %v5133 = vunpack.c.0.s8 %v5132
        %v5134 = vlaneseq
        %v5135 = vshrl.u32 %v5134, 7
        %v5136 = vsub.s32 %v5133, %v5135
        %v5137 = vrot.slane %v5130, %v5136
        %v5138 = vcombine.low %v5121, %v5129
        %v5140 = vunpack.c.l.s4 1934713408
        %v5141 = vunpack.c.0.s8 %v5140
        %v5142 = vlaneseq
        %v5143 = vshrl.u32 %v5142, 7
        %v5144 = vsub.s32 %v5141, %v5143
        %v5145 = vrot.slane %v5138, %v5144
        %v5146 = vcombine.low %v5137, %v5145
        %v5147 = vcombine.high %v5137, %v5145
        %v5148 = vcombine.low %v4178, %v4185
        %v5150 = vunpack.c.l.s4 1983009808
        %v5151 = vunpack.c.0.s8 %v5150
        %v5152 = vlaneseq
        %v5153 = vshrl.u32 %v5152, 7
        %v5154 = vsub.s32 %v5151, %v5153
        %v5155 = vrot.slane %v5148, %v5154
        %v5156 = vcombine.low %v4202, %v4203
        %v5158 = vunpack.c.l.s4 1983009808
        %v5159 = vunpack.c.0.s8 %v5158
        %v5160 = vlaneseq
        %v5161 = vshrl.u32 %v5160, 7
        %v5162 = vsub.s32 %v5159, %v5161
        %v5163 = vrot.slane %v5156, %v5162
        %v5164 = vcombine.low %v4194, %v4201
        %v5166 = vunpack.c.l.s4 1983009808
        %v5167 = vunpack.c.0.s8 %v5166
        %v5168 = vlaneseq
        %v5169 = vshrl.u32 %v5168, 7
        %v5170 = vsub.s32 %v5167, %v5169
        %v5171 = vrot.slane %v5164, %v5170
        %v5172 = vcombine.low %v4204, %v4205
        %v5174 = vunpack.c.l.s4 1983009808
        %v5175 = vunpack.c.0.s8 %v5174
        %v5176 = vlaneseq
        %v5177 = vshrl.u32 %v5176, 7
        %v5178 = vsub.s32 %v5175, %v5177
        %v5179 = vrot.slane %v5172, %v5178
        %v5180 = vcombine.low %v5155, %v5163
        %v5182 = vunpack.c.l.s4 1934713408
        %v5183 = vunpack.c.0.s8 %v5182
        %v5184 = vlaneseq
        %v5185 = vshrl.u32 %v5184, 7
        %v5186 = vsub.s32 %v5183, %v5185
        %v5187 = vrot.slane %v5180, %v5186
        %v5188 = vcombine.low %v5171, %v5179
        %v5190 = vunpack.c.l.s4 1934713408
        %v5191 = vunpack.c.0.s8 %v5190
        %v5192 = vlaneseq
        %v5193 = vshrl.u32 %v5192, 7
        %v5194 = vsub.s32 %v5191, %v5193
        %v5195 = vrot.slane %v5188, %v5194
        %v5196 = vcombine.low %v5187, %v5195
        %v5197 = vcombine.high %v5187, %v5195
        %v5198 = vcombine.low %v4244, %v4251
        %v5200 = vunpack.c.l.s4 1983009808
        %v5201 = vunpack.c.0.s8 %v5200
        %v5202 = vlaneseq
        %v5203 = vshrl.u32 %v5202, 7
        %v5204 = vsub.s32 %v5201, %v5203
        %v5205 = vrot.slane %v5198, %v5204
        %v5206 = vcombine.low %v4268, %v4269
        %v5208 = vunpack.c.l.s4 1983009808
        %v5209 = vunpack.c.0.s8 %v5208
        %v5210 = vlaneseq
        %v5211 = vshrl.u32 %v5210, 7
        %v5212 = vsub.s32 %v5209, %v5211
        %v5213 = vrot.slane %v5206, %v5212
        %v5214 = vcombine.low %v4260, %v4267
        %v5216 = vunpack.c.l.s4 1983009808
        %v5217 = vunpack.c.0.s8 %v5216
        %v5218 = vlaneseq
        %v5219 = vshrl.u32 %v5218, 7
        %v5220 = vsub.s32 %v5217, %v5219
        %v5221 = vrot.slane %v5214, %v5220
        %v5222 = vcombine.low %v4270, %v4271
        %v5224 = vunpack.c.l.s4 1983009808
        %v5225 = vunpack.c.0.s8 %v5224
        %v5226 = vlaneseq
        %v5227 = vshrl.u32 %v5226, 7
        %v5228 = vsub.s32 %v5225, %v5227
        %v5229 = vrot.slane %v5222, %v5228
        %v5230 = vcombine.low %v5205, %v5213
        %v5232 = vunpack.c.l.s4 1934713408
        %v5233 = vunpack.c.0.s8 %v5232
        %v5234 = vlaneseq
        %v5235 = vshrl.u32 %v5234, 7
        %v5236 = vsub.s32 %v5233, %v5235
        %v5237 = vrot.slane %v5230, %v5236
        %v5238 = vcombine.low %v5221, %v5229
        %v5240 = vunpack.c.l.s4 1934713408
        %v5241 = vunpack.c.0.s8 %v5240
        %v5242 = vlaneseq
        %v5243 = vshrl.u32 %v5242, 7
        %v5244 = vsub.s32 %v5241, %v5243
        %v5245 = vrot.slane %v5238, %v5244
        %v5246 = vcombine.low %v5237, %v5245
        %v5247 = vcombine.high %v5237, %v5245
        %v5248 = vcombine.low %v4310, %v4317
        %v5250 = vunpack.c.l.s4 1983009808
        %v5251 = vunpack.c.0.s8 %v5250
        %v5252 = vlaneseq
        %v5253 = vshrl.u32 %v5252, 7
        %v5254 = vsub.s32 %v5251, %v5253
        %v5255 = vrot.slane %v5248, %v5254
        %v5256 = vcombine.low %v4334, %v4335
        %v5258 = vunpack.c.l.s4 1983009808
        %v5259 = vunpack.c.0.s8 %v5258
        %v5260 = vlaneseq
        %v5261 = vshrl.u32 %v5260, 7
        %v5262 = vsub.s32 %v5259, %v5261
        %v5263 = vrot.slane %v5256, %v5262
        %v5264 = vcombine.low %v4326, %v4333
        %v5266 = vunpack.c.l.s4 1983009808
        %v5267 = vunpack.c.0.s8 %v5266
        %v5268 = vlaneseq
        %v5269 = vshrl.u32 %v5268, 7
        %v5270 = vsub.s32 %v5267, %v5269
        %v5271 = vrot.slane %v5264, %v5270
        %v5272 = vcombine.low %v4336, %v4337
        %v5274 = vunpack.c.l.s4 1983009808
        %v5275 = vunpack.c.0.s8 %v5274
        %v5276 = vlaneseq
        %v5277 = vshrl.u32 %v5276, 7
        %v5278 = vsub.s32 %v5275, %v5277
        %v5279 = vrot.slane %v5272, %v5278
        %v5280 = vcombine.low %v5255, %v5263
        %v5282 = vunpack.c.l.s4 1934713408
        %v5283 = vunpack.c.0.s8 %v5282
        %v5284 = vlaneseq
        %v5285 = vshrl.u32 %v5284, 7
        %v5286 = vsub.s32 %v5283, %v5285
        %v5287 = vrot.slane %v5280, %v5286
        %v5288 = vcombine.low %v5271, %v5279
        %v5290 = vunpack.c.l.s4 1934713408
        %v5291 = vunpack.c.0.s8 %v5290
        %v5292 = vlaneseq
        %v5293 = vshrl.u32 %v5292, 7
        %v5294 = vsub.s32 %v5291, %v5293
        %v5295 = vrot.slane %v5288, %v5294
        %v5296 = vcombine.low %v5287, %v5295
        %v5297 = vcombine.high %v5287, %v5295
        %v5298 = vcombine.low %v4376, %v4383
        %v5300 = vunpack.c.l.s4 1983009808
        %v5301 = vunpack.c.0.s8 %v5300
        %v5302 = vlaneseq
        %v5303 = vshrl.u32 %v5302, 7
        %v5304 = vsub.s32 %v5301, %v5303
        %v5305 = vrot.slane %v5298, %v5304
        %v5306 = vcombine.low %v4400, %v4401
        %v5308 = vunpack.c.l.s4 1983009808
        %v5309 = vunpack.c.0.s8 %v5308
        %v5310 = vlaneseq
        %v5311 = vshrl.u32 %v5310, 7
        %v5312 = vsub.s32 %v5309, %v5311
        %v5313 = vrot.slane %v5306, %v5312
        %v5314 = vcombine.low %v4392, %v4399
        %v5316 = vunpack.c.l.s4 1983009808
        %v5317 = vunpack.c.0.s8 %v5316
        %v5318 = vlaneseq
        %v5319 = vshrl.u32 %v5318, 7
        %v5320 = vsub.s32 %v5317, %v5319
        %v5321 = vrot.slane %v5314, %v5320
        %v5322 = vcombine.low %v4402, %v4403
        %v5324 = vunpack.c.l.s4 1983009808
        %v5325 = vunpack.c.0.s8 %v5324
        %v5326 = vlaneseq
        %v5327 = vshrl.u32 %v5326, 7
        %v5328 = vsub.s32 %v5325, %v5327
        %v5329 = vrot.slane %v5322, %v5328
        %v5330 = vcombine.low %v5305, %v5313
        %v5332 = vunpack.c.l.s4 1934713408
        %v5333 = vunpack.c.0.s8 %v5332
        %v5334 = vlaneseq
        %v5335 = vshrl.u32 %v5334, 7
        %v5336 = vsub.s32 %v5333, %v5335
        %v5337 = vrot.slane %v5330, %v5336
        %v5338 = vcombine.low %v5321, %v5329
        %v5340 = vunpack.c.l.s4 1934713408
        %v5341 = vunpack.c.0.s8 %v5340
        %v5342 = vlaneseq
        %v5343 = vshrl.u32 %v5342, 7
        %v5344 = vsub.s32 %v5341, %v5343
        %v5345 = vrot.slane %v5338, %v5344
        %v5346 = vcombine.low %v5337, %v5345
        %v5347 = vcombine.high %v5337, %v5345
        %v5348 = vcombine.low %v4442, %v4449
        %v5350 = vunpack.c.l.s4 1983009808
        %v5351 = vunpack.c.0.s8 %v5350
        %v5352 = vlaneseq
        %v5353 = vshrl.u32 %v5352, 7
        %v5354 = vsub.s32 %v5351, %v5353
        %v5355 = vrot.slane %v5348, %v5354
        %v5356 = vcombine.low %v4466, %v4467
        %v5358 = vunpack.c.l.s4 1983009808
        %v5359 = vunpack.c.0.s8 %v5358
        %v5360 = vlaneseq
        %v5361 = vshrl.u32 %v5360, 7
        %v5362 = vsub.s32 %v5359, %v5361
        %v5363 = vrot.slane %v5356, %v5362
        %v5364 = vcombine.low %v4458, %v4465
        %v5366 = vunpack.c.l.s4 1983009808
        %v5367 = vunpack.c.0.s8 %v5366
        %v5368 = vlaneseq
        %v5369 = vshrl.u32 %v5368, 7
        %v5370 = vsub.s32 %v5367, %v5369
        %v5371 = vrot.slane %v5364, %v5370
        %v5372 = vcombine.low %v4468, %v4469
        %v5374 = vunpack.c.l.s4 1983009808
        %v5375 = vunpack.c.0.s8 %v5374
        %v5376 = vlaneseq
        %v5377 = vshrl.u32 %v5376, 7
        %v5378 = vsub.s32 %v5375, %v5377
        %v5379 = vrot.slane %v5372, %v5378
        %v5380 = vcombine.low %v5355, %v5363
        %v5382 = vunpack.c.l.s4 1934713408
        %v5383 = vunpack.c.0.s8 %v5382
        %v5384 = vlaneseq
        %v5385 = vshrl.u32 %v5384, 7
        %v5386 = vsub.s32 %v5383, %v5385
        %v5387 = vrot.slane %v5380, %v5386
        %v5388 = vcombine.low %v5371, %v5379
        %v5390 = vunpack.c.l.s4 1934713408
        %v5391 = vunpack.c.0.s8 %v5390
        %v5392 = vlaneseq
        %v5393 = vshrl.u32 %v5392, 7
        %v5394 = vsub.s32 %v5391, %v5393
        %v5395 = vrot.slane %v5388, %v5394
        %v5396 = vcombine.low %v5387, %v5395
        %v5397 = vcombine.high %v5387, %v5395
        %v5398 = vcombine.low %v4508, %v4515
        %v5400 = vunpack.c.l.s4 1983009808
        %v5401 = vunpack.c.0.s8 %v5400
        %v5402 = vlaneseq
        %v5403 = vshrl.u32 %v5402, 7
        %v5404 = vsub.s32 %v5401, %v5403
        %v5405 = vrot.slane %v5398, %v5404
        %v5406 = vcombine.low %v4532, %v4533
        %v5408 = vunpack.c.l.s4 1983009808
        %v5409 = vunpack.c.0.s8 %v5408
        %v5410 = vlaneseq
        %v5411 = vshrl.u32 %v5410, 7
        %v5412 = vsub.s32 %v5409, %v5411
        %v5413 = vrot.slane %v5406, %v5412
        %v5414 = vcombine.low %v4524, %v4531
        %v5416 = vunpack.c.l.s4 1983009808
        %v5417 = vunpack.c.0.s8 %v5416
        %v5418 = vlaneseq
        %v5419 = vshrl.u32 %v5418, 7
        %v5420 = vsub.s32 %v5417, %v5419
        %v5421 = vrot.slane %v5414, %v5420
        %v5422 = vcombine.low %v4534, %v4535
        %v5424 = vunpack.c.l.s4 1983009808
        %v5425 = vunpack.c.0.s8 %v5424
        %v5426 = vlaneseq
        %v5427 = vshrl.u32 %v5426, 7
        %v5428 = vsub.s32 %v5425, %v5427
        %v5429 = vrot.slane %v5422, %v5428
        %v5430 = vcombine.low %v5405, %v5413
        %v5432 = vunpack.c.l.s4 1934713408
        %v5433 = vunpack.c.0.s8 %v5432
        %v5434 = vlaneseq
        %v5435 = vshrl.u32 %v5434, 7
        %v5436 = vsub.s32 %v5433, %v5435
        %v5437 = vrot.slane %v5430, %v5436
        %v5438 = vcombine.low %v5421, %v5429
        %v5440 = vunpack.c.l.s4 1934713408
        %v5441 = vunpack.c.0.s8 %v5440
        %v5442 = vlaneseq
        %v5443 = vshrl.u32 %v5442, 7
        %v5444 = vsub.s32 %v5441, %v5443
        %v5445 = vrot.slane %v5438, %v5444
        %v5446 = vcombine.low %v5437, %v5445
        %v5447 = vcombine.high %v5437, %v5445
        %v5448 = vcombine.low %v4574, %v4581
        %v5450 = vunpack.c.l.s4 1983009808
        %v5451 = vunpack.c.0.s8 %v5450
        %v5452 = vlaneseq
        %v5453 = vshrl.u32 %v5452, 7
        %v5454 = vsub.s32 %v5451, %v5453
        %v5455 = vrot.slane %v5448, %v5454
        %v5456 = vcombine.low %v4598, %v4599
        %v5458 = vunpack.c.l.s4 1983009808
        %v5459 = vunpack.c.0.s8 %v5458
        %v5460 = vlaneseq
        %v5461 = vshrl.u32 %v5460, 7
        %v5462 = vsub.s32 %v5459, %v5461
        %v5463 = vrot.slane %v5456, %v5462
        %v5464 = vcombine.low %v4590, %v4597
        %v5466 = vunpack.c.l.s4 1983009808
        %v5467 = vunpack.c.0.s8 %v5466
        %v5468 = vlaneseq
        %v5469 = vshrl.u32 %v5468, 7
        %v5470 = vsub.s32 %v5467, %v5469
        %v5471 = vrot.slane %v5464, %v5470
        %v5472 = vcombine.low %v4600, %v4601
        %v5474 = vunpack.c.l.s4 1983009808
        %v5475 = vunpack.c.0.s8 %v5474
        %v5476 = vlaneseq
        %v5477 = vshrl.u32 %v5476, 7
        %v5478 = vsub.s32 %v5475, %v5477
        %v5479 = vrot.slane %v5472, %v5478
        %v5480 = vcombine.low %v5455, %v5463
        %v5482 = vunpack.c.l.s4 1934713408
        %v5483 = vunpack.c.0.s8 %v5482
        %v5484 = vlaneseq
        %v5485 = vshrl.u32 %v5484, 7
        %v5486 = vsub.s32 %v5483, %v5485
        %v5487 = vrot.slane %v5480, %v5486
        %v5488 = vcombine.low %v5471, %v5479
        %v5490 = vunpack.c.l.s4 1934713408
        %v5491 = vunpack.c.0.s8 %v5490
        %v5492 = vlaneseq
        %v5493 = vshrl.u32 %v5492, 7
        %v5494 = vsub.s32 %v5491, %v5493
        %v5495 = vrot.slane %v5488, %v5494
        %v5496 = vcombine.low %v5487, %v5495
        %v5497 = vcombine.high %v5487, %v5495
        %v5498 = vcombine.low %v4640, %v4647
        %v5500 = vunpack.c.l.s4 1983009808
        %v5501 = vunpack.c.0.s8 %v5500
        %v5502 = vlaneseq
        %v5503 = vshrl.u32 %v5502, 7
        %v5504 = vsub.s32 %v5501, %v5503
        %v5505 = vrot.slane %v5498, %v5504
        %v5506 = vcombine.low %v4664, %v4665
        %v5508 = vunpack.c.l.s4 1983009808
        %v5509 = vunpack.c.0.s8 %v5508
        %v5510 = vlaneseq
        %v5511 = vshrl.u32 %v5510, 7
        %v5512 = vsub.s32 %v5509, %v5511
        %v5513 = vrot.slane %v5506, %v5512
        %v5514 = vcombine.low %v4656, %v4663
        %v5516 = vunpack.c.l.s4 1983009808
        %v5517 = vunpack.c.0.s8 %v5516
        %v5518 = vlaneseq
        %v5519 = vshrl.u32 %v5518, 7
        %v5520 = vsub.s32 %v5517, %v5519
        %v5521 = vrot.slane %v5514, %v5520
        %v5522 = vcombine.low %v4666, %v4667
        %v5524 = vunpack.c.l.s4 1983009808
        %v5525 = vunpack.c.0.s8 %v5524
        %v5526 = vlaneseq
        %v5527 = vshrl.u32 %v5526, 7
        %v5528 = vsub.s32 %v5525, %v5527
        %v5529 = vrot.slane %v5522, %v5528
        %v5530 = vcombine.low %v5505, %v5513
        %v5532 = vunpack.c.l.s4 1934713408
        %v5533 = vunpack.c.0.s8 %v5532
        %v5534 = vlaneseq
        %v5535 = vshrl.u32 %v5534, 7
        %v5536 = vsub.s32 %v5533, %v5535
        %v5537 = vrot.slane %v5530, %v5536
        %v5538 = vcombine.low %v5521, %v5529
        %v5540 = vunpack.c.l.s4 1934713408
        %v5541 = vunpack.c.0.s8 %v5540
        %v5542 = vlaneseq
        %v5543 = vshrl.u32 %v5542, 7
        %v5544 = vsub.s32 %v5541, %v5543
        %v5545 = vrot.slane %v5538, %v5544
        %v5546 = vcombine.low %v5537, %v5545
        %v5547 = vcombine.high %v5537, %v5545
        %v5548 = vcombine.low %v4706, %v4713
        %v5550 = vunpack.c.l.s4 1983009808
        %v5551 = vunpack.c.0.s8 %v5550
        %v5552 = vlaneseq
        %v5553 = vshrl.u32 %v5552, 7
        %v5554 = vsub.s32 %v5551, %v5553
        %v5555 = vrot.slane %v5548, %v5554
        %v5556 = vcombine.low %v4730, %v4731
        %v5558 = vunpack.c.l.s4 1983009808
        %v5559 = vunpack.c.0.s8 %v5558
        %v5560 = vlaneseq
        %v5561 = vshrl.u32 %v5560, 7
        %v5562 = vsub.s32 %v5559, %v5561
        %v5563 = vrot.slane %v5556, %v5562
        %v5564 = vcombine.low %v4722, %v4729
        %v5566 = vunpack.c.l.s4 1983009808
        %v5567 = vunpack.c.0.s8 %v5566
        %v5568 = vlaneseq
        %v5569 = vshrl.u32 %v5568, 7
        %v5570 = vsub.s32 %v5567, %v5569
        %v5571 = vrot.slane %v5564, %v5570
        %v5572 = vcombine.low %v4732, %v4733
        %v5574 = vunpack.c.l.s4 1983009808
        %v5575 = vunpack.c.0.s8 %v5574
        %v5576 = vlaneseq
        %v5577 = vshrl.u32 %v5576, 7
        %v5578 = vsub.s32 %v5575, %v5577
        %v5579 = vrot.slane %v5572, %v5578
        %v5580 = vcombine.low %v5555, %v5563
        %v5582 = vunpack.c.l.s4 1934713408
        %v5583 = vunpack.c.0.s8 %v5582
        %v5584 = vlaneseq
        %v5585 = vshrl.u32 %v5584, 7
        %v5586 = vsub.s32 %v5583, %v5585
        %v5587 = vrot.slane %v5580, %v5586
        %v5588 = vcombine.low %v5571, %v5579
        %v5590 = vunpack.c.l.s4 1934713408
        %v5591 = vunpack.c.0.s8 %v5590
        %v5592 = vlaneseq
        %v5593 = vshrl.u32 %v5592, 7
        %v5594 = vsub.s32 %v5591, %v5593
        %v5595 = vrot.slane %v5588, %v5594
        %v5596 = vcombine.low %v5587, %v5595
        %v5597 = vcombine.high %v5587, %v5595
        %v5598 = vcombine.low %v4772, %v4779
        %v5600 = vunpack.c.l.s4 1983009808
        %v5601 = vunpack.c.0.s8 %v5600
        %v5602 = vlaneseq
        %v5603 = vshrl.u32 %v5602, 7
        %v5604 = vsub.s32 %v5601, %v5603
        %v5605 = vrot.slane %v5598, %v5604
        %v5606 = vcombine.low %v4796, %v4797
        %v5608 = vunpack.c.l.s4 1983009808
        %v5609 = vunpack.c.0.s8 %v5608
        %v5610 = vlaneseq
        %v5611 = vshrl.u32 %v5610, 7
        %v5612 = vsub.s32 %v5609, %v5611
        %v5613 = vrot.slane %v5606, %v5612
        %v5614 = vcombine.low %v4788, %v4795
        %v5616 = vunpack.c.l.s4 1983009808
        %v5617 = vunpack.c.0.s8 %v5616
        %v5618 = vlaneseq
        %v5619 = vshrl.u32 %v5618, 7
        %v5620 = vsub.s32 %v5617, %v5619
        %v5621 = vrot.slane %v5614, %v5620
        %v5622 = vcombine.low %v4798, %v4799
        %v5624 = vunpack.c.l.s4 1983009808
        %v5625 = vunpack.c.0.s8 %v5624
        %v5626 = vlaneseq
        %v5627 = vshrl.u32 %v5626, 7
        %v5628 = vsub.s32 %v5625, %v5627
        %v5629 = vrot.slane %v5622, %v5628
        %v5630 = vcombine.low %v5605, %v5613
        %v5632 = vunpack.c.l.s4 1934713408
        %v5633 = vunpack.c.0.s8 %v5632
        %v5634 = vlaneseq
        %v5635 = vshrl.u32 %v5634, 7
        %v5636 = vsub.s32 %v5633, %v5635
        %v5637 = vrot.slane %v5630, %v5636
        %v5638 = vcombine.low %v5621, %v5629
        %v5640 = vunpack.c.l.s4 1934713408
        %v5641 = vunpack.c.0.s8 %v5640
        %v5642 = vlaneseq
        %v5643 = vshrl.u32 %v5642, 7
        %v5644 = vsub.s32 %v5641, %v5643
        %v5645 = vrot.slane %v5638, %v5644
        %v5646 = vcombine.low %v5637, %v5645
        %v5647 = vcombine.high %v5637, %v5645
        %v5648 = vcombine.low %v4838, %v4845
        %v5650 = vunpack.c.l.s4 1983009808
        %v5651 = vunpack.c.0.s8 %v5650
        %v5652 = vlaneseq
        %v5653 = vshrl.u32 %v5652, 7
        %v5654 = vsub.s32 %v5651, %v5653
        %v5655 = vrot.slane %v5648, %v5654
        %v5656 = vcombine.low %v4862, %v4863
        %v5658 = vunpack.c.l.s4 1983009808
        %v5659 = vunpack.c.0.s8 %v5658
        %v5660 = vlaneseq
        %v5661 = vshrl.u32 %v5660, 7
        %v5662 = vsub.s32 %v5659, %v5661
        %v5663 = vrot.slane %v5656, %v5662
        %v5664 = vcombine.low %v4854, %v4861
        %v5666 = vunpack.c.l.s4 1983009808
        %v5667 = vunpack.c.0.s8 %v5666
        %v5668 = vlaneseq
        %v5669 = vshrl.u32 %v5668, 7
        %v5670 = vsub.s32 %v5667, %v5669
        %v5671 = vrot.slane %v5664, %v5670
        %v5672 = vcombine.low %v4864, %v4865
        %v5674 = vunpack.c.l.s4 1983009808
        %v5675 = vunpack.c.0.s8 %v5674
        %v5676 = vlaneseq
        %v5677 = vshrl.u32 %v5676, 7
        %v5678 = vsub.s32 %v5675, %v5677
        %v5679 = vrot.slane %v5672, %v5678
        %v5680 = vcombine.low %v5655, %v5663
        %v5682 = vunpack.c.l.s4 1934713408
        %v5683 = vunpack.c.0.s8 %v5682
        %v5684 = vlaneseq
        %v5685 = vshrl.u32 %v5684, 7
        %v5686 = vsub.s32 %v5683, %v5685
        %v5687 = vrot.slane %v5680, %v5686
        %v5688 = vcombine.low %v5671, %v5679
        %v5690 = vunpack.c.l.s4 1934713408
        %v5691 = vunpack.c.0.s8 %v5690
        %v5692 = vlaneseq
        %v5693 = vshrl.u32 %v5692, 7
        %v5694 = vsub.s32 %v5691, %v5693
        %v5695 = vrot.slane %v5688, %v5694
        %v5696 = vcombine.low %v5687, %v5695
        %v5697 = vcombine.high %v5687, %v5695
        %v5698 = vcombine.low %v4904, %v4911
        %v5700 = vunpack.c.l.s4 1983009808
        %v5701 = vunpack.c.0.s8 %v5700
        %v5702 = vlaneseq
        %v5703 = vshrl.u32 %v5702, 7
        %v5704 = vsub.s32 %v5701, %v5703
        %v5705 = vrot.slane %v5698, %v5704
        %v5706 = vcombine.low %v4928, %v4929
        %v5708 = vunpack.c.l.s4 1983009808
        %v5709 = vunpack.c.0.s8 %v5708
        %v5710 = vlaneseq
        %v5711 = vshrl.u32 %v5710, 7
        %v5712 = vsub.s32 %v5709, %v5711
        %v5713 = vrot.slane %v5706, %v5712
        %v5714 = vcombine.low %v4920, %v4927
        %v5716 = vunpack.c.l.s4 1983009808
        %v5717 = vunpack.c.0.s8 %v5716
        %v5718 = vlaneseq
        %v5719 = vshrl.u32 %v5718, 7
        %v5720 = vsub.s32 %v5717, %v5719
        %v5721 = vrot.slane %v5714, %v5720
        %v5722 = vcombine.low %v4930, %v4931
        %v5724 = vunpack.c.l.s4 1983009808
        %v5725 = vunpack.c.0.s8 %v5724
        %v5726 = vlaneseq
        %v5727 = vshrl.u32 %v5726, 7
        %v5728 = vsub.s32 %v5725, %v5727
        %v5729 = vrot.slane %v5722, %v5728
        %v5730 = vcombine.low %v5705, %v5713
        %v5732 = vunpack.c.l.s4 1934713408
        %v5733 = vunpack.c.0.s8 %v5732
        %v5734 = vlaneseq
        %v5735 = vshrl.u32 %v5734, 7
        %v5736 = vsub.s32 %v5733, %v5735
        %v5737 = vrot.slane %v5730, %v5736
        %v5738 = vcombine.low %v5721, %v5729
        %v5740 = vunpack.c.l.s4 1934713408
        %v5741 = vunpack.c.0.s8 %v5740
        %v5742 = vlaneseq
        %v5743 = vshrl.u32 %v5742, 7
        %v5744 = vsub.s32 %v5741, %v5743
        %v5745 = vrot.slane %v5738, %v5744
        %v5746 = vcombine.low %v5737, %v5745
        %v5747 = vcombine.high %v5737, %v5745
        %v5748 = vcombine.low %v4970, %v4977
        %v5750 = vunpack.c.l.s4 1983009808
        %v5751 = vunpack.c.0.s8 %v5750
        %v5752 = vlaneseq
        %v5753 = vshrl.u32 %v5752, 7
        %v5754 = vsub.s32 %v5751, %v5753
        %v5755 = vrot.slane %v5748, %v5754
        %v5756 = vcombine.low %v4994, %v4995
        %v5758 = vunpack.c.l.s4 1983009808
        %v5759 = vunpack.c.0.s8 %v5758
        %v5760 = vlaneseq
        %v5761 = vshrl.u32 %v5760, 7
        %v5762 = vsub.s32 %v5759, %v5761
        %v5763 = vrot.slane %v5756, %v5762
        %v5764 = vcombine.low %v4986, %v4993
        %v5766 = vunpack.c.l.s4 1983009808
        %v5767 = vunpack.c.0.s8 %v5766
        %v5768 = vlaneseq
        %v5769 = vshrl.u32 %v5768, 7
        %v5770 = vsub.s32 %v5767, %v5769
        %v5771 = vrot.slane %v5764, %v5770
        %v5772 = vcombine.low %v4996, %v4997
        %v5774 = vunpack.c.l.s4 1983009808
        %v5775 = vunpack.c.0.s8 %v5774
        %v5776 = vlaneseq
        %v5777 = vshrl.u32 %v5776, 7
        %v5778 = vsub.s32 %v5775, %v5777
        %v5779 = vrot.slane %v5772, %v5778
        %v5780 = vcombine.low %v5755, %v5763
        %v5782 = vunpack.c.l.s4 1934713408
        %v5783 = vunpack.c.0.s8 %v5782
        %v5784 = vlaneseq
        %v5785 = vshrl.u32 %v5784, 7
        %v5786 = vsub.s32 %v5783, %v5785
        %v5787 = vrot.slane %v5780, %v5786
        %v5788 = vcombine.low %v5771, %v5779
        %v5790 = vunpack.c.l.s4 1934713408
        %v5791 = vunpack.c.0.s8 %v5790
        %v5792 = vlaneseq
        %v5793 = vshrl.u32 %v5792, 7
        %v5794 = vsub.s32 %v5791, %v5793
        %v5795 = vrot.slane %v5788, %v5794
        %v5796 = vcombine.low %v5787, %v5795
        %v5797 = vcombine.high %v5787, %v5795
        %v5800 = vpack.i.b16 %v5096, %v5046
        %v5801 = vshrl.u32 %v5046, 16
        %v5802 = vshrl.u32 %v5096, 16
        %v5803 = vpack.i.b16 %v5802, %v5801
        %v5806 = vpack.i.b16 %v5097, %v5047
        %v5807 = vshrl.u32 %v5047, 16
        %v5808 = vshrl.u32 %v5097, 16
        %v5809 = vpack.i.b16 %v5808, %v5807
        %v5812 = vpack.i.b16 %v5196, %v5146
        %v5813 = vshrl.u32 %v5146, 16
        %v5814 = vshrl.u32 %v5196, 16
        %v5815 = vpack.i.b16 %v5814, %v5813
        %v5818 = vpack.i.b16 %v5197, %v5147
        %v5819 = vshrl.u32 %v5147, 16
        %v5820 = vshrl.u32 %v5197, 16
        %v5821 = vpack.i.b16 %v5820, %v5819
        %v5824 = vpack.i.b16 %v5296, %v5246
        %v5825 = vshrl.u32 %v5246, 16
        %v5826 = vshrl.u32 %v5296, 16
        %v5827 = vpack.i.b16 %v5826, %v5825
        %v5830 = vpack.i.b16 %v5297, %v5247
        %v5831 = vshrl.u32 %v5247, 16
        %v5832 = vshrl.u32 %v5297, 16
        %v5833 = vpack.i.b16 %v5832, %v5831
        %v5836 = vpack.i.b16 %v5396, %v5346
        %v5837 = vshrl.u32 %v5346, 16
        %v5838 = vshrl.u32 %v5396, 16
        %v5839 = vpack.i.b16 %v5838, %v5837
        %v5842 = vpack.i.b16 %v5397, %v5347
        %v5843 = vshrl.u32 %v5347, 16
        %v5844 = vshrl.u32 %v5397, 16
        %v5845 = vpack.i.b16 %v5844, %v5843
        %v5848 = vpack.i.b16 %v5496, %v5446
        %v5849 = vshrl.u32 %v5446, 16
        %v5850 = vshrl.u32 %v5496, 16
        %v5851 = vpack.i.b16 %v5850, %v5849
        %v5854 = vpack.i.b16 %v5497, %v5447
        %v5855 = vshrl.u32 %v5447, 16
        %v5856 = vshrl.u32 %v5497, 16
        %v5857 = vpack.i.b16 %v5856, %v5855
        %v5860 = vpack.i.b16 %v5596, %v5546
        %v5861 = vshrl.u32 %v5546, 16
        %v5862 = vshrl.u32 %v5596, 16
        %v5863 = vpack.i.b16 %v5862, %v5861
        %v5866 = vpack.i.b16 %v5597, %v5547
        %v5867 = vshrl.u32 %v5547, 16
        %v5868 = vshrl.u32 %v5597, 16
        %v5869 = vpack.i.b16 %v5868, %v5867
        %v5872 = vpack.i.b16 %v5696, %v5646
        %v5873 = vshrl.u32 %v5646, 16
        %v5874 = vshrl.u32 %v5696, 16
        %v5875 = vpack.i.b16 %v5874, %v5873
        %v5878 = vpack.i.b16 %v5697, %v5647
        %v5879 = vshrl.u32 %v5647, 16
        %v5880 = vshrl.u32 %v5697, 16
        %v5881 = vpack.i.b16 %v5880, %v5879
        %v5884 = vpack.i.b16 %v5796, %v5746
        %v5885 = vshrl.u32 %v5746, 16
        %v5886 = vshrl.u32 %v5796, 16
        %v5887 = vpack.i.b16 %v5886, %v5885
        %v5890 = vpack.i.b16 %v5797, %v5747
        %v5891 = vshrl.u32 %v5747, 16
        %v5892 = vshrl.u32 %v5797, 16
        %v5893 = vpack.i.b16 %v5892, %v5891
        %v5894 = vpack.c.bf16 %v1525, %v1522
        %v5895 = vpack.c.bf16 %v1533, %v1530
        %v5896 = vpack.c.bf16 %v1541, %v1538
        %v5897 = vpack.c.bf16 %v1549, %v1546
        %v5898 = vpack.c.bf16 %v1557, %v1554
        %v5899 = vpack.c.bf16 %v1565, %v1562
        %v5900 = vpack.c.bf16 %v1573, %v1570
        %v5901 = vpack.c.bf16 %v1581, %v1578
        %5910 = vrot.lane.b32.xlu0 %v5894, 96
        %v5911 = vpop.permute.xlu0 %5910
        %5912 = vrot.lane.b32.xlu0 %v5895, 96
        %v5913 = vpop.permute.xlu0 %5912
        %5914 = vrot.lane.b32.xlu0 %v5896, 96
        %v5915 = vpop.permute.xlu0 %5914
        %5916 = vrot.lane.b32.xlu0 %v5897, 96
        %v5917 = vpop.permute.xlu0 %5916
        %5918 = vrot.lane.b32.xlu0 %v5898, 96
        %v5919 = vpop.permute.xlu0 %5918
        %5920 = vrot.lane.b32.xlu0 %v5899, 96
        %v5921 = vpop.permute.xlu0 %5920
        %5922 = vrot.lane.b32.xlu0 %v5900, 96
        %v5923 = vpop.permute.xlu0 %5922
        %5924 = vrot.lane.b32.xlu0 %v5901, 96
        %v5925 = vpop.permute.xlu0 %5924
        %5926 = vrot.lane.b32.xlu0 %v5894, 64
        %v5927 = vpop.permute.xlu0 %5926
        %5928 = vrot.lane.b32.xlu0 %v5895, 64
        %v5929 = vpop.permute.xlu0 %5928
        %5930 = vrot.lane.b32.xlu0 %v5896, 64
        %v5931 = vpop.permute.xlu0 %5930
        %5932 = vrot.lane.b32.xlu0 %v5897, 64
        %v5933 = vpop.permute.xlu0 %5932
        %5934 = vrot.lane.b32.xlu0 %v5898, 64
        %v5935 = vpop.permute.xlu0 %5934
        %5936 = vrot.lane.b32.xlu0 %v5899, 64
        %v5937 = vpop.permute.xlu0 %5936
        %5938 = vrot.lane.b32.xlu0 %v5900, 64
        %v5939 = vpop.permute.xlu0 %5938
        %5940 = vrot.lane.b32.xlu0 %v5901, 64
        %v5941 = vpop.permute.xlu0 %5940
        %5942 = vrot.lane.b32.xlu0 %v5894, 32
        %v5943 = vpop.permute.xlu0 %5942
        %5944 = vrot.lane.b32.xlu0 %v5895, 32
        %v5945 = vpop.permute.xlu0 %5944
        %5946 = vrot.lane.b32.xlu0 %v5896, 32
        %v5947 = vpop.permute.xlu0 %5946
        %5948 = vrot.lane.b32.xlu0 %v5897, 32
        %v5949 = vpop.permute.xlu0 %5948
        %5950 = vrot.lane.b32.xlu0 %v5898, 32
        %v5951 = vpop.permute.xlu0 %5950
        %5952 = vrot.lane.b32.xlu0 %v5899, 32
        %v5953 = vpop.permute.xlu0 %5952
        %5954 = vrot.lane.b32.xlu0 %v5900, 32
        %v5955 = vpop.permute.xlu0 %5954
        %5956 = vrot.lane.b32.xlu0 %v5901, 32
        %v5957 = vpop.permute.xlu0 %5956
        %v5960 = vpack.i.b16 %v5911, %v5894
        %v5962 = vshrl.u32 %v5894, 16
        %v5963 = vshrl.u32 %v5911, 16
        %v5964 = vpack.i.b16 %v5963, %v5962
        %v5968 = vpack.i.b16 %v5943, %v5927
        %v5970 = vshrl.u32 %v5927, 16
        %v5971 = vshrl.u32 %v5943, 16
        %v5972 = vpack.i.b16 %v5971, %v5970
        %v5976 = vpack.i.b16 %v5913, %v5895
        %v5978 = vshrl.u32 %v5895, 16
        %v5979 = vshrl.u32 %v5913, 16
        %v5980 = vpack.i.b16 %v5979, %v5978
        %v5984 = vpack.i.b16 %v5945, %v5929
        %v5986 = vshrl.u32 %v5929, 16
        %v5987 = vshrl.u32 %v5945, 16
        %v5988 = vpack.i.b16 %v5987, %v5986
        %v5992 = vpack.i.b16 %v5915, %v5896
        %v5994 = vshrl.u32 %v5896, 16
        %v5995 = vshrl.u32 %v5915, 16
        %v5996 = vpack.i.b16 %v5995, %v5994
        %v6000 = vpack.i.b16 %v5947, %v5931
        %v6002 = vshrl.u32 %v5931, 16
        %v6003 = vshrl.u32 %v5947, 16
        %v6004 = vpack.i.b16 %v6003, %v6002
        %v6008 = vpack.i.b16 %v5917, %v5897
        %v6010 = vshrl.u32 %v5897, 16
        %v6011 = vshrl.u32 %v5917, 16
        %v6012 = vpack.i.b16 %v6011, %v6010
        %v6016 = vpack.i.b16 %v5949, %v5933
        %v6018 = vshrl.u32 %v5933, 16
        %v6019 = vshrl.u32 %v5949, 16
        %v6020 = vpack.i.b16 %v6019, %v6018
        %v6024 = vpack.i.b16 %v5919, %v5898
        %v6026 = vshrl.u32 %v5898, 16
        %v6027 = vshrl.u32 %v5919, 16
        %v6028 = vpack.i.b16 %v6027, %v6026
        %v6032 = vpack.i.b16 %v5951, %v5935
        %v6034 = vshrl.u32 %v5935, 16
        %v6035 = vshrl.u32 %v5951, 16
        %v6036 = vpack.i.b16 %v6035, %v6034
        %v6040 = vpack.i.b16 %v5921, %v5899
        %v6042 = vshrl.u32 %v5899, 16
        %v6043 = vshrl.u32 %v5921, 16
        %v6044 = vpack.i.b16 %v6043, %v6042
        %v6048 = vpack.i.b16 %v5953, %v5937
        %v6050 = vshrl.u32 %v5937, 16
        %v6051 = vshrl.u32 %v5953, 16
        %v6052 = vpack.i.b16 %v6051, %v6050
        %v6056 = vpack.i.b16 %v5923, %v5900
        %v6058 = vshrl.u32 %v5900, 16
        %v6059 = vshrl.u32 %v5923, 16
        %v6060 = vpack.i.b16 %v6059, %v6058
        %v6064 = vpack.i.b16 %v5955, %v5939
        %v6066 = vshrl.u32 %v5939, 16
        %v6067 = vshrl.u32 %v5955, 16
        %v6068 = vpack.i.b16 %v6067, %v6066
        %v6072 = vpack.i.b16 %v5925, %v5901
        %v6074 = vshrl.u32 %v5901, 16
        %v6075 = vshrl.u32 %v5925, 16
        %v6076 = vpack.i.b16 %v6075, %v6074
        %v6080 = vpack.i.b16 %v5957, %v5941
        %v6082 = vshrl.u32 %v5941, 16
        %v6083 = vshrl.u32 %v5957, 16
        %v6084 = vpack.i.b16 %v6083, %v6082
        %v6086 = vcombine.high %v5960, %v1681
        %v6088 = vunpack.c.l.s4 1983009808
        %v6089 = vunpack.c.0.s8 %v6088
        %v6090 = vlaneseq
        %v6091 = vshrl.u32 %v6090, 7
        %v6092 = vsub.s32 %v6089, %v6091
        %v6093 = vrot.slane %v5960, %v6092
        %v6095 = vunpack.c.l.s4 1983009808
        %v6096 = vunpack.c.0.s8 %v6095
        %v6097 = vlaneseq
        %v6098 = vshrl.u32 %v6097, 7
        %v6099 = vsub.s32 %v6096, %v6098
        %v6100 = vrot.slane %v6086, %v6099
        %v6101 = vcombine.high %v5968, %v1681
        %v6103 = vunpack.c.l.s4 1983009808
        %v6104 = vunpack.c.0.s8 %v6103
        %v6105 = vlaneseq
        %v6106 = vshrl.u32 %v6105, 7
        %v6107 = vsub.s32 %v6104, %v6106
        %v6108 = vrot.slane %v5968, %v6107
        %v6110 = vunpack.c.l.s4 1983009808
        %v6111 = vunpack.c.0.s8 %v6110
        %v6112 = vlaneseq
        %v6113 = vshrl.u32 %v6112, 7
        %v6114 = vsub.s32 %v6111, %v6113
        %v6115 = vrot.slane %v6101, %v6114
        %v6116 = vcombine.low %v6093, %v6108
        %v6117 = vcombine.high %v6093, %v6108
        %v6119 = vunpack.c.l.s4 1934713408
        %v6120 = vunpack.c.0.s8 %v6119
        %v6121 = vlaneseq
        %v6122 = vshrl.u32 %v6121, 7
        %v6123 = vsub.s32 %v6120, %v6122
        %v6124 = vrot.slane %v6116, %v6123
        %v6126 = vunpack.c.l.s4 1934713408
        %v6127 = vunpack.c.0.s8 %v6126
        %v6128 = vlaneseq
        %v6129 = vshrl.u32 %v6128, 7
        %v6130 = vsub.s32 %v6127, %v6129
        %v6131 = vrot.slane %v6117, %v6130
        %v6132 = vcombine.low %v6100, %v6115
        %v6133 = vcombine.high %v6100, %v6115
        %v6135 = vunpack.c.l.s4 1934713408
        %v6136 = vunpack.c.0.s8 %v6135
        %v6137 = vlaneseq
        %v6138 = vshrl.u32 %v6137, 7
        %v6139 = vsub.s32 %v6136, %v6138
        %v6140 = vrot.slane %v6132, %v6139
        %v6142 = vunpack.c.l.s4 1934713408
        %v6143 = vunpack.c.0.s8 %v6142
        %v6144 = vlaneseq
        %v6145 = vshrl.u32 %v6144, 7
        %v6146 = vsub.s32 %v6143, %v6145
        %v6147 = vrot.slane %v6133, %v6146
        %v6148 = vcombine.high %v6124, 0
        %v6149 = vcombine.high %v6131, 0
        %v6150 = vcombine.high %v6140, 0
        %v6151 = vcombine.high %v6147, 0
        %v6152 = vcombine.high %v5964, %v1684
        %v6154 = vunpack.c.l.s4 1983009808
        %v6155 = vunpack.c.0.s8 %v6154
        %v6156 = vlaneseq
        %v6157 = vshrl.u32 %v6156, 7
        %v6158 = vsub.s32 %v6155, %v6157
        %v6159 = vrot.slane %v5964, %v6158
        %v6161 = vunpack.c.l.s4 1983009808
        %v6162 = vunpack.c.0.s8 %v6161
        %v6163 = vlaneseq
        %v6164 = vshrl.u32 %v6163, 7
        %v6165 = vsub.s32 %v6162, %v6164
        %v6166 = vrot.slane %v6152, %v6165
        %v6167 = vcombine.high %v5972, %v1684
        %v6169 = vunpack.c.l.s4 1983009808
        %v6170 = vunpack.c.0.s8 %v6169
        %v6171 = vlaneseq
        %v6172 = vshrl.u32 %v6171, 7
        %v6173 = vsub.s32 %v6170, %v6172
        %v6174 = vrot.slane %v5972, %v6173
        %v6176 = vunpack.c.l.s4 1983009808
        %v6177 = vunpack.c.0.s8 %v6176
        %v6178 = vlaneseq
        %v6179 = vshrl.u32 %v6178, 7
        %v6180 = vsub.s32 %v6177, %v6179
        %v6181 = vrot.slane %v6167, %v6180
        %v6182 = vcombine.low %v6159, %v6174
        %v6183 = vcombine.high %v6159, %v6174
        %v6185 = vunpack.c.l.s4 1934713408
        %v6186 = vunpack.c.0.s8 %v6185
        %v6187 = vlaneseq
        %v6188 = vshrl.u32 %v6187, 7
        %v6189 = vsub.s32 %v6186, %v6188
        %v6190 = vrot.slane %v6182, %v6189
        %v6192 = vunpack.c.l.s4 1934713408
        %v6193 = vunpack.c.0.s8 %v6192
        %v6194 = vlaneseq
        %v6195 = vshrl.u32 %v6194, 7
        %v6196 = vsub.s32 %v6193, %v6195
        %v6197 = vrot.slane %v6183, %v6196
        %v6198 = vcombine.low %v6166, %v6181
        %v6199 = vcombine.high %v6166, %v6181
        %v6201 = vunpack.c.l.s4 1934713408
        %v6202 = vunpack.c.0.s8 %v6201
        %v6203 = vlaneseq
        %v6204 = vshrl.u32 %v6203, 7
        %v6205 = vsub.s32 %v6202, %v6204
        %v6206 = vrot.slane %v6198, %v6205
        %v6208 = vunpack.c.l.s4 1934713408
        %v6209 = vunpack.c.0.s8 %v6208
        %v6210 = vlaneseq
        %v6211 = vshrl.u32 %v6210, 7
        %v6212 = vsub.s32 %v6209, %v6211
        %v6213 = vrot.slane %v6199, %v6212
        %v6214 = vcombine.high %v6190, 0
        %v6215 = vcombine.high %v6197, 0
        %v6216 = vcombine.high %v6206, 0
        %v6217 = vcombine.high %v6213, 0
        %v6218 = vcombine.high %v5976, %v1681
        %v6220 = vunpack.c.l.s4 1983009808
        %v6221 = vunpack.c.0.s8 %v6220
        %v6222 = vlaneseq
        %v6223 = vshrl.u32 %v6222, 7
        %v6224 = vsub.s32 %v6221, %v6223
        %v6225 = vrot.slane %v5976, %v6224
        %v6227 = vunpack.c.l.s4 1983009808
        %v6228 = vunpack.c.0.s8 %v6227
        %v6229 = vlaneseq
        %v6230 = vshrl.u32 %v6229, 7
        %v6231 = vsub.s32 %v6228, %v6230
        %v6232 = vrot.slane %v6218, %v6231
        %v6233 = vcombine.high %v5984, %v1681
        %v6235 = vunpack.c.l.s4 1983009808
        %v6236 = vunpack.c.0.s8 %v6235
        %v6237 = vlaneseq
        %v6238 = vshrl.u32 %v6237, 7
        %v6239 = vsub.s32 %v6236, %v6238
        %v6240 = vrot.slane %v5984, %v6239
        %v6242 = vunpack.c.l.s4 1983009808
        %v6243 = vunpack.c.0.s8 %v6242
        %v6244 = vlaneseq
        %v6245 = vshrl.u32 %v6244, 7
        %v6246 = vsub.s32 %v6243, %v6245
        %v6247 = vrot.slane %v6233, %v6246
        %v6248 = vcombine.low %v6225, %v6240
        %v6249 = vcombine.high %v6225, %v6240
        %v6251 = vunpack.c.l.s4 1934713408
        %v6252 = vunpack.c.0.s8 %v6251
        %v6253 = vlaneseq
        %v6254 = vshrl.u32 %v6253, 7
        %v6255 = vsub.s32 %v6252, %v6254
        %v6256 = vrot.slane %v6248, %v6255
        %v6258 = vunpack.c.l.s4 1934713408
        %v6259 = vunpack.c.0.s8 %v6258
        %v6260 = vlaneseq
        %v6261 = vshrl.u32 %v6260, 7
        %v6262 = vsub.s32 %v6259, %v6261
        %v6263 = vrot.slane %v6249, %v6262
        %v6264 = vcombine.low %v6232, %v6247
        %v6265 = vcombine.high %v6232, %v6247
        %v6267 = vunpack.c.l.s4 1934713408
        %v6268 = vunpack.c.0.s8 %v6267
        %v6269 = vlaneseq
        %v6270 = vshrl.u32 %v6269, 7
        %v6271 = vsub.s32 %v6268, %v6270
        %v6272 = vrot.slane %v6264, %v6271
        %v6274 = vunpack.c.l.s4 1934713408
        %v6275 = vunpack.c.0.s8 %v6274
        %v6276 = vlaneseq
        %v6277 = vshrl.u32 %v6276, 7
        %v6278 = vsub.s32 %v6275, %v6277
        %v6279 = vrot.slane %v6265, %v6278
        %v6280 = vcombine.high %v6256, 0
        %v6281 = vcombine.high %v6263, 0
        %v6282 = vcombine.high %v6272, 0
        %v6283 = vcombine.high %v6279, 0
        %v6284 = vcombine.high %v5980, %v1684
        %v6286 = vunpack.c.l.s4 1983009808
        %v6287 = vunpack.c.0.s8 %v6286
        %v6288 = vlaneseq
        %v6289 = vshrl.u32 %v6288, 7
        %v6290 = vsub.s32 %v6287, %v6289
        %v6291 = vrot.slane %v5980, %v6290
        %v6293 = vunpack.c.l.s4 1983009808
        %v6294 = vunpack.c.0.s8 %v6293
        %v6295 = vlaneseq
        %v6296 = vshrl.u32 %v6295, 7
        %v6297 = vsub.s32 %v6294, %v6296
        %v6298 = vrot.slane %v6284, %v6297
        %v6299 = vcombine.high %v5988, %v1684
        %v6301 = vunpack.c.l.s4 1983009808
        %v6302 = vunpack.c.0.s8 %v6301
        %v6303 = vlaneseq
        %v6304 = vshrl.u32 %v6303, 7
        %v6305 = vsub.s32 %v6302, %v6304
        %v6306 = vrot.slane %v5988, %v6305
        %v6308 = vunpack.c.l.s4 1983009808
        %v6309 = vunpack.c.0.s8 %v6308
        %v6310 = vlaneseq
        %v6311 = vshrl.u32 %v6310, 7
        %v6312 = vsub.s32 %v6309, %v6311
        %v6313 = vrot.slane %v6299, %v6312
        %v6314 = vcombine.low %v6291, %v6306
        %v6315 = vcombine.high %v6291, %v6306
        %v6317 = vunpack.c.l.s4 1934713408
        %v6318 = vunpack.c.0.s8 %v6317
        %v6319 = vlaneseq
        %v6320 = vshrl.u32 %v6319, 7
        %v6321 = vsub.s32 %v6318, %v6320
        %v6322 = vrot.slane %v6314, %v6321
        %v6324 = vunpack.c.l.s4 1934713408
        %v6325 = vunpack.c.0.s8 %v6324
        %v6326 = vlaneseq
        %v6327 = vshrl.u32 %v6326, 7
        %v6328 = vsub.s32 %v6325, %v6327
        %v6329 = vrot.slane %v6315, %v6328
        %v6330 = vcombine.low %v6298, %v6313
        %v6331 = vcombine.high %v6298, %v6313
        %v6333 = vunpack.c.l.s4 1934713408
        %v6334 = vunpack.c.0.s8 %v6333
        %v6335 = vlaneseq
        %v6336 = vshrl.u32 %v6335, 7
        %v6337 = vsub.s32 %v6334, %v6336
        %v6338 = vrot.slane %v6330, %v6337
        %v6340 = vunpack.c.l.s4 1934713408
        %v6341 = vunpack.c.0.s8 %v6340
        %v6342 = vlaneseq
        %v6343 = vshrl.u32 %v6342, 7
        %v6344 = vsub.s32 %v6341, %v6343
        %v6345 = vrot.slane %v6331, %v6344
        %v6346 = vcombine.high %v6322, 0
        %v6347 = vcombine.high %v6329, 0
        %v6348 = vcombine.high %v6338, 0
        %v6349 = vcombine.high %v6345, 0
        %v6350 = vcombine.high %v5992, %v1681
        %v6352 = vunpack.c.l.s4 1983009808
        %v6353 = vunpack.c.0.s8 %v6352
        %v6354 = vlaneseq
        %v6355 = vshrl.u32 %v6354, 7
        %v6356 = vsub.s32 %v6353, %v6355
        %v6357 = vrot.slane %v5992, %v6356
        %v6359 = vunpack.c.l.s4 1983009808
        %v6360 = vunpack.c.0.s8 %v6359
        %v6361 = vlaneseq
        %v6362 = vshrl.u32 %v6361, 7
        %v6363 = vsub.s32 %v6360, %v6362
        %v6364 = vrot.slane %v6350, %v6363
        %v6365 = vcombine.high %v6000, %v1681
        %v6367 = vunpack.c.l.s4 1983009808
        %v6368 = vunpack.c.0.s8 %v6367
        %v6369 = vlaneseq
        %v6370 = vshrl.u32 %v6369, 7
        %v6371 = vsub.s32 %v6368, %v6370
        %v6372 = vrot.slane %v6000, %v6371
        %v6374 = vunpack.c.l.s4 1983009808
        %v6375 = vunpack.c.0.s8 %v6374
        %v6376 = vlaneseq
        %v6377 = vshrl.u32 %v6376, 7
        %v6378 = vsub.s32 %v6375, %v6377
        %v6379 = vrot.slane %v6365, %v6378
        %v6380 = vcombine.low %v6357, %v6372
        %v6381 = vcombine.high %v6357, %v6372
        %v6383 = vunpack.c.l.s4 1934713408
        %v6384 = vunpack.c.0.s8 %v6383
        %v6385 = vlaneseq
        %v6386 = vshrl.u32 %v6385, 7
        %v6387 = vsub.s32 %v6384, %v6386
        %v6388 = vrot.slane %v6380, %v6387
        %v6390 = vunpack.c.l.s4 1934713408
        %v6391 = vunpack.c.0.s8 %v6390
        %v6392 = vlaneseq
        %v6393 = vshrl.u32 %v6392, 7
        %v6394 = vsub.s32 %v6391, %v6393
        %v6395 = vrot.slane %v6381, %v6394
        %v6396 = vcombine.low %v6364, %v6379
        %v6397 = vcombine.high %v6364, %v6379
        %v6399 = vunpack.c.l.s4 1934713408
        %v6400 = vunpack.c.0.s8 %v6399
        %v6401 = vlaneseq
        %v6402 = vshrl.u32 %v6401, 7
        %v6403 = vsub.s32 %v6400, %v6402
        %v6404 = vrot.slane %v6396, %v6403
        %v6406 = vunpack.c.l.s4 1934713408
        %v6407 = vunpack.c.0.s8 %v6406
        %v6408 = vlaneseq
        %v6409 = vshrl.u32 %v6408, 7
        %v6410 = vsub.s32 %v6407, %v6409
        %v6411 = vrot.slane %v6397, %v6410
        %v6412 = vcombine.high %v6388, 0
        %v6413 = vcombine.high %v6395, 0
        %v6414 = vcombine.high %v6404, 0
        %v6415 = vcombine.high %v6411, 0
        %v6416 = vcombine.high %v5996, %v1684
        %v6418 = vunpack.c.l.s4 1983009808
        %v6419 = vunpack.c.0.s8 %v6418
        %v6420 = vlaneseq
        %v6421 = vshrl.u32 %v6420, 7
        %v6422 = vsub.s32 %v6419, %v6421
        %v6423 = vrot.slane %v5996, %v6422
        %v6425 = vunpack.c.l.s4 1983009808
        %v6426 = vunpack.c.0.s8 %v6425
        %v6427 = vlaneseq
        %v6428 = vshrl.u32 %v6427, 7
        %v6429 = vsub.s32 %v6426, %v6428
        %v6430 = vrot.slane %v6416, %v6429
        %v6431 = vcombine.high %v6004, %v1684
        %v6433 = vunpack.c.l.s4 1983009808
        %v6434 = vunpack.c.0.s8 %v6433
        %v6435 = vlaneseq
        %v6436 = vshrl.u32 %v6435, 7
        %v6437 = vsub.s32 %v6434, %v6436
        %v6438 = vrot.slane %v6004, %v6437
        %v6440 = vunpack.c.l.s4 1983009808
        %v6441 = vunpack.c.0.s8 %v6440
        %v6442 = vlaneseq
        %v6443 = vshrl.u32 %v6442, 7
        %v6444 = vsub.s32 %v6441, %v6443
        %v6445 = vrot.slane %v6431, %v6444
        %v6446 = vcombine.low %v6423, %v6438
        %v6447 = vcombine.high %v6423, %v6438
        %v6449 = vunpack.c.l.s4 1934713408
        %v6450 = vunpack.c.0.s8 %v6449
        %v6451 = vlaneseq
        %v6452 = vshrl.u32 %v6451, 7
        %v6453 = vsub.s32 %v6450, %v6452
        %v6454 = vrot.slane %v6446, %v6453
        %v6456 = vunpack.c.l.s4 1934713408
        %v6457 = vunpack.c.0.s8 %v6456
        %v6458 = vlaneseq
        %v6459 = vshrl.u32 %v6458, 7
        %v6460 = vsub.s32 %v6457, %v6459
        %v6461 = vrot.slane %v6447, %v6460
        %v6462 = vcombine.low %v6430, %v6445
        %v6463 = vcombine.high %v6430, %v6445
        %v6465 = vunpack.c.l.s4 1934713408
        %v6466 = vunpack.c.0.s8 %v6465
        %v6467 = vlaneseq
        %v6468 = vshrl.u32 %v6467, 7
        %v6469 = vsub.s32 %v6466, %v6468
        %v6470 = vrot.slane %v6462, %v6469
        %v6472 = vunpack.c.l.s4 1934713408
        %v6473 = vunpack.c.0.s8 %v6472
        %v6474 = vlaneseq
        %v6475 = vshrl.u32 %v6474, 7
        %v6476 = vsub.s32 %v6473, %v6475
        %v6477 = vrot.slane %v6463, %v6476
        %v6478 = vcombine.high %v6454, 0
        %v6479 = vcombine.high %v6461, 0
        %v6480 = vcombine.high %v6470, 0
        %v6481 = vcombine.high %v6477, 0
        %v6482 = vcombine.high %v6008, %v1681
        %v6484 = vunpack.c.l.s4 1983009808
        %v6485 = vunpack.c.0.s8 %v6484
        %v6486 = vlaneseq
        %v6487 = vshrl.u32 %v6486, 7
        %v6488 = vsub.s32 %v6485, %v6487
        %v6489 = vrot.slane %v6008, %v6488
        %v6491 = vunpack.c.l.s4 1983009808
        %v6492 = vunpack.c.0.s8 %v6491
        %v6493 = vlaneseq
        %v6494 = vshrl.u32 %v6493, 7
        %v6495 = vsub.s32 %v6492, %v6494
        %v6496 = vrot.slane %v6482, %v6495
        %v6497 = vcombine.high %v6016, %v1681
        %v6499 = vunpack.c.l.s4 1983009808
        %v6500 = vunpack.c.0.s8 %v6499
        %v6501 = vlaneseq
        %v6502 = vshrl.u32 %v6501, 7
        %v6503 = vsub.s32 %v6500, %v6502
        %v6504 = vrot.slane %v6016, %v6503
        %v6506 = vunpack.c.l.s4 1983009808
        %v6507 = vunpack.c.0.s8 %v6506
        %v6508 = vlaneseq
        %v6509 = vshrl.u32 %v6508, 7
        %v6510 = vsub.s32 %v6507, %v6509
        %v6511 = vrot.slane %v6497, %v6510
        %v6512 = vcombine.low %v6489, %v6504
        %v6513 = vcombine.high %v6489, %v6504
        %v6515 = vunpack.c.l.s4 1934713408
        %v6516 = vunpack.c.0.s8 %v6515
        %v6517 = vlaneseq
        %v6518 = vshrl.u32 %v6517, 7
        %v6519 = vsub.s32 %v6516, %v6518
        %v6520 = vrot.slane %v6512, %v6519
        %v6522 = vunpack.c.l.s4 1934713408
        %v6523 = vunpack.c.0.s8 %v6522
        %v6524 = vlaneseq
        %v6525 = vshrl.u32 %v6524, 7
        %v6526 = vsub.s32 %v6523, %v6525
        %v6527 = vrot.slane %v6513, %v6526
        %v6528 = vcombine.low %v6496, %v6511
        %v6529 = vcombine.high %v6496, %v6511
        %v6531 = vunpack.c.l.s4 1934713408
        %v6532 = vunpack.c.0.s8 %v6531
        %v6533 = vlaneseq
        %v6534 = vshrl.u32 %v6533, 7
        %v6535 = vsub.s32 %v6532, %v6534
        %v6536 = vrot.slane %v6528, %v6535
        %v6538 = vunpack.c.l.s4 1934713408
        %v6539 = vunpack.c.0.s8 %v6538
        %v6540 = vlaneseq
        %v6541 = vshrl.u32 %v6540, 7
        %v6542 = vsub.s32 %v6539, %v6541
        %v6543 = vrot.slane %v6529, %v6542
        %v6544 = vcombine.high %v6520, 0
        %v6545 = vcombine.high %v6527, 0
        %v6546 = vcombine.high %v6536, 0
        %v6547 = vcombine.high %v6543, 0
        %v6548 = vcombine.high %v6012, %v1684
        %v6550 = vunpack.c.l.s4 1983009808
        %v6551 = vunpack.c.0.s8 %v6550
        %v6552 = vlaneseq
        %v6553 = vshrl.u32 %v6552, 7
        %v6554 = vsub.s32 %v6551, %v6553
        %v6555 = vrot.slane %v6012, %v6554
        %v6557 = vunpack.c.l.s4 1983009808
        %v6558 = vunpack.c.0.s8 %v6557
        %v6559 = vlaneseq
        %v6560 = vshrl.u32 %v6559, 7
        %v6561 = vsub.s32 %v6558, %v6560
        %v6562 = vrot.slane %v6548, %v6561
        %v6563 = vcombine.high %v6020, %v1684
        %v6565 = vunpack.c.l.s4 1983009808
        %v6566 = vunpack.c.0.s8 %v6565
        %v6567 = vlaneseq
        %v6568 = vshrl.u32 %v6567, 7
        %v6569 = vsub.s32 %v6566, %v6568
        %v6570 = vrot.slane %v6020, %v6569
        %v6572 = vunpack.c.l.s4 1983009808
        %v6573 = vunpack.c.0.s8 %v6572
        %v6574 = vlaneseq
        %v6575 = vshrl.u32 %v6574, 7
        %v6576 = vsub.s32 %v6573, %v6575
        %v6577 = vrot.slane %v6563, %v6576
        %v6578 = vcombine.low %v6555, %v6570
        %v6579 = vcombine.high %v6555, %v6570
        %v6581 = vunpack.c.l.s4 1934713408
        %v6582 = vunpack.c.0.s8 %v6581
        %v6583 = vlaneseq
        %v6584 = vshrl.u32 %v6583, 7
        %v6585 = vsub.s32 %v6582, %v6584
        %v6586 = vrot.slane %v6578, %v6585
        %v6588 = vunpack.c.l.s4 1934713408
        %v6589 = vunpack.c.0.s8 %v6588
        %v6590 = vlaneseq
        %v6591 = vshrl.u32 %v6590, 7
        %v6592 = vsub.s32 %v6589, %v6591
        %v6593 = vrot.slane %v6579, %v6592
        %v6594 = vcombine.low %v6562, %v6577
        %v6595 = vcombine.high %v6562, %v6577
        %v6597 = vunpack.c.l.s4 1934713408
        %v6598 = vunpack.c.0.s8 %v6597
        %v6599 = vlaneseq
        %v6600 = vshrl.u32 %v6599, 7
        %v6601 = vsub.s32 %v6598, %v6600
        %v6602 = vrot.slane %v6594, %v6601
        %v6604 = vunpack.c.l.s4 1934713408
        %v6605 = vunpack.c.0.s8 %v6604
        %v6606 = vlaneseq
        %v6607 = vshrl.u32 %v6606, 7
        %v6608 = vsub.s32 %v6605, %v6607
        %v6609 = vrot.slane %v6595, %v6608
        %v6610 = vcombine.high %v6586, 0
        %v6611 = vcombine.high %v6593, 0
        %v6612 = vcombine.high %v6602, 0
        %v6613 = vcombine.high %v6609, 0
        %v6614 = vcombine.high %v6024, %v1681
        %v6616 = vunpack.c.l.s4 1983009808
        %v6617 = vunpack.c.0.s8 %v6616
        %v6618 = vlaneseq
        %v6619 = vshrl.u32 %v6618, 7
        %v6620 = vsub.s32 %v6617, %v6619
        %v6621 = vrot.slane %v6024, %v6620
        %v6623 = vunpack.c.l.s4 1983009808
        %v6624 = vunpack.c.0.s8 %v6623
        %v6625 = vlaneseq
        %v6626 = vshrl.u32 %v6625, 7
        %v6627 = vsub.s32 %v6624, %v6626
        %v6628 = vrot.slane %v6614, %v6627
        %v6629 = vcombine.high %v6032, %v1681
        %v6631 = vunpack.c.l.s4 1983009808
        %v6632 = vunpack.c.0.s8 %v6631
        %v6633 = vlaneseq
        %v6634 = vshrl.u32 %v6633, 7
        %v6635 = vsub.s32 %v6632, %v6634
        %v6636 = vrot.slane %v6032, %v6635
        %v6638 = vunpack.c.l.s4 1983009808
        %v6639 = vunpack.c.0.s8 %v6638
        %v6640 = vlaneseq
        %v6641 = vshrl.u32 %v6640, 7
        %v6642 = vsub.s32 %v6639, %v6641
        %v6643 = vrot.slane %v6629, %v6642
        %v6644 = vcombine.low %v6621, %v6636
        %v6645 = vcombine.high %v6621, %v6636
        %v6647 = vunpack.c.l.s4 1934713408
        %v6648 = vunpack.c.0.s8 %v6647
        %v6649 = vlaneseq
        %v6650 = vshrl.u32 %v6649, 7
        %v6651 = vsub.s32 %v6648, %v6650
        %v6652 = vrot.slane %v6644, %v6651
        %v6654 = vunpack.c.l.s4 1934713408
        %v6655 = vunpack.c.0.s8 %v6654
        %v6656 = vlaneseq
        %v6657 = vshrl.u32 %v6656, 7
        %v6658 = vsub.s32 %v6655, %v6657
        %v6659 = vrot.slane %v6645, %v6658
        %v6660 = vcombine.low %v6628, %v6643
        %v6661 = vcombine.high %v6628, %v6643
        %v6663 = vunpack.c.l.s4 1934713408
        %v6664 = vunpack.c.0.s8 %v6663
        %v6665 = vlaneseq
        %v6666 = vshrl.u32 %v6665, 7
        %v6667 = vsub.s32 %v6664, %v6666
        %v6668 = vrot.slane %v6660, %v6667
        %v6670 = vunpack.c.l.s4 1934713408
        %v6671 = vunpack.c.0.s8 %v6670
        %v6672 = vlaneseq
        %v6673 = vshrl.u32 %v6672, 7
        %v6674 = vsub.s32 %v6671, %v6673
        %v6675 = vrot.slane %v6661, %v6674
        %v6676 = vcombine.high %v6652, 0
        %v6677 = vcombine.high %v6659, 0
        %v6678 = vcombine.high %v6668, 0
        %v6679 = vcombine.high %v6675, 0
        %v6680 = vcombine.high %v6028, %v1684
        %v6682 = vunpack.c.l.s4 1983009808
        %v6683 = vunpack.c.0.s8 %v6682
        %v6684 = vlaneseq
        %v6685 = vshrl.u32 %v6684, 7
        %v6686 = vsub.s32 %v6683, %v6685
        %v6687 = vrot.slane %v6028, %v6686
        %v6689 = vunpack.c.l.s4 1983009808
        %v6690 = vunpack.c.0.s8 %v6689
        %v6691 = vlaneseq
        %v6692 = vshrl.u32 %v6691, 7
        %v6693 = vsub.s32 %v6690, %v6692
        %v6694 = vrot.slane %v6680, %v6693
        %v6695 = vcombine.high %v6036, %v1684
        %v6697 = vunpack.c.l.s4 1983009808
        %v6698 = vunpack.c.0.s8 %v6697
        %v6699 = vlaneseq
        %v6700 = vshrl.u32 %v6699, 7
        %v6701 = vsub.s32 %v6698, %v6700
        %v6702 = vrot.slane %v6036, %v6701
        %v6704 = vunpack.c.l.s4 1983009808
        %v6705 = vunpack.c.0.s8 %v6704
        %v6706 = vlaneseq
        %v6707 = vshrl.u32 %v6706, 7
        %v6708 = vsub.s32 %v6705, %v6707
        %v6709 = vrot.slane %v6695, %v6708
        %v6710 = vcombine.low %v6687, %v6702
        %v6711 = vcombine.high %v6687, %v6702
        %v6713 = vunpack.c.l.s4 1934713408
        %v6714 = vunpack.c.0.s8 %v6713
        %v6715 = vlaneseq
        %v6716 = vshrl.u32 %v6715, 7
        %v6717 = vsub.s32 %v6714, %v6716
        %v6718 = vrot.slane %v6710, %v6717
        %v6720 = vunpack.c.l.s4 1934713408
        %v6721 = vunpack.c.0.s8 %v6720
        %v6722 = vlaneseq
        %v6723 = vshrl.u32 %v6722, 7
        %v6724 = vsub.s32 %v6721, %v6723
        %v6725 = vrot.slane %v6711, %v6724
        %v6726 = vcombine.low %v6694, %v6709
        %v6727 = vcombine.high %v6694, %v6709
        %v6729 = vunpack.c.l.s4 1934713408
        %v6730 = vunpack.c.0.s8 %v6729
        %v6731 = vlaneseq
        %v6732 = vshrl.u32 %v6731, 7
        %v6733 = vsub.s32 %v6730, %v6732
        %v6734 = vrot.slane %v6726, %v6733
        %v6736 = vunpack.c.l.s4 1934713408
        %v6737 = vunpack.c.0.s8 %v6736
        %v6738 = vlaneseq
        %v6739 = vshrl.u32 %v6738, 7
        %v6740 = vsub.s32 %v6737, %v6739
        %v6741 = vrot.slane %v6727, %v6740
        %v6742 = vcombine.high %v6718, 0
        %v6743 = vcombine.high %v6725, 0
        %v6744 = vcombine.high %v6734, 0
        %v6745 = vcombine.high %v6741, 0
        %v6746 = vcombine.high %v6040, %v1681
        %v6748 = vunpack.c.l.s4 1983009808
        %v6749 = vunpack.c.0.s8 %v6748
        %v6750 = vlaneseq
        %v6751 = vshrl.u32 %v6750, 7
        %v6752 = vsub.s32 %v6749, %v6751
        %v6753 = vrot.slane %v6040, %v6752
        %v6755 = vunpack.c.l.s4 1983009808
        %v6756 = vunpack.c.0.s8 %v6755
        %v6757 = vlaneseq
        %v6758 = vshrl.u32 %v6757, 7
        %v6759 = vsub.s32 %v6756, %v6758
        %v6760 = vrot.slane %v6746, %v6759
        %v6761 = vcombine.high %v6048, %v1681
        %v6763 = vunpack.c.l.s4 1983009808
        %v6764 = vunpack.c.0.s8 %v6763
        %v6765 = vlaneseq
        %v6766 = vshrl.u32 %v6765, 7
        %v6767 = vsub.s32 %v6764, %v6766
        %v6768 = vrot.slane %v6048, %v6767
        %v6770 = vunpack.c.l.s4 1983009808
        %v6771 = vunpack.c.0.s8 %v6770
        %v6772 = vlaneseq
        %v6773 = vshrl.u32 %v6772, 7
        %v6774 = vsub.s32 %v6771, %v6773
        %v6775 = vrot.slane %v6761, %v6774
        %v6776 = vcombine.low %v6753, %v6768
        %v6777 = vcombine.high %v6753, %v6768
        %v6779 = vunpack.c.l.s4 1934713408
        %v6780 = vunpack.c.0.s8 %v6779
        %v6781 = vlaneseq
        %v6782 = vshrl.u32 %v6781, 7
        %v6783 = vsub.s32 %v6780, %v6782
        %v6784 = vrot.slane %v6776, %v6783
        %v6786 = vunpack.c.l.s4 1934713408
        %v6787 = vunpack.c.0.s8 %v6786
        %v6788 = vlaneseq
        %v6789 = vshrl.u32 %v6788, 7
        %v6790 = vsub.s32 %v6787, %v6789
        %v6791 = vrot.slane %v6777, %v6790
        %v6792 = vcombine.low %v6760, %v6775
        %v6793 = vcombine.high %v6760, %v6775
        %v6795 = vunpack.c.l.s4 1934713408
        %v6796 = vunpack.c.0.s8 %v6795
        %v6797 = vlaneseq
        %v6798 = vshrl.u32 %v6797, 7
        %v6799 = vsub.s32 %v6796, %v6798
        %v6800 = vrot.slane %v6792, %v6799
        %v6802 = vunpack.c.l.s4 1934713408
        %v6803 = vunpack.c.0.s8 %v6802
        %v6804 = vlaneseq
        %v6805 = vshrl.u32 %v6804, 7
        %v6806 = vsub.s32 %v6803, %v6805
        %v6807 = vrot.slane %v6793, %v6806
        %v6808 = vcombine.high %v6784, 0
        %v6809 = vcombine.high %v6791, 0
        %v6810 = vcombine.high %v6800, 0
        %v6811 = vcombine.high %v6807, 0
        %v6812 = vcombine.high %v6044, %v1684
        %v6814 = vunpack.c.l.s4 1983009808
        %v6815 = vunpack.c.0.s8 %v6814
        %v6816 = vlaneseq
        %v6817 = vshrl.u32 %v6816, 7
        %v6818 = vsub.s32 %v6815, %v6817
        %v6819 = vrot.slane %v6044, %v6818
        %v6821 = vunpack.c.l.s4 1983009808
        %v6822 = vunpack.c.0.s8 %v6821
        %v6823 = vlaneseq
        %v6824 = vshrl.u32 %v6823, 7
        %v6825 = vsub.s32 %v6822, %v6824
        %v6826 = vrot.slane %v6812, %v6825
        %v6827 = vcombine.high %v6052, %v1684
        %v6829 = vunpack.c.l.s4 1983009808
        %v6830 = vunpack.c.0.s8 %v6829
        %v6831 = vlaneseq
        %v6832 = vshrl.u32 %v6831, 7
        %v6833 = vsub.s32 %v6830, %v6832
        %v6834 = vrot.slane %v6052, %v6833
        %v6836 = vunpack.c.l.s4 1983009808
        %v6837 = vunpack.c.0.s8 %v6836
        %v6838 = vlaneseq
        %v6839 = vshrl.u32 %v6838, 7
        %v6840 = vsub.s32 %v6837, %v6839
        %v6841 = vrot.slane %v6827, %v6840
        %v6842 = vcombine.low %v6819, %v6834
        %v6843 = vcombine.high %v6819, %v6834
        %v6845 = vunpack.c.l.s4 1934713408
        %v6846 = vunpack.c.0.s8 %v6845
        %v6847 = vlaneseq
        %v6848 = vshrl.u32 %v6847, 7
        %v6849 = vsub.s32 %v6846, %v6848
        %v6850 = vrot.slane %v6842, %v6849
        %v6852 = vunpack.c.l.s4 1934713408
        %v6853 = vunpack.c.0.s8 %v6852
        %v6854 = vlaneseq
        %v6855 = vshrl.u32 %v6854, 7
        %v6856 = vsub.s32 %v6853, %v6855
        %v6857 = vrot.slane %v6843, %v6856
        %v6858 = vcombine.low %v6826, %v6841
        %v6859 = vcombine.high %v6826, %v6841
        %v6861 = vunpack.c.l.s4 1934713408
        %v6862 = vunpack.c.0.s8 %v6861
        %v6863 = vlaneseq
        %v6864 = vshrl.u32 %v6863, 7
        %v6865 = vsub.s32 %v6862, %v6864
        %v6866 = vrot.slane %v6858, %v6865
        %v6868 = vunpack.c.l.s4 1934713408
        %v6869 = vunpack.c.0.s8 %v6868
        %v6870 = vlaneseq
        %v6871 = vshrl.u32 %v6870, 7
        %v6872 = vsub.s32 %v6869, %v6871
        %v6873 = vrot.slane %v6859, %v6872
        %v6874 = vcombine.high %v6850, 0
        %v6875 = vcombine.high %v6857, 0
        %v6876 = vcombine.high %v6866, 0
        %v6877 = vcombine.high %v6873, 0
        %v6878 = vcombine.high %v6056, %v1681
        %v6880 = vunpack.c.l.s4 1983009808
        %v6881 = vunpack.c.0.s8 %v6880
        %v6882 = vlaneseq
        %v6883 = vshrl.u32 %v6882, 7
        %v6884 = vsub.s32 %v6881, %v6883
        %v6885 = vrot.slane %v6056, %v6884
        %v6887 = vunpack.c.l.s4 1983009808
        %v6888 = vunpack.c.0.s8 %v6887
        %v6889 = vlaneseq
        %v6890 = vshrl.u32 %v6889, 7
        %v6891 = vsub.s32 %v6888, %v6890
        %v6892 = vrot.slane %v6878, %v6891
        %v6893 = vcombine.high %v6064, %v1681
        %v6895 = vunpack.c.l.s4 1983009808
        %v6896 = vunpack.c.0.s8 %v6895
        %v6897 = vlaneseq
        %v6898 = vshrl.u32 %v6897, 7
        %v6899 = vsub.s32 %v6896, %v6898
        %v6900 = vrot.slane %v6064, %v6899
        %v6902 = vunpack.c.l.s4 1983009808
        %v6903 = vunpack.c.0.s8 %v6902
        %v6904 = vlaneseq
        %v6905 = vshrl.u32 %v6904, 7
        %v6906 = vsub.s32 %v6903, %v6905
        %v6907 = vrot.slane %v6893, %v6906
        %v6908 = vcombine.low %v6885, %v6900
        %v6909 = vcombine.high %v6885, %v6900
        %v6911 = vunpack.c.l.s4 1934713408
        %v6912 = vunpack.c.0.s8 %v6911
        %v6913 = vlaneseq
        %v6914 = vshrl.u32 %v6913, 7
        %v6915 = vsub.s32 %v6912, %v6914
        %v6916 = vrot.slane %v6908, %v6915
        %v6918 = vunpack.c.l.s4 1934713408
        %v6919 = vunpack.c.0.s8 %v6918
        %v6920 = vlaneseq
        %v6921 = vshrl.u32 %v6920, 7
        %v6922 = vsub.s32 %v6919, %v6921
        %v6923 = vrot.slane %v6909, %v6922
        %v6924 = vcombine.low %v6892, %v6907
        %v6925 = vcombine.high %v6892, %v6907
        %v6927 = vunpack.c.l.s4 1934713408
        %v6928 = vunpack.c.0.s8 %v6927
        %v6929 = vlaneseq
        %v6930 = vshrl.u32 %v6929, 7
        %v6931 = vsub.s32 %v6928, %v6930
        %v6932 = vrot.slane %v6924, %v6931
        %v6934 = vunpack.c.l.s4 1934713408
        %v6935 = vunpack.c.0.s8 %v6934
        %v6936 = vlaneseq
        %v6937 = vshrl.u32 %v6936, 7
        %v6938 = vsub.s32 %v6935, %v6937
        %v6939 = vrot.slane %v6925, %v6938
        %v6940 = vcombine.high %v6916, 0
        %v6941 = vcombine.high %v6923, 0
        %v6942 = vcombine.high %v6932, 0
        %v6943 = vcombine.high %v6939, 0
        %v6944 = vcombine.high %v6060, %v1684
        %v6946 = vunpack.c.l.s4 1983009808
        %v6947 = vunpack.c.0.s8 %v6946
        %v6948 = vlaneseq
        %v6949 = vshrl.u32 %v6948, 7
        %v6950 = vsub.s32 %v6947, %v6949
        %v6951 = vrot.slane %v6060, %v6950
        %v6953 = vunpack.c.l.s4 1983009808
        %v6954 = vunpack.c.0.s8 %v6953
        %v6955 = vlaneseq
        %v6956 = vshrl.u32 %v6955, 7
        %v6957 = vsub.s32 %v6954, %v6956
        %v6958 = vrot.slane %v6944, %v6957
        %v6959 = vcombine.high %v6068, %v1684
        %v6961 = vunpack.c.l.s4 1983009808
        %v6962 = vunpack.c.0.s8 %v6961
        %v6963 = vlaneseq
        %v6964 = vshrl.u32 %v6963, 7
        %v6965 = vsub.s32 %v6962, %v6964
        %v6966 = vrot.slane %v6068, %v6965
        %v6968 = vunpack.c.l.s4 1983009808
        %v6969 = vunpack.c.0.s8 %v6968
        %v6970 = vlaneseq
        %v6971 = vshrl.u32 %v6970, 7
        %v6972 = vsub.s32 %v6969, %v6971
        %v6973 = vrot.slane %v6959, %v6972
        %v6974 = vcombine.low %v6951, %v6966
        %v6975 = vcombine.high %v6951, %v6966
        %v6977 = vunpack.c.l.s4 1934713408
        %v6978 = vunpack.c.0.s8 %v6977
        %v6979 = vlaneseq
        %v6980 = vshrl.u32 %v6979, 7
        %v6981 = vsub.s32 %v6978, %v6980
        %v6982 = vrot.slane %v6974, %v6981
        %v6984 = vunpack.c.l.s4 1934713408
        %v6985 = vunpack.c.0.s8 %v6984
        %v6986 = vlaneseq
        %v6987 = vshrl.u32 %v6986, 7
        %v6988 = vsub.s32 %v6985, %v6987
        %v6989 = vrot.slane %v6975, %v6988
        %v6990 = vcombine.low %v6958, %v6973
        %v6991 = vcombine.high %v6958, %v6973
        %v6993 = vunpack.c.l.s4 1934713408
        %v6994 = vunpack.c.0.s8 %v6993
        %v6995 = vlaneseq
        %v6996 = vshrl.u32 %v6995, 7
        %v6997 = vsub.s32 %v6994, %v6996
        %v6998 = vrot.slane %v6990, %v6997
        %v7000 = vunpack.c.l.s4 1934713408
        %v7001 = vunpack.c.0.s8 %v7000
        %v7002 = vlaneseq
        %v7003 = vshrl.u32 %v7002, 7
        %v7004 = vsub.s32 %v7001, %v7003
        %v7005 = vrot.slane %v6991, %v7004
        %v7006 = vcombine.high %v6982, 0
        %v7007 = vcombine.high %v6989, 0
        %v7008 = vcombine.high %v6998, 0
        %v7009 = vcombine.high %v7005, 0
        %v7010 = vcombine.high %v6072, %v1681
        %v7012 = vunpack.c.l.s4 1983009808
        %v7013 = vunpack.c.0.s8 %v7012
        %v7014 = vlaneseq
        %v7015 = vshrl.u32 %v7014, 7
        %v7016 = vsub.s32 %v7013, %v7015
        %v7017 = vrot.slane %v6072, %v7016
        %v7019 = vunpack.c.l.s4 1983009808
        %v7020 = vunpack.c.0.s8 %v7019
        %v7021 = vlaneseq
        %v7022 = vshrl.u32 %v7021, 7
        %v7023 = vsub.s32 %v7020, %v7022
        %v7024 = vrot.slane %v7010, %v7023
        %v7025 = vcombine.high %v6080, %v1681
        %v7027 = vunpack.c.l.s4 1983009808
        %v7028 = vunpack.c.0.s8 %v7027
        %v7029 = vlaneseq
        %v7030 = vshrl.u32 %v7029, 7
        %v7031 = vsub.s32 %v7028, %v7030
        %v7032 = vrot.slane %v6080, %v7031
        %v7034 = vunpack.c.l.s4 1983009808
        %v7035 = vunpack.c.0.s8 %v7034
        %v7036 = vlaneseq
        %v7037 = vshrl.u32 %v7036, 7
        %v7038 = vsub.s32 %v7035, %v7037
        %v7039 = vrot.slane %v7025, %v7038
        %v7040 = vcombine.low %v7017, %v7032
        %v7041 = vcombine.high %v7017, %v7032
        %v7043 = vunpack.c.l.s4 1934713408
        %v7044 = vunpack.c.0.s8 %v7043
        %v7045 = vlaneseq
        %v7046 = vshrl.u32 %v7045, 7
        %v7047 = vsub.s32 %v7044, %v7046
        %v7048 = vrot.slane %v7040, %v7047
        %v7050 = vunpack.c.l.s4 1934713408
        %v7051 = vunpack.c.0.s8 %v7050
        %v7052 = vlaneseq
        %v7053 = vshrl.u32 %v7052, 7
        %v7054 = vsub.s32 %v7051, %v7053
        %v7055 = vrot.slane %v7041, %v7054
        %v7056 = vcombine.low %v7024, %v7039
        %v7057 = vcombine.high %v7024, %v7039
        %v7059 = vunpack.c.l.s4 1934713408
        %v7060 = vunpack.c.0.s8 %v7059
        %v7061 = vlaneseq
        %v7062 = vshrl.u32 %v7061, 7
        %v7063 = vsub.s32 %v7060, %v7062
        %v7064 = vrot.slane %v7056, %v7063
        %v7066 = vunpack.c.l.s4 1934713408
        %v7067 = vunpack.c.0.s8 %v7066
        %v7068 = vlaneseq
        %v7069 = vshrl.u32 %v7068, 7
        %v7070 = vsub.s32 %v7067, %v7069
        %v7071 = vrot.slane %v7057, %v7070
        %v7072 = vcombine.high %v7048, 0
        %v7073 = vcombine.high %v7055, 0
        %v7074 = vcombine.high %v7064, 0
        %v7075 = vcombine.high %v7071, 0
        %v7076 = vcombine.high %v6076, %v1684
        %v7078 = vunpack.c.l.s4 1983009808
        %v7079 = vunpack.c.0.s8 %v7078
        %v7080 = vlaneseq
        %v7081 = vshrl.u32 %v7080, 7
        %v7082 = vsub.s32 %v7079, %v7081
        %v7083 = vrot.slane %v6076, %v7082
        %v7085 = vunpack.c.l.s4 1983009808
        %v7086 = vunpack.c.0.s8 %v7085
        %v7087 = vlaneseq
        %v7088 = vshrl.u32 %v7087, 7
        %v7089 = vsub.s32 %v7086, %v7088
        %v7090 = vrot.slane %v7076, %v7089
        %v7091 = vcombine.high %v6084, %v1684
        %v7093 = vunpack.c.l.s4 1983009808
        %v7094 = vunpack.c.0.s8 %v7093
        %v7095 = vlaneseq
        %v7096 = vshrl.u32 %v7095, 7
        %v7097 = vsub.s32 %v7094, %v7096
        %v7098 = vrot.slane %v6084, %v7097
        %v7100 = vunpack.c.l.s4 1983009808
        %v7101 = vunpack.c.0.s8 %v7100
        %v7102 = vlaneseq
        %v7103 = vshrl.u32 %v7102, 7
        %v7104 = vsub.s32 %v7101, %v7103
        %v7105 = vrot.slane %v7091, %v7104
        %v7106 = vcombine.low %v7083, %v7098
        %v7107 = vcombine.high %v7083, %v7098
        %v7109 = vunpack.c.l.s4 1934713408
        %v7110 = vunpack.c.0.s8 %v7109
        %v7111 = vlaneseq
        %v7112 = vshrl.u32 %v7111, 7
        %v7113 = vsub.s32 %v7110, %v7112
        %v7114 = vrot.slane %v7106, %v7113
        %v7116 = vunpack.c.l.s4 1934713408
        %v7117 = vunpack.c.0.s8 %v7116
        %v7118 = vlaneseq
        %v7119 = vshrl.u32 %v7118, 7
        %v7120 = vsub.s32 %v7117, %v7119
        %v7121 = vrot.slane %v7107, %v7120
        %v7122 = vcombine.low %v7090, %v7105
        %v7123 = vcombine.high %v7090, %v7105
        %v7125 = vunpack.c.l.s4 1934713408
        %v7126 = vunpack.c.0.s8 %v7125
        %v7127 = vlaneseq
        %v7128 = vshrl.u32 %v7127, 7
        %v7129 = vsub.s32 %v7126, %v7128
        %v7130 = vrot.slane %v7122, %v7129
        %v7132 = vunpack.c.l.s4 1934713408
        %v7133 = vunpack.c.0.s8 %v7132
        %v7134 = vlaneseq
        %v7135 = vshrl.u32 %v7134, 7
        %v7136 = vsub.s32 %v7133, %v7135
        %v7137 = vrot.slane %v7123, %v7136
        %v7138 = vcombine.high %v7114, 0
        %v7139 = vcombine.high %v7121, 0
        %v7140 = vcombine.high %v7130, 0
        %v7141 = vcombine.high %v7137, 0
        %v7142 = vcombine.low %v6124, %v6131
        %v7144 = vunpack.c.l.s4 1983009808
        %v7145 = vunpack.c.0.s8 %v7144
        %v7146 = vlaneseq
        %v7147 = vshrl.u32 %v7146, 7
        %v7148 = vsub.s32 %v7145, %v7147
        %v7149 = vrot.slane %v7142, %v7148
        %v7150 = vcombine.low %v6148, %v6149
        %v7152 = vunpack.c.l.s4 1983009808
        %v7153 = vunpack.c.0.s8 %v7152
        %v7154 = vlaneseq
        %v7155 = vshrl.u32 %v7154, 7
        %v7156 = vsub.s32 %v7153, %v7155
        %v7157 = vrot.slane %v7150, %v7156
        %v7158 = vcombine.low %v6140, %v6147
        %v7160 = vunpack.c.l.s4 1983009808
        %v7161 = vunpack.c.0.s8 %v7160
        %v7162 = vlaneseq
        %v7163 = vshrl.u32 %v7162, 7
        %v7164 = vsub.s32 %v7161, %v7163
        %v7165 = vrot.slane %v7158, %v7164
        %v7166 = vcombine.low %v6150, %v6151
        %v7168 = vunpack.c.l.s4 1983009808
        %v7169 = vunpack.c.0.s8 %v7168
        %v7170 = vlaneseq
        %v7171 = vshrl.u32 %v7170, 7
        %v7172 = vsub.s32 %v7169, %v7171
        %v7173 = vrot.slane %v7166, %v7172
        %v7174 = vcombine.low %v7149, %v7157
        %v7176 = vunpack.c.l.s4 1934713408
        %v7177 = vunpack.c.0.s8 %v7176
        %v7178 = vlaneseq
        %v7179 = vshrl.u32 %v7178, 7
        %v7180 = vsub.s32 %v7177, %v7179
        %v7181 = vrot.slane %v7174, %v7180
        %v7182 = vcombine.low %v7165, %v7173
        %v7184 = vunpack.c.l.s4 1934713408
        %v7185 = vunpack.c.0.s8 %v7184
        %v7186 = vlaneseq
        %v7187 = vshrl.u32 %v7186, 7
        %v7188 = vsub.s32 %v7185, %v7187
        %v7189 = vrot.slane %v7182, %v7188
        %v7190 = vcombine.low %v7181, %v7189
        %v7191 = vcombine.high %v7181, %v7189
        %v7192 = vcombine.low %v6190, %v6197
        %v7194 = vunpack.c.l.s4 1983009808
        %v7195 = vunpack.c.0.s8 %v7194
        %v7196 = vlaneseq
        %v7197 = vshrl.u32 %v7196, 7
        %v7198 = vsub.s32 %v7195, %v7197
        %v7199 = vrot.slane %v7192, %v7198
        %v7200 = vcombine.low %v6214, %v6215
        %v7202 = vunpack.c.l.s4 1983009808
        %v7203 = vunpack.c.0.s8 %v7202
        %v7204 = vlaneseq
        %v7205 = vshrl.u32 %v7204, 7
        %v7206 = vsub.s32 %v7203, %v7205
        %v7207 = vrot.slane %v7200, %v7206
        %v7208 = vcombine.low %v6206, %v6213
        %v7210 = vunpack.c.l.s4 1983009808
        %v7211 = vunpack.c.0.s8 %v7210
        %v7212 = vlaneseq
        %v7213 = vshrl.u32 %v7212, 7
        %v7214 = vsub.s32 %v7211, %v7213
        %v7215 = vrot.slane %v7208, %v7214
        %v7216 = vcombine.low %v6216, %v6217
        %v7218 = vunpack.c.l.s4 1983009808
        %v7219 = vunpack.c.0.s8 %v7218
        %v7220 = vlaneseq
        %v7221 = vshrl.u32 %v7220, 7
        %v7222 = vsub.s32 %v7219, %v7221
        %v7223 = vrot.slane %v7216, %v7222
        %v7224 = vcombine.low %v7199, %v7207
        %v7226 = vunpack.c.l.s4 1934713408
        %v7227 = vunpack.c.0.s8 %v7226
        %v7228 = vlaneseq
        %v7229 = vshrl.u32 %v7228, 7
        %v7230 = vsub.s32 %v7227, %v7229
        %v7231 = vrot.slane %v7224, %v7230
        %v7232 = vcombine.low %v7215, %v7223
        %v7234 = vunpack.c.l.s4 1934713408
        %v7235 = vunpack.c.0.s8 %v7234
        %v7236 = vlaneseq
        %v7237 = vshrl.u32 %v7236, 7
        %v7238 = vsub.s32 %v7235, %v7237
        %v7239 = vrot.slane %v7232, %v7238
        %v7240 = vcombine.low %v7231, %v7239
        %v7241 = vcombine.high %v7231, %v7239
        %v7242 = vcombine.low %v6256, %v6263
        %v7244 = vunpack.c.l.s4 1983009808
        %v7245 = vunpack.c.0.s8 %v7244
        %v7246 = vlaneseq
        %v7247 = vshrl.u32 %v7246, 7
        %v7248 = vsub.s32 %v7245, %v7247
        %v7249 = vrot.slane %v7242, %v7248
        %v7250 = vcombine.low %v6280, %v6281
        %v7252 = vunpack.c.l.s4 1983009808
        %v7253 = vunpack.c.0.s8 %v7252
        %v7254 = vlaneseq
        %v7255 = vshrl.u32 %v7254, 7
        %v7256 = vsub.s32 %v7253, %v7255
        %v7257 = vrot.slane %v7250, %v7256
        %v7258 = vcombine.low %v6272, %v6279
        %v7260 = vunpack.c.l.s4 1983009808
        %v7261 = vunpack.c.0.s8 %v7260
        %v7262 = vlaneseq
        %v7263 = vshrl.u32 %v7262, 7
        %v7264 = vsub.s32 %v7261, %v7263
        %v7265 = vrot.slane %v7258, %v7264
        %v7266 = vcombine.low %v6282, %v6283
        %v7268 = vunpack.c.l.s4 1983009808
        %v7269 = vunpack.c.0.s8 %v7268
        %v7270 = vlaneseq
        %v7271 = vshrl.u32 %v7270, 7
        %v7272 = vsub.s32 %v7269, %v7271
        %v7273 = vrot.slane %v7266, %v7272
        %v7274 = vcombine.low %v7249, %v7257
        %v7276 = vunpack.c.l.s4 1934713408
        %v7277 = vunpack.c.0.s8 %v7276
        %v7278 = vlaneseq
        %v7279 = vshrl.u32 %v7278, 7
        %v7280 = vsub.s32 %v7277, %v7279
        %v7281 = vrot.slane %v7274, %v7280
        %v7282 = vcombine.low %v7265, %v7273
        %v7284 = vunpack.c.l.s4 1934713408
        %v7285 = vunpack.c.0.s8 %v7284
        %v7286 = vlaneseq
        %v7287 = vshrl.u32 %v7286, 7
        %v7288 = vsub.s32 %v7285, %v7287
        %v7289 = vrot.slane %v7282, %v7288
        %v7290 = vcombine.low %v7281, %v7289
        %v7291 = vcombine.high %v7281, %v7289
        %v7292 = vcombine.low %v6322, %v6329
        %v7294 = vunpack.c.l.s4 1983009808
        %v7295 = vunpack.c.0.s8 %v7294
        %v7296 = vlaneseq
        %v7297 = vshrl.u32 %v7296, 7
        %v7298 = vsub.s32 %v7295, %v7297
        %v7299 = vrot.slane %v7292, %v7298
        %v7300 = vcombine.low %v6346, %v6347
        %v7302 = vunpack.c.l.s4 1983009808
        %v7303 = vunpack.c.0.s8 %v7302
        %v7304 = vlaneseq
        %v7305 = vshrl.u32 %v7304, 7
        %v7306 = vsub.s32 %v7303, %v7305
        %v7307 = vrot.slane %v7300, %v7306
        %v7308 = vcombine.low %v6338, %v6345
        %v7310 = vunpack.c.l.s4 1983009808
        %v7311 = vunpack.c.0.s8 %v7310
        %v7312 = vlaneseq
        %v7313 = vshrl.u32 %v7312, 7
        %v7314 = vsub.s32 %v7311, %v7313
        %v7315 = vrot.slane %v7308, %v7314
        %v7316 = vcombine.low %v6348, %v6349
        %v7318 = vunpack.c.l.s4 1983009808
        %v7319 = vunpack.c.0.s8 %v7318
        %v7320 = vlaneseq
        %v7321 = vshrl.u32 %v7320, 7
        %v7322 = vsub.s32 %v7319, %v7321
        %v7323 = vrot.slane %v7316, %v7322
        %v7324 = vcombine.low %v7299, %v7307
        %v7326 = vunpack.c.l.s4 1934713408
        %v7327 = vunpack.c.0.s8 %v7326
        %v7328 = vlaneseq
        %v7329 = vshrl.u32 %v7328, 7
        %v7330 = vsub.s32 %v7327, %v7329
        %v7331 = vrot.slane %v7324, %v7330
        %v7332 = vcombine.low %v7315, %v7323
        %v7334 = vunpack.c.l.s4 1934713408
        %v7335 = vunpack.c.0.s8 %v7334
        %v7336 = vlaneseq
        %v7337 = vshrl.u32 %v7336, 7
        %v7338 = vsub.s32 %v7335, %v7337
        %v7339 = vrot.slane %v7332, %v7338
        %v7340 = vcombine.low %v7331, %v7339
        %v7341 = vcombine.high %v7331, %v7339
        %v7342 = vcombine.low %v6388, %v6395
        %v7344 = vunpack.c.l.s4 1983009808
        %v7345 = vunpack.c.0.s8 %v7344
        %v7346 = vlaneseq
        %v7347 = vshrl.u32 %v7346, 7
        %v7348 = vsub.s32 %v7345, %v7347
        %v7349 = vrot.slane %v7342, %v7348
        %v7350 = vcombine.low %v6412, %v6413
        %v7352 = vunpack.c.l.s4 1983009808
        %v7353 = vunpack.c.0.s8 %v7352
        %v7354 = vlaneseq
        %v7355 = vshrl.u32 %v7354, 7
        %v7356 = vsub.s32 %v7353, %v7355
        %v7357 = vrot.slane %v7350, %v7356
        %v7358 = vcombine.low %v6404, %v6411
        %v7360 = vunpack.c.l.s4 1983009808
        %v7361 = vunpack.c.0.s8 %v7360
        %v7362 = vlaneseq
        %v7363 = vshrl.u32 %v7362, 7
        %v7364 = vsub.s32 %v7361, %v7363
        %v7365 = vrot.slane %v7358, %v7364
        %v7366 = vcombine.low %v6414, %v6415
        %v7368 = vunpack.c.l.s4 1983009808
        %v7369 = vunpack.c.0.s8 %v7368
        %v7370 = vlaneseq
        %v7371 = vshrl.u32 %v7370, 7
        %v7372 = vsub.s32 %v7369, %v7371
        %v7373 = vrot.slane %v7366, %v7372
        %v7374 = vcombine.low %v7349, %v7357
        %v7376 = vunpack.c.l.s4 1934713408
        %v7377 = vunpack.c.0.s8 %v7376
        %v7378 = vlaneseq
        %v7379 = vshrl.u32 %v7378, 7
        %v7380 = vsub.s32 %v7377, %v7379
        %v7381 = vrot.slane %v7374, %v7380
        %v7382 = vcombine.low %v7365, %v7373
        %v7384 = vunpack.c.l.s4 1934713408
        %v7385 = vunpack.c.0.s8 %v7384
        %v7386 = vlaneseq
        %v7387 = vshrl.u32 %v7386, 7
        %v7388 = vsub.s32 %v7385, %v7387
        %v7389 = vrot.slane %v7382, %v7388
        %v7390 = vcombine.low %v7381, %v7389
        %v7391 = vcombine.high %v7381, %v7389
        %v7392 = vcombine.low %v6454, %v6461
        %v7394 = vunpack.c.l.s4 1983009808
        %v7395 = vunpack.c.0.s8 %v7394
        %v7396 = vlaneseq
        %v7397 = vshrl.u32 %v7396, 7
        %v7398 = vsub.s32 %v7395, %v7397
        %v7399 = vrot.slane %v7392, %v7398
        %v7400 = vcombine.low %v6478, %v6479
        %v7402 = vunpack.c.l.s4 1983009808
        %v7403 = vunpack.c.0.s8 %v7402
        %v7404 = vlaneseq
        %v7405 = vshrl.u32 %v7404, 7
        %v7406 = vsub.s32 %v7403, %v7405
        %v7407 = vrot.slane %v7400, %v7406
        %v7408 = vcombine.low %v6470, %v6477
        %v7410 = vunpack.c.l.s4 1983009808
        %v7411 = vunpack.c.0.s8 %v7410
        %v7412 = vlaneseq
        %v7413 = vshrl.u32 %v7412, 7
        %v7414 = vsub.s32 %v7411, %v7413
        %v7415 = vrot.slane %v7408, %v7414
        %v7416 = vcombine.low %v6480, %v6481
        %v7418 = vunpack.c.l.s4 1983009808
        %v7419 = vunpack.c.0.s8 %v7418
        %v7420 = vlaneseq
        %v7421 = vshrl.u32 %v7420, 7
        %v7422 = vsub.s32 %v7419, %v7421
        %v7423 = vrot.slane %v7416, %v7422
        %v7424 = vcombine.low %v7399, %v7407
        %v7426 = vunpack.c.l.s4 1934713408
        %v7427 = vunpack.c.0.s8 %v7426
        %v7428 = vlaneseq
        %v7429 = vshrl.u32 %v7428, 7
        %v7430 = vsub.s32 %v7427, %v7429
        %v7431 = vrot.slane %v7424, %v7430
        %v7432 = vcombine.low %v7415, %v7423
        %v7434 = vunpack.c.l.s4 1934713408
        %v7435 = vunpack.c.0.s8 %v7434
        %v7436 = vlaneseq
        %v7437 = vshrl.u32 %v7436, 7
        %v7438 = vsub.s32 %v7435, %v7437
        %v7439 = vrot.slane %v7432, %v7438
        %v7440 = vcombine.low %v7431, %v7439
        %v7441 = vcombine.high %v7431, %v7439
        %v7442 = vcombine.low %v6520, %v6527
        %v7444 = vunpack.c.l.s4 1983009808
        %v7445 = vunpack.c.0.s8 %v7444
        %v7446 = vlaneseq
        %v7447 = vshrl.u32 %v7446, 7
        %v7448 = vsub.s32 %v7445, %v7447
        %v7449 = vrot.slane %v7442, %v7448
        %v7450 = vcombine.low %v6544, %v6545
        %v7452 = vunpack.c.l.s4 1983009808
        %v7453 = vunpack.c.0.s8 %v7452
        %v7454 = vlaneseq
        %v7455 = vshrl.u32 %v7454, 7
        %v7456 = vsub.s32 %v7453, %v7455
        %v7457 = vrot.slane %v7450, %v7456
        %v7458 = vcombine.low %v6536, %v6543
        %v7460 = vunpack.c.l.s4 1983009808
        %v7461 = vunpack.c.0.s8 %v7460
        %v7462 = vlaneseq
        %v7463 = vshrl.u32 %v7462, 7
        %v7464 = vsub.s32 %v7461, %v7463
        %v7465 = vrot.slane %v7458, %v7464
        %v7466 = vcombine.low %v6546, %v6547
        %v7468 = vunpack.c.l.s4 1983009808
        %v7469 = vunpack.c.0.s8 %v7468
        %v7470 = vlaneseq
        %v7471 = vshrl.u32 %v7470, 7
        %v7472 = vsub.s32 %v7469, %v7471
        %v7473 = vrot.slane %v7466, %v7472
        %v7474 = vcombine.low %v7449, %v7457
        %v7476 = vunpack.c.l.s4 1934713408
        %v7477 = vunpack.c.0.s8 %v7476
        %v7478 = vlaneseq
        %v7479 = vshrl.u32 %v7478, 7
        %v7480 = vsub.s32 %v7477, %v7479
        %v7481 = vrot.slane %v7474, %v7480
        %v7482 = vcombine.low %v7465, %v7473
        %v7484 = vunpack.c.l.s4 1934713408
        %v7485 = vunpack.c.0.s8 %v7484
        %v7486 = vlaneseq
        %v7487 = vshrl.u32 %v7486, 7
        %v7488 = vsub.s32 %v7485, %v7487
        %v7489 = vrot.slane %v7482, %v7488
        %v7490 = vcombine.low %v7481, %v7489
        %v7491 = vcombine.high %v7481, %v7489
        %v7492 = vcombine.low %v6586, %v6593
        %v7494 = vunpack.c.l.s4 1983009808
        %v7495 = vunpack.c.0.s8 %v7494
        %v7496 = vlaneseq
        %v7497 = vshrl.u32 %v7496, 7
        %v7498 = vsub.s32 %v7495, %v7497
        %v7499 = vrot.slane %v7492, %v7498
        %v7500 = vcombine.low %v6610, %v6611
        %v7502 = vunpack.c.l.s4 1983009808
        %v7503 = vunpack.c.0.s8 %v7502
        %v7504 = vlaneseq
        %v7505 = vshrl.u32 %v7504, 7
        %v7506 = vsub.s32 %v7503, %v7505
        %v7507 = vrot.slane %v7500, %v7506
        %v7508 = vcombine.low %v6602, %v6609
        %v7510 = vunpack.c.l.s4 1983009808
        %v7511 = vunpack.c.0.s8 %v7510
        %v7512 = vlaneseq
        %v7513 = vshrl.u32 %v7512, 7
        %v7514 = vsub.s32 %v7511, %v7513
        %v7515 = vrot.slane %v7508, %v7514
        %v7516 = vcombine.low %v6612, %v6613
        %v7518 = vunpack.c.l.s4 1983009808
        %v7519 = vunpack.c.0.s8 %v7518
        %v7520 = vlaneseq
        %v7521 = vshrl.u32 %v7520, 7
        %v7522 = vsub.s32 %v7519, %v7521
        %v7523 = vrot.slane %v7516, %v7522
        %v7524 = vcombine.low %v7499, %v7507
        %v7526 = vunpack.c.l.s4 1934713408
        %v7527 = vunpack.c.0.s8 %v7526
        %v7528 = vlaneseq
        %v7529 = vshrl.u32 %v7528, 7
        %v7530 = vsub.s32 %v7527, %v7529
        %v7531 = vrot.slane %v7524, %v7530
        %v7532 = vcombine.low %v7515, %v7523
        %v7534 = vunpack.c.l.s4 1934713408
        %v7535 = vunpack.c.0.s8 %v7534
        %v7536 = vlaneseq
        %v7537 = vshrl.u32 %v7536, 7
        %v7538 = vsub.s32 %v7535, %v7537
        %v7539 = vrot.slane %v7532, %v7538
        %v7540 = vcombine.low %v7531, %v7539
        %v7541 = vcombine.high %v7531, %v7539
        %v7542 = vcombine.low %v6652, %v6659
        %v7544 = vunpack.c.l.s4 1983009808
        %v7545 = vunpack.c.0.s8 %v7544
        %v7546 = vlaneseq
        %v7547 = vshrl.u32 %v7546, 7
        %v7548 = vsub.s32 %v7545, %v7547
        %v7549 = vrot.slane %v7542, %v7548
        %v7550 = vcombine.low %v6676, %v6677
        %v7552 = vunpack.c.l.s4 1983009808
        %v7553 = vunpack.c.0.s8 %v7552
        %v7554 = vlaneseq
        %v7555 = vshrl.u32 %v7554, 7
        %v7556 = vsub.s32 %v7553, %v7555
        %v7557 = vrot.slane %v7550, %v7556
        %v7558 = vcombine.low %v6668, %v6675
        %v7560 = vunpack.c.l.s4 1983009808
        %v7561 = vunpack.c.0.s8 %v7560
        %v7562 = vlaneseq
        %v7563 = vshrl.u32 %v7562, 7
        %v7564 = vsub.s32 %v7561, %v7563
        %v7565 = vrot.slane %v7558, %v7564
        %v7566 = vcombine.low %v6678, %v6679
        %v7568 = vunpack.c.l.s4 1983009808
        %v7569 = vunpack.c.0.s8 %v7568
        %v7570 = vlaneseq
        %v7571 = vshrl.u32 %v7570, 7
        %v7572 = vsub.s32 %v7569, %v7571
        %v7573 = vrot.slane %v7566, %v7572
        %v7574 = vcombine.low %v7549, %v7557
        %v7576 = vunpack.c.l.s4 1934713408
        %v7577 = vunpack.c.0.s8 %v7576
        %v7578 = vlaneseq
        %v7579 = vshrl.u32 %v7578, 7
        %v7580 = vsub.s32 %v7577, %v7579
        %v7581 = vrot.slane %v7574, %v7580
        %v7582 = vcombine.low %v7565, %v7573
        %v7584 = vunpack.c.l.s4 1934713408
        %v7585 = vunpack.c.0.s8 %v7584
        %v7586 = vlaneseq
        %v7587 = vshrl.u32 %v7586, 7
        %v7588 = vsub.s32 %v7585, %v7587
        %v7589 = vrot.slane %v7582, %v7588
        %v7590 = vcombine.low %v7581, %v7589
        %v7591 = vcombine.high %v7581, %v7589
        %v7592 = vcombine.low %v6718, %v6725
        %v7594 = vunpack.c.l.s4 1983009808
        %v7595 = vunpack.c.0.s8 %v7594
        %v7596 = vlaneseq
        %v7597 = vshrl.u32 %v7596, 7
        %v7598 = vsub.s32 %v7595, %v7597
        %v7599 = vrot.slane %v7592, %v7598
        %v7600 = vcombine.low %v6742, %v6743
        %v7602 = vunpack.c.l.s4 1983009808
        %v7603 = vunpack.c.0.s8 %v7602
        %v7604 = vlaneseq
        %v7605 = vshrl.u32 %v7604, 7
        %v7606 = vsub.s32 %v7603, %v7605
        %v7607 = vrot.slane %v7600, %v7606
        %v7608 = vcombine.low %v6734, %v6741
        %v7610 = vunpack.c.l.s4 1983009808
        %v7611 = vunpack.c.0.s8 %v7610
        %v7612 = vlaneseq
        %v7613 = vshrl.u32 %v7612, 7
        %v7614 = vsub.s32 %v7611, %v7613
        %v7615 = vrot.slane %v7608, %v7614
        %v7616 = vcombine.low %v6744, %v6745
        %v7618 = vunpack.c.l.s4 1983009808
        %v7619 = vunpack.c.0.s8 %v7618
        %v7620 = vlaneseq
        %v7621 = vshrl.u32 %v7620, 7
        %v7622 = vsub.s32 %v7619, %v7621
        %v7623 = vrot.slane %v7616, %v7622
        %v7624 = vcombine.low %v7599, %v7607
        %v7626 = vunpack.c.l.s4 1934713408
        %v7627 = vunpack.c.0.s8 %v7626
        %v7628 = vlaneseq
        %v7629 = vshrl.u32 %v7628, 7
        %v7630 = vsub.s32 %v7627, %v7629
        %v7631 = vrot.slane %v7624, %v7630
        %v7632 = vcombine.low %v7615, %v7623
        %v7634 = vunpack.c.l.s4 1934713408
        %v7635 = vunpack.c.0.s8 %v7634
        %v7636 = vlaneseq
        %v7637 = vshrl.u32 %v7636, 7
        %v7638 = vsub.s32 %v7635, %v7637
        %v7639 = vrot.slane %v7632, %v7638
        %v7640 = vcombine.low %v7631, %v7639
        %v7641 = vcombine.high %v7631, %v7639
        %v7642 = vcombine.low %v6784, %v6791
        %v7644 = vunpack.c.l.s4 1983009808
        %v7645 = vunpack.c.0.s8 %v7644
        %v7646 = vlaneseq
        %v7647 = vshrl.u32 %v7646, 7
        %v7648 = vsub.s32 %v7645, %v7647
        %v7649 = vrot.slane %v7642, %v7648
        %v7650 = vcombine.low %v6808, %v6809
        %v7652 = vunpack.c.l.s4 1983009808
        %v7653 = vunpack.c.0.s8 %v7652
        %v7654 = vlaneseq
        %v7655 = vshrl.u32 %v7654, 7
        %v7656 = vsub.s32 %v7653, %v7655
        %v7657 = vrot.slane %v7650, %v7656
        %v7658 = vcombine.low %v6800, %v6807
        %v7660 = vunpack.c.l.s4 1983009808
        %v7661 = vunpack.c.0.s8 %v7660
        %v7662 = vlaneseq
        %v7663 = vshrl.u32 %v7662, 7
        %v7664 = vsub.s32 %v7661, %v7663
        %v7665 = vrot.slane %v7658, %v7664
        %v7666 = vcombine.low %v6810, %v6811
        %v7668 = vunpack.c.l.s4 1983009808
        %v7669 = vunpack.c.0.s8 %v7668
        %v7670 = vlaneseq
        %v7671 = vshrl.u32 %v7670, 7
        %v7672 = vsub.s32 %v7669, %v7671
        %v7673 = vrot.slane %v7666, %v7672
        %v7674 = vcombine.low %v7649, %v7657
        %v7676 = vunpack.c.l.s4 1934713408
        %v7677 = vunpack.c.0.s8 %v7676
        %v7678 = vlaneseq
        %v7679 = vshrl.u32 %v7678, 7
        %v7680 = vsub.s32 %v7677, %v7679
        %v7681 = vrot.slane %v7674, %v7680
        %v7682 = vcombine.low %v7665, %v7673
        %v7684 = vunpack.c.l.s4 1934713408
        %v7685 = vunpack.c.0.s8 %v7684
        %v7686 = vlaneseq
        %v7687 = vshrl.u32 %v7686, 7
        %v7688 = vsub.s32 %v7685, %v7687
        %v7689 = vrot.slane %v7682, %v7688
        %v7690 = vcombine.low %v7681, %v7689
        %v7691 = vcombine.high %v7681, %v7689
        %v7692 = vcombine.low %v6850, %v6857
        %v7694 = vunpack.c.l.s4 1983009808
        %v7695 = vunpack.c.0.s8 %v7694
        %v7696 = vlaneseq
        %v7697 = vshrl.u32 %v7696, 7
        %v7698 = vsub.s32 %v7695, %v7697
        %v7699 = vrot.slane %v7692, %v7698
        %v7700 = vcombine.low %v6874, %v6875
        %v7702 = vunpack.c.l.s4 1983009808
        %v7703 = vunpack.c.0.s8 %v7702
        %v7704 = vlaneseq
        %v7705 = vshrl.u32 %v7704, 7
        %v7706 = vsub.s32 %v7703, %v7705
        %v7707 = vrot.slane %v7700, %v7706
        %v7708 = vcombine.low %v6866, %v6873
        %v7710 = vunpack.c.l.s4 1983009808
        %v7711 = vunpack.c.0.s8 %v7710
        %v7712 = vlaneseq
        %v7713 = vshrl.u32 %v7712, 7
        %v7714 = vsub.s32 %v7711, %v7713
        %v7715 = vrot.slane %v7708, %v7714
        %v7716 = vcombine.low %v6876, %v6877
        %v7718 = vunpack.c.l.s4 1983009808
        %v7719 = vunpack.c.0.s8 %v7718
        %v7720 = vlaneseq
        %v7721 = vshrl.u32 %v7720, 7
        %v7722 = vsub.s32 %v7719, %v7721
        %v7723 = vrot.slane %v7716, %v7722
        %v7724 = vcombine.low %v7699, %v7707
        %v7726 = vunpack.c.l.s4 1934713408
        %v7727 = vunpack.c.0.s8 %v7726
        %v7728 = vlaneseq
        %v7729 = vshrl.u32 %v7728, 7
        %v7730 = vsub.s32 %v7727, %v7729
        %v7731 = vrot.slane %v7724, %v7730
        %v7732 = vcombine.low %v7715, %v7723
        %v7734 = vunpack.c.l.s4 1934713408
        %v7735 = vunpack.c.0.s8 %v7734
        %v7736 = vlaneseq
        %v7737 = vshrl.u32 %v7736, 7
        %v7738 = vsub.s32 %v7735, %v7737
        %v7739 = vrot.slane %v7732, %v7738
        %v7740 = vcombine.low %v7731, %v7739
        %v7741 = vcombine.high %v7731, %v7739
        %v7742 = vcombine.low %v6916, %v6923
        %v7744 = vunpack.c.l.s4 1983009808
        %v7745 = vunpack.c.0.s8 %v7744
        %v7746 = vlaneseq
        %v7747 = vshrl.u32 %v7746, 7
        %v7748 = vsub.s32 %v7745, %v7747
        %v7749 = vrot.slane %v7742, %v7748
        %v7750 = vcombine.low %v6940, %v6941
        %v7752 = vunpack.c.l.s4 1983009808
        %v7753 = vunpack.c.0.s8 %v7752
        %v7754 = vlaneseq
        %v7755 = vshrl.u32 %v7754, 7
        %v7756 = vsub.s32 %v7753, %v7755
        %v7757 = vrot.slane %v7750, %v7756
        %v7758 = vcombine.low %v6932, %v6939
        %v7760 = vunpack.c.l.s4 1983009808
        %v7761 = vunpack.c.0.s8 %v7760
        %v7762 = vlaneseq
        %v7763 = vshrl.u32 %v7762, 7
        %v7764 = vsub.s32 %v7761, %v7763
        %v7765 = vrot.slane %v7758, %v7764
        %v7766 = vcombine.low %v6942, %v6943
        %v7768 = vunpack.c.l.s4 1983009808
        %v7769 = vunpack.c.0.s8 %v7768
        %v7770 = vlaneseq
        %v7771 = vshrl.u32 %v7770, 7
        %v7772 = vsub.s32 %v7769, %v7771
        %v7773 = vrot.slane %v7766, %v7772
        %v7774 = vcombine.low %v7749, %v7757
        %v7776 = vunpack.c.l.s4 1934713408
        %v7777 = vunpack.c.0.s8 %v7776
        %v7778 = vlaneseq
        %v7779 = vshrl.u32 %v7778, 7
        %v7780 = vsub.s32 %v7777, %v7779
        %v7781 = vrot.slane %v7774, %v7780
        %v7782 = vcombine.low %v7765, %v7773
        %v7784 = vunpack.c.l.s4 1934713408
        %v7785 = vunpack.c.0.s8 %v7784
        %v7786 = vlaneseq
        %v7787 = vshrl.u32 %v7786, 7
        %v7788 = vsub.s32 %v7785, %v7787
        %v7789 = vrot.slane %v7782, %v7788
        %v7790 = vcombine.low %v7781, %v7789
        %v7791 = vcombine.high %v7781, %v7789
        %v7792 = vcombine.low %v6982, %v6989
        %v7794 = vunpack.c.l.s4 1983009808
        %v7795 = vunpack.c.0.s8 %v7794
        %v7796 = vlaneseq
        %v7797 = vshrl.u32 %v7796, 7
        %v7798 = vsub.s32 %v7795, %v7797
        %v7799 = vrot.slane %v7792, %v7798
        %v7800 = vcombine.low %v7006, %v7007
        %v7802 = vunpack.c.l.s4 1983009808
        %v7803 = vunpack.c.0.s8 %v7802
        %v7804 = vlaneseq
        %v7805 = vshrl.u32 %v7804, 7
        %v7806 = vsub.s32 %v7803, %v7805
        %v7807 = vrot.slane %v7800, %v7806
        %v7808 = vcombine.low %v6998, %v7005
        %v7810 = vunpack.c.l.s4 1983009808
        %v7811 = vunpack.c.0.s8 %v7810
        %v7812 = vlaneseq
        %v7813 = vshrl.u32 %v7812, 7
        %v7814 = vsub.s32 %v7811, %v7813
        %v7815 = vrot.slane %v7808, %v7814
        %v7816 = vcombine.low %v7008, %v7009
        %v7818 = vunpack.c.l.s4 1983009808
        %v7819 = vunpack.c.0.s8 %v7818
        %v7820 = vlaneseq
        %v7821 = vshrl.u32 %v7820, 7
        %v7822 = vsub.s32 %v7819, %v7821
        %v7823 = vrot.slane %v7816, %v7822
        %v7824 = vcombine.low %v7799, %v7807
        %v7826 = vunpack.c.l.s4 1934713408
        %v7827 = vunpack.c.0.s8 %v7826
        %v7828 = vlaneseq
        %v7829 = vshrl.u32 %v7828, 7
        %v7830 = vsub.s32 %v7827, %v7829
        %v7831 = vrot.slane %v7824, %v7830
        %v7832 = vcombine.low %v7815, %v7823
        %v7834 = vunpack.c.l.s4 1934713408
        %v7835 = vunpack.c.0.s8 %v7834
        %v7836 = vlaneseq
        %v7837 = vshrl.u32 %v7836, 7
        %v7838 = vsub.s32 %v7835, %v7837
        %v7839 = vrot.slane %v7832, %v7838
        %v7840 = vcombine.low %v7831, %v7839
        %v7841 = vcombine.high %v7831, %v7839
        %v7842 = vcombine.low %v7048, %v7055
        %v7844 = vunpack.c.l.s4 1983009808
        %v7845 = vunpack.c.0.s8 %v7844
        %v7846 = vlaneseq
        %v7847 = vshrl.u32 %v7846, 7
        %v7848 = vsub.s32 %v7845, %v7847
        %v7849 = vrot.slane %v7842, %v7848
        %v7850 = vcombine.low %v7072, %v7073
        %v7852 = vunpack.c.l.s4 1983009808
        %v7853 = vunpack.c.0.s8 %v7852
        %v7854 = vlaneseq
        %v7855 = vshrl.u32 %v7854, 7
        %v7856 = vsub.s32 %v7853, %v7855
        %v7857 = vrot.slane %v7850, %v7856
        %v7858 = vcombine.low %v7064, %v7071
        %v7860 = vunpack.c.l.s4 1983009808
        %v7861 = vunpack.c.0.s8 %v7860
        %v7862 = vlaneseq
        %v7863 = vshrl.u32 %v7862, 7
        %v7864 = vsub.s32 %v7861, %v7863
        %v7865 = vrot.slane %v7858, %v7864
        %v7866 = vcombine.low %v7074, %v7075
        %v7868 = vunpack.c.l.s4 1983009808
        %v7869 = vunpack.c.0.s8 %v7868
        %v7870 = vlaneseq
        %v7871 = vshrl.u32 %v7870, 7
        %v7872 = vsub.s32 %v7869, %v7871
        %v7873 = vrot.slane %v7866, %v7872
        %v7874 = vcombine.low %v7849, %v7857
        %v7876 = vunpack.c.l.s4 1934713408
        %v7877 = vunpack.c.0.s8 %v7876
        %v7878 = vlaneseq
        %v7879 = vshrl.u32 %v7878, 7
        %v7880 = vsub.s32 %v7877, %v7879
        %v7881 = vrot.slane %v7874, %v7880
        %v7882 = vcombine.low %v7865, %v7873
        %v7884 = vunpack.c.l.s4 1934713408
        %v7885 = vunpack.c.0.s8 %v7884
        %v7886 = vlaneseq
        %v7887 = vshrl.u32 %v7886, 7
        %v7888 = vsub.s32 %v7885, %v7887
        %v7889 = vrot.slane %v7882, %v7888
        %v7890 = vcombine.low %v7881, %v7889
        %v7891 = vcombine.high %v7881, %v7889
        %v7892 = vcombine.low %v7114, %v7121
        %v7894 = vunpack.c.l.s4 1983009808
        %v7895 = vunpack.c.0.s8 %v7894
        %v7896 = vlaneseq
        %v7897 = vshrl.u32 %v7896, 7
        %v7898 = vsub.s32 %v7895, %v7897
        %v7899 = vrot.slane %v7892, %v7898
        %v7900 = vcombine.low %v7138, %v7139
        %v7902 = vunpack.c.l.s4 1983009808
        %v7903 = vunpack.c.0.s8 %v7902
        %v7904 = vlaneseq
        %v7905 = vshrl.u32 %v7904, 7
        %v7906 = vsub.s32 %v7903, %v7905
        %v7907 = vrot.slane %v7900, %v7906
        %v7908 = vcombine.low %v7130, %v7137
        %v7910 = vunpack.c.l.s4 1983009808
        %v7911 = vunpack.c.0.s8 %v7910
        %v7912 = vlaneseq
        %v7913 = vshrl.u32 %v7912, 7
        %v7914 = vsub.s32 %v7911, %v7913
        %v7915 = vrot.slane %v7908, %v7914
        %v7916 = vcombine.low %v7140, %v7141
        %v7918 = vunpack.c.l.s4 1983009808
        %v7919 = vunpack.c.0.s8 %v7918
        %v7920 = vlaneseq
        %v7921 = vshrl.u32 %v7920, 7
        %v7922 = vsub.s32 %v7919, %v7921
        %v7923 = vrot.slane %v7916, %v7922
        %v7924 = vcombine.low %v7899, %v7907
        %v7926 = vunpack.c.l.s4 1934713408
        %v7927 = vunpack.c.0.s8 %v7926
        %v7928 = vlaneseq
        %v7929 = vshrl.u32 %v7928, 7
        %v7930 = vsub.s32 %v7927, %v7929
        %v7931 = vrot.slane %v7924, %v7930
        %v7932 = vcombine.low %v7915, %v7923
        %v7934 = vunpack.c.l.s4 1934713408
        %v7935 = vunpack.c.0.s8 %v7934
        %v7936 = vlaneseq
        %v7937 = vshrl.u32 %v7936, 7
        %v7938 = vsub.s32 %v7935, %v7937
        %v7939 = vrot.slane %v7932, %v7938
        %v7940 = vcombine.low %v7931, %v7939
        %v7941 = vcombine.high %v7931, %v7939
        %v7944 = vpack.i.b16 %v7240, %v7190
        %v7946 = vshrl.u32 %v7190, 16
        %v7947 = vshrl.u32 %v7240, 16
        %v7948 = vpack.i.b16 %v7947, %v7946
        %v7952 = vpack.i.b16 %v7241, %v7191
        %v7954 = vshrl.u32 %v7191, 16
        %v7955 = vshrl.u32 %v7241, 16
        %v7956 = vpack.i.b16 %v7955, %v7954
        %v7960 = vpack.i.b16 %v7340, %v7290
        %v7962 = vshrl.u32 %v7290, 16
        %v7963 = vshrl.u32 %v7340, 16
        %v7964 = vpack.i.b16 %v7963, %v7962
        %v7968 = vpack.i.b16 %v7341, %v7291
        %v7970 = vshrl.u32 %v7291, 16
        %v7971 = vshrl.u32 %v7341, 16
        %v7972 = vpack.i.b16 %v7971, %v7970
        %v7976 = vpack.i.b16 %v7440, %v7390
        %v7978 = vshrl.u32 %v7390, 16
        %v7979 = vshrl.u32 %v7440, 16
        %v7980 = vpack.i.b16 %v7979, %v7978
        %v7984 = vpack.i.b16 %v7441, %v7391
        %v7986 = vshrl.u32 %v7391, 16
        %v7987 = vshrl.u32 %v7441, 16
        %v7988 = vpack.i.b16 %v7987, %v7986
        %v7992 = vpack.i.b16 %v7540, %v7490
        %v7994 = vshrl.u32 %v7490, 16
        %v7995 = vshrl.u32 %v7540, 16
        %v7996 = vpack.i.b16 %v7995, %v7994
        %v8000 = vpack.i.b16 %v7541, %v7491
        %v8002 = vshrl.u32 %v7491, 16
        %v8003 = vshrl.u32 %v7541, 16
        %v8004 = vpack.i.b16 %v8003, %v8002
        %v8008 = vpack.i.b16 %v7640, %v7590
        %v8010 = vshrl.u32 %v7590, 16
        %v8011 = vshrl.u32 %v7640, 16
        %v8012 = vpack.i.b16 %v8011, %v8010
        %v8016 = vpack.i.b16 %v7641, %v7591
        %v8018 = vshrl.u32 %v7591, 16
        %v8019 = vshrl.u32 %v7641, 16
        %v8020 = vpack.i.b16 %v8019, %v8018
        %v8024 = vpack.i.b16 %v7740, %v7690
        %v8026 = vshrl.u32 %v7690, 16
        %v8027 = vshrl.u32 %v7740, 16
        %v8028 = vpack.i.b16 %v8027, %v8026
        %v8032 = vpack.i.b16 %v7741, %v7691
        %v8034 = vshrl.u32 %v7691, 16
        %v8035 = vshrl.u32 %v7741, 16
        %v8036 = vpack.i.b16 %v8035, %v8034
        %v8040 = vpack.i.b16 %v7840, %v7790
        %v8042 = vshrl.u32 %v7790, 16
        %v8043 = vshrl.u32 %v7840, 16
        %v8044 = vpack.i.b16 %v8043, %v8042
        %v8048 = vpack.i.b16 %v7841, %v7791
        %v8050 = vshrl.u32 %v7791, 16
        %v8051 = vshrl.u32 %v7841, 16
        %v8052 = vpack.i.b16 %v8051, %v8050
        %v8056 = vpack.i.b16 %v7940, %v7890
        %v8058 = vshrl.u32 %v7890, 16
        %v8059 = vshrl.u32 %v7940, 16
        %v8060 = vpack.i.b16 %v8059, %v8058
        %v8064 = vpack.i.b16 %v7941, %v7891
        %v8066 = vshrl.u32 %v7891, 16
        %v8067 = vshrl.u32 %v7941, 16
        %v8068 = vpack.i.b16 %v8067, %v8066
        %v8070 = vld [vmem:[#allocation13] sm:$0xff]
        %v8071 = vld [vmem:[#allocation13 + $0x8] sm:$0xff]
        %v8072 = vld [vmem:[#allocation13 + $0x10] sm:$0xff]
        %v8073 = vld [vmem:[#allocation13 + $0x18] sm:$0xff]
        %v8074 = vld [vmem:[#allocation13 + $0x20] sm:$0xff]
        %v8075 = vld [vmem:[#allocation13 + $0x28] sm:$0xff]
        %v8076 = vld [vmem:[#allocation13 + $0x30] sm:$0xff]
        %v8077 = vld [vmem:[#allocation13 + $0x38] sm:$0xff]
        %v8078 = vld [vmem:[#allocation13 + $0x40] sm:$0xff]
        %v8079 = vld [vmem:[#allocation13 + $0x48] sm:$0xff]
        %v8080 = vld [vmem:[#allocation13 + $0x50] sm:$0xff]
        %v8081 = vld [vmem:[#allocation13 + $0x58] sm:$0xff]
        %v8082 = vld [vmem:[#allocation13 + $0x60] sm:$0xff]
        %v8083 = vld [vmem:[#allocation13 + $0x68] sm:$0xff]
        %v8084 = vld [vmem:[#allocation13 + $0x70] sm:$0xff]
        %v8085 = vld [vmem:[#allocation13 + $0x78] sm:$0xff]
        %vm8086 = vcmask 261120
        %v8088 = vsel %vm8086, %v3656, 0
        %v8091 = vsel %vm8086, %v3668, 0
        %v8094 = vsel %vm8086, %v3680, 0
        %v8097 = vsel %vm8086, %v3692, 0
        %v8100 = vsel %vm8086, %v3704, 0
        %v8103 = vsel %vm8086, %v3716, 0
        %v8106 = vsel %vm8086, %v3728, 0
        %v8109 = vsel %vm8086, %v3740, 0
        %v8112 = vsel %vm8086, %v5800, 0
        %v8115 = vsel %vm8086, %v5812, 0
        %v8118 = vsel %vm8086, %v5824, 0
        %v8121 = vsel %vm8086, %v5836, 0
        %v8124 = vsel %vm8086, %v5848, 0
        %v8127 = vsel %vm8086, %v5860, 0
        %v8130 = vsel %vm8086, %v5872, 0
        %v8133 = vsel %vm8086, %v5884, 0
        %8135 = vmatprep.subr.bf16.mxu0 0
        %8136 = vmatpush1.bf16.xpose.msra.mxu0 %v8112
        %8137 = vmatprep.subr.bf16.mxu0 0
        %8138 = vmatpush1.bf16.xpose.msra.mxu0 %v8115
        %8139 = vmatprep.subr.bf16.mxu0 0
        %8140 = vmatpush1.bf16.xpose.msra.mxu0 %v8118
        %8141 = vmatprep.subr.bf16.mxu0 0
        %8142 = vmatpush1.bf16.xpose.msra.mxu0 %v8121
        %8143 = vmatprep.subr.bf16.mxu0 0
        %8144 = vmatpush1.bf16.xpose.msra.mxu0 %v8124
        %8145 = vmatprep.subr.bf16.mxu0 0
        %8146 = vmatpush1.bf16.xpose.msra.mxu0 %v8127
        %8147 = vmatprep.subr.bf16.mxu0 0
        %8148 = vmatpush1.bf16.xpose.msra.mxu0 %v8130
        %8149 = vmatprep.subr.bf16.mxu0 0
        %8150 = vmatpush1.bf16.xpose.msra.mxu0 %v8133
        %8151 = vmatprep.subr.bf16.mxu0 0
        %8152 = vmatpush1.bf16.xpose.msra.mxu0 0
        %8153 = vmatprep.subr.bf16.mxu0 0
        %8154 = vmatpush1.bf16.xpose.msra.mxu0 0
        %8155 = vmatprep.subr.bf16.mxu0 0
        %8156 = vmatpush1.bf16.xpose.msra.mxu0 0
        %8157 = vmatprep.subr.bf16.mxu0 0
        %8158 = vmatpush1.bf16.xpose.msra.mxu0 0
        %8159 = vmatprep.subr.bf16.mxu0 0
        %8160 = vmatpush1.bf16.xpose.msra.mxu0 0
        %8161 = vmatprep.subr.bf16.mxu0 0
        %8162 = vmatpush1.bf16.xpose.msra.mxu0 0
        %8163 = vmatprep.subr.bf16.mxu0 0
        %8164 = vmatpush1.bf16.xpose.msra.mxu0 0
        %8165 = vmatprep.subr.bf16.mxu0 0
        %8166 = vmatpush1.bf16.xpose.msra.mxu0 0
        %8167 = vmatprep.mubr.bf16.mxu0 0
        %8168 = vmatmul.mubr.bf16.gmra.mrb[0].mxu0 %v8088
        %v8169 = vpop.f32.mrb[0].mxu0
        %v8170 = vadd.f32 %v8070, %v8169
        %v8171 = vpop.f32.mrb[0].mxu0
        %v8172 = vpop.f32.mrb[0].mxu0
        %v8173 = vadd.f32 %v8071, %v8172
        %v8174 = vpop.f32.mrb[0].mxu0
        %8175 = vmatprep.mubr.bf16.mxu0 0
        %8176 = vmatmul.mubr.bf16.gmra.mrb[0].mxu0 %v8091
        %v8177 = vpop.f32.mrb[0].mxu0
        %v8178 = vadd.f32 %v8072, %v8177
        %v8179 = vpop.f32.mrb[0].mxu0
        %v8180 = vpop.f32.mrb[0].mxu0
        %v8181 = vadd.f32 %v8073, %v8180
        %v8182 = vpop.f32.mrb[0].mxu0
        %8183 = vmatprep.mubr.bf16.mxu0 0
        %8184 = vmatmul.mubr.bf16.gmra.mrb[0].mxu0 %v8094
        %v8185 = vpop.f32.mrb[0].mxu0
        %v8186 = vadd.f32 %v8074, %v8185
        %v8187 = vpop.f32.mrb[0].mxu0
        %v8188 = vpop.f32.mrb[0].mxu0
        %v8189 = vadd.f32 %v8075, %v8188
        %v8190 = vpop.f32.mrb[0].mxu0
        %8191 = vmatprep.mubr.bf16.mxu0 0
        %8192 = vmatmul.mubr.bf16.gmra.mrb[0].mxu0 %v8097
        %v8193 = vpop.f32.mrb[0].mxu0
        %v8194 = vadd.f32 %v8076, %v8193
        %v8195 = vpop.f32.mrb[0].mxu0
        %v8196 = vpop.f32.mrb[0].mxu0
        %v8197 = vadd.f32 %v8077, %v8196
        %v8198 = vpop.f32.mrb[0].mxu0
        %8199 = vmatprep.mubr.bf16.mxu0 0
        %8200 = vmatmul.mubr.bf16.gmra.mrb[0].mxu0 %v8100
        %v8201 = vpop.f32.mrb[0].mxu0
        %v8202 = vadd.f32 %v8078, %v8201
        %v8203 = vpop.f32.mrb[0].mxu0
        %v8204 = vpop.f32.mrb[0].mxu0
        %v8205 = vadd.f32 %v8079, %v8204
        %v8206 = vpop.f32.mrb[0].mxu0
        %8207 = vmatprep.mubr.bf16.mxu0 0
        %8208 = vmatmul.mubr.bf16.gmra.mrb[0].mxu0 %v8103
        %v8209 = vpop.f32.mrb[0].mxu0
        %v8210 = vadd.f32 %v8080, %v8209
        %v8211 = vpop.f32.mrb[0].mxu0
        %v8212 = vpop.f32.mrb[0].mxu0
        %v8213 = vadd.f32 %v8081, %v8212
        %v8214 = vpop.f32.mrb[0].mxu0
        %8215 = vmatprep.mubr.bf16.mxu0 0
        %8216 = vmatmul.mubr.bf16.gmra.mrb[0].mxu0 %v8106
        %v8217 = vpop.f32.mrb[0].mxu0
        %v8218 = vadd.f32 %v8082, %v8217
        %v8219 = vpop.f32.mrb[0].mxu0
        %v8220 = vpop.f32.mrb[0].mxu0
        %v8221 = vadd.f32 %v8083, %v8220
        %v8222 = vpop.f32.mrb[0].mxu0
        %8223 = vmatprep.mubr.bf16.mxu0 0
        %8224 = vmatmul.mubr.bf16.gmra.mrb[0].mxu0 %v8109
        %v8225 = vpop.f32.mrb[0].mxu0
        %v8226 = vadd.f32 %v8084, %v8225
        %v8227 = vpop.f32.mrb[0].mxu0
        %v8228 = vpop.f32.mrb[0].mxu0
        %v8229 = vadd.f32 %v8085, %v8228
        %v8230 = vpop.f32.mrb[0].mxu0
        %8231 = vdwg.mxu0
        %v8233 = vsel %vm8086, %v3659, 0
        %v8236 = vsel %vm8086, %v3671, 0
        %v8239 = vsel %vm8086, %v3683, 0
        %v8242 = vsel %vm8086, %v3695, 0
        %v8245 = vsel %vm8086, %v3707, 0
        %v8248 = vsel %vm8086, %v3719, 0
        %v8251 = vsel %vm8086, %v3731, 0
        %v8254 = vsel %vm8086, %v3743, 0
        %v8257 = vsel %vm8086, %v5803, 0
        %v8260 = vsel %vm8086, %v5815, 0
        %v8263 = vsel %vm8086, %v5827, 0
        %v8266 = vsel %vm8086, %v5839, 0
        %v8269 = vsel %vm8086, %v5851, 0
        %v8272 = vsel %vm8086, %v5863, 0
        %v8275 = vsel %vm8086, %v5875, 0
        %v8278 = vsel %vm8086, %v5887, 0
        %8280 = vmatprep.subr.bf16.mxu0 0
        %8281 = vmatpush1.bf16.xpose.msra.mxu0 %v8257
        %8282 = vmatprep.subr.bf16.mxu0 0
        %8283 = vmatpush1.bf16.xpose.msra.mxu0 %v8260
        %8284 = vmatprep.subr.bf16.mxu0 0
        %8285 = vmatpush1.bf16.xpose.msra.mxu0 %v8263
        %8286 = vmatprep.subr.bf16.mxu0 0
        %8287 = vmatpush1.bf16.xpose.msra.mxu0 %v8266
        %8288 = vmatprep.subr.bf16.mxu0 0
        %8289 = vmatpush1.bf16.xpose.msra.mxu0 %v8269
        %8290 = vmatprep.subr.bf16.mxu0 0
        %8291 = vmatpush1.bf16.xpose.msra.mxu0 %v8272
        %8292 = vmatprep.subr.bf16.mxu0 0
        %8293 = vmatpush1.bf16.xpose.msra.mxu0 %v8275
        %8294 = vmatprep.subr.bf16.mxu0 0
        %8295 = vmatpush1.bf16.xpose.msra.mxu0 %v8278
        %8296 = vmatprep.subr.bf16.mxu0 0
        %8297 = vmatpush1.bf16.xpose.msra.mxu0 0
        %8298 = vmatprep.subr.bf16.mxu0 0
        %8299 = vmatpush1.bf16.xpose.msra.mxu0 0
        %8300 = vmatprep.subr.bf16.mxu0 0
        %8301 = vmatpush1.bf16.xpose.msra.mxu0 0
        %8302 = vmatprep.subr.bf16.mxu0 0
        %8303 = vmatpush1.bf16.xpose.msra.mxu0 0
        %8304 = vmatprep.subr.bf16.mxu0 0
        %8305 = vmatpush1.bf16.xpose.msra.mxu0 0
        %8306 = vmatprep.subr.bf16.mxu0 0
        %8307 = vmatpush1.bf16.xpose.msra.mxu0 0
        %8308 = vmatprep.subr.bf16.mxu0 0
        %8309 = vmatpush1.bf16.xpose.msra.mxu0 0
        %8310 = vmatprep.subr.bf16.mxu0 0
        %8311 = vmatpush1.bf16.xpose.msra.mxu0 0
        %8312 = vmatprep.mubr.bf16.mxu0 0
        %8313 = vmatmul.mubr.bf16.gmra.mrb[0].mxu0 %v8233
        %v8314 = vpop.f32.mrb[0].mxu0
        %v8315 = vadd.f32 %v8070, %v8314
        %v8316 = vpop.f32.mrb[0].mxu0
        %v8317 = vpop.f32.mrb[0].mxu0
        %v8318 = vadd.f32 %v8071, %v8317
        %v8319 = vpop.f32.mrb[0].mxu0
        %8320 = vmatprep.mubr.bf16.mxu0 0
        %8321 = vmatmul.mubr.bf16.gmra.mrb[0].mxu0 %v8236
        %v8322 = vpop.f32.mrb[0].mxu0
        %v8323 = vadd.f32 %v8072, %v8322
        %v8324 = vpop.f32.mrb[0].mxu0
        %v8325 = vpop.f32.mrb[0].mxu0
        %v8326 = vadd.f32 %v8073, %v8325
        %v8327 = vpop.f32.mrb[0].mxu0
        %8328 = vmatprep.mubr.bf16.mxu0 0
        %8329 = vmatmul.mubr.bf16.gmra.mrb[0].mxu0 %v8239
        %v8330 = vpop.f32.mrb[0].mxu0
        %v8331 = vadd.f32 %v8074, %v8330
        %v8332 = vpop.f32.mrb[0].mxu0
        %v8333 = vpop.f32.mrb[0].mxu0
        %v8334 = vadd.f32 %v8075, %v8333
        %v8335 = vpop.f32.mrb[0].mxu0
        %8336 = vmatprep.mubr.bf16.mxu0 0
        %8337 = vmatmul.mubr.bf16.gmra.mrb[0].mxu0 %v8242
        %v8338 = vpop.f32.mrb[0].mxu0
        %v8339 = vadd.f32 %v8076, %v8338
        %v8340 = vpop.f32.mrb[0].mxu0
        %v8341 = vpop.f32.mrb[0].mxu0
        %v8342 = vadd.f32 %v8077, %v8341
        %v8343 = vpop.f32.mrb[0].mxu0
        %8344 = vmatprep.mubr.bf16.mxu0 0
        %8345 = vmatmul.mubr.bf16.gmra.mrb[0].mxu0 %v8245
        %v8346 = vpop.f32.mrb[0].mxu0
        %v8347 = vadd.f32 %v8078, %v8346
        %v8348 = vpop.f32.mrb[0].mxu0
        %v8349 = vpop.f32.mrb[0].mxu0
        %v8350 = vadd.f32 %v8079, %v8349
        %v8351 = vpop.f32.mrb[0].mxu0
        %8352 = vmatprep.mubr.bf16.mxu0 0
        %8353 = vmatmul.mubr.bf16.gmra.mrb[0].mxu0 %v8248
        %v8354 = vpop.f32.mrb[0].mxu0
        %v8355 = vadd.f32 %v8080, %v8354
        %v8356 = vpop.f32.mrb[0].mxu0
        %v8357 = vpop.f32.mrb[0].mxu0
        %v8358 = vadd.f32 %v8081, %v8357
        %v8359 = vpop.f32.mrb[0].mxu0
        %8360 = vmatprep.mubr.bf16.mxu0 0
        %8361 = vmatmul.mubr.bf16.gmra.mrb[0].mxu0 %v8251
        %v8362 = vpop.f32.mrb[0].mxu0
        %v8363 = vadd.f32 %v8082, %v8362
        %v8364 = vpop.f32.mrb[0].mxu0
        %v8365 = vpop.f32.mrb[0].mxu0
        %v8366 = vadd.f32 %v8083, %v8365
        %v8367 = vpop.f32.mrb[0].mxu0
        %8368 = vmatprep.mubr.bf16.mxu0 0
        %8369 = vmatmul.mubr.bf16.gmra.mrb[0].mxu0 %v8254
        %v8370 = vpop.f32.mrb[0].mxu0
        %v8371 = vadd.f32 %v8084, %v8370
        %v8372 = vpop.f32.mrb[0].mxu0
        %v8373 = vpop.f32.mrb[0].mxu0
        %v8374 = vadd.f32 %v8085, %v8373
        %v8375 = vpop.f32.mrb[0].mxu0
        %8376 = vdwg.mxu0
        %v8378 = vsel %vm8086, %v3662, 0
        %v8381 = vsel %vm8086, %v3674, 0
        %v8384 = vsel %vm8086, %v3686, 0
        %v8387 = vsel %vm8086, %v3698, 0
        %v8390 = vsel %vm8086, %v3710, 0
        %v8393 = vsel %vm8086, %v3722, 0
        %v8396 = vsel %vm8086, %v3734, 0
        %v8399 = vsel %vm8086, %v3746, 0
        %v8402 = vsel %vm8086, %v5806, 0
        %v8405 = vsel %vm8086, %v5818, 0
        %v8408 = vsel %vm8086, %v5830, 0
        %v8411 = vsel %vm8086, %v5842, 0
        %v8414 = vsel %vm8086, %v5854, 0
        %v8417 = vsel %vm8086, %v5866, 0
        %v8420 = vsel %vm8086, %v5878, 0
        %v8423 = vsel %vm8086, %v5890, 0
        %8425 = vmatprep.subr.bf16.mxu0 0
        %8426 = vmatpush1.bf16.xpose.msra.mxu0 %v8402
        %8427 = vmatprep.subr.bf16.mxu0 0
        %8428 = vmatpush1.bf16.xpose.msra.mxu0 %v8405
        %8429 = vmatprep.subr.bf16.mxu0 0
        %8430 = vmatpush1.bf16.xpose.msra.mxu0 %v8408
        %8431 = vmatprep.subr.bf16.mxu0 0
        %8432 = vmatpush1.bf16.xpose.msra.mxu0 %v8411
        %8433 = vmatprep.subr.bf16.mxu0 0
        %8434 = vmatpush1.bf16.xpose.msra.mxu0 %v8414
        %8435 = vmatprep.subr.bf16.mxu0 0
        %8436 = vmatpush1.bf16.xpose.msra.mxu0 %v8417
        %8437 = vmatprep.subr.bf16.mxu0 0
        %8438 = vmatpush1.bf16.xpose.msra.mxu0 %v8420
        %8439 = vmatprep.subr.bf16.mxu0 0
        %8440 = vmatpush1.bf16.xpose.msra.mxu0 %v8423
        %8441 = vmatprep.subr.bf16.mxu0 0
        %8442 = vmatpush1.bf16.xpose.msra.mxu0 0
        %8443 = vmatprep.subr.bf16.mxu0 0
        %8444 = vmatpush1.bf16.xpose.msra.mxu0 0
        %8445 = vmatprep.subr.bf16.mxu0 0
        %8446 = vmatpush1.bf16.xpose.msra.mxu0 0
        %8447 = vmatprep.subr.bf16.mxu0 0
        %8448 = vmatpush1.bf16.xpose.msra.mxu0 0
        %8449 = vmatprep.subr.bf16.mxu0 0
        %8450 = vmatpush1.bf16.xpose.msra.mxu0 0
        %8451 = vmatprep.subr.bf16.mxu0 0
        %8452 = vmatpush1.bf16.xpose.msra.mxu0 0
        %8453 = vmatprep.subr.bf16.mxu0 0
        %8454 = vmatpush1.bf16.xpose.msra.mxu0 0
        %8455 = vmatprep.subr.bf16.mxu0 0
        %8456 = vmatpush1.bf16.xpose.msra.mxu0 0
        %8457 = vmatprep.mubr.bf16.mxu0 0
        %8458 = vmatmul.mubr.bf16.gmra.mrb[0].mxu0 %v8378
        %v8459 = vpop.f32.mrb[0].mxu0
        %v8460 = vadd.f32 %v8070, %v8459
        %v8461 = vpop.f32.mrb[0].mxu0
        %v8462 = vpop.f32.mrb[0].mxu0
        %v8463 = vadd.f32 %v8071, %v8462
        %v8464 = vpop.f32.mrb[0].mxu0
        %8465 = vmatprep.mubr.bf16.mxu0 0
        %8466 = vmatmul.mubr.bf16.gmra.mrb[0].mxu0 %v8381
        %v8467 = vpop.f32.mrb[0].mxu0
        %v8468 = vadd.f32 %v8072, %v8467
        %v8469 = vpop.f32.mrb[0].mxu0
        %v8470 = vpop.f32.mrb[0].mxu0
        %v8471 = vadd.f32 %v8073, %v8470
        %v8472 = vpop.f32.mrb[0].mxu0
        %8473 = vmatprep.mubr.bf16.mxu0 0
        %8474 = vmatmul.mubr.bf16.gmra.mrb[0].mxu0 %v8384
        %v8475 = vpop.f32.mrb[0].mxu0
        %v8476 = vadd.f32 %v8074, %v8475
        %v8477 = vpop.f32.mrb[0].mxu0
        %v8478 = vpop.f32.mrb[0].mxu0
        %v8479 = vadd.f32 %v8075, %v8478
        %v8480 = vpop.f32.mrb[0].mxu0
        %8481 = vmatprep.mubr.bf16.mxu0 0
        %8482 = vmatmul.mubr.bf16.gmra.mrb[0].mxu0 %v8387
        %v8483 = vpop.f32.mrb[0].mxu0
        %v8484 = vadd.f32 %v8076, %v8483
        %v8485 = vpop.f32.mrb[0].mxu0
        %v8486 = vpop.f32.mrb[0].mxu0
        %v8487 = vadd.f32 %v8077, %v8486
        %v8488 = vpop.f32.mrb[0].mxu0
        %8489 = vmatprep.mubr.bf16.mxu0 0
        %8490 = vmatmul.mubr.bf16.gmra.mrb[0].mxu0 %v8390
        %v8491 = vpop.f32.mrb[0].mxu0
        %v8492 = vadd.f32 %v8078, %v8491
        %v8493 = vpop.f32.mrb[0].mxu0
        %v8494 = vpop.f32.mrb[0].mxu0
        %v8495 = vadd.f32 %v8079, %v8494
        %v8496 = vpop.f32.mrb[0].mxu0
        %8497 = vmatprep.mubr.bf16.mxu0 0
        %8498 = vmatmul.mubr.bf16.gmra.mrb[0].mxu0 %v8393
        %v8499 = vpop.f32.mrb[0].mxu0
        %v8500 = vadd.f32 %v8080, %v8499
        %v8501 = vpop.f32.mrb[0].mxu0
        %v8502 = vpop.f32.mrb[0].mxu0
        %v8503 = vadd.f32 %v8081, %v8502
        %v8504 = vpop.f32.mrb[0].mxu0
        %8505 = vmatprep.mubr.bf16.mxu0 0
        %8506 = vmatmul.mubr.bf16.gmra.mrb[0].mxu0 %v8396
        %v8507 = vpop.f32.mrb[0].mxu0
        %v8508 = vadd.f32 %v8082, %v8507
        %v8509 = vpop.f32.mrb[0].mxu0
        %v8510 = vpop.f32.mrb[0].mxu0
        %v8511 = vadd.f32 %v8083, %v8510
        %v8512 = vpop.f32.mrb[0].mxu0
        %8513 = vmatprep.mubr.bf16.mxu0 0
        %8514 = vmatmul.mubr.bf16.gmra.mrb[0].mxu0 %v8399
        %v8515 = vpop.f32.mrb[0].mxu0
        %v8516 = vadd.f32 %v8084, %v8515
        %v8517 = vpop.f32.mrb[0].mxu0
        %v8518 = vpop.f32.mrb[0].mxu0
        %v8519 = vadd.f32 %v8085, %v8518
        %v8520 = vpop.f32.mrb[0].mxu0
        %8521 = vdwg.mxu0
        %v8523 = vsel %vm8086, %v3665, 0
        %v8526 = vsel %vm8086, %v3677, 0
        %v8529 = vsel %vm8086, %v3689, 0
        %v8532 = vsel %vm8086, %v3701, 0
        %v8535 = vsel %vm8086, %v3713, 0
        %v8538 = vsel %vm8086, %v3725, 0
        %v8541 = vsel %vm8086, %v3737, 0
        %v8544 = vsel %vm8086, %v3749, 0
        %v8547 = vsel %vm8086, %v5809, 0
        %v8550 = vsel %vm8086, %v5821, 0
        %v8553 = vsel %vm8086, %v5833, 0
        %v8556 = vsel %vm8086, %v5845, 0
        %v8559 = vsel %vm8086, %v5857, 0
        %v8562 = vsel %vm8086, %v5869, 0
        %v8565 = vsel %vm8086, %v5881, 0
        %v8568 = vsel %vm8086, %v5893, 0
        %8570 = vmatprep.subr.bf16.mxu0 0
        %8571 = vmatpush1.bf16.xpose.msra.mxu0 %v8547
        %8572 = vmatprep.subr.bf16.mxu0 0
        %8573 = vmatpush1.bf16.xpose.msra.mxu0 %v8550
        %8574 = vmatprep.subr.bf16.mxu0 0
        %8575 = vmatpush1.bf16.xpose.msra.mxu0 %v8553
        %8576 = vmatprep.subr.bf16.mxu0 0
        %8577 = vmatpush1.bf16.xpose.msra.mxu0 %v8556
        %8578 = vmatprep.subr.bf16.mxu0 0
        %8579 = vmatpush1.bf16.xpose.msra.mxu0 %v8559
        %8580 = vmatprep.subr.bf16.mxu0 0
        %8581 = vmatpush1.bf16.xpose.msra.mxu0 %v8562
        %8582 = vmatprep.subr.bf16.mxu0 0
        %8583 = vmatpush1.bf16.xpose.msra.mxu0 %v8565
        %8584 = vmatprep.subr.bf16.mxu0 0
        %8585 = vmatpush1.bf16.xpose.msra.mxu0 %v8568
        %8586 = vmatprep.subr.bf16.mxu0 0
        %8587 = vmatpush1.bf16.xpose.msra.mxu0 0
        %8588 = vmatprep.subr.bf16.mxu0 0
        %8589 = vmatpush1.bf16.xpose.msra.mxu0 0
        %8590 = vmatprep.subr.bf16.mxu0 0
        %8591 = vmatpush1.bf16.xpose.msra.mxu0 0
        %8592 = vmatprep.subr.bf16.mxu0 0
        %8593 = vmatpush1.bf16.xpose.msra.mxu0 0
        %8594 = vmatprep.subr.bf16.mxu0 0
        %8595 = vmatpush1.bf16.xpose.msra.mxu0 0
        %8596 = vmatprep.subr.bf16.mxu0 0
        %8597 = vmatpush1.bf16.xpose.msra.mxu0 0
        %8598 = vmatprep.subr.bf16.mxu0 0
        %8599 = vmatpush1.bf16.xpose.msra.mxu0 0
        %8600 = vmatprep.subr.bf16.mxu0 0
        %8601 = vmatpush1.bf16.xpose.msra.mxu0 0
        %8602 = vmatprep.mubr.bf16.mxu0 0
        %8603 = vmatmul.mubr.bf16.gmra.mrb[0].mxu0 %v8523
        %v8604 = vpop.f32.mrb[0].mxu0
        %v8605 = vadd.f32 %v8070, %v8604
        %v8606 = vpop.f32.mrb[0].mxu0
        %v8607 = vpop.f32.mrb[0].mxu0
        %v8608 = vadd.f32 %v8071, %v8607
        %v8609 = vpop.f32.mrb[0].mxu0
        %8610 = vmatprep.mubr.bf16.mxu0 0
        %8611 = vmatmul.mubr.bf16.gmra.mrb[0].mxu0 %v8526
        %v8612 = vpop.f32.mrb[0].mxu0
        %v8613 = vadd.f32 %v8072, %v8612
        %v8614 = vpop.f32.mrb[0].mxu0
        %v8615 = vpop.f32.mrb[0].mxu0
        %v8616 = vadd.f32 %v8073, %v8615
        %v8617 = vpop.f32.mrb[0].mxu0
        %8618 = vmatprep.mubr.bf16.mxu0 0
        %8619 = vmatmul.mubr.bf16.gmra.mrb[0].mxu0 %v8529
        %v8620 = vpop.f32.mrb[0].mxu0
        %v8621 = vadd.f32 %v8074, %v8620
        %v8622 = vpop.f32.mrb[0].mxu0
        %v8623 = vpop.f32.mrb[0].mxu0
        %v8624 = vadd.f32 %v8075, %v8623
        %v8625 = vpop.f32.mrb[0].mxu0
        %8626 = vmatprep.mubr.bf16.mxu0 0
        %8627 = vmatmul.mubr.bf16.gmra.mrb[0].mxu0 %v8532
        %v8628 = vpop.f32.mrb[0].mxu0
        %v8629 = vadd.f32 %v8076, %v8628
        %v8630 = vpop.f32.mrb[0].mxu0
        %v8631 = vpop.f32.mrb[0].mxu0
        %v8632 = vadd.f32 %v8077, %v8631
        %v8633 = vpop.f32.mrb[0].mxu0
        %8634 = vmatprep.mubr.bf16.mxu0 0
        %8635 = vmatmul.mubr.bf16.gmra.mrb[0].mxu0 %v8535
        %v8636 = vpop.f32.mrb[0].mxu0
        %v8637 = vadd.f32 %v8078, %v8636
        %v8638 = vpop.f32.mrb[0].mxu0
        %v8639 = vpop.f32.mrb[0].mxu0
        %v8640 = vadd.f32 %v8079, %v8639
        %v8641 = vpop.f32.mrb[0].mxu0
        %8642 = vmatprep.mubr.bf16.mxu0 0
        %8643 = vmatmul.mubr.bf16.gmra.mrb[0].mxu0 %v8538
        %v8644 = vpop.f32.mrb[0].mxu0
        %v8645 = vadd.f32 %v8080, %v8644
        %v8646 = vpop.f32.mrb[0].mxu0
        %v8647 = vpop.f32.mrb[0].mxu0
        %v8648 = vadd.f32 %v8081, %v8647
        %v8649 = vpop.f32.mrb[0].mxu0
        %8650 = vmatprep.mubr.bf16.mxu0 0
        %8651 = vmatmul.mubr.bf16.gmra.mrb[0].mxu0 %v8541
        %v8652 = vpop.f32.mrb[0].mxu0
        %v8653 = vadd.f32 %v8082, %v8652
        %v8654 = vpop.f32.mrb[0].mxu0
        %v8655 = vpop.f32.mrb[0].mxu0
        %v8656 = vadd.f32 %v8083, %v8655
        %v8657 = vpop.f32.mrb[0].mxu0
        %8658 = vmatprep.mubr.bf16.mxu0 0
        %8659 = vmatmul.mubr.bf16.gmra.mrb[0].mxu0 %v8544
        %v8660 = vpop.f32.mrb[0].mxu0
        %v8661 = vadd.f32 %v8084, %v8660
        %v8662 = vpop.f32.mrb[0].mxu0
        %v8663 = vpop.f32.mrb[0].mxu0
        %v8664 = vadd.f32 %v8085, %v8663
        %v8665 = vpop.f32.mrb[0].mxu0
        %8666 = vdwg.mxu0
        %8667 = vmax.xlane.f32.xlu0 %v8170
        %v8668 = vpop.xlane.xlu0 %8667
        %8669 = vmax.xlane.f32.xlu0 %v8173
        %v8670 = vpop.xlane.xlu0 %8669
        %8671 = vmax.xlane.f32.xlu0 %v8178
        %v8672 = vpop.xlane.xlu0 %8671
        %8673 = vmax.xlane.f32.xlu0 %v8181
        %v8674 = vpop.xlane.xlu0 %8673
        %8675 = vmax.xlane.f32.xlu0 %v8186
        %v8676 = vpop.xlane.xlu0 %8675
        %8677 = vmax.xlane.f32.xlu0 %v8189
        %v8678 = vpop.xlane.xlu0 %8677
        %8679 = vmax.xlane.f32.xlu0 %v8194
        %v8680 = vpop.xlane.xlu0 %8679
        %8681 = vmax.xlane.f32.xlu0 %v8197
        %v8682 = vpop.xlane.xlu0 %8681
        %8683 = vmax.xlane.f32.xlu0 %v8202
        %v8684 = vpop.xlane.xlu0 %8683
        %8685 = vmax.xlane.f32.xlu0 %v8205
        %v8686 = vpop.xlane.xlu0 %8685
        %8687 = vmax.xlane.f32.xlu0 %v8210
        %v8688 = vpop.xlane.xlu0 %8687
        %8689 = vmax.xlane.f32.xlu0 %v8213
        %v8690 = vpop.xlane.xlu0 %8689
        %8691 = vmax.xlane.f32.xlu0 %v8218
        %v8692 = vpop.xlane.xlu0 %8691
        %8693 = vmax.xlane.f32.xlu0 %v8221
        %v8694 = vpop.xlane.xlu0 %8693
        %8695 = vmax.xlane.f32.xlu0 %v8226
        %v8696 = vpop.xlane.xlu0 %8695
        %8697 = vmax.xlane.f32.xlu0 %v8229
        %v8698 = vpop.xlane.xlu0 %8697
        %8699 = vmax.xlane.f32.xlu0 %v8315
        %v8700 = vpop.xlane.xlu0 %8699
        %8701 = vmax.xlane.f32.xlu0 %v8318
        %v8702 = vpop.xlane.xlu0 %8701
        %8703 = vmax.xlane.f32.xlu0 %v8323
        %v8704 = vpop.xlane.xlu0 %8703
        %8705 = vmax.xlane.f32.xlu0 %v8326
        %v8706 = vpop.xlane.xlu0 %8705
        %8707 = vmax.xlane.f32.xlu0 %v8331
        %v8708 = vpop.xlane.xlu0 %8707
        %8709 = vmax.xlane.f32.xlu0 %v8334
        %v8710 = vpop.xlane.xlu0 %8709
        %8711 = vmax.xlane.f32.xlu0 %v8339
        %v8712 = vpop.xlane.xlu0 %8711
        %8713 = vmax.xlane.f32.xlu0 %v8342
        %v8714 = vpop.xlane.xlu0 %8713
        %8715 = vmax.xlane.f32.xlu0 %v8347
        %v8716 = vpop.xlane.xlu0 %8715
        %8717 = vmax.xlane.f32.xlu0 %v8350
        %v8718 = vpop.xlane.xlu0 %8717
        %8719 = vmax.xlane.f32.xlu0 %v8355
        %v8720 = vpop.xlane.xlu0 %8719
        %8721 = vmax.xlane.f32.xlu0 %v8358
        %v8722 = vpop.xlane.xlu0 %8721
        %8723 = vmax.xlane.f32.xlu0 %v8363
        %v8724 = vpop.xlane.xlu0 %8723
        %8725 = vmax.xlane.f32.xlu0 %v8366
        %v8726 = vpop.xlane.xlu0 %8725
        %8727 = vmax.xlane.f32.xlu0 %v8371
        %v8728 = vpop.xlane.xlu0 %8727
        %8729 = vmax.xlane.f32.xlu0 %v8374
        %v8730 = vpop.xlane.xlu0 %8729
        %8731 = vmax.xlane.f32.xlu0 %v8460
        %v8732 = vpop.xlane.xlu0 %8731
        %8733 = vmax.xlane.f32.xlu0 %v8463
        %v8734 = vpop.xlane.xlu0 %8733
        %8735 = vmax.xlane.f32.xlu0 %v8468
        %v8736 = vpop.xlane.xlu0 %8735
        %8737 = vmax.xlane.f32.xlu0 %v8471
        %v8738 = vpop.xlane.xlu0 %8737
        %8739 = vmax.xlane.f32.xlu0 %v8476
        %v8740 = vpop.xlane.xlu0 %8739
        %8741 = vmax.xlane.f32.xlu0 %v8479
        %v8742 = vpop.xlane.xlu0 %8741
        %8743 = vmax.xlane.f32.xlu0 %v8484
        %v8744 = vpop.xlane.xlu0 %8743
        %8745 = vmax.xlane.f32.xlu0 %v8487
        %v8746 = vpop.xlane.xlu0 %8745
        %8747 = vmax.xlane.f32.xlu0 %v8492
        %v8748 = vpop.xlane.xlu0 %8747
        %8749 = vmax.xlane.f32.xlu0 %v8495
        %v8750 = vpop.xlane.xlu0 %8749
        %8751 = vmax.xlane.f32.xlu0 %v8500
        %v8752 = vpop.xlane.xlu0 %8751
        %8753 = vmax.xlane.f32.xlu0 %v8503
        %v8754 = vpop.xlane.xlu0 %8753
        %8755 = vmax.xlane.f32.xlu0 %v8508
        %v8756 = vpop.xlane.xlu0 %8755
        %8757 = vmax.xlane.f32.xlu0 %v8511
        %v8758 = vpop.xlane.xlu0 %8757
        %8759 = vmax.xlane.f32.xlu0 %v8516
        %v8760 = vpop.xlane.xlu0 %8759
        %8761 = vmax.xlane.f32.xlu0 %v8519
        %v8762 = vpop.xlane.xlu0 %8761
        %8763 = vmax.xlane.f32.xlu0 %v8605
        %v8764 = vpop.xlane.xlu0 %8763
        %8765 = vmax.xlane.f32.xlu0 %v8608
        %v8766 = vpop.xlane.xlu0 %8765
        %8767 = vmax.xlane.f32.xlu0 %v8613
        %v8768 = vpop.xlane.xlu0 %8767
        %8769 = vmax.xlane.f32.xlu0 %v8616
        %v8770 = vpop.xlane.xlu0 %8769
        %8771 = vmax.xlane.f32.xlu0 %v8621
        %v8772 = vpop.xlane.xlu0 %8771
        %8773 = vmax.xlane.f32.xlu0 %v8624
        %v8774 = vpop.xlane.xlu0 %8773
        %8775 = vmax.xlane.f32.xlu0 %v8629
        %v8776 = vpop.xlane.xlu0 %8775
        %8777 = vmax.xlane.f32.xlu0 %v8632
        %v8778 = vpop.xlane.xlu0 %8777
        %8779 = vmax.xlane.f32.xlu0 %v8637
        %v8780 = vpop.xlane.xlu0 %8779
        %8781 = vmax.xlane.f32.xlu0 %v8640
        %v8782 = vpop.xlane.xlu0 %8781
        %8783 = vmax.xlane.f32.xlu0 %v8645
        %v8784 = vpop.xlane.xlu0 %8783
        %8785 = vmax.xlane.f32.xlu0 %v8648
        %v8786 = vpop.xlane.xlu0 %8785
        %8787 = vmax.xlane.f32.xlu0 %v8653
        %v8788 = vpop.xlane.xlu0 %8787
        %8789 = vmax.xlane.f32.xlu0 %v8656
        %v8790 = vpop.xlane.xlu0 %8789
        %8791 = vmax.xlane.f32.xlu0 %v8661
        %v8792 = vpop.xlane.xlu0 %8791
        %8793 = vmax.xlane.f32.xlu0 %v8664
        %v8794 = vpop.xlane.xlu0 %8793
        %v8795 = vsub.f32 %v8170, %v8668
        %v8796 = vsub.f32 %v8173, %v8670
        %v8797 = vsub.f32 %v8178, %v8672
        %v8798 = vsub.f32 %v8181, %v8674
        %v8799 = vsub.f32 %v8186, %v8676
        %v8800 = vsub.f32 %v8189, %v8678
        %v8801 = vsub.f32 %v8194, %v8680
        %v8802 = vsub.f32 %v8197, %v8682
        %v8803 = vsub.f32 %v8202, %v8684
        %v8804 = vsub.f32 %v8205, %v8686
        %v8805 = vsub.f32 %v8210, %v8688
        %v8806 = vsub.f32 %v8213, %v8690
        %v8807 = vsub.f32 %v8218, %v8692
        %v8808 = vsub.f32 %v8221, %v8694
        %v8809 = vsub.f32 %v8226, %v8696
        %v8810 = vsub.f32 %v8229, %v8698
        %v8811 = vsub.f32 %v8315, %v8700
        %v8812 = vsub.f32 %v8318, %v8702
        %v8813 = vsub.f32 %v8323, %v8704
        %v8814 = vsub.f32 %v8326, %v8706
        %v8815 = vsub.f32 %v8331, %v8708
        %v8816 = vsub.f32 %v8334, %v8710
        %v8817 = vsub.f32 %v8339, %v8712
        %v8818 = vsub.f32 %v8342, %v8714
        %v8819 = vsub.f32 %v8347, %v8716
        %v8820 = vsub.f32 %v8350, %v8718
        %v8821 = vsub.f32 %v8355, %v8720
        %v8822 = vsub.f32 %v8358, %v8722
        %v8823 = vsub.f32 %v8363, %v8724
        %v8824 = vsub.f32 %v8366, %v8726
        %v8825 = vsub.f32 %v8371, %v8728
        %v8826 = vsub.f32 %v8374, %v8730
        %v8827 = vsub.f32 %v8460, %v8732
        %v8828 = vsub.f32 %v8463, %v8734
        %v8829 = vsub.f32 %v8468, %v8736
        %v8830 = vsub.f32 %v8471, %v8738
        %v8831 = vsub.f32 %v8476, %v8740
        %v8832 = vsub.f32 %v8479, %v8742
        %v8833 = vsub.f32 %v8484, %v8744
        %v8834 = vsub.f32 %v8487, %v8746
        %v8835 = vsub.f32 %v8492, %v8748
        %v8836 = vsub.f32 %v8495, %v8750
        %v8837 = vsub.f32 %v8500, %v8752
        %v8838 = vsub.f32 %v8503, %v8754
        %v8839 = vsub.f32 %v8508, %v8756
        %v8840 = vsub.f32 %v8511, %v8758
        %v8841 = vsub.f32 %v8516, %v8760
        %v8842 = vsub.f32 %v8519, %v8762
        %v8843 = vsub.f32 %v8605, %v8764
        %v8844 = vsub.f32 %v8608, %v8766
        %v8845 = vsub.f32 %v8613, %v8768
        %v8846 = vsub.f32 %v8616, %v8770
        %v8847 = vsub.f32 %v8621, %v8772
        %v8848 = vsub.f32 %v8624, %v8774
        %v8849 = vsub.f32 %v8629, %v8776
        %v8850 = vsub.f32 %v8632, %v8778
        %v8851 = vsub.f32 %v8637, %v8780
        %v8852 = vsub.f32 %v8640, %v8782
        %v8853 = vsub.f32 %v8645, %v8784
        %v8854 = vsub.f32 %v8648, %v8786
        %v8855 = vsub.f32 %v8653, %v8788
        %v8856 = vsub.f32 %v8656, %v8790
        %v8857 = vsub.f32 %v8661, %v8792
        %v8858 = vsub.f32 %v8664, %v8794
        %v8859 = vmul.f32 %v8795, 1.442695
        %v8860 = vpow.pop %v8859
        %v8861 = vmul.f32 %v8796, 1.442695
        %v8862 = vpow.pop %v8861
        %v8863 = vmul.f32 %v8797, 1.442695
        %v8864 = vpow.pop %v8863
        %v8865 = vmul.f32 %v8798, 1.442695
        %v8866 = vpow.pop %v8865
        %v8867 = vmul.f32 %v8799, 1.442695
        %v8868 = vpow.pop %v8867
        %v8869 = vmul.f32 %v8800, 1.442695
        %v8870 = vpow.pop %v8869
        %v8871 = vmul.f32 %v8801, 1.442695
        %v8872 = vpow.pop %v8871
        %v8873 = vmul.f32 %v8802, 1.442695
        %v8874 = vpow.pop %v8873
        %v8875 = vmul.f32 %v8803, 1.442695
        %v8876 = vpow.pop %v8875
        %v8877 = vmul.f32 %v8804, 1.442695
        %v8878 = vpow.pop %v8877
        %v8879 = vmul.f32 %v8805, 1.442695
        %v8880 = vpow.pop %v8879
        %v8881 = vmul.f32 %v8806, 1.442695
        %v8882 = vpow.pop %v8881
        %v8883 = vmul.f32 %v8807, 1.442695
        %v8884 = vpow.pop %v8883
        %v8885 = vmul.f32 %v8808, 1.442695
        %v8886 = vpow.pop %v8885
        %v8887 = vmul.f32 %v8809, 1.442695
        %v8888 = vpow.pop %v8887
        %v8889 = vmul.f32 %v8810, 1.442695
        %v8890 = vpow.pop %v8889
        %v8891 = vmul.f32 %v8811, 1.442695
        %v8892 = vpow.pop %v8891
        %v8893 = vmul.f32 %v8812, 1.442695
        %v8894 = vpow.pop %v8893
        %v8895 = vmul.f32 %v8813, 1.442695
        %v8896 = vpow.pop %v8895
        %v8897 = vmul.f32 %v8814, 1.442695
        %v8898 = vpow.pop %v8897
        %v8899 = vmul.f32 %v8815, 1.442695
        %v8900 = vpow.pop %v8899
        %v8901 = vmul.f32 %v8816, 1.442695
        %v8902 = vpow.pop %v8901
        %v8903 = vmul.f32 %v8817, 1.442695
        %v8904 = vpow.pop %v8903
        %v8905 = vmul.f32 %v8818, 1.442695
        %v8906 = vpow.pop %v8905
        %v8907 = vmul.f32 %v8819, 1.442695
        %v8908 = vpow.pop %v8907
        %v8909 = vmul.f32 %v8820, 1.442695
        %v8910 = vpow.pop %v8909
        %v8911 = vmul.f32 %v8821, 1.442695
        %v8912 = vpow.pop %v8911
        %v8913 = vmul.f32 %v8822, 1.442695
        %v8914 = vpow.pop %v8913
        %v8915 = vmul.f32 %v8823, 1.442695
        %v8916 = vpow.pop %v8915
        %v8917 = vmul.f32 %v8824, 1.442695
        %v8918 = vpow.pop %v8917
        %v8919 = vmul.f32 %v8825, 1.442695
        %v8920 = vpow.pop %v8919
        %v8921 = vmul.f32 %v8826, 1.442695
        %v8922 = vpow.pop %v8921
        %v8923 = vmul.f32 %v8827, 1.442695
        %v8924 = vpow.pop %v8923
        %v8925 = vmul.f32 %v8828, 1.442695
        %v8926 = vpow.pop %v8925
        %v8927 = vmul.f32 %v8829, 1.442695
        %v8928 = vpow.pop %v8927
        %v8929 = vmul.f32 %v8830, 1.442695
        %v8930 = vpow.pop %v8929
        %v8931 = vmul.f32 %v8831, 1.442695
        %v8932 = vpow.pop %v8931
        %v8933 = vmul.f32 %v8832, 1.442695
        %v8934 = vpow.pop %v8933
        %v8935 = vmul.f32 %v8833, 1.442695
        %v8936 = vpow.pop %v8935
        %v8937 = vmul.f32 %v8834, 1.442695
        %v8938 = vpow.pop %v8937
        %v8939 = vmul.f32 %v8835, 1.442695
        %v8940 = vpow.pop %v8939
        %v8941 = vmul.f32 %v8836, 1.442695
        %v8942 = vpow.pop %v8941
        %v8943 = vmul.f32 %v8837, 1.442695
        %v8944 = vpow.pop %v8943
        %v8945 = vmul.f32 %v8838, 1.442695
        %v8946 = vpow.pop %v8945
        %v8947 = vmul.f32 %v8839, 1.442695
        %v8948 = vpow.pop %v8947
        %v8949 = vmul.f32 %v8840, 1.442695
        %v8950 = vpow.pop %v8949
        %v8951 = vmul.f32 %v8841, 1.442695
        %v8952 = vpow.pop %v8951
        %v8953 = vmul.f32 %v8842, 1.442695
        %v8954 = vpow.pop %v8953
        %v8955 = vmul.f32 %v8843, 1.442695
        %v8956 = vpow.pop %v8955
        %v8957 = vmul.f32 %v8844, 1.442695
        %v8958 = vpow.pop %v8957
        %v8959 = vmul.f32 %v8845, 1.442695
        %v8960 = vpow.pop %v8959
        %v8961 = vmul.f32 %v8846, 1.442695
        %v8962 = vpow.pop %v8961
        %v8963 = vmul.f32 %v8847, 1.442695
        %v8964 = vpow.pop %v8963
        %v8965 = vmul.f32 %v8848, 1.442695
        %v8966 = vpow.pop %v8965
        %v8967 = vmul.f32 %v8849, 1.442695
        %v8968 = vpow.pop %v8967
        %v8969 = vmul.f32 %v8850, 1.442695
        %v8970 = vpow.pop %v8969
        %v8971 = vmul.f32 %v8851, 1.442695
        %v8972 = vpow.pop %v8971
        %v8973 = vmul.f32 %v8852, 1.442695
        %v8974 = vpow.pop %v8973
        %v8975 = vmul.f32 %v8853, 1.442695
        %v8976 = vpow.pop %v8975
        %v8977 = vmul.f32 %v8854, 1.442695
        %v8978 = vpow.pop %v8977
        %v8979 = vmul.f32 %v8855, 1.442695
        %v8980 = vpow.pop %v8979
        %v8981 = vmul.f32 %v8856, 1.442695
        %v8982 = vpow.pop %v8981
        %v8983 = vmul.f32 %v8857, 1.442695
        %v8984 = vpow.pop %v8983
        %v8985 = vmul.f32 %v8858, 1.442695
        %v8986 = vpow.pop %v8985
        %8987 = vadd.xlane.f32.xlu0 %v8860
        %v8988 = vpop.xlane.xlu0 %8987
        %8989 = vadd.xlane.f32.xlu0 %v8862
        %v8990 = vpop.xlane.xlu0 %8989
        %8991 = vadd.xlane.f32.xlu0 %v8864
        %v8992 = vpop.xlane.xlu0 %8991
        %8993 = vadd.xlane.f32.xlu0 %v8866
        %v8994 = vpop.xlane.xlu0 %8993
        %8995 = vadd.xlane.f32.xlu0 %v8868
        %v8996 = vpop.xlane.xlu0 %8995
        %8997 = vadd.xlane.f32.xlu0 %v8870
        %v8998 = vpop.xlane.xlu0 %8997
        %8999 = vadd.xlane.f32.xlu0 %v8872
        %v9000 = vpop.xlane.xlu0 %8999
        %9001 = vadd.xlane.f32.xlu0 %v8874
        %v9002 = vpop.xlane.xlu0 %9001
        %9003 = vadd.xlane.f32.xlu0 %v8876
        %v9004 = vpop.xlane.xlu0 %9003
        %9005 = vadd.xlane.f32.xlu0 %v8878
        %v9006 = vpop.xlane.xlu0 %9005
        %9007 = vadd.xlane.f32.xlu0 %v8880
        %v9008 = vpop.xlane.xlu0 %9007
        %9009 = vadd.xlane.f32.xlu0 %v8882
        %v9010 = vpop.xlane.xlu0 %9009
        %9011 = vadd.xlane.f32.xlu0 %v8884
        %v9012 = vpop.xlane.xlu0 %9011
        %9013 = vadd.xlane.f32.xlu0 %v8886
        %v9014 = vpop.xlane.xlu0 %9013
        %9015 = vadd.xlane.f32.xlu0 %v8888
        %v9016 = vpop.xlane.xlu0 %9015
        %9017 = vadd.xlane.f32.xlu0 %v8890
        %v9018 = vpop.xlane.xlu0 %9017
        %9019 = vadd.xlane.f32.xlu0 %v8892
        %v9020 = vpop.xlane.xlu0 %9019
        %9021 = vadd.xlane.f32.xlu0 %v8894
        %v9022 = vpop.xlane.xlu0 %9021
        %9023 = vadd.xlane.f32.xlu0 %v8896
        %v9024 = vpop.xlane.xlu0 %9023
        %9025 = vadd.xlane.f32.xlu0 %v8898
        %v9026 = vpop.xlane.xlu0 %9025
        %9027 = vadd.xlane.f32.xlu0 %v8900
        %v9028 = vpop.xlane.xlu0 %9027
        %9029 = vadd.xlane.f32.xlu0 %v8902
        %v9030 = vpop.xlane.xlu0 %9029
        %9031 = vadd.xlane.f32.xlu0 %v8904
        %v9032 = vpop.xlane.xlu0 %9031
        %9033 = vadd.xlane.f32.xlu0 %v8906
        %v9034 = vpop.xlane.xlu0 %9033
        %9035 = vadd.xlane.f32.xlu0 %v8908
        %v9036 = vpop.xlane.xlu0 %9035
        %9037 = vadd.xlane.f32.xlu0 %v8910
        %v9038 = vpop.xlane.xlu0 %9037
        %9039 = vadd.xlane.f32.xlu0 %v8912
        %v9040 = vpop.xlane.xlu0 %9039
        %9041 = vadd.xlane.f32.xlu0 %v8914
        %v9042 = vpop.xlane.xlu0 %9041
        %9043 = vadd.xlane.f32.xlu0 %v8916
        %v9044 = vpop.xlane.xlu0 %9043
        %9045 = vadd.xlane.f32.xlu0 %v8918
        %v9046 = vpop.xlane.xlu0 %9045
        %9047 = vadd.xlane.f32.xlu0 %v8920
        %v9048 = vpop.xlane.xlu0 %9047
        %9049 = vadd.xlane.f32.xlu0 %v8922
        %v9050 = vpop.xlane.xlu0 %9049
        %9051 = vadd.xlane.f32.xlu0 %v8924
        %v9052 = vpop.xlane.xlu0 %9051
        %9053 = vadd.xlane.f32.xlu0 %v8926
        %v9054 = vpop.xlane.xlu0 %9053
        %9055 = vadd.xlane.f32.xlu0 %v8928
        %v9056 = vpop.xlane.xlu0 %9055
        %9057 = vadd.xlane.f32.xlu0 %v8930
        %v9058 = vpop.xlane.xlu0 %9057
        %9059 = vadd.xlane.f32.xlu0 %v8932
        %v9060 = vpop.xlane.xlu0 %9059
        %9061 = vadd.xlane.f32.xlu0 %v8934
        %v9062 = vpop.xlane.xlu0 %9061
        %9063 = vadd.xlane.f32.xlu0 %v8936
        %v9064 = vpop.xlane.xlu0 %9063
        %9065 = vadd.xlane.f32.xlu0 %v8938
        %v9066 = vpop.xlane.xlu0 %9065
        %9067 = vadd.xlane.f32.xlu0 %v8940
        %v9068 = vpop.xlane.xlu0 %9067
        %9069 = vadd.xlane.f32.xlu0 %v8942
        %v9070 = vpop.xlane.xlu0 %9069
        %9071 = vadd.xlane.f32.xlu0 %v8944
        %v9072 = vpop.xlane.xlu0 %9071
        %9073 = vadd.xlane.f32.xlu0 %v8946
        %v9074 = vpop.xlane.xlu0 %9073
        %9075 = vadd.xlane.f32.xlu0 %v8948
        %v9076 = vpop.xlane.xlu0 %9075
        %9077 = vadd.xlane.f32.xlu0 %v8950
        %v9078 = vpop.xlane.xlu0 %9077
        %9079 = vadd.xlane.f32.xlu0 %v8952
        %v9080 = vpop.xlane.xlu0 %9079
        %9081 = vadd.xlane.f32.xlu0 %v8954
        %v9082 = vpop.xlane.xlu0 %9081
        %9083 = vadd.xlane.f32.xlu0 %v8956
        %v9084 = vpop.xlane.xlu0 %9083
        %9085 = vadd.xlane.f32.xlu0 %v8958
        %v9086 = vpop.xlane.xlu0 %9085
        %9087 = vadd.xlane.f32.xlu0 %v8960
        %v9088 = vpop.xlane.xlu0 %9087
        %9089 = vadd.xlane.f32.xlu0 %v8962
        %v9090 = vpop.xlane.xlu0 %9089
        %9091 = vadd.xlane.f32.xlu0 %v8964
        %v9092 = vpop.xlane.xlu0 %9091
        %9093 = vadd.xlane.f32.xlu0 %v8966
        %v9094 = vpop.xlane.xlu0 %9093
        %9095 = vadd.xlane.f32.xlu0 %v8968
        %v9096 = vpop.xlane.xlu0 %9095
        %9097 = vadd.xlane.f32.xlu0 %v8970
        %v9098 = vpop.xlane.xlu0 %9097
        %9099 = vadd.xlane.f32.xlu0 %v8972
        %v9100 = vpop.xlane.xlu0 %9099
        %9101 = vadd.xlane.f32.xlu0 %v8974
        %v9102 = vpop.xlane.xlu0 %9101
        %9103 = vadd.xlane.f32.xlu0 %v8976
        %v9104 = vpop.xlane.xlu0 %9103
        %9105 = vadd.xlane.f32.xlu0 %v8978
        %v9106 = vpop.xlane.xlu0 %9105
        %9107 = vadd.xlane.f32.xlu0 %v8980
        %v9108 = vpop.xlane.xlu0 %9107
        %9109 = vadd.xlane.f32.xlu0 %v8982
        %v9110 = vpop.xlane.xlu0 %9109
        %9111 = vadd.xlane.f32.xlu0 %v8984
        %v9112 = vpop.xlane.xlu0 %9111
        %9113 = vadd.xlane.f32.xlu0 %v8986
        %v9114 = vpop.xlane.xlu0 %9113
        %v9115 = vrcp.pop %v8988
        %v9116 = vrcp.pop %v8990
        %v9117 = vrcp.pop %v8992
        %v9118 = vrcp.pop %v8994
        %v9119 = vrcp.pop %v8996
        %v9120 = vrcp.pop %v8998
        %v9121 = vrcp.pop %v9000
        %v9122 = vrcp.pop %v9002
        %v9123 = vrcp.pop %v9004
        %v9124 = vrcp.pop %v9006
        %v9125 = vrcp.pop %v9008
        %v9126 = vrcp.pop %v9010
        %v9127 = vrcp.pop %v9012
        %v9128 = vrcp.pop %v9014
        %v9129 = vrcp.pop %v9016
        %v9130 = vrcp.pop %v9018
        %v9131 = vrcp.pop %v9020
        %v9132 = vrcp.pop %v9022
        %v9133 = vrcp.pop %v9024
        %v9134 = vrcp.pop %v9026
        %v9135 = vrcp.pop %v9028
        %v9136 = vrcp.pop %v9030
        %v9137 = vrcp.pop %v9032
        %v9138 = vrcp.pop %v9034
        %v9139 = vrcp.pop %v9036
        %v9140 = vrcp.pop %v9038
        %v9141 = vrcp.pop %v9040
        %v9142 = vrcp.pop %v9042
        %v9143 = vrcp.pop %v9044
        %v9144 = vrcp.pop %v9046
        %v9145 = vrcp.pop %v9048
        %v9146 = vrcp.pop %v9050
        %v9147 = vrcp.pop %v9052
        %v9148 = vrcp.pop %v9054
        %v9149 = vrcp.pop %v9056
        %v9150 = vrcp.pop %v9058
        %v9151 = vrcp.pop %v9060
        %v9152 = vrcp.pop %v9062
        %v9153 = vrcp.pop %v9064
        %v9154 = vrcp.pop %v9066
        %v9155 = vrcp.pop %v9068
        %v9156 = vrcp.pop %v9070
        %v9157 = vrcp.pop %v9072
        %v9158 = vrcp.pop %v9074
        %v9159 = vrcp.pop %v9076
        %v9160 = vrcp.pop %v9078
        %v9161 = vrcp.pop %v9080
        %v9162 = vrcp.pop %v9082
        %v9163 = vrcp.pop %v9084
        %v9164 = vrcp.pop %v9086
        %v9165 = vrcp.pop %v9088
        %v9166 = vrcp.pop %v9090
        %v9167 = vrcp.pop %v9092
        %v9168 = vrcp.pop %v9094
        %v9169 = vrcp.pop %v9096
        %v9170 = vrcp.pop %v9098
        %v9171 = vrcp.pop %v9100
        %v9172 = vrcp.pop %v9102
        %v9173 = vrcp.pop %v9104
        %v9174 = vrcp.pop %v9106
        %v9175 = vrcp.pop %v9108
        %v9176 = vrcp.pop %v9110
        %v9177 = vrcp.pop %v9112
        %v9178 = vrcp.pop %v9114
        %v9179 = vmul.f32 %v8860, %v9115
        %v9180 = vmul.f32 %v8862, %v9116
        %v9181 = vmul.f32 %v8864, %v9117
        %v9182 = vmul.f32 %v8866, %v9118
        %v9183 = vmul.f32 %v8868, %v9119
        %v9184 = vmul.f32 %v8870, %v9120
        %v9185 = vmul.f32 %v8872, %v9121
        %v9186 = vmul.f32 %v8874, %v9122
        %v9187 = vmul.f32 %v8876, %v9123
        %v9188 = vmul.f32 %v8878, %v9124
        %v9189 = vmul.f32 %v8880, %v9125
        %v9190 = vmul.f32 %v8882, %v9126
        %v9191 = vmul.f32 %v8884, %v9127
        %v9192 = vmul.f32 %v8886, %v9128
        %v9193 = vmul.f32 %v8888, %v9129
        %v9194 = vmul.f32 %v8890, %v9130
        %v9195 = vmul.f32 %v8892, %v9131
        %v9196 = vmul.f32 %v8894, %v9132
        %v9197 = vmul.f32 %v8896, %v9133
        %v9198 = vmul.f32 %v8898, %v9134
        %v9199 = vmul.f32 %v8900, %v9135
        %v9200 = vmul.f32 %v8902, %v9136
        %v9201 = vmul.f32 %v8904, %v9137
        %v9202 = vmul.f32 %v8906, %v9138
        %v9203 = vmul.f32 %v8908, %v9139
        %v9204 = vmul.f32 %v8910, %v9140
        %v9205 = vmul.f32 %v8912, %v9141
        %v9206 = vmul.f32 %v8914, %v9142
        %v9207 = vmul.f32 %v8916, %v9143
        %v9208 = vmul.f32 %v8918, %v9144
        %v9209 = vmul.f32 %v8920, %v9145
        %v9210 = vmul.f32 %v8922, %v9146
        %v9211 = vmul.f32 %v8924, %v9147
        %v9212 = vmul.f32 %v8926, %v9148
        %v9213 = vmul.f32 %v8928, %v9149
        %v9214 = vmul.f32 %v8930, %v9150
        %v9215 = vmul.f32 %v8932, %v9151
        %v9216 = vmul.f32 %v8934, %v9152
        %v9217 = vmul.f32 %v8936, %v9153
        %v9218 = vmul.f32 %v8938, %v9154
        %v9219 = vmul.f32 %v8940, %v9155
        %v9220 = vmul.f32 %v8942, %v9156
        %v9221 = vmul.f32 %v8944, %v9157
        %v9222 = vmul.f32 %v8946, %v9158
        %v9223 = vmul.f32 %v8948, %v9159
        %v9224 = vmul.f32 %v8950, %v9160
        %v9225 = vmul.f32 %v8952, %v9161
        %v9226 = vmul.f32 %v8954, %v9162
        %v9227 = vmul.f32 %v8956, %v9163
        %v9228 = vmul.f32 %v8958, %v9164
        %v9229 = vmul.f32 %v8960, %v9165
        %v9230 = vmul.f32 %v8962, %v9166
        %v9231 = vmul.f32 %v8964, %v9167
        %v9232 = vmul.f32 %v8966, %v9168
        %v9233 = vmul.f32 %v8968, %v9169
        %v9234 = vmul.f32 %v8970, %v9170
        %v9235 = vmul.f32 %v8972, %v9171
        %v9236 = vmul.f32 %v8974, %v9172
        %v9237 = vmul.f32 %v8976, %v9173
        %v9238 = vmul.f32 %v8978, %v9174
        %v9239 = vmul.f32 %v8980, %v9175
        %v9240 = vmul.f32 %v8982, %v9176
        %v9241 = vmul.f32 %v8984, %v9177
        %v9242 = vmul.f32 %v8986, %v9178
        %v9243 = vpack.c.bf16 %v9180, %v9179
        %v9244 = vpack.c.bf16 %v9182, %v9181
        %v9245 = vpack.c.bf16 %v9184, %v9183
        %v9246 = vpack.c.bf16 %v9186, %v9185
        %v9247 = vpack.c.bf16 %v9188, %v9187
        %v9248 = vpack.c.bf16 %v9190, %v9189
        %v9249 = vpack.c.bf16 %v9192, %v9191
        %v9250 = vpack.c.bf16 %v9194, %v9193
        %v9251 = vpack.c.bf16 %v9196, %v9195
        %v9252 = vpack.c.bf16 %v9198, %v9197
        %v9253 = vpack.c.bf16 %v9200, %v9199
        %v9254 = vpack.c.bf16 %v9202, %v9201
        %v9255 = vpack.c.bf16 %v9204, %v9203
        %v9256 = vpack.c.bf16 %v9206, %v9205
        %v9257 = vpack.c.bf16 %v9208, %v9207
        %v9258 = vpack.c.bf16 %v9210, %v9209
        %v9259 = vpack.c.bf16 %v9212, %v9211
        %v9260 = vpack.c.bf16 %v9214, %v9213
        %v9261 = vpack.c.bf16 %v9216, %v9215
        %v9262 = vpack.c.bf16 %v9218, %v9217
        %v9263 = vpack.c.bf16 %v9220, %v9219
        %v9264 = vpack.c.bf16 %v9222, %v9221
        %v9265 = vpack.c.bf16 %v9224, %v9223
        %v9266 = vpack.c.bf16 %v9226, %v9225
        %v9267 = vpack.c.bf16 %v9228, %v9227
        %v9268 = vpack.c.bf16 %v9230, %v9229
        %v9269 = vpack.c.bf16 %v9232, %v9231
        %v9270 = vpack.c.bf16 %v9234, %v9233
        %v9271 = vpack.c.bf16 %v9236, %v9235
        %v9272 = vpack.c.bf16 %v9238, %v9237
        %v9273 = vpack.c.bf16 %v9240, %v9239
        %v9274 = vpack.c.bf16 %v9242, %v9241
        %9275 = vmatprep.subr.bf16.mxu0 0
        %9276 = vmatpush1.bf16.msra.mxu0 %v7944
        %9277 = vmatprep.subr.bf16.mxu0 0
        %9278 = vmatpush1.bf16.msra.mxu0 %v7960
        %9279 = vmatprep.subr.bf16.mxu0 0
        %9280 = vmatpush1.bf16.msra.mxu0 %v7976
        %9281 = vmatprep.subr.bf16.mxu0 0
        %9282 = vmatpush1.bf16.msra.mxu0 %v7992
        %9283 = vmatprep.subr.bf16.mxu0 0
        %9284 = vmatpush1.bf16.msra.mxu0 %v8008
        %9285 = vmatprep.subr.bf16.mxu0 0
        %9286 = vmatpush1.bf16.msra.mxu0 %v8024
        %9287 = vmatprep.subr.bf16.mxu0 0
        %9288 = vmatpush1.bf16.msra.mxu0 %v8040
        %9289 = vmatprep.subr.bf16.mxu0 0
        %9290 = vmatpush1.bf16.msra.mxu0 %v8056
        %9291 = vmatprep.subr.bf16.mxu0 0
        %9292 = vmatpush1.bf16.msra.mxu0 0
        %9293 = vmatprep.subr.bf16.mxu0 0
        %9294 = vmatpush1.bf16.msra.mxu0 0
        %9295 = vmatprep.subr.bf16.mxu0 0
        %9296 = vmatpush1.bf16.msra.mxu0 0
        %9297 = vmatprep.subr.bf16.mxu0 0
        %9298 = vmatpush1.bf16.msra.mxu0 0
        %9299 = vmatprep.subr.bf16.mxu0 0
        %9300 = vmatpush1.bf16.msra.mxu0 0
        %9301 = vmatprep.subr.bf16.mxu0 0
        %9302 = vmatpush1.bf16.msra.mxu0 0
        %9303 = vmatprep.subr.bf16.mxu0 0
        %9304 = vmatpush1.bf16.msra.mxu0 0
        %9305 = vmatprep.subr.bf16.mxu0 0
        %9306 = vmatpush1.bf16.msra.mxu0 0
        %9307 = vmatprep.mubr.bf16.mxu0 0
        %9308 = vmatmul.mubr.bf16.gmra.mrb[0].mxu0 %v9243
        %v9309 = vpop.f32.mrb[0].mxu0
        %v9310 = vadd.f32 0.0, %v9309
        %v9311 = vpop.f32.mrb[0].mxu0
        %v9312 = vpop.f32.mrb[0].mxu0
        %v9313 = vadd.f32 0.0, %v9312
        %v9314 = vpop.f32.mrb[0].mxu0
        %9315 = vmatprep.mubr.bf16.mxu0 0
        %9316 = vmatmul.mubr.bf16.gmra.mrb[0].mxu0 %v9244
        %v9317 = vpop.f32.mrb[0].mxu0
        %v9318 = vadd.f32 0.0, %v9317
        %v9319 = vpop.f32.mrb[0].mxu0
        %v9320 = vpop.f32.mrb[0].mxu0
        %v9321 = vadd.f32 0.0, %v9320
        %v9322 = vpop.f32.mrb[0].mxu0
        %9323 = vmatprep.mubr.bf16.mxu0 0
        %9324 = vmatmul.mubr.bf16.gmra.mrb[0].mxu0 %v9245
        %v9325 = vpop.f32.mrb[0].mxu0
        %v9326 = vadd.f32 0.0, %v9325
        %v9327 = vpop.f32.mrb[0].mxu0
        %v9328 = vpop.f32.mrb[0].mxu0
        %v9329 = vadd.f32 0.0, %v9328
        %v9330 = vpop.f32.mrb[0].mxu0
        %9331 = vmatprep.mubr.bf16.mxu0 0
        %9332 = vmatmul.mubr.bf16.gmra.mrb[0].mxu0 %v9246
        %v9333 = vpop.f32.mrb[0].mxu0
        %v9334 = vadd.f32 0.0, %v9333
        %v9335 = vpop.f32.mrb[0].mxu0
        %v9336 = vpop.f32.mrb[0].mxu0
        %v9337 = vadd.f32 0.0, %v9336
        %v9338 = vpop.f32.mrb[0].mxu0
        %9339 = vmatprep.mubr.bf16.mxu0 0
        %9340 = vmatmul.mubr.bf16.gmra.mrb[0].mxu0 %v9247
        %v9341 = vpop.f32.mrb[0].mxu0
        %v9342 = vadd.f32 0.0, %v9341
        %v9343 = vpop.f32.mrb[0].mxu0
        %v9344 = vpop.f32.mrb[0].mxu0
        %v9345 = vadd.f32 0.0, %v9344
        %v9346 = vpop.f32.mrb[0].mxu0
        %9347 = vmatprep.mubr.bf16.mxu0 0
        %9348 = vmatmul.mubr.bf16.gmra.mrb[0].mxu0 %v9248
        %v9349 = vpop.f32.mrb[0].mxu0
        %v9350 = vadd.f32 0.0, %v9349
        %v9351 = vpop.f32.mrb[0].mxu0
        %v9352 = vpop.f32.mrb[0].mxu0
        %v9353 = vadd.f32 0.0, %v9352
        %v9354 = vpop.f32.mrb[0].mxu0
        %9355 = vmatprep.mubr.bf16.mxu0 0
        %9356 = vmatmul.mubr.bf16.gmra.mrb[0].mxu0 %v9249
        %v9357 = vpop.f32.mrb[0].mxu0
        %v9358 = vadd.f32 0.0, %v9357
        %v9359 = vpop.f32.mrb[0].mxu0
        %v9360 = vpop.f32.mrb[0].mxu0
        %v9361 = vadd.f32 0.0, %v9360
        %v9362 = vpop.f32.mrb[0].mxu0
        %9363 = vmatprep.mubr.bf16.mxu0 0
        %9364 = vmatmul.mubr.bf16.gmra.mrb[0].mxu0 %v9250
        %v9365 = vpop.f32.mrb[0].mxu0
        %v9366 = vadd.f32 0.0, %v9365
        %v9367 = vpop.f32.mrb[0].mxu0
        %v9368 = vpop.f32.mrb[0].mxu0
        %v9369 = vadd.f32 0.0, %v9368
        %v9370 = vpop.f32.mrb[0].mxu0
        %9371 = vdwg.mxu0
        %9372 = vmatprep.subr.bf16.mxu0 0
        %9373 = vmatpush1.bf16.msra.mxu0 %v7948
        %9374 = vmatprep.subr.bf16.mxu0 0
        %9375 = vmatpush1.bf16.msra.mxu0 %v7964
        %9376 = vmatprep.subr.bf16.mxu0 0
        %9377 = vmatpush1.bf16.msra.mxu0 %v7980
        %9378 = vmatprep.subr.bf16.mxu0 0
        %9379 = vmatpush1.bf16.msra.mxu0 %v7996
        %9380 = vmatprep.subr.bf16.mxu0 0
        %9381 = vmatpush1.bf16.msra.mxu0 %v8012
        %9382 = vmatprep.subr.bf16.mxu0 0
        %9383 = vmatpush1.bf16.msra.mxu0 %v8028
        %9384 = vmatprep.subr.bf16.mxu0 0
        %9385 = vmatpush1.bf16.msra.mxu0 %v8044
        %9386 = vmatprep.subr.bf16.mxu0 0
        %9387 = vmatpush1.bf16.msra.mxu0 %v8060
        %9388 = vmatprep.subr.bf16.mxu0 0
        %9389 = vmatpush1.bf16.msra.mxu0 0
        %9390 = vmatprep.subr.bf16.mxu0 0
        %9391 = vmatpush1.bf16.msra.mxu0 0
        %9392 = vmatprep.subr.bf16.mxu0 0
        %9393 = vmatpush1.bf16.msra.mxu0 0
        %9394 = vmatprep.subr.bf16.mxu0 0
        %9395 = vmatpush1.bf16.msra.mxu0 0
        %9396 = vmatprep.subr.bf16.mxu0 0
        %9397 = vmatpush1.bf16.msra.mxu0 0
        %9398 = vmatprep.subr.bf16.mxu0 0
        %9399 = vmatpush1.bf16.msra.mxu0 0
        %9400 = vmatprep.subr.bf16.mxu0 0
        %9401 = vmatpush1.bf16.msra.mxu0 0
        %9402 = vmatprep.subr.bf16.mxu0 0
        %9403 = vmatpush1.bf16.msra.mxu0 0
        %9404 = vmatprep.mubr.bf16.mxu0 0
        %9405 = vmatmul.mubr.bf16.gmra.mrb[0].mxu0 %v9251
        %v9406 = vpop.f32.mrb[0].mxu0
        %v9407 = vadd.f32 0.0, %v9406
        %v9408 = vpop.f32.mrb[0].mxu0
        %v9409 = vpop.f32.mrb[0].mxu0
        %v9410 = vadd.f32 0.0, %v9409
        %v9411 = vpop.f32.mrb[0].mxu0
        %9412 = vmatprep.mubr.bf16.mxu0 0
        %9413 = vmatmul.mubr.bf16.gmra.mrb[0].mxu0 %v9252
        %v9414 = vpop.f32.mrb[0].mxu0
        %v9415 = vadd.f32 0.0, %v9414
        %v9416 = vpop.f32.mrb[0].mxu0
        %v9417 = vpop.f32.mrb[0].mxu0
        %v9418 = vadd.f32 0.0, %v9417
        %v9419 = vpop.f32.mrb[0].mxu0
        %9420 = vmatprep.mubr.bf16.mxu0 0
        %9421 = vmatmul.mubr.bf16.gmra.mrb[0].mxu0 %v9253
        %v9422 = vpop.f32.mrb[0].mxu0
        %v9423 = vadd.f32 0.0, %v9422
        %v9424 = vpop.f32.mrb[0].mxu0
        %v9425 = vpop.f32.mrb[0].mxu0
        %v9426 = vadd.f32 0.0, %v9425
        %v9427 = vpop.f32.mrb[0].mxu0
        %9428 = vmatprep.mubr.bf16.mxu0 0
        %9429 = vmatmul.mubr.bf16.gmra.mrb[0].mxu0 %v9254
        %v9430 = vpop.f32.mrb[0].mxu0
        %v9431 = vadd.f32 0.0, %v9430
        %v9432 = vpop.f32.mrb[0].mxu0
        %v9433 = vpop.f32.mrb[0].mxu0
        %v9434 = vadd.f32 0.0, %v9433
        %v9435 = vpop.f32.mrb[0].mxu0
        %9436 = vmatprep.mubr.bf16.mxu0 0
        %9437 = vmatmul.mubr.bf16.gmra.mrb[0].mxu0 %v9255
        %v9438 = vpop.f32.mrb[0].mxu0
        %v9439 = vadd.f32 0.0, %v9438
        %v9440 = vpop.f32.mrb[0].mxu0
        %v9441 = vpop.f32.mrb[0].mxu0
        %v9442 = vadd.f32 0.0, %v9441
        %v9443 = vpop.f32.mrb[0].mxu0
        %9444 = vmatprep.mubr.bf16.mxu0 0
        %9445 = vmatmul.mubr.bf16.gmra.mrb[0].mxu0 %v9256
        %v9446 = vpop.f32.mrb[0].mxu0
        %v9447 = vadd.f32 0.0, %v9446
        %v9448 = vpop.f32.mrb[0].mxu0
        %v9449 = vpop.f32.mrb[0].mxu0
        %v9450 = vadd.f32 0.0, %v9449
        %v9451 = vpop.f32.mrb[0].mxu0
        %9452 = vmatprep.mubr.bf16.mxu0 0
        %9453 = vmatmul.mubr.bf16.gmra.mrb[0].mxu0 %v9257
        %v9454 = vpop.f32.mrb[0].mxu0
        %v9455 = vadd.f32 0.0, %v9454
        %v9456 = vpop.f32.mrb[0].mxu0
        %v9457 = vpop.f32.mrb[0].mxu0
        %v9458 = vadd.f32 0.0, %v9457
        %v9459 = vpop.f32.mrb[0].mxu0
        %9460 = vmatprep.mubr.bf16.mxu0 0
        %9461 = vmatmul.mubr.bf16.gmra.mrb[0].mxu0 %v9258
        %v9462 = vpop.f32.mrb[0].mxu0
        %v9463 = vadd.f32 0.0, %v9462
        %v9464 = vpop.f32.mrb[0].mxu0
        %v9465 = vpop.f32.mrb[0].mxu0
        %v9466 = vadd.f32 0.0, %v9465
        %v9467 = vpop.f32.mrb[0].mxu0
        %9468 = vdwg.mxu0
        %9469 = vmatprep.subr.bf16.mxu0 0
        %9470 = vmatpush1.bf16.msra.mxu0 %v7952
        %9471 = vmatprep.subr.bf16.mxu0 0
        %9472 = vmatpush1.bf16.msra.mxu0 %v7968
        %9473 = vmatprep.subr.bf16.mxu0 0
        %9474 = vmatpush1.bf16.msra.mxu0 %v7984
        %9475 = vmatprep.subr.bf16.mxu0 0
        %9476 = vmatpush1.bf16.msra.mxu0 %v8000
        %9477 = vmatprep.subr.bf16.mxu0 0
        %9478 = vmatpush1.bf16.msra.mxu0 %v8016
        %9479 = vmatprep.subr.bf16.mxu0 0
        %9480 = vmatpush1.bf16.msra.mxu0 %v8032
        %9481 = vmatprep.subr.bf16.mxu0 0
        %9482 = vmatpush1.bf16.msra.mxu0 %v8048
        %9483 = vmatprep.subr.bf16.mxu0 0
        %9484 = vmatpush1.bf16.msra.mxu0 %v8064
        %9485 = vmatprep.subr.bf16.mxu0 0
        %9486 = vmatpush1.bf16.msra.mxu0 0
        %9487 = vmatprep.subr.bf16.mxu0 0
        %9488 = vmatpush1.bf16.msra.mxu0 0
        %9489 = vmatprep.subr.bf16.mxu0 0
        %9490 = vmatpush1.bf16.msra.mxu0 0
        %9491 = vmatprep.subr.bf16.mxu0 0
        %9492 = vmatpush1.bf16.msra.mxu0 0
        %9493 = vmatprep.subr.bf16.mxu0 0
        %9494 = vmatpush1.bf16.msra.mxu0 0
        %9495 = vmatprep.subr.bf16.mxu0 0
        %9496 = vmatpush1.bf16.msra.mxu0 0
        %9497 = vmatprep.subr.bf16.mxu0 0
        %9498 = vmatpush1.bf16.msra.mxu0 0
        %9499 = vmatprep.subr.bf16.mxu0 0
        %9500 = vmatpush1.bf16.msra.mxu0 0
        %9501 = vmatprep.mubr.bf16.mxu0 0
        %9502 = vmatmul.mubr.bf16.gmra.mrb[0].mxu0 %v9259
        %v9503 = vpop.f32.mrb[0].mxu0
        %v9504 = vadd.f32 0.0, %v9503
        %v9505 = vpop.f32.mrb[0].mxu0
        %v9506 = vpop.f32.mrb[0].mxu0
        %v9507 = vadd.f32 0.0, %v9506
        %v9508 = vpop.f32.mrb[0].mxu0
        %9509 = vmatprep.mubr.bf16.mxu0 0
        %9510 = vmatmul.mubr.bf16.gmra.mrb[0].mxu0 %v9260
        %v9511 = vpop.f32.mrb[0].mxu0
        %v9512 = vadd.f32 0.0, %v9511
        %v9513 = vpop.f32.mrb[0].mxu0
        %v9514 = vpop.f32.mrb[0].mxu0
        %v9515 = vadd.f32 0.0, %v9514
        %v9516 = vpop.f32.mrb[0].mxu0
        %9517 = vmatprep.mubr.bf16.mxu0 0
        %9518 = vmatmul.mubr.bf16.gmra.mrb[0].mxu0 %v9261
        %v9519 = vpop.f32.mrb[0].mxu0
        %v9520 = vadd.f32 0.0, %v9519
        %v9521 = vpop.f32.mrb[0].mxu0
        %v9522 = vpop.f32.mrb[0].mxu0
        %v9523 = vadd.f32 0.0, %v9522
        %v9524 = vpop.f32.mrb[0].mxu0
        %9525 = vmatprep.mubr.bf16.mxu0 0
        %9526 = vmatmul.mubr.bf16.gmra.mrb[0].mxu0 %v9262
        %v9527 = vpop.f32.mrb[0].mxu0
        %v9528 = vadd.f32 0.0, %v9527
        %v9529 = vpop.f32.mrb[0].mxu0
        %v9530 = vpop.f32.mrb[0].mxu0
        %v9531 = vadd.f32 0.0, %v9530
        %v9532 = vpop.f32.mrb[0].mxu0
        %9533 = vmatprep.mubr.bf16.mxu0 0
        %9534 = vmatmul.mubr.bf16.gmra.mrb[0].mxu0 %v9263
        %v9535 = vpop.f32.mrb[0].mxu0
        %v9536 = vadd.f32 0.0, %v9535
        %v9537 = vpop.f32.mrb[0].mxu0
        %v9538 = vpop.f32.mrb[0].mxu0
        %v9539 = vadd.f32 0.0, %v9538
        %v9540 = vpop.f32.mrb[0].mxu0
        %9541 = vmatprep.mubr.bf16.mxu0 0
        %9542 = vmatmul.mubr.bf16.gmra.mrb[0].mxu0 %v9264
        %v9543 = vpop.f32.mrb[0].mxu0
        %v9544 = vadd.f32 0.0, %v9543
        %v9545 = vpop.f32.mrb[0].mxu0
        %v9546 = vpop.f32.mrb[0].mxu0
        %v9547 = vadd.f32 0.0, %v9546
        %v9548 = vpop.f32.mrb[0].mxu0
        %9549 = vmatprep.mubr.bf16.mxu0 0
        %9550 = vmatmul.mubr.bf16.gmra.mrb[0].mxu0 %v9265
        %v9551 = vpop.f32.mrb[0].mxu0
        %v9552 = vadd.f32 0.0, %v9551
        %v9553 = vpop.f32.mrb[0].mxu0
        %v9554 = vpop.f32.mrb[0].mxu0
        %v9555 = vadd.f32 0.0, %v9554
        %v9556 = vpop.f32.mrb[0].mxu0
        %9557 = vmatprep.mubr.bf16.mxu0 0
        %9558 = vmatmul.mubr.bf16.gmra.mrb[0].mxu0 %v9266
        %v9559 = vpop.f32.mrb[0].mxu0
        %v9560 = vadd.f32 0.0, %v9559
        %v9561 = vpop.f32.mrb[0].mxu0
        %v9562 = vpop.f32.mrb[0].mxu0
        %v9563 = vadd.f32 0.0, %v9562
        %v9564 = vpop.f32.mrb[0].mxu0
        %9565 = vdwg.mxu0
        %9566 = vmatprep.subr.bf16.mxu0 0
        %9567 = vmatpush1.bf16.msra.mxu0 %v7956
        %9568 = vmatprep.subr.bf16.mxu0 0
        %9569 = vmatpush1.bf16.msra.mxu0 %v7972
        %9570 = vmatprep.subr.bf16.mxu0 0
        %9571 = vmatpush1.bf16.msra.mxu0 %v7988
        %9572 = vmatprep.subr.bf16.mxu0 0
        %9573 = vmatpush1.bf16.msra.mxu0 %v8004
        %9574 = vmatprep.subr.bf16.mxu0 0
        %9575 = vmatpush1.bf16.msra.mxu0 %v8020
        %9576 = vmatprep.subr.bf16.mxu0 0
        %9577 = vmatpush1.bf16.msra.mxu0 %v8036
        %9578 = vmatprep.subr.bf16.mxu0 0
        %9579 = vmatpush1.bf16.msra.mxu0 %v8052
        %9580 = vmatprep.subr.bf16.mxu0 0
        %9581 = vmatpush1.bf16.msra.mxu0 %v8068
        %9582 = vmatprep.subr.bf16.mxu0 0
        %9583 = vmatpush1.bf16.msra.mxu0 0
        %9584 = vmatprep.subr.bf16.mxu0 0
        %9585 = vmatpush1.bf16.msra.mxu0 0
        %9586 = vmatprep.subr.bf16.mxu0 0
        %9587 = vmatpush1.bf16.msra.mxu0 0
        %9588 = vmatprep.subr.bf16.mxu0 0
        %9589 = vmatpush1.bf16.msra.mxu0 0
        %9590 = vmatprep.subr.bf16.mxu0 0
        %9591 = vmatpush1.bf16.msra.mxu0 0
        %9592 = vmatprep.subr.bf16.mxu0 0
        %9593 = vmatpush1.bf16.msra.mxu0 0
        %9594 = vmatprep.subr.bf16.mxu0 0
        %9595 = vmatpush1.bf16.msra.mxu0 0
        %9596 = vmatprep.subr.bf16.mxu0 0
        %9597 = vmatpush1.bf16.msra.mxu0 0
        %9598 = vmatprep.mubr.bf16.mxu0 0
        %9599 = vmatmul.mubr.bf16.gmra.mrb[0].mxu0 %v9267
        %v9600 = vpop.f32.mrb[0].mxu0
        %v9601 = vadd.f32 0.0, %v9600
        %v9602 = vpop.f32.mrb[0].mxu0
        %v9603 = vpop.f32.mrb[0].mxu0
        %v9604 = vadd.f32 0.0, %v9603
        %v9605 = vpop.f32.mrb[0].mxu0
        %9606 = vmatprep.mubr.bf16.mxu0 0
        %9607 = vmatmul.mubr.bf16.gmra.mrb[0].mxu0 %v9268
        %v9608 = vpop.f32.mrb[0].mxu0
        %v9609 = vadd.f32 0.0, %v9608
        %v9610 = vpop.f32.mrb[0].mxu0
        %v9611 = vpop.f32.mrb[0].mxu0
        %v9612 = vadd.f32 0.0, %v9611
        %v9613 = vpop.f32.mrb[0].mxu0
        %9614 = vmatprep.mubr.bf16.mxu0 0
        %9615 = vmatmul.mubr.bf16.gmra.mrb[0].mxu0 %v9269
        %v9616 = vpop.f32.mrb[0].mxu0
        %v9617 = vadd.f32 0.0, %v9616
        %v9618 = vpop.f32.mrb[0].mxu0
        %v9619 = vpop.f32.mrb[0].mxu0
        %v9620 = vadd.f32 0.0, %v9619
        %v9621 = vpop.f32.mrb[0].mxu0
        %9622 = vmatprep.mubr.bf16.mxu0 0
        %9623 = vmatmul.mubr.bf16.gmra.mrb[0].mxu0 %v9270
        %v9624 = vpop.f32.mrb[0].mxu0
        %v9625 = vadd.f32 0.0, %v9624
        %v9626 = vpop.f32.mrb[0].mxu0
        %v9627 = vpop.f32.mrb[0].mxu0
        %v9628 = vadd.f32 0.0, %v9627
        %v9629 = vpop.f32.mrb[0].mxu0
        %9630 = vmatprep.mubr.bf16.mxu0 0
        %9631 = vmatmul.mubr.bf16.gmra.mrb[0].mxu0 %v9271
        %v9632 = vpop.f32.mrb[0].mxu0
        %v9633 = vadd.f32 0.0, %v9632
        %v9634 = vpop.f32.mrb[0].mxu0
        %v9635 = vpop.f32.mrb[0].mxu0
        %v9636 = vadd.f32 0.0, %v9635
        %v9637 = vpop.f32.mrb[0].mxu0
        %9638 = vmatprep.mubr.bf16.mxu0 0
        %9639 = vmatmul.mubr.bf16.gmra.mrb[0].mxu0 %v9272
        %v9640 = vpop.f32.mrb[0].mxu0
        %v9641 = vadd.f32 0.0, %v9640
        %v9642 = vpop.f32.mrb[0].mxu0
        %v9643 = vpop.f32.mrb[0].mxu0
        %v9644 = vadd.f32 0.0, %v9643
        %v9645 = vpop.f32.mrb[0].mxu0
        %9646 = vmatprep.mubr.bf16.mxu0 0
        %9647 = vmatmul.mubr.bf16.gmra.mrb[0].mxu0 %v9273
        %v9648 = vpop.f32.mrb[0].mxu0
        %v9649 = vadd.f32 0.0, %v9648
        %v9650 = vpop.f32.mrb[0].mxu0
        %v9651 = vpop.f32.mrb[0].mxu0
        %v9652 = vadd.f32 0.0, %v9651
        %v9653 = vpop.f32.mrb[0].mxu0
        %9654 = vmatprep.mubr.bf16.mxu0 0
        %9655 = vmatmul.mubr.bf16.gmra.mrb[0].mxu0 %v9274
        %v9656 = vpop.f32.mrb[0].mxu0
        %v9657 = vadd.f32 0.0, %v9656
        %v9658 = vpop.f32.mrb[0].mxu0
        %v9659 = vpop.f32.mrb[0].mxu0
        %v9660 = vadd.f32 0.0, %v9659
        %v9661 = vpop.f32.mrb[0].mxu0
        %9662 = vdwg.mxu0
        %v9663 = vcombine.low %v9310, %v9504
        %v9664 = vcombine.high %v9310, %v9504
        %v9666 = vunpack.c.l.s4 1983009808
        %v9667 = vunpack.c.0.s8 %v9666
        %v9668 = vlaneseq
        %v9669 = vshrl.u32 %v9668, 7
        %v9670 = vsub.s32 %v9667, %v9669
        %v9671 = vrot.slane %v9663, %v9670
        %v9673 = vunpack.c.l.s4 1983009808
        %v9674 = vunpack.c.0.s8 %v9673
        %v9675 = vlaneseq
        %v9676 = vshrl.u32 %v9675, 7
        %v9677 = vsub.s32 %v9674, %v9676
        %v9678 = vrot.slane %v9664, %v9677
        %v9679 = vcombine.low %v9407, %v9601
        %v9680 = vcombine.high %v9407, %v9601
        %v9682 = vunpack.c.l.s4 1983009808
        %v9683 = vunpack.c.0.s8 %v9682
        %v9684 = vlaneseq
        %v9685 = vshrl.u32 %v9684, 7
        %v9686 = vsub.s32 %v9683, %v9685
        %v9687 = vrot.slane %v9679, %v9686
        %v9689 = vunpack.c.l.s4 1983009808
        %v9690 = vunpack.c.0.s8 %v9689
        %v9691 = vlaneseq
        %v9692 = vshrl.u32 %v9691, 7
        %v9693 = vsub.s32 %v9690, %v9692
        %v9694 = vrot.slane %v9680, %v9693
        %v9695 = vcombine.low %v9671, %v9687
        %v9696 = vcombine.high %v9671, %v9687
        %v9698 = vunpack.c.l.s4 1934713408
        %v9699 = vunpack.c.0.s8 %v9698
        %v9700 = vlaneseq
        %v9701 = vshrl.u32 %v9700, 7
        %v9702 = vsub.s32 %v9699, %v9701
        %v9703 = vrot.slane %v9695, %v9702
        %v9705 = vunpack.c.l.s4 1934713408
        %v9706 = vunpack.c.0.s8 %v9705
        %v9707 = vlaneseq
        %v9708 = vshrl.u32 %v9707, 7
        %v9709 = vsub.s32 %v9706, %v9708
        %v9710 = vrot.slane %v9696, %v9709
        %v9711 = vcombine.low %v9678, %v9694
        %v9712 = vcombine.high %v9678, %v9694
        %v9714 = vunpack.c.l.s4 1934713408
        %v9715 = vunpack.c.0.s8 %v9714
        %v9716 = vlaneseq
        %v9717 = vshrl.u32 %v9716, 7
        %v9718 = vsub.s32 %v9715, %v9717
        %v9719 = vrot.slane %v9711, %v9718
        %v9721 = vunpack.c.l.s4 1934713408
        %v9722 = vunpack.c.0.s8 %v9721
        %v9723 = vlaneseq
        %v9724 = vshrl.u32 %v9723, 7
        %v9725 = vsub.s32 %v9722, %v9724
        %v9726 = vrot.slane %v9712, %v9725
        %v9727 = vcombine.high %v9703, 0.0
        %v9728 = vcombine.high %v9710, 0.0
        %v9729 = vcombine.high %v9719, 0.0
        %v9730 = vcombine.high %v9726, 0.0
        %v9731 = vcombine.low %v9313, %v9507
        %v9732 = vcombine.high %v9313, %v9507
        %v9734 = vunpack.c.l.s4 1983009808
        %v9735 = vunpack.c.0.s8 %v9734
        %v9736 = vlaneseq
        %v9737 = vshrl.u32 %v9736, 7
        %v9738 = vsub.s32 %v9735, %v9737
        %v9739 = vrot.slane %v9731, %v9738
        %v9741 = vunpack.c.l.s4 1983009808
        %v9742 = vunpack.c.0.s8 %v9741
        %v9743 = vlaneseq
        %v9744 = vshrl.u32 %v9743, 7
        %v9745 = vsub.s32 %v9742, %v9744
        %v9746 = vrot.slane %v9732, %v9745
        %v9747 = vcombine.low %v9410, %v9604
        %v9748 = vcombine.high %v9410, %v9604
        %v9750 = vunpack.c.l.s4 1983009808
        %v9751 = vunpack.c.0.s8 %v9750
        %v9752 = vlaneseq
        %v9753 = vshrl.u32 %v9752, 7
        %v9754 = vsub.s32 %v9751, %v9753
        %v9755 = vrot.slane %v9747, %v9754
        %v9757 = vunpack.c.l.s4 1983009808
        %v9758 = vunpack.c.0.s8 %v9757
        %v9759 = vlaneseq
        %v9760 = vshrl.u32 %v9759, 7
        %v9761 = vsub.s32 %v9758, %v9760
        %v9762 = vrot.slane %v9748, %v9761
        %v9763 = vcombine.low %v9739, %v9755
        %v9764 = vcombine.high %v9739, %v9755
        %v9766 = vunpack.c.l.s4 1934713408
        %v9767 = vunpack.c.0.s8 %v9766
        %v9768 = vlaneseq
        %v9769 = vshrl.u32 %v9768, 7
        %v9770 = vsub.s32 %v9767, %v9769
        %v9771 = vrot.slane %v9763, %v9770
        %v9773 = vunpack.c.l.s4 1934713408
        %v9774 = vunpack.c.0.s8 %v9773
        %v9775 = vlaneseq
        %v9776 = vshrl.u32 %v9775, 7
        %v9777 = vsub.s32 %v9774, %v9776
        %v9778 = vrot.slane %v9764, %v9777
        %v9779 = vcombine.low %v9746, %v9762
        %v9780 = vcombine.high %v9746, %v9762
        %v9782 = vunpack.c.l.s4 1934713408
        %v9783 = vunpack.c.0.s8 %v9782
        %v9784 = vlaneseq
        %v9785 = vshrl.u32 %v9784, 7
        %v9786 = vsub.s32 %v9783, %v9785
        %v9787 = vrot.slane %v9779, %v9786
        %v9789 = vunpack.c.l.s4 1934713408
        %v9790 = vunpack.c.0.s8 %v9789
        %v9791 = vlaneseq
        %v9792 = vshrl.u32 %v9791, 7
        %v9793 = vsub.s32 %v9790, %v9792
        %v9794 = vrot.slane %v9780, %v9793
        %v9795 = vcombine.high %v9771, 0.0
        %v9796 = vcombine.high %v9778, 0.0
        %v9797 = vcombine.high %v9787, 0.0
        %v9798 = vcombine.high %v9794, 0.0
        %v9799 = vcombine.low %v9318, %v9512
        %v9800 = vcombine.high %v9318, %v9512
        %v9802 = vunpack.c.l.s4 1983009808
        %v9803 = vunpack.c.0.s8 %v9802
        %v9804 = vlaneseq
        %v9805 = vshrl.u32 %v9804, 7
        %v9806 = vsub.s32 %v9803, %v9805
        %v9807 = vrot.slane %v9799, %v9806
        %v9809 = vunpack.c.l.s4 1983009808
        %v9810 = vunpack.c.0.s8 %v9809
        %v9811 = vlaneseq
        %v9812 = vshrl.u32 %v9811, 7
        %v9813 = vsub.s32 %v9810, %v9812
        %v9814 = vrot.slane %v9800, %v9813
        %v9815 = vcombine.low %v9415, %v9609
        %v9816 = vcombine.high %v9415, %v9609
        %v9818 = vunpack.c.l.s4 1983009808
        %v9819 = vunpack.c.0.s8 %v9818
        %v9820 = vlaneseq
        %v9821 = vshrl.u32 %v9820, 7
        %v9822 = vsub.s32 %v9819, %v9821
        %v9823 = vrot.slane %v9815, %v9822
        %v9825 = vunpack.c.l.s4 1983009808
        %v9826 = vunpack.c.0.s8 %v9825
        %v9827 = vlaneseq
        %v9828 = vshrl.u32 %v9827, 7
        %v9829 = vsub.s32 %v9826, %v9828
        %v9830 = vrot.slane %v9816, %v9829
        %v9831 = vcombine.low %v9807, %v9823
        %v9832 = vcombine.high %v9807, %v9823
        %v9834 = vunpack.c.l.s4 1934713408
        %v9835 = vunpack.c.0.s8 %v9834
        %v9836 = vlaneseq
        %v9837 = vshrl.u32 %v9836, 7
        %v9838 = vsub.s32 %v9835, %v9837
        %v9839 = vrot.slane %v9831, %v9838
        %v9841 = vunpack.c.l.s4 1934713408
        %v9842 = vunpack.c.0.s8 %v9841
        %v9843 = vlaneseq
        %v9844 = vshrl.u32 %v9843, 7
        %v9845 = vsub.s32 %v9842, %v9844
        %v9846 = vrot.slane %v9832, %v9845
        %v9847 = vcombine.low %v9814, %v9830
        %v9848 = vcombine.high %v9814, %v9830
        %v9850 = vunpack.c.l.s4 1934713408
        %v9851 = vunpack.c.0.s8 %v9850
        %v9852 = vlaneseq
        %v9853 = vshrl.u32 %v9852, 7
        %v9854 = vsub.s32 %v9851, %v9853
        %v9855 = vrot.slane %v9847, %v9854
        %v9857 = vunpack.c.l.s4 1934713408
        %v9858 = vunpack.c.0.s8 %v9857
        %v9859 = vlaneseq
        %v9860 = vshrl.u32 %v9859, 7
        %v9861 = vsub.s32 %v9858, %v9860
        %v9862 = vrot.slane %v9848, %v9861
        %v9863 = vcombine.high %v9839, 0.0
        %v9864 = vcombine.high %v9846, 0.0
        %v9865 = vcombine.high %v9855, 0.0
        %v9866 = vcombine.high %v9862, 0.0
        %v9867 = vcombine.low %v9321, %v9515
        %v9868 = vcombine.high %v9321, %v9515
        %v9870 = vunpack.c.l.s4 1983009808
        %v9871 = vunpack.c.0.s8 %v9870
        %v9872 = vlaneseq
        %v9873 = vshrl.u32 %v9872, 7
        %v9874 = vsub.s32 %v9871, %v9873
        %v9875 = vrot.slane %v9867, %v9874
        %v9877 = vunpack.c.l.s4 1983009808
        %v9878 = vunpack.c.0.s8 %v9877
        %v9879 = vlaneseq
        %v9880 = vshrl.u32 %v9879, 7
        %v9881 = vsub.s32 %v9878, %v9880
        %v9882 = vrot.slane %v9868, %v9881
        %v9883 = vcombine.low %v9418, %v9612
        %v9884 = vcombine.high %v9418, %v9612
        %v9886 = vunpack.c.l.s4 1983009808
        %v9887 = vunpack.c.0.s8 %v9886
        %v9888 = vlaneseq
        %v9889 = vshrl.u32 %v9888, 7
        %v9890 = vsub.s32 %v9887, %v9889
        %v9891 = vrot.slane %v9883, %v9890
        %v9893 = vunpack.c.l.s4 1983009808
        %v9894 = vunpack.c.0.s8 %v9893
        %v9895 = vlaneseq
        %v9896 = vshrl.u32 %v9895, 7
        %v9897 = vsub.s32 %v9894, %v9896
        %v9898 = vrot.slane %v9884, %v9897
        %v9899 = vcombine.low %v9875, %v9891
        %v9900 = vcombine.high %v9875, %v9891
        %v9902 = vunpack.c.l.s4 1934713408
        %v9903 = vunpack.c.0.s8 %v9902
        %v9904 = vlaneseq
        %v9905 = vshrl.u32 %v9904, 7
        %v9906 = vsub.s32 %v9903, %v9905
        %v9907 = vrot.slane %v9899, %v9906
        %v9909 = vunpack.c.l.s4 1934713408
        %v9910 = vunpack.c.0.s8 %v9909
        %v9911 = vlaneseq
        %v9912 = vshrl.u32 %v9911, 7
        %v9913 = vsub.s32 %v9910, %v9912
        %v9914 = vrot.slane %v9900, %v9913
        %v9915 = vcombine.low %v9882, %v9898
        %v9916 = vcombine.high %v9882, %v9898
        %v9918 = vunpack.c.l.s4 1934713408
        %v9919 = vunpack.c.0.s8 %v9918
        %v9920 = vlaneseq
        %v9921 = vshrl.u32 %v9920, 7
        %v9922 = vsub.s32 %v9919, %v9921
        %v9923 = vrot.slane %v9915, %v9922
        %v9925 = vunpack.c.l.s4 1934713408
        %v9926 = vunpack.c.0.s8 %v9925
        %v9927 = vlaneseq
        %v9928 = vshrl.u32 %v9927, 7
        %v9929 = vsub.s32 %v9926, %v9928
        %v9930 = vrot.slane %v9916, %v9929
        %v9931 = vcombine.high %v9907, 0.0
        %v9932 = vcombine.high %v9914, 0.0
        %v9933 = vcombine.high %v9923, 0.0
        %v9934 = vcombine.high %v9930, 0.0
        %v9935 = vcombine.low %v9326, %v9520
        %v9936 = vcombine.high %v9326, %v9520
        %v9938 = vunpack.c.l.s4 1983009808
        %v9939 = vunpack.c.0.s8 %v9938
        %v9940 = vlaneseq
        %v9941 = vshrl.u32 %v9940, 7
        %v9942 = vsub.s32 %v9939, %v9941
        %v9943 = vrot.slane %v9935, %v9942
        %v9945 = vunpack.c.l.s4 1983009808
        %v9946 = vunpack.c.0.s8 %v9945
        %v9947 = vlaneseq
        %v9948 = vshrl.u32 %v9947, 7
        %v9949 = vsub.s32 %v9946, %v9948
        %v9950 = vrot.slane %v9936, %v9949
        %v9951 = vcombine.low %v9423, %v9617
        %v9952 = vcombine.high %v9423, %v9617
        %v9954 = vunpack.c.l.s4 1983009808
        %v9955 = vunpack.c.0.s8 %v9954
        %v9956 = vlaneseq
        %v9957 = vshrl.u32 %v9956, 7
        %v9958 = vsub.s32 %v9955, %v9957
        %v9959 = vrot.slane %v9951, %v9958
        %v9961 = vunpack.c.l.s4 1983009808
        %v9962 = vunpack.c.0.s8 %v9961
        %v9963 = vlaneseq
        %v9964 = vshrl.u32 %v9963, 7
        %v9965 = vsub.s32 %v9962, %v9964
        %v9966 = vrot.slane %v9952, %v9965
        %v9967 = vcombine.low %v9943, %v9959
        %v9968 = vcombine.high %v9943, %v9959
        %v9970 = vunpack.c.l.s4 1934713408
        %v9971 = vunpack.c.0.s8 %v9970
        %v9972 = vlaneseq
        %v9973 = vshrl.u32 %v9972, 7
        %v9974 = vsub.s32 %v9971, %v9973
        %v9975 = vrot.slane %v9967, %v9974
        %v9977 = vunpack.c.l.s4 1934713408
        %v9978 = vunpack.c.0.s8 %v9977
        %v9979 = vlaneseq
        %v9980 = vshrl.u32 %v9979, 7
        %v9981 = vsub.s32 %v9978, %v9980
        %v9982 = vrot.slane %v9968, %v9981
        %v9983 = vcombine.low %v9950, %v9966
        %v9984 = vcombine.high %v9950, %v9966
        %v9986 = vunpack.c.l.s4 1934713408
        %v9987 = vunpack.c.0.s8 %v9986
        %v9988 = vlaneseq
        %v9989 = vshrl.u32 %v9988, 7
        %v9990 = vsub.s32 %v9987, %v9989
        %v9991 = vrot.slane %v9983, %v9990
        %v9993 = vunpack.c.l.s4 1934713408
        %v9994 = vunpack.c.0.s8 %v9993
        %v9995 = vlaneseq
        %v9996 = vshrl.u32 %v9995, 7
        %v9997 = vsub.s32 %v9994, %v9996
        %v9998 = vrot.slane %v9984, %v9997
        %v9999 = vcombine.high %v9975, 0.0
        %v10000 = vcombine.high %v9982, 0.0
        %v10001 = vcombine.high %v9991, 0.0
        %v10002 = vcombine.high %v9998, 0.0
        %v10003 = vcombine.low %v9329, %v9523
        %v10004 = vcombine.high %v9329, %v9523
        %v10006 = vunpack.c.l.s4 1983009808
        %v10007 = vunpack.c.0.s8 %v10006
        %v10008 = vlaneseq
        %v10009 = vshrl.u32 %v10008, 7
        %v10010 = vsub.s32 %v10007, %v10009
        %v10011 = vrot.slane %v10003, %v10010
        %v10013 = vunpack.c.l.s4 1983009808
        %v10014 = vunpack.c.0.s8 %v10013
        %v10015 = vlaneseq
        %v10016 = vshrl.u32 %v10015, 7
        %v10017 = vsub.s32 %v10014, %v10016
        %v10018 = vrot.slane %v10004, %v10017
        %v10019 = vcombine.low %v9426, %v9620
        %v10020 = vcombine.high %v9426, %v9620
        %v10022 = vunpack.c.l.s4 1983009808
        %v10023 = vunpack.c.0.s8 %v10022
        %v10024 = vlaneseq
        %v10025 = vshrl.u32 %v10024, 7
        %v10026 = vsub.s32 %v10023, %v10025
        %v10027 = vrot.slane %v10019, %v10026
        %v10029 = vunpack.c.l.s4 1983009808
        %v10030 = vunpack.c.0.s8 %v10029
        %v10031 = vlaneseq
        %v10032 = vshrl.u32 %v10031, 7
        %v10033 = vsub.s32 %v10030, %v10032
        %v10034 = vrot.slane %v10020, %v10033
        %v10035 = vcombine.low %v10011, %v10027
        %v10036 = vcombine.high %v10011, %v10027
        %v10038 = vunpack.c.l.s4 1934713408
        %v10039 = vunpack.c.0.s8 %v10038
        %v10040 = vlaneseq
        %v10041 = vshrl.u32 %v10040, 7
        %v10042 = vsub.s32 %v10039, %v10041
        %v10043 = vrot.slane %v10035, %v10042
        %v10045 = vunpack.c.l.s4 1934713408
        %v10046 = vunpack.c.0.s8 %v10045
        %v10047 = vlaneseq
        %v10048 = vshrl.u32 %v10047, 7
        %v10049 = vsub.s32 %v10046, %v10048
        %v10050 = vrot.slane %v10036, %v10049
        %v10051 = vcombine.low %v10018, %v10034
        %v10052 = vcombine.high %v10018, %v10034
        %v10054 = vunpack.c.l.s4 1934713408
        %v10055 = vunpack.c.0.s8 %v10054
        %v10056 = vlaneseq
        %v10057 = vshrl.u32 %v10056, 7
        %v10058 = vsub.s32 %v10055, %v10057
        %v10059 = vrot.slane %v10051, %v10058
        %v10061 = vunpack.c.l.s4 1934713408
        %v10062 = vunpack.c.0.s8 %v10061
        %v10063 = vlaneseq
        %v10064 = vshrl.u32 %v10063, 7
        %v10065 = vsub.s32 %v10062, %v10064
        %v10066 = vrot.slane %v10052, %v10065
        %v10067 = vcombine.high %v10043, 0.0
        %v10068 = vcombine.high %v10050, 0.0
        %v10069 = vcombine.high %v10059, 0.0
        %v10070 = vcombine.high %v10066, 0.0
        %v10071 = vcombine.low %v9334, %v9528
        %v10072 = vcombine.high %v9334, %v9528
        %v10074 = vunpack.c.l.s4 1983009808
        %v10075 = vunpack.c.0.s8 %v10074
        %v10076 = vlaneseq
        %v10077 = vshrl.u32 %v10076, 7
        %v10078 = vsub.s32 %v10075, %v10077
        %v10079 = vrot.slane %v10071, %v10078
        %v10081 = vunpack.c.l.s4 1983009808
        %v10082 = vunpack.c.0.s8 %v10081
        %v10083 = vlaneseq
        %v10084 = vshrl.u32 %v10083, 7
        %v10085 = vsub.s32 %v10082, %v10084
        %v10086 = vrot.slane %v10072, %v10085
        %v10087 = vcombine.low %v9431, %v9625
        %v10088 = vcombine.high %v9431, %v9625
        %v10090 = vunpack.c.l.s4 1983009808
        %v10091 = vunpack.c.0.s8 %v10090
        %v10092 = vlaneseq
        %v10093 = vshrl.u32 %v10092, 7
        %v10094 = vsub.s32 %v10091, %v10093
        %v10095 = vrot.slane %v10087, %v10094
        %v10097 = vunpack.c.l.s4 1983009808
        %v10098 = vunpack.c.0.s8 %v10097
        %v10099 = vlaneseq
        %v10100 = vshrl.u32 %v10099, 7
        %v10101 = vsub.s32 %v10098, %v10100
        %v10102 = vrot.slane %v10088, %v10101
        %v10103 = vcombine.low %v10079, %v10095
        %v10104 = vcombine.high %v10079, %v10095
        %v10106 = vunpack.c.l.s4 1934713408
        %v10107 = vunpack.c.0.s8 %v10106
        %v10108 = vlaneseq
        %v10109 = vshrl.u32 %v10108, 7
        %v10110 = vsub.s32 %v10107, %v10109
        %v10111 = vrot.slane %v10103, %v10110
        %v10113 = vunpack.c.l.s4 1934713408
        %v10114 = vunpack.c.0.s8 %v10113
        %v10115 = vlaneseq
        %v10116 = vshrl.u32 %v10115, 7
        %v10117 = vsub.s32 %v10114, %v10116
        %v10118 = vrot.slane %v10104, %v10117
        %v10119 = vcombine.low %v10086, %v10102
        %v10120 = vcombine.high %v10086, %v10102
        %v10122 = vunpack.c.l.s4 1934713408
        %v10123 = vunpack.c.0.s8 %v10122
        %v10124 = vlaneseq
        %v10125 = vshrl.u32 %v10124, 7
        %v10126 = vsub.s32 %v10123, %v10125
        %v10127 = vrot.slane %v10119, %v10126
        %v10129 = vunpack.c.l.s4 1934713408
        %v10130 = vunpack.c.0.s8 %v10129
        %v10131 = vlaneseq
        %v10132 = vshrl.u32 %v10131, 7
        %v10133 = vsub.s32 %v10130, %v10132
        %v10134 = vrot.slane %v10120, %v10133
        %v10135 = vcombine.high %v10111, 0.0
        %v10136 = vcombine.high %v10118, 0.0
        %v10137 = vcombine.high %v10127, 0.0
        %v10138 = vcombine.high %v10134, 0.0
        %v10139 = vcombine.low %v9337, %v9531
        %v10140 = vcombine.high %v9337, %v9531
        %v10142 = vunpack.c.l.s4 1983009808
        %v10143 = vunpack.c.0.s8 %v10142
        %v10144 = vlaneseq
        %v10145 = vshrl.u32 %v10144, 7
        %v10146 = vsub.s32 %v10143, %v10145
        %v10147 = vrot.slane %v10139, %v10146
        %v10149 = vunpack.c.l.s4 1983009808
        %v10150 = vunpack.c.0.s8 %v10149
        %v10151 = vlaneseq
        %v10152 = vshrl.u32 %v10151, 7
        %v10153 = vsub.s32 %v10150, %v10152
        %v10154 = vrot.slane %v10140, %v10153
        %v10155 = vcombine.low %v9434, %v9628
        %v10156 = vcombine.high %v9434, %v9628
        %v10158 = vunpack.c.l.s4 1983009808
        %v10159 = vunpack.c.0.s8 %v10158
        %v10160 = vlaneseq
        %v10161 = vshrl.u32 %v10160, 7
        %v10162 = vsub.s32 %v10159, %v10161
        %v10163 = vrot.slane %v10155, %v10162
        %v10165 = vunpack.c.l.s4 1983009808
        %v10166 = vunpack.c.0.s8 %v10165
        %v10167 = vlaneseq
        %v10168 = vshrl.u32 %v10167, 7
        %v10169 = vsub.s32 %v10166, %v10168
        %v10170 = vrot.slane %v10156, %v10169
        %v10171 = vcombine.low %v10147, %v10163
        %v10172 = vcombine.high %v10147, %v10163
        %v10174 = vunpack.c.l.s4 1934713408
        %v10175 = vunpack.c.0.s8 %v10174
        %v10176 = vlaneseq
        %v10177 = vshrl.u32 %v10176, 7
        %v10178 = vsub.s32 %v10175, %v10177
        %v10179 = vrot.slane %v10171, %v10178
        %v10181 = vunpack.c.l.s4 1934713408
        %v10182 = vunpack.c.0.s8 %v10181
        %v10183 = vlaneseq
        %v10184 = vshrl.u32 %v10183, 7
        %v10185 = vsub.s32 %v10182, %v10184
        %v10186 = vrot.slane %v10172, %v10185
        %v10187 = vcombine.low %v10154, %v10170
        %v10188 = vcombine.high %v10154, %v10170
        %v10190 = vunpack.c.l.s4 1934713408
        %v10191 = vunpack.c.0.s8 %v10190
        %v10192 = vlaneseq
        %v10193 = vshrl.u32 %v10192, 7
        %v10194 = vsub.s32 %v10191, %v10193
        %v10195 = vrot.slane %v10187, %v10194
        %v10197 = vunpack.c.l.s4 1934713408
        %v10198 = vunpack.c.0.s8 %v10197
        %v10199 = vlaneseq
        %v10200 = vshrl.u32 %v10199, 7
        %v10201 = vsub.s32 %v10198, %v10200
        %v10202 = vrot.slane %v10188, %v10201
        %v10203 = vcombine.high %v10179, 0.0
        %v10204 = vcombine.high %v10186, 0.0
        %v10205 = vcombine.high %v10195, 0.0
        %v10206 = vcombine.high %v10202, 0.0
        %v10207 = vcombine.low %v9342, %v9536
        %v10208 = vcombine.high %v9342, %v9536
        %v10210 = vunpack.c.l.s4 1983009808
        %v10211 = vunpack.c.0.s8 %v10210
        %v10212 = vlaneseq
        %v10213 = vshrl.u32 %v10212, 7
        %v10214 = vsub.s32 %v10211, %v10213
        %v10215 = vrot.slane %v10207, %v10214
        %v10217 = vunpack.c.l.s4 1983009808
        %v10218 = vunpack.c.0.s8 %v10217
        %v10219 = vlaneseq
        %v10220 = vshrl.u32 %v10219, 7
        %v10221 = vsub.s32 %v10218, %v10220
        %v10222 = vrot.slane %v10208, %v10221
        %v10223 = vcombine.low %v9439, %v9633
        %v10224 = vcombine.high %v9439, %v9633
        %v10226 = vunpack.c.l.s4 1983009808
        %v10227 = vunpack.c.0.s8 %v10226
        %v10228 = vlaneseq
        %v10229 = vshrl.u32 %v10228, 7
        %v10230 = vsub.s32 %v10227, %v10229
        %v10231 = vrot.slane %v10223, %v10230
        %v10233 = vunpack.c.l.s4 1983009808
        %v10234 = vunpack.c.0.s8 %v10233
        %v10235 = vlaneseq
        %v10236 = vshrl.u32 %v10235, 7
        %v10237 = vsub.s32 %v10234, %v10236
        %v10238 = vrot.slane %v10224, %v10237
        %v10239 = vcombine.low %v10215, %v10231
        %v10240 = vcombine.high %v10215, %v10231
        %v10242 = vunpack.c.l.s4 1934713408
        %v10243 = vunpack.c.0.s8 %v10242
        %v10244 = vlaneseq
        %v10245 = vshrl.u32 %v10244, 7
        %v10246 = vsub.s32 %v10243, %v10245
        %v10247 = vrot.slane %v10239, %v10246
        %v10249 = vunpack.c.l.s4 1934713408
        %v10250 = vunpack.c.0.s8 %v10249
        %v10251 = vlaneseq
        %v10252 = vshrl.u32 %v10251, 7
        %v10253 = vsub.s32 %v10250, %v10252
        %v10254 = vrot.slane %v10240, %v10253
        %v10255 = vcombine.low %v10222, %v10238
        %v10256 = vcombine.high %v10222, %v10238
        %v10258 = vunpack.c.l.s4 1934713408
        %v10259 = vunpack.c.0.s8 %v10258
        %v10260 = vlaneseq
        %v10261 = vshrl.u32 %v10260, 7
        %v10262 = vsub.s32 %v10259, %v10261
        %v10263 = vrot.slane %v10255, %v10262
        %v10265 = vunpack.c.l.s4 1934713408
        %v10266 = vunpack.c.0.s8 %v10265
        %v10267 = vlaneseq
        %v10268 = vshrl.u32 %v10267, 7
        %v10269 = vsub.s32 %v10266, %v10268
        %v10270 = vrot.slane %v10256, %v10269
        %v10271 = vcombine.high %v10247, 0.0
        %v10272 = vcombine.high %v10254, 0.0
        %v10273 = vcombine.high %v10263, 0.0
        %v10274 = vcombine.high %v10270, 0.0
        %v10275 = vcombine.low %v9345, %v9539
        %v10276 = vcombine.high %v9345, %v9539
        %v10278 = vunpack.c.l.s4 1983009808
        %v10279 = vunpack.c.0.s8 %v10278
        %v10280 = vlaneseq
        %v10281 = vshrl.u32 %v10280, 7
        %v10282 = vsub.s32 %v10279, %v10281
        %v10283 = vrot.slane %v10275, %v10282
        %v10285 = vunpack.c.l.s4 1983009808
        %v10286 = vunpack.c.0.s8 %v10285
        %v10287 = vlaneseq
        %v10288 = vshrl.u32 %v10287, 7
        %v10289 = vsub.s32 %v10286, %v10288
        %v10290 = vrot.slane %v10276, %v10289
        %v10291 = vcombine.low %v9442, %v9636
        %v10292 = vcombine.high %v9442, %v9636
        %v10294 = vunpack.c.l.s4 1983009808
        %v10295 = vunpack.c.0.s8 %v10294
        %v10296 = vlaneseq
        %v10297 = vshrl.u32 %v10296, 7
        %v10298 = vsub.s32 %v10295, %v10297
        %v10299 = vrot.slane %v10291, %v10298
        %v10301 = vunpack.c.l.s4 1983009808
        %v10302 = vunpack.c.0.s8 %v10301
        %v10303 = vlaneseq
        %v10304 = vshrl.u32 %v10303, 7
        %v10305 = vsub.s32 %v10302, %v10304
        %v10306 = vrot.slane %v10292, %v10305
        %v10307 = vcombine.low %v10283, %v10299
        %v10308 = vcombine.high %v10283, %v10299
        %v10310 = vunpack.c.l.s4 1934713408
        %v10311 = vunpack.c.0.s8 %v10310
        %v10312 = vlaneseq
        %v10313 = vshrl.u32 %v10312, 7
        %v10314 = vsub.s32 %v10311, %v10313
        %v10315 = vrot.slane %v10307, %v10314
        %v10317 = vunpack.c.l.s4 1934713408
        %v10318 = vunpack.c.0.s8 %v10317
        %v10319 = vlaneseq
        %v10320 = vshrl.u32 %v10319, 7
        %v10321 = vsub.s32 %v10318, %v10320
        %v10322 = vrot.slane %v10308, %v10321
        %v10323 = vcombine.low %v10290, %v10306
        %v10324 = vcombine.high %v10290, %v10306
        %v10326 = vunpack.c.l.s4 1934713408
        %v10327 = vunpack.c.0.s8 %v10326
        %v10328 = vlaneseq
        %v10329 = vshrl.u32 %v10328, 7
        %v10330 = vsub.s32 %v10327, %v10329
        %v10331 = vrot.slane %v10323, %v10330
        %v10333 = vunpack.c.l.s4 1934713408
        %v10334 = vunpack.c.0.s8 %v10333
        %v10335 = vlaneseq
        %v10336 = vshrl.u32 %v10335, 7
        %v10337 = vsub.s32 %v10334, %v10336
        %v10338 = vrot.slane %v10324, %v10337
        %v10339 = vcombine.high %v10315, 0.0
        %v10340 = vcombine.high %v10322, 0.0
        %v10341 = vcombine.high %v10331, 0.0
        %v10342 = vcombine.high %v10338, 0.0
        %v10343 = vcombine.low %v9350, %v9544
        %v10344 = vcombine.high %v9350, %v9544
        %v10346 = vunpack.c.l.s4 1983009808
        %v10347 = vunpack.c.0.s8 %v10346
        %v10348 = vlaneseq
        %v10349 = vshrl.u32 %v10348, 7
        %v10350 = vsub.s32 %v10347, %v10349
        %v10351 = vrot.slane %v10343, %v10350
        %v10353 = vunpack.c.l.s4 1983009808
        %v10354 = vunpack.c.0.s8 %v10353
        %v10355 = vlaneseq
        %v10356 = vshrl.u32 %v10355, 7
        %v10357 = vsub.s32 %v10354, %v10356
        %v10358 = vrot.slane %v10344, %v10357
        %v10359 = vcombine.low %v9447, %v9641
        %v10360 = vcombine.high %v9447, %v9641
        %v10362 = vunpack.c.l.s4 1983009808
        %v10363 = vunpack.c.0.s8 %v10362
        %v10364 = vlaneseq
        %v10365 = vshrl.u32 %v10364, 7
        %v10366 = vsub.s32 %v10363, %v10365
        %v10367 = vrot.slane %v10359, %v10366
        %v10369 = vunpack.c.l.s4 1983009808
        %v10370 = vunpack.c.0.s8 %v10369
        %v10371 = vlaneseq
        %v10372 = vshrl.u32 %v10371, 7
        %v10373 = vsub.s32 %v10370, %v10372
        %v10374 = vrot.slane %v10360, %v10373
        %v10375 = vcombine.low %v10351, %v10367
        %v10376 = vcombine.high %v10351, %v10367
        %v10378 = vunpack.c.l.s4 1934713408
        %v10379 = vunpack.c.0.s8 %v10378
        %v10380 = vlaneseq
        %v10381 = vshrl.u32 %v10380, 7
        %v10382 = vsub.s32 %v10379, %v10381
        %v10383 = vrot.slane %v10375, %v10382
        %v10385 = vunpack.c.l.s4 1934713408
        %v10386 = vunpack.c.0.s8 %v10385
        %v10387 = vlaneseq
        %v10388 = vshrl.u32 %v10387, 7
        %v10389 = vsub.s32 %v10386, %v10388
        %v10390 = vrot.slane %v10376, %v10389
        %v10391 = vcombine.low %v10358, %v10374
        %v10392 = vcombine.high %v10358, %v10374
        %v10394 = vunpack.c.l.s4 1934713408
        %v10395 = vunpack.c.0.s8 %v10394
        %v10396 = vlaneseq
        %v10397 = vshrl.u32 %v10396, 7
        %v10398 = vsub.s32 %v10395, %v10397
        %v10399 = vrot.slane %v10391, %v10398
        %v10401 = vunpack.c.l.s4 1934713408
        %v10402 = vunpack.c.0.s8 %v10401
        %v10403 = vlaneseq
        %v10404 = vshrl.u32 %v10403, 7
        %v10405 = vsub.s32 %v10402, %v10404
        %v10406 = vrot.slane %v10392, %v10405
        %v10407 = vcombine.high %v10383, 0.0
        %v10408 = vcombine.high %v10390, 0.0
        %v10409 = vcombine.high %v10399, 0.0
        %v10410 = vcombine.high %v10406, 0.0
        %v10411 = vcombine.low %v9353, %v9547
        %v10412 = vcombine.high %v9353, %v9547
        %v10414 = vunpack.c.l.s4 1983009808
        %v10415 = vunpack.c.0.s8 %v10414
        %v10416 = vlaneseq
        %v10417 = vshrl.u32 %v10416, 7
        %v10418 = vsub.s32 %v10415, %v10417
        %v10419 = vrot.slane %v10411, %v10418
        %v10421 = vunpack.c.l.s4 1983009808
        %v10422 = vunpack.c.0.s8 %v10421
        %v10423 = vlaneseq
        %v10424 = vshrl.u32 %v10423, 7
        %v10425 = vsub.s32 %v10422, %v10424
        %v10426 = vrot.slane %v10412, %v10425
        %v10427 = vcombine.low %v9450, %v9644
        %v10428 = vcombine.high %v9450, %v9644
        %v10430 = vunpack.c.l.s4 1983009808
        %v10431 = vunpack.c.0.s8 %v10430
        %v10432 = vlaneseq
        %v10433 = vshrl.u32 %v10432, 7
        %v10434 = vsub.s32 %v10431, %v10433
        %v10435 = vrot.slane %v10427, %v10434
        %v10437 = vunpack.c.l.s4 1983009808
        %v10438 = vunpack.c.0.s8 %v10437
        %v10439 = vlaneseq
        %v10440 = vshrl.u32 %v10439, 7
        %v10441 = vsub.s32 %v10438, %v10440
        %v10442 = vrot.slane %v10428, %v10441
        %v10443 = vcombine.low %v10419, %v10435
        %v10444 = vcombine.high %v10419, %v10435
        %v10446 = vunpack.c.l.s4 1934713408
        %v10447 = vunpack.c.0.s8 %v10446
        %v10448 = vlaneseq
        %v10449 = vshrl.u32 %v10448, 7
        %v10450 = vsub.s32 %v10447, %v10449
        %v10451 = vrot.slane %v10443, %v10450
        %v10453 = vunpack.c.l.s4 1934713408
        %v10454 = vunpack.c.0.s8 %v10453
        %v10455 = vlaneseq
        %v10456 = vshrl.u32 %v10455, 7
        %v10457 = vsub.s32 %v10454, %v10456
        %v10458 = vrot.slane %v10444, %v10457
        %v10459 = vcombine.low %v10426, %v10442
        %v10460 = vcombine.high %v10426, %v10442
        %v10462 = vunpack.c.l.s4 1934713408
        %v10463 = vunpack.c.0.s8 %v10462
        %v10464 = vlaneseq
        %v10465 = vshrl.u32 %v10464, 7
        %v10466 = vsub.s32 %v10463, %v10465
        %v10467 = vrot.slane %v10459, %v10466
        %v10469 = vunpack.c.l.s4 1934713408
        %v10470 = vunpack.c.0.s8 %v10469
        %v10471 = vlaneseq
        %v10472 = vshrl.u32 %v10471, 7
        %v10473 = vsub.s32 %v10470, %v10472
        %v10474 = vrot.slane %v10460, %v10473
        %v10475 = vcombine.high %v10451, 0.0
        %v10476 = vcombine.high %v10458, 0.0
        %v10477 = vcombine.high %v10467, 0.0
        %v10478 = vcombine.high %v10474, 0.0
        %v10479 = vcombine.low %v9358, %v9552
        %v10480 = vcombine.high %v9358, %v9552
        %v10482 = vunpack.c.l.s4 1983009808
        %v10483 = vunpack.c.0.s8 %v10482
        %v10484 = vlaneseq
        %v10485 = vshrl.u32 %v10484, 7
        %v10486 = vsub.s32 %v10483, %v10485
        %v10487 = vrot.slane %v10479, %v10486
        %v10489 = vunpack.c.l.s4 1983009808
        %v10490 = vunpack.c.0.s8 %v10489
        %v10491 = vlaneseq
        %v10492 = vshrl.u32 %v10491, 7
        %v10493 = vsub.s32 %v10490, %v10492
        %v10494 = vrot.slane %v10480, %v10493
        %v10495 = vcombine.low %v9455, %v9649
        %v10496 = vcombine.high %v9455, %v9649
        %v10498 = vunpack.c.l.s4 1983009808
        %v10499 = vunpack.c.0.s8 %v10498
        %v10500 = vlaneseq
        %v10501 = vshrl.u32 %v10500, 7
        %v10502 = vsub.s32 %v10499, %v10501
        %v10503 = vrot.slane %v10495, %v10502
        %v10505 = vunpack.c.l.s4 1983009808
        %v10506 = vunpack.c.0.s8 %v10505
        %v10507 = vlaneseq
        %v10508 = vshrl.u32 %v10507, 7
        %v10509 = vsub.s32 %v10506, %v10508
        %v10510 = vrot.slane %v10496, %v10509
        %v10511 = vcombine.low %v10487, %v10503
        %v10512 = vcombine.high %v10487, %v10503
        %v10514 = vunpack.c.l.s4 1934713408
        %v10515 = vunpack.c.0.s8 %v10514
        %v10516 = vlaneseq
        %v10517 = vshrl.u32 %v10516, 7
        %v10518 = vsub.s32 %v10515, %v10517
        %v10519 = vrot.slane %v10511, %v10518
        %v10521 = vunpack.c.l.s4 1934713408
        %v10522 = vunpack.c.0.s8 %v10521
        %v10523 = vlaneseq
        %v10524 = vshrl.u32 %v10523, 7
        %v10525 = vsub.s32 %v10522, %v10524
        %v10526 = vrot.slane %v10512, %v10525
        %v10527 = vcombine.low %v10494, %v10510
        %v10528 = vcombine.high %v10494, %v10510
        %v10530 = vunpack.c.l.s4 1934713408
        %v10531 = vunpack.c.0.s8 %v10530
        %v10532 = vlaneseq
        %v10533 = vshrl.u32 %v10532, 7
        %v10534 = vsub.s32 %v10531, %v10533
        %v10535 = vrot.slane %v10527, %v10534
        %v10537 = vunpack.c.l.s4 1934713408
        %v10538 = vunpack.c.0.s8 %v10537
        %v10539 = vlaneseq
        %v10540 = vshrl.u32 %v10539, 7
        %v10541 = vsub.s32 %v10538, %v10540
        %v10542 = vrot.slane %v10528, %v10541
        %v10543 = vcombine.high %v10519, 0.0
        %v10544 = vcombine.high %v10526, 0.0
        %v10545 = vcombine.high %v10535, 0.0
        %v10546 = vcombine.high %v10542, 0.0
        %v10547 = vcombine.low %v9361, %v9555
        %v10548 = vcombine.high %v9361, %v9555
        %v10550 = vunpack.c.l.s4 1983009808
        %v10551 = vunpack.c.0.s8 %v10550
        %v10552 = vlaneseq
        %v10553 = vshrl.u32 %v10552, 7
        %v10554 = vsub.s32 %v10551, %v10553
        %v10555 = vrot.slane %v10547, %v10554
        %v10557 = vunpack.c.l.s4 1983009808
        %v10558 = vunpack.c.0.s8 %v10557
        %v10559 = vlaneseq
        %v10560 = vshrl.u32 %v10559, 7
        %v10561 = vsub.s32 %v10558, %v10560
        %v10562 = vrot.slane %v10548, %v10561
        %v10563 = vcombine.low %v9458, %v9652
        %v10564 = vcombine.high %v9458, %v9652
        %v10566 = vunpack.c.l.s4 1983009808
        %v10567 = vunpack.c.0.s8 %v10566
        %v10568 = vlaneseq
        %v10569 = vshrl.u32 %v10568, 7
        %v10570 = vsub.s32 %v10567, %v10569
        %v10571 = vrot.slane %v10563, %v10570
        %v10573 = vunpack.c.l.s4 1983009808
        %v10574 = vunpack.c.0.s8 %v10573
        %v10575 = vlaneseq
        %v10576 = vshrl.u32 %v10575, 7
        %v10577 = vsub.s32 %v10574, %v10576
        %v10578 = vrot.slane %v10564, %v10577
        %v10579 = vcombine.low %v10555, %v10571
        %v10580 = vcombine.high %v10555, %v10571
        %v10582 = vunpack.c.l.s4 1934713408
        %v10583 = vunpack.c.0.s8 %v10582
        %v10584 = vlaneseq
        %v10585 = vshrl.u32 %v10584, 7
        %v10586 = vsub.s32 %v10583, %v10585
        %v10587 = vrot.slane %v10579, %v10586
        %v10589 = vunpack.c.l.s4 1934713408
        %v10590 = vunpack.c.0.s8 %v10589
        %v10591 = vlaneseq
        %v10592 = vshrl.u32 %v10591, 7
        %v10593 = vsub.s32 %v10590, %v10592
        %v10594 = vrot.slane %v10580, %v10593
        %v10595 = vcombine.low %v10562, %v10578
        %v10596 = vcombine.high %v10562, %v10578
        %v10598 = vunpack.c.l.s4 1934713408
        %v10599 = vunpack.c.0.s8 %v10598
        %v10600 = vlaneseq
        %v10601 = vshrl.u32 %v10600, 7
        %v10602 = vsub.s32 %v10599, %v10601
        %v10603 = vrot.slane %v10595, %v10602
        %v10605 = vunpack.c.l.s4 1934713408
        %v10606 = vunpack.c.0.s8 %v10605
        %v10607 = vlaneseq
        %v10608 = vshrl.u32 %v10607, 7
        %v10609 = vsub.s32 %v10606, %v10608
        %v10610 = vrot.slane %v10596, %v10609
        %v10611 = vcombine.high %v10587, 0.0
        %v10612 = vcombine.high %v10594, 0.0
        %v10613 = vcombine.high %v10603, 0.0
        %v10614 = vcombine.high %v10610, 0.0
        %v10615 = vcombine.low %v9366, %v9560
        %v10616 = vcombine.high %v9366, %v9560
        %v10618 = vunpack.c.l.s4 1983009808
        %v10619 = vunpack.c.0.s8 %v10618
        %v10620 = vlaneseq
        %v10621 = vshrl.u32 %v10620, 7
        %v10622 = vsub.s32 %v10619, %v10621
        %v10623 = vrot.slane %v10615, %v10622
        %v10625 = vunpack.c.l.s4 1983009808
        %v10626 = vunpack.c.0.s8 %v10625
        %v10627 = vlaneseq
        %v10628 = vshrl.u32 %v10627, 7
        %v10629 = vsub.s32 %v10626, %v10628
        %v10630 = vrot.slane %v10616, %v10629
        %v10631 = vcombine.low %v9463, %v9657
        %v10632 = vcombine.high %v9463, %v9657
        %v10634 = vunpack.c.l.s4 1983009808
        %v10635 = vunpack.c.0.s8 %v10634
        %v10636 = vlaneseq
        %v10637 = vshrl.u32 %v10636, 7
        %v10638 = vsub.s32 %v10635, %v10637
        %v10639 = vrot.slane %v10631, %v10638
        %v10641 = vunpack.c.l.s4 1983009808
        %v10642 = vunpack.c.0.s8 %v10641
        %v10643 = vlaneseq
        %v10644 = vshrl.u32 %v10643, 7
        %v10645 = vsub.s32 %v10642, %v10644
        %v10646 = vrot.slane %v10632, %v10645
        %v10647 = vcombine.low %v10623, %v10639
        %v10648 = vcombine.high %v10623, %v10639
        %v10650 = vunpack.c.l.s4 1934713408
        %v10651 = vunpack.c.0.s8 %v10650
        %v10652 = vlaneseq
        %v10653 = vshrl.u32 %v10652, 7
        %v10654 = vsub.s32 %v10651, %v10653
        %v10655 = vrot.slane %v10647, %v10654
        %v10657 = vunpack.c.l.s4 1934713408
        %v10658 = vunpack.c.0.s8 %v10657
        %v10659 = vlaneseq
        %v10660 = vshrl.u32 %v10659, 7
        %v10661 = vsub.s32 %v10658, %v10660
        %v10662 = vrot.slane %v10648, %v10661
        %v10663 = vcombine.low %v10630, %v10646
        %v10664 = vcombine.high %v10630, %v10646
        %v10666 = vunpack.c.l.s4 1934713408
        %v10667 = vunpack.c.0.s8 %v10666
        %v10668 = vlaneseq
        %v10669 = vshrl.u32 %v10668, 7
        %v10670 = vsub.s32 %v10667, %v10669
        %v10671 = vrot.slane %v10663, %v10670
        %v10673 = vunpack.c.l.s4 1934713408
        %v10674 = vunpack.c.0.s8 %v10673
        %v10675 = vlaneseq
        %v10676 = vshrl.u32 %v10675, 7
        %v10677 = vsub.s32 %v10674, %v10676
        %v10678 = vrot.slane %v10664, %v10677
        %v10679 = vcombine.high %v10655, 0.0
        %v10680 = vcombine.high %v10662, 0.0
        %v10681 = vcombine.high %v10671, 0.0
        %v10682 = vcombine.high %v10678, 0.0
        %v10683 = vcombine.low %v9369, %v9563
        %v10684 = vcombine.high %v9369, %v9563
        %v10686 = vunpack.c.l.s4 1983009808
        %v10687 = vunpack.c.0.s8 %v10686
        %v10688 = vlaneseq
        %v10689 = vshrl.u32 %v10688, 7
        %v10690 = vsub.s32 %v10687, %v10689
        %v10691 = vrot.slane %v10683, %v10690
        %v10693 = vunpack.c.l.s4 1983009808
        %v10694 = vunpack.c.0.s8 %v10693
        %v10695 = vlaneseq
        %v10696 = vshrl.u32 %v10695, 7
        %v10697 = vsub.s32 %v10694, %v10696
        %v10698 = vrot.slane %v10684, %v10697
        %v10699 = vcombine.low %v9466, %v9660
        %v10700 = vcombine.high %v9466, %v9660
        %v10702 = vunpack.c.l.s4 1983009808
        %v10703 = vunpack.c.0.s8 %v10702
        %v10704 = vlaneseq
        %v10705 = vshrl.u32 %v10704, 7
        %v10706 = vsub.s32 %v10703, %v10705
        %v10707 = vrot.slane %v10699, %v10706
        %v10709 = vunpack.c.l.s4 1983009808
        %v10710 = vunpack.c.0.s8 %v10709
        %v10711 = vlaneseq
        %v10712 = vshrl.u32 %v10711, 7
        %v10713 = vsub.s32 %v10710, %v10712
        %v10714 = vrot.slane %v10700, %v10713
        %v10715 = vcombine.low %v10691, %v10707
        %v10716 = vcombine.high %v10691, %v10707
        %v10718 = vunpack.c.l.s4 1934713408
        %v10719 = vunpack.c.0.s8 %v10718
        %v10720 = vlaneseq
        %v10721 = vshrl.u32 %v10720, 7
        %v10722 = vsub.s32 %v10719, %v10721
        %v10723 = vrot.slane %v10715, %v10722
        %v10725 = vunpack.c.l.s4 1934713408
        %v10726 = vunpack.c.0.s8 %v10725
        %v10727 = vlaneseq
        %v10728 = vshrl.u32 %v10727, 7
        %v10729 = vsub.s32 %v10726, %v10728
        %v10730 = vrot.slane %v10716, %v10729
        %v10731 = vcombine.low %v10698, %v10714
        %v10732 = vcombine.high %v10698, %v10714
        %v10734 = vunpack.c.l.s4 1934713408
        %v10735 = vunpack.c.0.s8 %v10734
        %v10736 = vlaneseq
        %v10737 = vshrl.u32 %v10736, 7
        %v10738 = vsub.s32 %v10735, %v10737
        %v10739 = vrot.slane %v10731, %v10738
        %v10741 = vunpack.c.l.s4 1934713408
        %v10742 = vunpack.c.0.s8 %v10741
        %v10743 = vlaneseq
        %v10744 = vshrl.u32 %v10743, 7
        %v10745 = vsub.s32 %v10742, %v10744
        %v10746 = vrot.slane %v10732, %v10745
        %v10747 = vcombine.high %v10723, 0.0
        %v10748 = vcombine.high %v10730, 0.0
        %v10749 = vcombine.high %v10739, 0.0
        %v10750 = vcombine.high %v10746, 0.0
        %v10751 = vcombine.low %v9703, %v9710
        %v10753 = vunpack.c.l.s4 1983009808
        %v10754 = vunpack.c.0.s8 %v10753
        %v10755 = vlaneseq
        %v10756 = vshrl.u32 %v10755, 7
        %v10757 = vsub.s32 %v10754, %v10756
        %v10758 = vrot.slane %v10751, %v10757
        %v10759 = vcombine.low %v9727, %v9728
        %v10761 = vunpack.c.l.s4 1983009808
        %v10762 = vunpack.c.0.s8 %v10761
        %v10763 = vlaneseq
        %v10764 = vshrl.u32 %v10763, 7
        %v10765 = vsub.s32 %v10762, %v10764
        %v10766 = vrot.slane %v10759, %v10765
        %v10767 = vcombine.low %v9719, %v9726
        %v10769 = vunpack.c.l.s4 1983009808
        %v10770 = vunpack.c.0.s8 %v10769
        %v10771 = vlaneseq
        %v10772 = vshrl.u32 %v10771, 7
        %v10773 = vsub.s32 %v10770, %v10772
        %v10774 = vrot.slane %v10767, %v10773
        %v10775 = vcombine.low %v9729, %v9730
        %v10777 = vunpack.c.l.s4 1983009808
        %v10778 = vunpack.c.0.s8 %v10777
        %v10779 = vlaneseq
        %v10780 = vshrl.u32 %v10779, 7
        %v10781 = vsub.s32 %v10778, %v10780
        %v10782 = vrot.slane %v10775, %v10781
        %v10783 = vcombine.low %v10758, %v10766
        %v10784 = vcombine.high %v10758, %v10766
        %v10786 = vunpack.c.l.s4 1934713408
        %v10787 = vunpack.c.0.s8 %v10786
        %v10788 = vlaneseq
        %v10789 = vshrl.u32 %v10788, 7
        %v10790 = vsub.s32 %v10787, %v10789
        %v10791 = vrot.slane %v10783, %v10790
        %v10793 = vunpack.c.l.s4 1934713408
        %v10794 = vunpack.c.0.s8 %v10793
        %v10795 = vlaneseq
        %v10796 = vshrl.u32 %v10795, 7
        %v10797 = vsub.s32 %v10794, %v10796
        %v10798 = vrot.slane %v10784, %v10797
        %v10799 = vcombine.low %v10774, %v10782
        %v10800 = vcombine.high %v10774, %v10782
        %v10802 = vunpack.c.l.s4 1934713408
        %v10803 = vunpack.c.0.s8 %v10802
        %v10804 = vlaneseq
        %v10805 = vshrl.u32 %v10804, 7
        %v10806 = vsub.s32 %v10803, %v10805
        %v10807 = vrot.slane %v10799, %v10806
        %v10809 = vunpack.c.l.s4 1934713408
        %v10810 = vunpack.c.0.s8 %v10809
        %v10811 = vlaneseq
        %v10812 = vshrl.u32 %v10811, 7
        %v10813 = vsub.s32 %v10810, %v10812
        %v10814 = vrot.slane %v10800, %v10813
        %v10815 = vcombine.low %v10791, %v10807
        %v10816 = vcombine.high %v10791, %v10807
        %v10817 = vcombine.low %v10798, %v10814
        %v10818 = vcombine.high %v10798, %v10814
        %v10819 = vcombine.low %v9771, %v9778
        %v10821 = vunpack.c.l.s4 1983009808
        %v10822 = vunpack.c.0.s8 %v10821
        %v10823 = vlaneseq
        %v10824 = vshrl.u32 %v10823, 7
        %v10825 = vsub.s32 %v10822, %v10824
        %v10826 = vrot.slane %v10819, %v10825
        %v10827 = vcombine.low %v9795, %v9796
        %v10829 = vunpack.c.l.s4 1983009808
        %v10830 = vunpack.c.0.s8 %v10829
        %v10831 = vlaneseq
        %v10832 = vshrl.u32 %v10831, 7
        %v10833 = vsub.s32 %v10830, %v10832
        %v10834 = vrot.slane %v10827, %v10833
        %v10835 = vcombine.low %v9787, %v9794
        %v10837 = vunpack.c.l.s4 1983009808
        %v10838 = vunpack.c.0.s8 %v10837
        %v10839 = vlaneseq
        %v10840 = vshrl.u32 %v10839, 7
        %v10841 = vsub.s32 %v10838, %v10840
        %v10842 = vrot.slane %v10835, %v10841
        %v10843 = vcombine.low %v9797, %v9798
        %v10845 = vunpack.c.l.s4 1983009808
        %v10846 = vunpack.c.0.s8 %v10845
        %v10847 = vlaneseq
        %v10848 = vshrl.u32 %v10847, 7
        %v10849 = vsub.s32 %v10846, %v10848
        %v10850 = vrot.slane %v10843, %v10849
        %v10851 = vcombine.low %v10826, %v10834
        %v10852 = vcombine.high %v10826, %v10834
        %v10854 = vunpack.c.l.s4 1934713408
        %v10855 = vunpack.c.0.s8 %v10854
        %v10856 = vlaneseq
        %v10857 = vshrl.u32 %v10856, 7
        %v10858 = vsub.s32 %v10855, %v10857
        %v10859 = vrot.slane %v10851, %v10858
        %v10861 = vunpack.c.l.s4 1934713408
        %v10862 = vunpack.c.0.s8 %v10861
        %v10863 = vlaneseq
        %v10864 = vshrl.u32 %v10863, 7
        %v10865 = vsub.s32 %v10862, %v10864
        %v10866 = vrot.slane %v10852, %v10865
        %v10867 = vcombine.low %v10842, %v10850
        %v10868 = vcombine.high %v10842, %v10850
        %v10870 = vunpack.c.l.s4 1934713408
        %v10871 = vunpack.c.0.s8 %v10870
        %v10872 = vlaneseq
        %v10873 = vshrl.u32 %v10872, 7
        %v10874 = vsub.s32 %v10871, %v10873
        %v10875 = vrot.slane %v10867, %v10874
        %v10877 = vunpack.c.l.s4 1934713408
        %v10878 = vunpack.c.0.s8 %v10877
        %v10879 = vlaneseq
        %v10880 = vshrl.u32 %v10879, 7
        %v10881 = vsub.s32 %v10878, %v10880
        %v10882 = vrot.slane %v10868, %v10881
        %v10883 = vcombine.low %v10859, %v10875
        %v10884 = vcombine.high %v10859, %v10875
        %v10885 = vcombine.low %v10866, %v10882
        %v10886 = vcombine.high %v10866, %v10882
        %v10887 = vcombine.low %v9839, %v9846
        %v10889 = vunpack.c.l.s4 1983009808
        %v10890 = vunpack.c.0.s8 %v10889
        %v10891 = vlaneseq
        %v10892 = vshrl.u32 %v10891, 7
        %v10893 = vsub.s32 %v10890, %v10892
        %v10894 = vrot.slane %v10887, %v10893
        %v10895 = vcombine.low %v9863, %v9864
        %v10897 = vunpack.c.l.s4 1983009808
        %v10898 = vunpack.c.0.s8 %v10897
        %v10899 = vlaneseq
        %v10900 = vshrl.u32 %v10899, 7
        %v10901 = vsub.s32 %v10898, %v10900
        %v10902 = vrot.slane %v10895, %v10901
        %v10903 = vcombine.low %v9855, %v9862
        %v10905 = vunpack.c.l.s4 1983009808
        %v10906 = vunpack.c.0.s8 %v10905
        %v10907 = vlaneseq
        %v10908 = vshrl.u32 %v10907, 7
        %v10909 = vsub.s32 %v10906, %v10908
        %v10910 = vrot.slane %v10903, %v10909
        %v10911 = vcombine.low %v9865, %v9866
        %v10913 = vunpack.c.l.s4 1983009808
        %v10914 = vunpack.c.0.s8 %v10913
        %v10915 = vlaneseq
        %v10916 = vshrl.u32 %v10915, 7
        %v10917 = vsub.s32 %v10914, %v10916
        %v10918 = vrot.slane %v10911, %v10917
        %v10919 = vcombine.low %v10894, %v10902
        %v10920 = vcombine.high %v10894, %v10902
        %v10922 = vunpack.c.l.s4 1934713408
        %v10923 = vunpack.c.0.s8 %v10922
        %v10924 = vlaneseq
        %v10925 = vshrl.u32 %v10924, 7
        %v10926 = vsub.s32 %v10923, %v10925
        %v10927 = vrot.slane %v10919, %v10926
        %v10929 = vunpack.c.l.s4 1934713408
        %v10930 = vunpack.c.0.s8 %v10929
        %v10931 = vlaneseq
        %v10932 = vshrl.u32 %v10931, 7
        %v10933 = vsub.s32 %v10930, %v10932
        %v10934 = vrot.slane %v10920, %v10933
        %v10935 = vcombine.low %v10910, %v10918
        %v10936 = vcombine.high %v10910, %v10918
        %v10938 = vunpack.c.l.s4 1934713408
        %v10939 = vunpack.c.0.s8 %v10938
        %v10940 = vlaneseq
        %v10941 = vshrl.u32 %v10940, 7
        %v10942 = vsub.s32 %v10939, %v10941
        %v10943 = vrot.slane %v10935, %v10942
        %v10945 = vunpack.c.l.s4 1934713408
        %v10946 = vunpack.c.0.s8 %v10945
        %v10947 = vlaneseq
        %v10948 = vshrl.u32 %v10947, 7
        %v10949 = vsub.s32 %v10946, %v10948
        %v10950 = vrot.slane %v10936, %v10949
        %v10951 = vcombine.low %v10927, %v10943
        %v10952 = vcombine.high %v10927, %v10943
        %v10953 = vcombine.low %v10934, %v10950
        %v10954 = vcombine.high %v10934, %v10950
        %v10955 = vcombine.low %v9907, %v9914
        %v10957 = vunpack.c.l.s4 1983009808
        %v10958 = vunpack.c.0.s8 %v10957
        %v10959 = vlaneseq
        %v10960 = vshrl.u32 %v10959, 7
        %v10961 = vsub.s32 %v10958, %v10960
        %v10962 = vrot.slane %v10955, %v10961
        %v10963 = vcombine.low %v9931, %v9932
        %v10965 = vunpack.c.l.s4 1983009808
        %v10966 = vunpack.c.0.s8 %v10965
        %v10967 = vlaneseq
        %v10968 = vshrl.u32 %v10967, 7
        %v10969 = vsub.s32 %v10966, %v10968
        %v10970 = vrot.slane %v10963, %v10969
        %v10971 = vcombine.low %v9923, %v9930
        %v10973 = vunpack.c.l.s4 1983009808
        %v10974 = vunpack.c.0.s8 %v10973
        %v10975 = vlaneseq
        %v10976 = vshrl.u32 %v10975, 7
        %v10977 = vsub.s32 %v10974, %v10976
        %v10978 = vrot.slane %v10971, %v10977
        %v10979 = vcombine.low %v9933, %v9934
        %v10981 = vunpack.c.l.s4 1983009808
        %v10982 = vunpack.c.0.s8 %v10981
        %v10983 = vlaneseq
        %v10984 = vshrl.u32 %v10983, 7
        %v10985 = vsub.s32 %v10982, %v10984
        %v10986 = vrot.slane %v10979, %v10985
        %v10987 = vcombine.low %v10962, %v10970
        %v10988 = vcombine.high %v10962, %v10970
        %v10990 = vunpack.c.l.s4 1934713408
        %v10991 = vunpack.c.0.s8 %v10990
        %v10992 = vlaneseq
        %v10993 = vshrl.u32 %v10992, 7
        %v10994 = vsub.s32 %v10991, %v10993
        %v10995 = vrot.slane %v10987, %v10994
        %v10997 = vunpack.c.l.s4 1934713408
        %v10998 = vunpack.c.0.s8 %v10997
        %v10999 = vlaneseq
        %v11000 = vshrl.u32 %v10999, 7
        %v11001 = vsub.s32 %v10998, %v11000
        %v11002 = vrot.slane %v10988, %v11001
        %v11003 = vcombine.low %v10978, %v10986
        %v11004 = vcombine.high %v10978, %v10986
        %v11006 = vunpack.c.l.s4 1934713408
        %v11007 = vunpack.c.0.s8 %v11006
        %v11008 = vlaneseq
        %v11009 = vshrl.u32 %v11008, 7
        %v11010 = vsub.s32 %v11007, %v11009
        %v11011 = vrot.slane %v11003, %v11010
        %v11013 = vunpack.c.l.s4 1934713408
        %v11014 = vunpack.c.0.s8 %v11013
        %v11015 = vlaneseq
        %v11016 = vshrl.u32 %v11015, 7
        %v11017 = vsub.s32 %v11014, %v11016
        %v11018 = vrot.slane %v11004, %v11017
        %v11019 = vcombine.low %v10995, %v11011
        %v11020 = vcombine.high %v10995, %v11011
        %v11021 = vcombine.low %v11002, %v11018
        %v11022 = vcombine.high %v11002, %v11018
        %v11023 = vcombine.low %v9975, %v9982
        %v11025 = vunpack.c.l.s4 1983009808
        %v11026 = vunpack.c.0.s8 %v11025
        %v11027 = vlaneseq
        %v11028 = vshrl.u32 %v11027, 7
        %v11029 = vsub.s32 %v11026, %v11028
        %v11030 = vrot.slane %v11023, %v11029
        %v11031 = vcombine.low %v9999, %v10000
        %v11033 = vunpack.c.l.s4 1983009808
        %v11034 = vunpack.c.0.s8 %v11033
        %v11035 = vlaneseq
        %v11036 = vshrl.u32 %v11035, 7
        %v11037 = vsub.s32 %v11034, %v11036
        %v11038 = vrot.slane %v11031, %v11037
        %v11039 = vcombine.low %v9991, %v9998
        %v11041 = vunpack.c.l.s4 1983009808
        %v11042 = vunpack.c.0.s8 %v11041
        %v11043 = vlaneseq
        %v11044 = vshrl.u32 %v11043, 7
        %v11045 = vsub.s32 %v11042, %v11044
        %v11046 = vrot.slane %v11039, %v11045
        %v11047 = vcombine.low %v10001, %v10002
        %v11049 = vunpack.c.l.s4 1983009808
        %v11050 = vunpack.c.0.s8 %v11049
        %v11051 = vlaneseq
        %v11052 = vshrl.u32 %v11051, 7
        %v11053 = vsub.s32 %v11050, %v11052
        %v11054 = vrot.slane %v11047, %v11053
        %v11055 = vcombine.low %v11030, %v11038
        %v11056 = vcombine.high %v11030, %v11038
        %v11058 = vunpack.c.l.s4 1934713408
        %v11059 = vunpack.c.0.s8 %v11058
        %v11060 = vlaneseq
        %v11061 = vshrl.u32 %v11060, 7
        %v11062 = vsub.s32 %v11059, %v11061
        %v11063 = vrot.slane %v11055, %v11062
        %v11065 = vunpack.c.l.s4 1934713408
        %v11066 = vunpack.c.0.s8 %v11065
        %v11067 = vlaneseq
        %v11068 = vshrl.u32 %v11067, 7
        %v11069 = vsub.s32 %v11066, %v11068
        %v11070 = vrot.slane %v11056, %v11069
        %v11071 = vcombine.low %v11046, %v11054
        %v11072 = vcombine.high %v11046, %v11054
        %v11074 = vunpack.c.l.s4 1934713408
        %v11075 = vunpack.c.0.s8 %v11074
        %v11076 = vlaneseq
        %v11077 = vshrl.u32 %v11076, 7
        %v11078 = vsub.s32 %v11075, %v11077
        %v11079 = vrot.slane %v11071, %v11078
        %v11081 = vunpack.c.l.s4 1934713408
        %v11082 = vunpack.c.0.s8 %v11081
        %v11083 = vlaneseq
        %v11084 = vshrl.u32 %v11083, 7
        %v11085 = vsub.s32 %v11082, %v11084
        %v11086 = vrot.slane %v11072, %v11085
        %v11087 = vcombine.low %v11063, %v11079
        %v11088 = vcombine.high %v11063, %v11079
        %v11089 = vcombine.low %v11070, %v11086
        %v11090 = vcombine.high %v11070, %v11086
        %v11091 = vcombine.low %v10043, %v10050
        %v11093 = vunpack.c.l.s4 1983009808
        %v11094 = vunpack.c.0.s8 %v11093
        %v11095 = vlaneseq
        %v11096 = vshrl.u32 %v11095, 7
        %v11097 = vsub.s32 %v11094, %v11096
        %v11098 = vrot.slane %v11091, %v11097
        %v11099 = vcombine.low %v10067, %v10068
        %v11101 = vunpack.c.l.s4 1983009808
        %v11102 = vunpack.c.0.s8 %v11101
        %v11103 = vlaneseq
        %v11104 = vshrl.u32 %v11103, 7
        %v11105 = vsub.s32 %v11102, %v11104
        %v11106 = vrot.slane %v11099, %v11105
        %v11107 = vcombine.low %v10059, %v10066
        %v11109 = vunpack.c.l.s4 1983009808
        %v11110 = vunpack.c.0.s8 %v11109
        %v11111 = vlaneseq
        %v11112 = vshrl.u32 %v11111, 7
        %v11113 = vsub.s32 %v11110, %v11112
        %v11114 = vrot.slane %v11107, %v11113
        %v11115 = vcombine.low %v10069, %v10070
        %v11117 = vunpack.c.l.s4 1983009808
        %v11118 = vunpack.c.0.s8 %v11117
        %v11119 = vlaneseq
        %v11120 = vshrl.u32 %v11119, 7
        %v11121 = vsub.s32 %v11118, %v11120
        %v11122 = vrot.slane %v11115, %v11121
        %v11123 = vcombine.low %v11098, %v11106
        %v11124 = vcombine.high %v11098, %v11106
        %v11126 = vunpack.c.l.s4 1934713408
        %v11127 = vunpack.c.0.s8 %v11126
        %v11128 = vlaneseq
        %v11129 = vshrl.u32 %v11128, 7
        %v11130 = vsub.s32 %v11127, %v11129
        %v11131 = vrot.slane %v11123, %v11130
        %v11133 = vunpack.c.l.s4 1934713408
        %v11134 = vunpack.c.0.s8 %v11133
        %v11135 = vlaneseq
        %v11136 = vshrl.u32 %v11135, 7
        %v11137 = vsub.s32 %v11134, %v11136
        %v11138 = vrot.slane %v11124, %v11137
        %v11139 = vcombine.low %v11114, %v11122
        %v11140 = vcombine.high %v11114, %v11122
        %v11142 = vunpack.c.l.s4 1934713408
        %v11143 = vunpack.c.0.s8 %v11142
        %v11144 = vlaneseq
        %v11145 = vshrl.u32 %v11144, 7
        %v11146 = vsub.s32 %v11143, %v11145
        %v11147 = vrot.slane %v11139, %v11146
        %v11149 = vunpack.c.l.s4 1934713408
        %v11150 = vunpack.c.0.s8 %v11149
        %v11151 = vlaneseq
        %v11152 = vshrl.u32 %v11151, 7
        %v11153 = vsub.s32 %v11150, %v11152
        %v11154 = vrot.slane %v11140, %v11153
        %v11155 = vcombine.low %v11131, %v11147
        %v11156 = vcombine.high %v11131, %v11147
        %v11157 = vcombine.low %v11138, %v11154
        %v11158 = vcombine.high %v11138, %v11154
        %v11159 = vcombine.low %v10111, %v10118
        %v11161 = vunpack.c.l.s4 1983009808
        %v11162 = vunpack.c.0.s8 %v11161
        %v11163 = vlaneseq
        %v11164 = vshrl.u32 %v11163, 7
        %v11165 = vsub.s32 %v11162, %v11164
        %v11166 = vrot.slane %v11159, %v11165
        %v11167 = vcombine.low %v10135, %v10136
        %v11169 = vunpack.c.l.s4 1983009808
        %v11170 = vunpack.c.0.s8 %v11169
        %v11171 = vlaneseq
        %v11172 = vshrl.u32 %v11171, 7
        %v11173 = vsub.s32 %v11170, %v11172
        %v11174 = vrot.slane %v11167, %v11173
        %v11175 = vcombine.low %v10127, %v10134
        %v11177 = vunpack.c.l.s4 1983009808
        %v11178 = vunpack.c.0.s8 %v11177
        %v11179 = vlaneseq
        %v11180 = vshrl.u32 %v11179, 7
        %v11181 = vsub.s32 %v11178, %v11180
        %v11182 = vrot.slane %v11175, %v11181
        %v11183 = vcombine.low %v10137, %v10138
        %v11185 = vunpack.c.l.s4 1983009808
        %v11186 = vunpack.c.0.s8 %v11185
        %v11187 = vlaneseq
        %v11188 = vshrl.u32 %v11187, 7
        %v11189 = vsub.s32 %v11186, %v11188
        %v11190 = vrot.slane %v11183, %v11189
        %v11191 = vcombine.low %v11166, %v11174
        %v11192 = vcombine.high %v11166, %v11174
        %v11194 = vunpack.c.l.s4 1934713408
        %v11195 = vunpack.c.0.s8 %v11194
        %v11196 = vlaneseq
        %v11197 = vshrl.u32 %v11196, 7
        %v11198 = vsub.s32 %v11195, %v11197
        %v11199 = vrot.slane %v11191, %v11198
        %v11201 = vunpack.c.l.s4 1934713408
        %v11202 = vunpack.c.0.s8 %v11201
        %v11203 = vlaneseq
        %v11204 = vshrl.u32 %v11203, 7
        %v11205 = vsub.s32 %v11202, %v11204
        %v11206 = vrot.slane %v11192, %v11205
        %v11207 = vcombine.low %v11182, %v11190
        %v11208 = vcombine.high %v11182, %v11190
        %v11210 = vunpack.c.l.s4 1934713408
        %v11211 = vunpack.c.0.s8 %v11210
        %v11212 = vlaneseq
        %v11213 = vshrl.u32 %v11212, 7
        %v11214 = vsub.s32 %v11211, %v11213
        %v11215 = vrot.slane %v11207, %v11214
        %v11217 = vunpack.c.l.s4 1934713408
        %v11218 = vunpack.c.0.s8 %v11217
        %v11219 = vlaneseq
        %v11220 = vshrl.u32 %v11219, 7
        %v11221 = vsub.s32 %v11218, %v11220
        %v11222 = vrot.slane %v11208, %v11221
        %v11223 = vcombine.low %v11199, %v11215
        %v11224 = vcombine.high %v11199, %v11215
        %v11225 = vcombine.low %v11206, %v11222
        %v11226 = vcombine.high %v11206, %v11222
        %v11227 = vcombine.low %v10179, %v10186
        %v11229 = vunpack.c.l.s4 1983009808
        %v11230 = vunpack.c.0.s8 %v11229
        %v11231 = vlaneseq
        %v11232 = vshrl.u32 %v11231, 7
        %v11233 = vsub.s32 %v11230, %v11232
        %v11234 = vrot.slane %v11227, %v11233
        %v11235 = vcombine.low %v10203, %v10204
        %v11237 = vunpack.c.l.s4 1983009808
        %v11238 = vunpack.c.0.s8 %v11237
        %v11239 = vlaneseq
        %v11240 = vshrl.u32 %v11239, 7
        %v11241 = vsub.s32 %v11238, %v11240
        %v11242 = vrot.slane %v11235, %v11241
        %v11243 = vcombine.low %v10195, %v10202
        %v11245 = vunpack.c.l.s4 1983009808
        %v11246 = vunpack.c.0.s8 %v11245
        %v11247 = vlaneseq
        %v11248 = vshrl.u32 %v11247, 7
        %v11249 = vsub.s32 %v11246, %v11248
        %v11250 = vrot.slane %v11243, %v11249
        %v11251 = vcombine.low %v10205, %v10206
        %v11253 = vunpack.c.l.s4 1983009808
        %v11254 = vunpack.c.0.s8 %v11253
        %v11255 = vlaneseq
        %v11256 = vshrl.u32 %v11255, 7
        %v11257 = vsub.s32 %v11254, %v11256
        %v11258 = vrot.slane %v11251, %v11257
        %v11259 = vcombine.low %v11234, %v11242
        %v11260 = vcombine.high %v11234, %v11242
        %v11262 = vunpack.c.l.s4 1934713408
        %v11263 = vunpack.c.0.s8 %v11262
        %v11264 = vlaneseq
        %v11265 = vshrl.u32 %v11264, 7
        %v11266 = vsub.s32 %v11263, %v11265
        %v11267 = vrot.slane %v11259, %v11266
        %v11269 = vunpack.c.l.s4 1934713408
        %v11270 = vunpack.c.0.s8 %v11269
        %v11271 = vlaneseq
        %v11272 = vshrl.u32 %v11271, 7
        %v11273 = vsub.s32 %v11270, %v11272
        %v11274 = vrot.slane %v11260, %v11273
        %v11275 = vcombine.low %v11250, %v11258
        %v11276 = vcombine.high %v11250, %v11258
        %v11278 = vunpack.c.l.s4 1934713408
        %v11279 = vunpack.c.0.s8 %v11278
        %v11280 = vlaneseq
        %v11281 = vshrl.u32 %v11280, 7
        %v11282 = vsub.s32 %v11279, %v11281
        %v11283 = vrot.slane %v11275, %v11282
        %v11285 = vunpack.c.l.s4 1934713408
        %v11286 = vunpack.c.0.s8 %v11285
        %v11287 = vlaneseq
        %v11288 = vshrl.u32 %v11287, 7
        %v11289 = vsub.s32 %v11286, %v11288
        %v11290 = vrot.slane %v11276, %v11289
        %v11291 = vcombine.low %v11267, %v11283
        %v11292 = vcombine.high %v11267, %v11283
        %v11293 = vcombine.low %v11274, %v11290
        %v11294 = vcombine.high %v11274, %v11290
        %v11295 = vcombine.low %v10247, %v10254
        %v11297 = vunpack.c.l.s4 1983009808
        %v11298 = vunpack.c.0.s8 %v11297
        %v11299 = vlaneseq
        %v11300 = vshrl.u32 %v11299, 7
        %v11301 = vsub.s32 %v11298, %v11300
        %v11302 = vrot.slane %v11295, %v11301
        %v11303 = vcombine.low %v10271, %v10272
        %v11305 = vunpack.c.l.s4 1983009808
        %v11306 = vunpack.c.0.s8 %v11305
        %v11307 = vlaneseq
        %v11308 = vshrl.u32 %v11307, 7
        %v11309 = vsub.s32 %v11306, %v11308
        %v11310 = vrot.slane %v11303, %v11309
        %v11311 = vcombine.low %v10263, %v10270
        %v11313 = vunpack.c.l.s4 1983009808
        %v11314 = vunpack.c.0.s8 %v11313
        %v11315 = vlaneseq
        %v11316 = vshrl.u32 %v11315, 7
        %v11317 = vsub.s32 %v11314, %v11316
        %v11318 = vrot.slane %v11311, %v11317
        %v11319 = vcombine.low %v10273, %v10274
        %v11321 = vunpack.c.l.s4 1983009808
        %v11322 = vunpack.c.0.s8 %v11321
        %v11323 = vlaneseq
        %v11324 = vshrl.u32 %v11323, 7
        %v11325 = vsub.s32 %v11322, %v11324
        %v11326 = vrot.slane %v11319, %v11325
        %v11327 = vcombine.low %v11302, %v11310
        %v11328 = vcombine.high %v11302, %v11310
        %v11330 = vunpack.c.l.s4 1934713408
        %v11331 = vunpack.c.0.s8 %v11330
        %v11332 = vlaneseq
        %v11333 = vshrl.u32 %v11332, 7
        %v11334 = vsub.s32 %v11331, %v11333
        %v11335 = vrot.slane %v11327, %v11334
        %v11337 = vunpack.c.l.s4 1934713408
        %v11338 = vunpack.c.0.s8 %v11337
        %v11339 = vlaneseq
        %v11340 = vshrl.u32 %v11339, 7
        %v11341 = vsub.s32 %v11338, %v11340
        %v11342 = vrot.slane %v11328, %v11341
        %v11343 = vcombine.low %v11318, %v11326
        %v11344 = vcombine.high %v11318, %v11326
        %v11346 = vunpack.c.l.s4 1934713408
        %v11347 = vunpack.c.0.s8 %v11346
        %v11348 = vlaneseq
        %v11349 = vshrl.u32 %v11348, 7
        %v11350 = vsub.s32 %v11347, %v11349
        %v11351 = vrot.slane %v11343, %v11350
        %v11353 = vunpack.c.l.s4 1934713408
        %v11354 = vunpack.c.0.s8 %v11353
        %v11355 = vlaneseq
        %v11356 = vshrl.u32 %v11355, 7
        %v11357 = vsub.s32 %v11354, %v11356
        %v11358 = vrot.slane %v11344, %v11357
        %v11359 = vcombine.low %v11335, %v11351
        %v11360 = vcombine.high %v11335, %v11351
        %v11361 = vcombine.low %v11342, %v11358
        %v11362 = vcombine.high %v11342, %v11358
        %v11363 = vcombine.low %v10315, %v10322
        %v11365 = vunpack.c.l.s4 1983009808
        %v11366 = vunpack.c.0.s8 %v11365
        %v11367 = vlaneseq
        %v11368 = vshrl.u32 %v11367, 7
        %v11369 = vsub.s32 %v11366, %v11368
        %v11370 = vrot.slane %v11363, %v11369
        %v11371 = vcombine.low %v10339, %v10340
        %v11373 = vunpack.c.l.s4 1983009808
        %v11374 = vunpack.c.0.s8 %v11373
        %v11375 = vlaneseq
        %v11376 = vshrl.u32 %v11375, 7
        %v11377 = vsub.s32 %v11374, %v11376
        %v11378 = vrot.slane %v11371, %v11377
        %v11379 = vcombine.low %v10331, %v10338
        %v11381 = vunpack.c.l.s4 1983009808
        %v11382 = vunpack.c.0.s8 %v11381
        %v11383 = vlaneseq
        %v11384 = vshrl.u32 %v11383, 7
        %v11385 = vsub.s32 %v11382, %v11384
        %v11386 = vrot.slane %v11379, %v11385
        %v11387 = vcombine.low %v10341, %v10342
        %v11389 = vunpack.c.l.s4 1983009808
        %v11390 = vunpack.c.0.s8 %v11389
        %v11391 = vlaneseq
        %v11392 = vshrl.u32 %v11391, 7
        %v11393 = vsub.s32 %v11390, %v11392
        %v11394 = vrot.slane %v11387, %v11393
        %v11395 = vcombine.low %v11370, %v11378
        %v11396 = vcombine.high %v11370, %v11378
        %v11398 = vunpack.c.l.s4 1934713408
        %v11399 = vunpack.c.0.s8 %v11398
        %v11400 = vlaneseq
        %v11401 = vshrl.u32 %v11400, 7
        %v11402 = vsub.s32 %v11399, %v11401
        %v11403 = vrot.slane %v11395, %v11402
        %v11405 = vunpack.c.l.s4 1934713408
        %v11406 = vunpack.c.0.s8 %v11405
        %v11407 = vlaneseq
        %v11408 = vshrl.u32 %v11407, 7
        %v11409 = vsub.s32 %v11406, %v11408
        %v11410 = vrot.slane %v11396, %v11409
        %v11411 = vcombine.low %v11386, %v11394
        %v11412 = vcombine.high %v11386, %v11394
        %v11414 = vunpack.c.l.s4 1934713408
        %v11415 = vunpack.c.0.s8 %v11414
        %v11416 = vlaneseq
        %v11417 = vshrl.u32 %v11416, 7
        %v11418 = vsub.s32 %v11415, %v11417
        %v11419 = vrot.slane %v11411, %v11418
        %v11421 = vunpack.c.l.s4 1934713408
        %v11422 = vunpack.c.0.s8 %v11421
        %v11423 = vlaneseq
        %v11424 = vshrl.u32 %v11423, 7
        %v11425 = vsub.s32 %v11422, %v11424
        %v11426 = vrot.slane %v11412, %v11425
        %v11427 = vcombine.low %v11403, %v11419
        %v11428 = vcombine.high %v11403, %v11419
        %v11429 = vcombine.low %v11410, %v11426
        %v11430 = vcombine.high %v11410, %v11426
        %v11431 = vcombine.low %v10383, %v10390
        %v11433 = vunpack.c.l.s4 1983009808
        %v11434 = vunpack.c.0.s8 %v11433
        %v11435 = vlaneseq
        %v11436 = vshrl.u32 %v11435, 7
        %v11437 = vsub.s32 %v11434, %v11436
        %v11438 = vrot.slane %v11431, %v11437
        %v11439 = vcombine.low %v10407, %v10408
        %v11441 = vunpack.c.l.s4 1983009808
        %v11442 = vunpack.c.0.s8 %v11441
        %v11443 = vlaneseq
        %v11444 = vshrl.u32 %v11443, 7
        %v11445 = vsub.s32 %v11442, %v11444
        %v11446 = vrot.slane %v11439, %v11445
        %v11447 = vcombine.low %v10399, %v10406
        %v11449 = vunpack.c.l.s4 1983009808
        %v11450 = vunpack.c.0.s8 %v11449
        %v11451 = vlaneseq
        %v11452 = vshrl.u32 %v11451, 7
        %v11453 = vsub.s32 %v11450, %v11452
        %v11454 = vrot.slane %v11447, %v11453
        %v11455 = vcombine.low %v10409, %v10410
        %v11457 = vunpack.c.l.s4 1983009808
        %v11458 = vunpack.c.0.s8 %v11457
        %v11459 = vlaneseq
        %v11460 = vshrl.u32 %v11459, 7
        %v11461 = vsub.s32 %v11458, %v11460
        %v11462 = vrot.slane %v11455, %v11461
        %v11463 = vcombine.low %v11438, %v11446
        %v11464 = vcombine.high %v11438, %v11446
        %v11466 = vunpack.c.l.s4 1934713408
        %v11467 = vunpack.c.0.s8 %v11466
        %v11468 = vlaneseq
        %v11469 = vshrl.u32 %v11468, 7
        %v11470 = vsub.s32 %v11467, %v11469
        %v11471 = vrot.slane %v11463, %v11470
        %v11473 = vunpack.c.l.s4 1934713408
        %v11474 = vunpack.c.0.s8 %v11473
        %v11475 = vlaneseq
        %v11476 = vshrl.u32 %v11475, 7
        %v11477 = vsub.s32 %v11474, %v11476
        %v11478 = vrot.slane %v11464, %v11477
        %v11479 = vcombine.low %v11454, %v11462
        %v11480 = vcombine.high %v11454, %v11462
        %v11482 = vunpack.c.l.s4 1934713408
        %v11483 = vunpack.c.0.s8 %v11482
        %v11484 = vlaneseq
        %v11485 = vshrl.u32 %v11484, 7
        %v11486 = vsub.s32 %v11483, %v11485
        %v11487 = vrot.slane %v11479, %v11486
        %v11489 = vunpack.c.l.s4 1934713408
        %v11490 = vunpack.c.0.s8 %v11489
        %v11491 = vlaneseq
        %v11492 = vshrl.u32 %v11491, 7
        %v11493 = vsub.s32 %v11490, %v11492
        %v11494 = vrot.slane %v11480, %v11493
        %v11495 = vcombine.low %v11471, %v11487
        %v11496 = vcombine.high %v11471, %v11487
        %v11497 = vcombine.low %v11478, %v11494
        %v11498 = vcombine.high %v11478, %v11494
        %v11499 = vcombine.low %v10451, %v10458
        %v11501 = vunpack.c.l.s4 1983009808
        %v11502 = vunpack.c.0.s8 %v11501
        %v11503 = vlaneseq
        %v11504 = vshrl.u32 %v11503, 7
        %v11505 = vsub.s32 %v11502, %v11504
        %v11506 = vrot.slane %v11499, %v11505
        %v11507 = vcombine.low %v10475, %v10476
        %v11509 = vunpack.c.l.s4 1983009808
        %v11510 = vunpack.c.0.s8 %v11509
        %v11511 = vlaneseq
        %v11512 = vshrl.u32 %v11511, 7
        %v11513 = vsub.s32 %v11510, %v11512
        %v11514 = vrot.slane %v11507, %v11513
        %v11515 = vcombine.low %v10467, %v10474
        %v11517 = vunpack.c.l.s4 1983009808
        %v11518 = vunpack.c.0.s8 %v11517
        %v11519 = vlaneseq
        %v11520 = vshrl.u32 %v11519, 7
        %v11521 = vsub.s32 %v11518, %v11520
        %v11522 = vrot.slane %v11515, %v11521
        %v11523 = vcombine.low %v10477, %v10478
        %v11525 = vunpack.c.l.s4 1983009808
        %v11526 = vunpack.c.0.s8 %v11525
        %v11527 = vlaneseq
        %v11528 = vshrl.u32 %v11527, 7
        %v11529 = vsub.s32 %v11526, %v11528
        %v11530 = vrot.slane %v11523, %v11529
        %v11531 = vcombine.low %v11506, %v11514
        %v11532 = vcombine.high %v11506, %v11514
        %v11534 = vunpack.c.l.s4 1934713408
        %v11535 = vunpack.c.0.s8 %v11534
        %v11536 = vlaneseq
        %v11537 = vshrl.u32 %v11536, 7
        %v11538 = vsub.s32 %v11535, %v11537
        %v11539 = vrot.slane %v11531, %v11538
        %v11541 = vunpack.c.l.s4 1934713408
        %v11542 = vunpack.c.0.s8 %v11541
        %v11543 = vlaneseq
        %v11544 = vshrl.u32 %v11543, 7
        %v11545 = vsub.s32 %v11542, %v11544
        %v11546 = vrot.slane %v11532, %v11545
        %v11547 = vcombine.low %v11522, %v11530
        %v11548 = vcombine.high %v11522, %v11530
        %v11550 = vunpack.c.l.s4 1934713408
        %v11551 = vunpack.c.0.s8 %v11550
        %v11552 = vlaneseq
        %v11553 = vshrl.u32 %v11552, 7
        %v11554 = vsub.s32 %v11551, %v11553
        %v11555 = vrot.slane %v11547, %v11554
        %v11557 = vunpack.c.l.s4 1934713408
        %v11558 = vunpack.c.0.s8 %v11557
        %v11559 = vlaneseq
        %v11560 = vshrl.u32 %v11559, 7
        %v11561 = vsub.s32 %v11558, %v11560
        %v11562 = vrot.slane %v11548, %v11561
        %v11563 = vcombine.low %v11539, %v11555
        %v11564 = vcombine.high %v11539, %v11555
        %v11565 = vcombine.low %v11546, %v11562
        %v11566 = vcombine.high %v11546, %v11562
        %v11567 = vcombine.low %v10519, %v10526
        %v11569 = vunpack.c.l.s4 1983009808
        %v11570 = vunpack.c.0.s8 %v11569
        %v11571 = vlaneseq
        %v11572 = vshrl.u32 %v11571, 7
        %v11573 = vsub.s32 %v11570, %v11572
        %v11574 = vrot.slane %v11567, %v11573
        %v11575 = vcombine.low %v10543, %v10544
        %v11577 = vunpack.c.l.s4 1983009808
        %v11578 = vunpack.c.0.s8 %v11577
        %v11579 = vlaneseq
        %v11580 = vshrl.u32 %v11579, 7
        %v11581 = vsub.s32 %v11578, %v11580
        %v11582 = vrot.slane %v11575, %v11581
        %v11583 = vcombine.low %v10535, %v10542
        %v11585 = vunpack.c.l.s4 1983009808
        %v11586 = vunpack.c.0.s8 %v11585
        %v11587 = vlaneseq
        %v11588 = vshrl.u32 %v11587, 7
        %v11589 = vsub.s32 %v11586, %v11588
        %v11590 = vrot.slane %v11583, %v11589
        %v11591 = vcombine.low %v10545, %v10546
        %v11593 = vunpack.c.l.s4 1983009808
        %v11594 = vunpack.c.0.s8 %v11593
        %v11595 = vlaneseq
        %v11596 = vshrl.u32 %v11595, 7
        %v11597 = vsub.s32 %v11594, %v11596
        %v11598 = vrot.slane %v11591, %v11597
        %v11599 = vcombine.low %v11574, %v11582
        %v11600 = vcombine.high %v11574, %v11582
        %v11602 = vunpack.c.l.s4 1934713408
        %v11603 = vunpack.c.0.s8 %v11602
        %v11604 = vlaneseq
        %v11605 = vshrl.u32 %v11604, 7
        %v11606 = vsub.s32 %v11603, %v11605
        %v11607 = vrot.slane %v11599, %v11606
        %v11609 = vunpack.c.l.s4 1934713408
        %v11610 = vunpack.c.0.s8 %v11609
        %v11611 = vlaneseq
        %v11612 = vshrl.u32 %v11611, 7
        %v11613 = vsub.s32 %v11610, %v11612
        %v11614 = vrot.slane %v11600, %v11613
        %v11615 = vcombine.low %v11590, %v11598
        %v11616 = vcombine.high %v11590, %v11598
        %v11618 = vunpack.c.l.s4 1934713408
        %v11619 = vunpack.c.0.s8 %v11618
        %v11620 = vlaneseq
        %v11621 = vshrl.u32 %v11620, 7
        %v11622 = vsub.s32 %v11619, %v11621
        %v11623 = vrot.slane %v11615, %v11622
        %v11625 = vunpack.c.l.s4 1934713408
        %v11626 = vunpack.c.0.s8 %v11625
        %v11627 = vlaneseq
        %v11628 = vshrl.u32 %v11627, 7
        %v11629 = vsub.s32 %v11626, %v11628
        %v11630 = vrot.slane %v11616, %v11629
        %v11631 = vcombine.low %v11607, %v11623
        %v11632 = vcombine.high %v11607, %v11623
        %v11633 = vcombine.low %v11614, %v11630
        %v11634 = vcombine.high %v11614, %v11630
        %v11635 = vcombine.low %v10587, %v10594
        %v11637 = vunpack.c.l.s4 1983009808
        %v11638 = vunpack.c.0.s8 %v11637
        %v11639 = vlaneseq
        %v11640 = vshrl.u32 %v11639, 7
        %v11641 = vsub.s32 %v11638, %v11640
        %v11642 = vrot.slane %v11635, %v11641
        %v11643 = vcombine.low %v10611, %v10612
        %v11645 = vunpack.c.l.s4 1983009808
        %v11646 = vunpack.c.0.s8 %v11645
        %v11647 = vlaneseq
        %v11648 = vshrl.u32 %v11647, 7
        %v11649 = vsub.s32 %v11646, %v11648
        %v11650 = vrot.slane %v11643, %v11649
        %v11651 = vcombine.low %v10603, %v10610
        %v11653 = vunpack.c.l.s4 1983009808
        %v11654 = vunpack.c.0.s8 %v11653
        %v11655 = vlaneseq
        %v11656 = vshrl.u32 %v11655, 7
        %v11657 = vsub.s32 %v11654, %v11656
        %v11658 = vrot.slane %v11651, %v11657
        %v11659 = vcombine.low %v10613, %v10614
        %v11661 = vunpack.c.l.s4 1983009808
        %v11662 = vunpack.c.0.s8 %v11661
        %v11663 = vlaneseq
        %v11664 = vshrl.u32 %v11663, 7
        %v11665 = vsub.s32 %v11662, %v11664
        %v11666 = vrot.slane %v11659, %v11665
        %v11667 = vcombine.low %v11642, %v11650
        %v11668 = vcombine.high %v11642, %v11650
        %v11670 = vunpack.c.l.s4 1934713408
        %v11671 = vunpack.c.0.s8 %v11670
        %v11672 = vlaneseq
        %v11673 = vshrl.u32 %v11672, 7
        %v11674 = vsub.s32 %v11671, %v11673
        %v11675 = vrot.slane %v11667, %v11674
        %v11677 = vunpack.c.l.s4 1934713408
        %v11678 = vunpack.c.0.s8 %v11677
        %v11679 = vlaneseq
        %v11680 = vshrl.u32 %v11679, 7
        %v11681 = vsub.s32 %v11678, %v11680
        %v11682 = vrot.slane %v11668, %v11681
        %v11683 = vcombine.low %v11658, %v11666
        %v11684 = vcombine.high %v11658, %v11666
        %v11686 = vunpack.c.l.s4 1934713408
        %v11687 = vunpack.c.0.s8 %v11686
        %v11688 = vlaneseq
        %v11689 = vshrl.u32 %v11688, 7
        %v11690 = vsub.s32 %v11687, %v11689
        %v11691 = vrot.slane %v11683, %v11690
        %v11693 = vunpack.c.l.s4 1934713408
        %v11694 = vunpack.c.0.s8 %v11693
        %v11695 = vlaneseq
        %v11696 = vshrl.u32 %v11695, 7
        %v11697 = vsub.s32 %v11694, %v11696
        %v11698 = vrot.slane %v11684, %v11697
        %v11699 = vcombine.low %v11675, %v11691
        %v11700 = vcombine.high %v11675, %v11691
        %v11701 = vcombine.low %v11682, %v11698
        %v11702 = vcombine.high %v11682, %v11698
        %v11703 = vcombine.low %v10655, %v10662
        %v11705 = vunpack.c.l.s4 1983009808
        %v11706 = vunpack.c.0.s8 %v11705
        %v11707 = vlaneseq
        %v11708 = vshrl.u32 %v11707, 7
        %v11709 = vsub.s32 %v11706, %v11708
        %v11710 = vrot.slane %v11703, %v11709
        %v11711 = vcombine.low %v10679, %v10680
        %v11713 = vunpack.c.l.s4 1983009808
        %v11714 = vunpack.c.0.s8 %v11713
        %v11715 = vlaneseq
        %v11716 = vshrl.u32 %v11715, 7
        %v11717 = vsub.s32 %v11714, %v11716
        %v11718 = vrot.slane %v11711, %v11717
        %v11719 = vcombine.low %v10671, %v10678
        %v11721 = vunpack.c.l.s4 1983009808
        %v11722 = vunpack.c.0.s8 %v11721
        %v11723 = vlaneseq
        %v11724 = vshrl.u32 %v11723, 7
        %v11725 = vsub.s32 %v11722, %v11724
        %v11726 = vrot.slane %v11719, %v11725
        %v11727 = vcombine.low %v10681, %v10682
        %v11729 = vunpack.c.l.s4 1983009808
        %v11730 = vunpack.c.0.s8 %v11729
        %v11731 = vlaneseq
        %v11732 = vshrl.u32 %v11731, 7
        %v11733 = vsub.s32 %v11730, %v11732
        %v11734 = vrot.slane %v11727, %v11733
        %v11735 = vcombine.low %v11710, %v11718
        %v11736 = vcombine.high %v11710, %v11718
        %v11738 = vunpack.c.l.s4 1934713408
        %v11739 = vunpack.c.0.s8 %v11738
        %v11740 = vlaneseq
        %v11741 = vshrl.u32 %v11740, 7
        %v11742 = vsub.s32 %v11739, %v11741
        %v11743 = vrot.slane %v11735, %v11742
        %v11745 = vunpack.c.l.s4 1934713408
        %v11746 = vunpack.c.0.s8 %v11745
        %v11747 = vlaneseq
        %v11748 = vshrl.u32 %v11747, 7
        %v11749 = vsub.s32 %v11746, %v11748
        %v11750 = vrot.slane %v11736, %v11749
        %v11751 = vcombine.low %v11726, %v11734
        %v11752 = vcombine.high %v11726, %v11734
        %v11754 = vunpack.c.l.s4 1934713408
        %v11755 = vunpack.c.0.s8 %v11754
        %v11756 = vlaneseq
        %v11757 = vshrl.u32 %v11756, 7
        %v11758 = vsub.s32 %v11755, %v11757
        %v11759 = vrot.slane %v11751, %v11758
        %v11761 = vunpack.c.l.s4 1934713408
        %v11762 = vunpack.c.0.s8 %v11761
        %v11763 = vlaneseq
        %v11764 = vshrl.u32 %v11763, 7
        %v11765 = vsub.s32 %v11762, %v11764
        %v11766 = vrot.slane %v11752, %v11765
        %v11767 = vcombine.low %v11743, %v11759
        %v11768 = vcombine.high %v11743, %v11759
        %v11769 = vcombine.low %v11750, %v11766
        %v11770 = vcombine.high %v11750, %v11766
        %v11771 = vcombine.low %v10723, %v10730
        %v11773 = vunpack.c.l.s4 1983009808
        %v11774 = vunpack.c.0.s8 %v11773
        %v11775 = vlaneseq
        %v11776 = vshrl.u32 %v11775, 7
        %v11777 = vsub.s32 %v11774, %v11776
        %v11778 = vrot.slane %v11771, %v11777
        %v11779 = vcombine.low %v10747, %v10748
        %v11781 = vunpack.c.l.s4 1983009808
        %v11782 = vunpack.c.0.s8 %v11781
        %v11783 = vlaneseq
        %v11784 = vshrl.u32 %v11783, 7
        %v11785 = vsub.s32 %v11782, %v11784
        %v11786 = vrot.slane %v11779, %v11785
        %v11787 = vcombine.low %v10739, %v10746
        %v11789 = vunpack.c.l.s4 1983009808
        %v11790 = vunpack.c.0.s8 %v11789
        %v11791 = vlaneseq
        %v11792 = vshrl.u32 %v11791, 7
        %v11793 = vsub.s32 %v11790, %v11792
        %v11794 = vrot.slane %v11787, %v11793
        %v11795 = vcombine.low %v10749, %v10750
        %v11797 = vunpack.c.l.s4 1983009808
        %v11798 = vunpack.c.0.s8 %v11797
        %v11799 = vlaneseq
        %v11800 = vshrl.u32 %v11799, 7
        %v11801 = vsub.s32 %v11798, %v11800
        %v11802 = vrot.slane %v11795, %v11801
        %v11803 = vcombine.low %v11778, %v11786
        %v11804 = vcombine.high %v11778, %v11786
        %v11806 = vunpack.c.l.s4 1934713408
        %v11807 = vunpack.c.0.s8 %v11806
        %v11808 = vlaneseq
        %v11809 = vshrl.u32 %v11808, 7
        %v11810 = vsub.s32 %v11807, %v11809
        %v11811 = vrot.slane %v11803, %v11810
        %v11813 = vunpack.c.l.s4 1934713408
        %v11814 = vunpack.c.0.s8 %v11813
        %v11815 = vlaneseq
        %v11816 = vshrl.u32 %v11815, 7
        %v11817 = vsub.s32 %v11814, %v11816
        %v11818 = vrot.slane %v11804, %v11817
        %v11819 = vcombine.low %v11794, %v11802
        %v11820 = vcombine.high %v11794, %v11802
        %v11822 = vunpack.c.l.s4 1934713408
        %v11823 = vunpack.c.0.s8 %v11822
        %v11824 = vlaneseq
        %v11825 = vshrl.u32 %v11824, 7
        %v11826 = vsub.s32 %v11823, %v11825
        %v11827 = vrot.slane %v11819, %v11826
        %v11829 = vunpack.c.l.s4 1934713408
        %v11830 = vunpack.c.0.s8 %v11829
        %v11831 = vlaneseq
        %v11832 = vshrl.u32 %v11831, 7
        %v11833 = vsub.s32 %v11830, %v11832
        %v11834 = vrot.slane %v11820, %v11833
        %v11835 = vcombine.low %v11811, %v11827
        %v11836 = vcombine.high %v11811, %v11827
        %v11837 = vcombine.low %v11818, %v11834
        %v11838 = vcombine.high %v11818, %v11834
        %11855 = vrot.lane.b32.xlu0 %v10816, 32
        %v11856 = vpop.permute.xlu0 %11855
        %11857 = vrot.lane.b32.xlu0 %v10884, 32
        %v11858 = vpop.permute.xlu0 %11857
        %11859 = vrot.lane.b32.xlu0 %v10952, 32
        %v11860 = vpop.permute.xlu0 %11859
        %11861 = vrot.lane.b32.xlu0 %v11020, 32
        %v11862 = vpop.permute.xlu0 %11861
        %11863 = vrot.lane.b32.xlu0 %v11088, 32
        %v11864 = vpop.permute.xlu0 %11863
        %11865 = vrot.lane.b32.xlu0 %v11156, 32
        %v11866 = vpop.permute.xlu0 %11865
        %11867 = vrot.lane.b32.xlu0 %v11224, 32
        %v11868 = vpop.permute.xlu0 %11867
        %11869 = vrot.lane.b32.xlu0 %v11292, 32
        %v11870 = vpop.permute.xlu0 %11869
        %11871 = vrot.lane.b32.xlu0 %v11360, 32
        %v11872 = vpop.permute.xlu0 %11871
        %11873 = vrot.lane.b32.xlu0 %v11428, 32
        %v11874 = vpop.permute.xlu0 %11873
        %11875 = vrot.lane.b32.xlu0 %v11496, 32
        %v11876 = vpop.permute.xlu0 %11875
        %11877 = vrot.lane.b32.xlu0 %v11564, 32
        %v11878 = vpop.permute.xlu0 %11877
        %11879 = vrot.lane.b32.xlu0 %v11632, 32
        %v11880 = vpop.permute.xlu0 %11879
        %11881 = vrot.lane.b32.xlu0 %v11700, 32
        %v11882 = vpop.permute.xlu0 %11881
        %11883 = vrot.lane.b32.xlu0 %v11768, 32
        %v11884 = vpop.permute.xlu0 %11883
        %11885 = vrot.lane.b32.xlu0 %v11836, 32
        %v11886 = vpop.permute.xlu0 %11885
        %11919 = vrot.lane.b32.xlu0 %v10817, 64
        %v11920 = vpop.permute.xlu0 %11919
        %11921 = vrot.lane.b32.xlu0 %v10885, 64
        %v11922 = vpop.permute.xlu0 %11921
        %11923 = vrot.lane.b32.xlu0 %v10953, 64
        %v11924 = vpop.permute.xlu0 %11923
        %11925 = vrot.lane.b32.xlu0 %v11021, 64
        %v11926 = vpop.permute.xlu0 %11925
        %11927 = vrot.lane.b32.xlu0 %v11089, 64
        %v11928 = vpop.permute.xlu0 %11927
        %11929 = vrot.lane.b32.xlu0 %v11157, 64
        %v11930 = vpop.permute.xlu0 %11929
        %11931 = vrot.lane.b32.xlu0 %v11225, 64
        %v11932 = vpop.permute.xlu0 %11931
        %11933 = vrot.lane.b32.xlu0 %v11293, 64
        %v11934 = vpop.permute.xlu0 %11933
        %11935 = vrot.lane.b32.xlu0 %v11361, 64
        %v11936 = vpop.permute.xlu0 %11935
        %11937 = vrot.lane.b32.xlu0 %v11429, 64
        %v11938 = vpop.permute.xlu0 %11937
        %11939 = vrot.lane.b32.xlu0 %v11497, 64
        %v11940 = vpop.permute.xlu0 %11939
        %11941 = vrot.lane.b32.xlu0 %v11565, 64
        %v11942 = vpop.permute.xlu0 %11941
        %11943 = vrot.lane.b32.xlu0 %v11633, 64
        %v11944 = vpop.permute.xlu0 %11943
        %11945 = vrot.lane.b32.xlu0 %v11701, 64
        %v11946 = vpop.permute.xlu0 %11945
        %11947 = vrot.lane.b32.xlu0 %v11769, 64
        %v11948 = vpop.permute.xlu0 %11947
        %11949 = vrot.lane.b32.xlu0 %v11837, 64
        %v11950 = vpop.permute.xlu0 %11949
        %11983 = vrot.lane.b32.xlu0 %v10818, 96
        %v11984 = vpop.permute.xlu0 %11983
        %11985 = vrot.lane.b32.xlu0 %v10886, 96
        %v11986 = vpop.permute.xlu0 %11985
        %11987 = vrot.lane.b32.xlu0 %v10954, 96
        %v11988 = vpop.permute.xlu0 %11987
        %11989 = vrot.lane.b32.xlu0 %v11022, 96
        %v11990 = vpop.permute.xlu0 %11989
        %11991 = vrot.lane.b32.xlu0 %v11090, 96
        %v11992 = vpop.permute.xlu0 %11991
        %11993 = vrot.lane.b32.xlu0 %v11158, 96
        %v11994 = vpop.permute.xlu0 %11993
        %11995 = vrot.lane.b32.xlu0 %v11226, 96
        %v11996 = vpop.permute.xlu0 %11995
        %11997 = vrot.lane.b32.xlu0 %v11294, 96
        %v11998 = vpop.permute.xlu0 %11997
        %11999 = vrot.lane.b32.xlu0 %v11362, 96
        %v12000 = vpop.permute.xlu0 %11999
        %12001 = vrot.lane.b32.xlu0 %v11430, 96
        %v12002 = vpop.permute.xlu0 %12001
        %12003 = vrot.lane.b32.xlu0 %v11498, 96
        %v12004 = vpop.permute.xlu0 %12003
        %12005 = vrot.lane.b32.xlu0 %v11566, 96
        %v12006 = vpop.permute.xlu0 %12005
        %12007 = vrot.lane.b32.xlu0 %v11634, 96
        %v12008 = vpop.permute.xlu0 %12007
        %12009 = vrot.lane.b32.xlu0 %v11702, 96
        %v12010 = vpop.permute.xlu0 %12009
        %12011 = vrot.lane.b32.xlu0 %v11770, 96
        %v12012 = vpop.permute.xlu0 %12011
        %12013 = vrot.lane.b32.xlu0 %v11838, 96
        %v12014 = vpop.permute.xlu0 %12013
        %v12031 = vsel %vm8086, %v10815, %v11856
        %v12032 = vsel %vm8086, %v10883, %v11858
        %v12033 = vsel %vm8086, %v10951, %v11860
        %v12034 = vsel %vm8086, %v11019, %v11862
        %v12035 = vsel %vm8086, %v11087, %v11864
        %v12036 = vsel %vm8086, %v11155, %v11866
        %v12037 = vsel %vm8086, %v11223, %v11868
        %v12038 = vsel %vm8086, %v11291, %v11870
        %v12039 = vsel %vm8086, %v11359, %v11872
        %v12040 = vsel %vm8086, %v11427, %v11874
        %v12041 = vsel %vm8086, %v11495, %v11876
        %v12042 = vsel %vm8086, %v11563, %v11878
        %v12043 = vsel %vm8086, %v11631, %v11880
        %v12044 = vsel %vm8086, %v11699, %v11882
        %v12045 = vsel %vm8086, %v11767, %v11884
        %v12046 = vsel %vm8086, %v11835, %v11886
        %vm12047 = vcmask 523264
        %v12048 = vsel %vm12047, %v12031, %v11920
        %v12049 = vsel %vm12047, %v12032, %v11922
        %v12050 = vsel %vm12047, %v12033, %v11924
        %v12051 = vsel %vm12047, %v12034, %v11926
        %v12052 = vsel %vm12047, %v12035, %v11928
        %v12053 = vsel %vm12047, %v12036, %v11930
        %v12054 = vsel %vm12047, %v12037, %v11932
        %v12055 = vsel %vm12047, %v12038, %v11934
        %v12056 = vsel %vm12047, %v12039, %v11936
        %v12057 = vsel %vm12047, %v12040, %v11938
        %v12058 = vsel %vm12047, %v12041, %v11940
        %v12059 = vsel %vm12047, %v12042, %v11942
        %v12060 = vsel %vm12047, %v12043, %v11944
        %v12061 = vsel %vm12047, %v12044, %v11946
        %v12062 = vsel %vm12047, %v12045, %v11948
        %v12063 = vsel %vm12047, %v12046, %v11950
        %vm12064 = vcmask 785408
        %v12065 = vsel %vm12064, %v12048, %v11984
        %v12066 = vsel %vm12064, %v12049, %v11986
        %v12067 = vsel %vm12064, %v12050, %v11988
        %v12068 = vsel %vm12064, %v12051, %v11990
        %v12069 = vsel %vm12064, %v12052, %v11992
        %v12070 = vsel %vm12064, %v12053, %v11994
        %v12071 = vsel %vm12064, %v12054, %v11996
        %v12072 = vsel %vm12064, %v12055, %v11998
        %v12073 = vsel %vm12064, %v12056, %v12000
        %v12074 = vsel %vm12064, %v12057, %v12002
        %v12075 = vsel %vm12064, %v12058, %v12004
        %v12076 = vsel %vm12064, %v12059, %v12006
        %v12077 = vsel %vm12064, %v12060, %v12008
        %v12078 = vsel %vm12064, %v12061, %v12010
        %v12079 = vsel %vm12064, %v12062, %v12012
        %v12080 = vsel %vm12064, %v12063, %v12014
        %v12081 = vpack.c.bf16 %v12066, %v12065
        %v12082 = vpack.c.bf16 %v12068, %v12067
        %v12083 = vpack.c.bf16 %v12070, %v12069
        %v12084 = vpack.c.bf16 %v12072, %v12071
        %v12085 = vpack.c.bf16 %v12074, %v12073
        %v12086 = vpack.c.bf16 %v12076, %v12075
        %v12087 = vpack.c.bf16 %v12078, %v12077
        %v12088 = vpack.c.bf16 %v12080, %v12079
        %v12089 = vld [vmem:[#allocation11] sm:$0xf]
        %v12090 = vld [vmem:[#allocation11 + $0x4] sm:$0xf]
        %v12091 = vld [vmem:[#allocation11 + $0x8] sm:$0xf]
        %v12092 = vld [vmem:[#allocation11 + $0xc] sm:$0xf]
        %v12093 = vld [vmem:[#allocation11 + $0x10] sm:$0xf]
        %v12094 = vld [vmem:[#allocation11 + $0x14] sm:$0xf]
        %v12095 = vld [vmem:[#allocation11 + $0x18] sm:$0xf]
        %v12096 = vld [vmem:[#allocation11 + $0x1c] sm:$0xf]
        %v12097 = vld [vmem:[#allocation11 + $0x20] sm:$0xf]
        %v12098 = vld [vmem:[#allocation11 + $0x24] sm:$0xf]
        %v12099 = vld [vmem:[#allocation11 + $0x28] sm:$0xf]
        %v12100 = vld [vmem:[#allocation11 + $0x2c] sm:$0xf]
        %v12101 = vld [vmem:[#allocation11 + $0x30] sm:$0xf]
        %v12102 = vld [vmem:[#allocation11 + $0x34] sm:$0xf]
        %v12103 = vld [vmem:[#allocation11 + $0x38] sm:$0xf]
        %v12104 = vld [vmem:[#allocation11 + $0x3c] sm:$0xf]
        %v12121 = vunpack.c.l.b16 %v12089
        %v12122 = vunpack.c.l.b16 %v12090
        %v12123 = vunpack.c.l.b16 %v12091
        %v12124 = vunpack.c.l.b16 %v12092
        %v12125 = vunpack.c.l.b16 %v12093
        %v12126 = vunpack.c.l.b16 %v12094
        %v12127 = vunpack.c.l.b16 %v12095
        %v12128 = vunpack.c.l.b16 %v12096
        %v12129 = vunpack.c.l.b16 %v12097
        %v12130 = vunpack.c.l.b16 %v12098
        %v12131 = vunpack.c.l.b16 %v12099
        %v12132 = vunpack.c.l.b16 %v12100
        %v12133 = vunpack.c.l.b16 %v12101
        %v12134 = vunpack.c.l.b16 %v12102
        %v12135 = vunpack.c.l.b16 %v12103
        %v12136 = vunpack.c.l.b16 %v12104
        %v12137 = vpack.c.b16 %v12122, %v12121
        %v12138 = vpack.c.b16 %v12124, %v12123
        %v12139 = vpack.c.b16 %v12126, %v12125
        %v12140 = vpack.c.b16 %v12128, %v12127
        %v12141 = vpack.c.b16 %v12130, %v12129
        %v12142 = vpack.c.b16 %v12132, %v12131
        %v12143 = vpack.c.b16 %v12134, %v12133
        %v12144 = vpack.c.b16 %v12136, %v12135
        %12153 = vmatprep.subr.bf16.mxu0 0
        %12154 = vmatpush1.bf16.msra.mxu0 %v12137
        %12155 = vmatprep.subr.bf16.mxu0 0
        %12156 = vmatpush1.bf16.msra.mxu0 %v12138
        %12157 = vmatprep.subr.bf16.mxu0 0
        %12158 = vmatpush1.bf16.msra.mxu0 %v12139
        %12159 = vmatprep.subr.bf16.mxu0 0
        %12160 = vmatpush1.bf16.msra.mxu0 %v12140
        %12161 = vmatprep.subr.bf16.mxu0 0
        %12162 = vmatpush1.bf16.msra.mxu0 %v12141
        %12163 = vmatprep.subr.bf16.mxu0 0
        %12164 = vmatpush1.bf16.msra.mxu0 %v12142
        %12165 = vmatprep.subr.bf16.mxu0 0
        %12166 = vmatpush1.bf16.msra.mxu0 %v12143
        %12167 = vmatprep.subr.bf16.mxu0 0
        %12168 = vmatpush1.bf16.msra.mxu0 %v12144
        %12169 = vmatprep.subr.bf16.mxu0 0
        %12170 = vmatpush1.bf16.msra.mxu0 0
        %12171 = vmatprep.subr.bf16.mxu0 0
        %12172 = vmatpush1.bf16.msra.mxu0 0
        %12173 = vmatprep.subr.bf16.mxu0 0
        %12174 = vmatpush1.bf16.msra.mxu0 0
        %12175 = vmatprep.subr.bf16.mxu0 0
        %12176 = vmatpush1.bf16.msra.mxu0 0
        %12177 = vmatprep.subr.bf16.mxu0 0
        %12178 = vmatpush1.bf16.msra.mxu0 0
        %12179 = vmatprep.subr.bf16.mxu0 0
        %12180 = vmatpush1.bf16.msra.mxu0 0
        %12181 = vmatprep.subr.bf16.mxu0 0
        %12182 = vmatpush1.bf16.msra.mxu0 0
        %12183 = vmatprep.subr.bf16.mxu0 0
        %12184 = vmatpush1.bf16.msra.mxu0 0
        %12185 = vmatprep.mubr.bf16.mxu0 0
        %12186 = vmatmul.mubr.bf16.gmra.mrb[0].mxu0 %v12081
        %v12187 = vpop.f32.mrb[0].mxu0
        %v12188 = vadd.f32 0.0, %v12187
        %v12189 = vpop.f32.mrb[0].mxu0
        %v12190 = vpop.f32.mrb[0].mxu0
        %v12191 = vadd.f32 0.0, %v12190
        %v12192 = vpop.f32.mrb[0].mxu0
        %12193 = vmatprep.mubr.bf16.mxu0 0
        %12194 = vmatmul.mubr.bf16.gmra.mrb[0].mxu0 %v12082
        %v12195 = vpop.f32.mrb[0].mxu0
        %v12196 = vadd.f32 0.0, %v12195
        %v12197 = vpop.f32.mrb[0].mxu0
        %v12198 = vpop.f32.mrb[0].mxu0
        %v12199 = vadd.f32 0.0, %v12198
        %v12200 = vpop.f32.mrb[0].mxu0
        %12201 = vmatprep.mubr.bf16.mxu0 0
        %12202 = vmatmul.mubr.bf16.gmra.mrb[0].mxu0 %v12083
        %v12203 = vpop.f32.mrb[0].mxu0
        %v12204 = vadd.f32 0.0, %v12203
        %v12205 = vpop.f32.mrb[0].mxu0
        %v12206 = vpop.f32.mrb[0].mxu0
        %v12207 = vadd.f32 0.0, %v12206
        %v12208 = vpop.f32.mrb[0].mxu0
        %12209 = vmatprep.mubr.bf16.mxu0 0
        %12210 = vmatmul.mubr.bf16.gmra.mrb[0].mxu0 %v12084
        %v12211 = vpop.f32.mrb[0].mxu0
        %v12212 = vadd.f32 0.0, %v12211
        %v12213 = vpop.f32.mrb[0].mxu0
        %v12214 = vpop.f32.mrb[0].mxu0
        %v12215 = vadd.f32 0.0, %v12214
        %v12216 = vpop.f32.mrb[0].mxu0
        %12217 = vmatprep.mubr.bf16.mxu0 0
        %12218 = vmatmul.mubr.bf16.gmra.mrb[0].mxu0 %v12085
        %v12219 = vpop.f32.mrb[0].mxu0
        %v12220 = vadd.f32 0.0, %v12219
        %v12221 = vpop.f32.mrb[0].mxu0
        %v12222 = vpop.f32.mrb[0].mxu0
        %v12223 = vadd.f32 0.0, %v12222
        %v12224 = vpop.f32.mrb[0].mxu0
        %12225 = vmatprep.mubr.bf16.mxu0 0
        %12226 = vmatmul.mubr.bf16.gmra.mrb[0].mxu0 %v12086
        %v12227 = vpop.f32.mrb[0].mxu0
        %v12228 = vadd.f32 0.0, %v12227
        %v12229 = vpop.f32.mrb[0].mxu0
        %v12230 = vpop.f32.mrb[0].mxu0
        %v12231 = vadd.f32 0.0, %v12230
        %v12232 = vpop.f32.mrb[0].mxu0
        %12233 = vmatprep.mubr.bf16.mxu0 0
        %12234 = vmatmul.mubr.bf16.gmra.mrb[0].mxu0 %v12087
        %v12235 = vpop.f32.mrb[0].mxu0
        %v12236 = vadd.f32 0.0, %v12235
        %v12237 = vpop.f32.mrb[0].mxu0
        %v12238 = vpop.f32.mrb[0].mxu0
        %v12239 = vadd.f32 0.0, %v12238
        %v12240 = vpop.f32.mrb[0].mxu0
        %12241 = vmatprep.mubr.bf16.mxu0 0
        %12242 = vmatmul.mubr.bf16.gmra.mrb[0].mxu0 %v12088
        %v12243 = vpop.f32.mrb[0].mxu0
        %v12244 = vadd.f32 0.0, %v12243
        %v12245 = vpop.f32.mrb[0].mxu0
        %v12246 = vpop.f32.mrb[0].mxu0
        %v12247 = vadd.f32 0.0, %v12246
        %v12248 = vpop.f32.mrb[0].mxu0
        %12249 = vdwg.mxu0
        %v12250 = vadd.f32 %v601, %v12188
        %v12251 = vadd.f32 %v602, %v12191
        %v12252 = vadd.f32 %v603, %v12196
        %v12253 = vadd.f32 %v604, %v12199
        %v12254 = vadd.f32 %v605, %v12204
        %v12255 = vadd.f32 %v606, %v12207
        %v12256 = vadd.f32 %v607, %v12212
        %v12257 = vadd.f32 %v608, %v12215
        %v12258 = vadd.f32 %v609, %v12220
        %v12259 = vadd.f32 %v610, %v12223
        %v12260 = vadd.f32 %v611, %v12228
        %v12261 = vadd.f32 %v612, %v12231
        %v12262 = vadd.f32 %v613, %v12236
        %v12263 = vadd.f32 %v614, %v12239
        %v12264 = vadd.f32 %v615, %v12244
        %v12265 = vadd.f32 %v616, %v12247
        %v12266 = vld [vmem:[%s11] sm:$0x1]
        %v12268 = vlaneseq
        %v12269 = vshrl.u32 %v12268, 7
        %v12270 = vsub.s32 0, %v12269
        %v12271 = vrot.slane %v12266, %v12270
        %v12273 = vadd.f32 %v12250, %v12271
        %v12274 = vadd.f32 %v12251, %v12271
        %v12275 = vadd.f32 %v12252, %v12271
        %v12276 = vadd.f32 %v12253, %v12271
        %v12277 = vadd.f32 %v12254, %v12271
        %v12278 = vadd.f32 %v12255, %v12271
        %v12279 = vadd.f32 %v12256, %v12271
        %v12280 = vadd.f32 %v12257, %v12271
        %v12281 = vadd.f32 %v12258, %v12271
        %v12282 = vadd.f32 %v12259, %v12271
        %v12283 = vadd.f32 %v12260, %v12271
        %v12284 = vadd.f32 %v12261, %v12271
        %v12285 = vadd.f32 %v12262, %v12271
        %v12286 = vadd.f32 %v12263, %v12271
        %v12287 = vadd.f32 %v12264, %v12271
        %v12288 = vadd.f32 %v12265, %v12271
        %12289 = vst [vmem:[%s596] sm:$0xff] %v12273
        %12290 = vst [vmem:[%s596 + $0x8] sm:$0xff] %v12274
        %12291 = vst [vmem:[%s596 + $0x10] sm:$0xff] %v12275
        %12292 = vst [vmem:[%s596 + $0x18] sm:$0xff] %v12276
        %12293 = vst [vmem:[%s596 + $0x20] sm:$0xff] %v12277
        %12294 = vst [vmem:[%s596 + $0x28] sm:$0xff] %v12278
        %12295 = vst [vmem:[%s596 + $0x30] sm:$0xff] %v12279
        %12296 = vst [vmem:[%s596 + $0x38] sm:$0xff] %v12280
        %12297 = vst [vmem:[%s596 + $0x40] sm:$0xff] %v12281
        %12298 = vst [vmem:[%s596 + $0x48] sm:$0xff] %v12282
        %12299 = vst [vmem:[%s596 + $0x50] sm:$0xff] %v12283
        %12300 = vst [vmem:[%s596 + $0x58] sm:$0xff] %v12284
        %12301 = vst [vmem:[%s596 + $0x60] sm:$0xff] %v12285
        %12302 = vst [vmem:[%s596 + $0x68] sm:$0xff] %v12286
        %12303 = vst [vmem:[%s596 + $0x70] sm:$0xff] %v12287
        %12304 = vst [vmem:[%s596 + $0x78] sm:$0xff] %v12288
        %s12305 = sand.u32 %s347, 1
        %s12306 = scalar_lea.sflag [#allocation4], %s12305
        %s12307 = sand.u32 %s347, 1
        %s12308 = smul.addr %s12307, 128
        %s12309 = scalar_lea.vmem [#allocation14], %s12308
        // Predicated region
        $region101: #{tpu_custom_call.1} parent=71 // pred_check
          %p12310 = pneg %p357
        $region102: #{tpu_custom_call.1} parent=71 // pred_check_branch
          %12312 = sbr.rel (%p12310) target = $region104
        $region103: #{tpu_custom_call.1} parent=71 // pred_region
          %s12313 = smul.u32 16, %s40
          %s12315 = ssub.s32 2048, 2048
          %12316 = vsyncadd %s12306, %s12315
          %s12317 = smul.addr %s39, 16
          %s12318 = sadd.s32 %s12313, %s12317
          %s12319 = smul.addr %s12318, 128
          %s12320 = scalar_lea.hbm %s13, %s12319
          %s12321 = sshll.u32 %s12309, 4
          %s12322 = int_to_ptr.vmem [resolvable:$true] %s12321
          %12327 = dma.vmem_to_hbm [thread:$0]  %s12322, 2048, %s12320, %s12306, 128, 128, 8
        $region104: #{tpu_custom_call.1} parent=71 // pred_fallthru
          _
      $region72: #{tpu_custom_call.1} parent=5 // pred_fallthru
        _
      %p12328 = scmp.le.s32.totalorder 2, %s30
      // Predicated region
      $region105: #{tpu_custom_call.1} parent=5 // pred_check
        %p12329 = pneg %p12328
      $region106: #{tpu_custom_call.1} parent=5 // pred_check_branch
        %12331 = sbr.rel (%p12329) target = $region108
      $region107: #{tpu_custom_call.1} parent=5 // pred_region
        %s12332 = ssub.s32 %s30, 2
        // Predicated region
        $region109: #{tpu_custom_call.1} parent=107 // pred_check
          %p12333 = pneg %p363
        $region110: #{tpu_custom_call.1} parent=107 // pred_check_branch
          %12335 = sbr.rel (%p12333) target = $region112
        $region111: #{tpu_custom_call.1} parent=107 // pred_region
          %s12336 = sand.u32 %s348, 1
          %s12337 = scalar_lea.sflag [#allocation4], %s12336
          %s12338 = sand.u32 %s348, 1
          %s12339 = smul.addr %s12338, 128
          %s12340 = scalar_lea.vmem [#allocation14], %s12339
          %12341 = dma.done %s12337, 2048
        $region112: #{tpu_custom_call.1} parent=107 // pred_fallthru
          _
      $region108: #{tpu_custom_call.1} parent=5 // pred_fallthru
        _
    $region6: #{tpu_custom_call.1} parent=1 // loop_footer
      %s34 = sadd.s32 1, %s30
    $region7: #{tpu_custom_call.1} parent=1 // loop_footer_branch
      %29 = sbr.rel target = $region3
    $region8: #{tpu_custom_call.1} parent=1 // loop_exit
      _
    %12342 = vsyncpa [#allocation3], 1
    %s12343 = scalar_lea.sflag [#allocation3], 1
    %12344 = vsyncpa %s12343, 1
    %12345 = vsyncpa [#allocation6], 1
    %s12346 = scalar_lea.sflag [#allocation6], 1
    %12347 = vsyncpa %s12346, 1
    %12348 = vsyncpa [#allocation9], 1
    %12349 = vsyncpa [#allocation12], 1
    %12350 = vsyncpa [#allocation4], 1
    %s12351 = scalar_lea.sflag [#allocation4], 1
    %12352 = vsyncpa %s12351, 1

</llo_original>
